<compile_context>
chip_gen: v7x
topology: tpu7x:2x2x1
jax: 0.10.0
libtpu: 0.0.40
codegen_flags: <defaults>
</compile_context>

<pallas_src>
import functools

import jax
import jax.numpy as jnp
import numpy as np
from jax import lax
from jax.experimental import pallas as pl
from jax.experimental.pallas import tpu as pltpu

NEG_SLOPE = 0.01       # F.leaky_relu / nn.LeakyReLU default
GAT_NEG_SLOPE = 0.2    # GATv2Conv default negative_slope
BN_EPS = 1e-5          # nn.BatchNorm1d default eps

# contraction over dim 0 of both 2-D operands (transposed-LHS matmul on the MXU)
TN_DIMS = (((0,), (0,)), ((), ()))


# ----------------------------- in-kernel helpers -----------------------------
def _leaky(x, slope=NEG_SLOPE):
    return jnp.where(x >= 0, x, slope * x)


def _elu(x):
    # F.elu_ with alpha = 1
    return jnp.where(x > 0, x, jnp.exp(x) - 1.0)


# ------------------------------ fused forward kernel -------------------------
def _fused_gnn_kernel(
        # data / graph operators
        x_ref, ea_ref, S_ref, A_ref, membT_ref,
        # stacked GINEConv + GIN_Sequential weights, [L, ...]
        We_ref, be_ref, W1_ref, b1_ref, bns_ref, bnb_ref, W2_ref, b2_ref,
        # stacked atom GRUCell weights, gates [r|z|n] on the leading axis [3L, ...]
        aWih_ref, aWhh_ref, abih_ref, abhh_ref,
        # mol GATv2Conv weights (heads=1, add_self_loops=False)
        Wl_ref, bl_ref, Wr_ref, br_ref, att_ref, gbias_ref,
        # mol GRUCell weights, gates on the leading axis [3, ...]
        mWih_ref, mWhh_ref, mbih_ref, mbhh_ref,
        # output head
        Wlin_ref, blin_ref,
        # outputs
        out_ref, amean_ref, acts_ref,
        *, num_layers_self):
    f32 = jnp.float32
    x = x_ref[...]                         # [N, D]  node features (stays resident)
    ea = ea_ref[...]                       # [E, edge_dim]
    S = S_ref[...].astype(f32)             # [E, N]  src one-hot (gather x_j)
    A = A_ref[...].astype(f32)             # [N, E]  dst one-hot^T (scatter-add)
    membT = membT_ref[...].astype(f32)     # [N, B]  node -> graph membership
    N = x.shape[0]
    num_layers = We_ref.shape[0]

    def gru_leaky(inp, hid, wih, whh, bih, bhh, base):
        # PyTorch GRUCell (gate order [r | z | n]), fused with the trailing leaky_relu.
        def gi(g):
            return jnp.dot(inp, wih[base + g], preferred_element_type=f32) + bih[base + g]

        def gh(g):
            return jnp.dot(hid, whh[base + g], preferred_element_type=f32) + bhh[base + g]

        r = jax.nn.sigmoid(gi(0) + gh(0))
        zg = jax.nn.sigmoid(gi(1) + gh(1))
        n = jnp.tanh(gi(2) + r * gh(2))
        return _leaky((1.0 - zg) * n + zg * hid)

    # ---------------- node-level GINEConv + GRU layers (unrolled) ----------------
    for l in range(num_layers):
        # GINEConv: sum_e ReLU(x_j + Linear(edge_attr)), eps = 0
        ep = jnp.dot(ea, We_ref[l], preferred_element_type=f32) + be_ref[l]        # [E, D]
        xs = jnp.dot(S, x, preferred_element_type=f32)                             # [E, D] gather x_j
        msg = jnp.maximum(xs + ep, 0.0)
        aggr = jnp.dot(A, msg, preferred_element_type=f32)                         # [N, D] scatter-add
        z = x + aggr                                                               # (1+eps)*x_i + aggr
        # GIN_Sequential: lin1 -> bn1 (active in eval) -> LeakyReLU -> dropout(id) -> lin2
        t = jnp.dot(z, W1_ref[l], preferred_element_type=f32) + b1_ref[l]
        t = _leaky(t * bns_ref[l] + bnb_ref[l])
        h = jnp.dot(t, W2_ref[l], preferred_element_type=f32) + b2_ref[l]
        h = _elu(h)                                                                # F.elu_
        # dropout: identity (eval);  x = leaky_relu(GRUCell(h, x))
        x = gru_leaky(h, x, aWih_ref, aWhh_ref, abih_ref, abhh_ref, 3 * l)

    acts_ref[...] = x                                                              # final_conv_acts

    # ---------------- out = leaky_relu(global_add_pool(x, batch)) ----------------
    out = _leaky(lax.dot_general(membT, x, TN_DIMS, preferred_element_type=f32))   # [B, D]

    # ---------------- graph-level GATv2 attention + GRU refinement ---------------
    # x / Wl / bl never change inside this loop -> hoist the source projection.
    xl = jnp.dot(x, Wl_ref[...], preferred_element_type=f32) + bl_ref[...]         # [N, D]
    att = att_ref[...]                                                             # [1, D]
    gbias = gbias_ref[...]                                                         # [1, D]
    alpha_sum = jnp.zeros((N, 1), f32)

    for _ in range(num_layers_self):
        xr = jnp.dot(out, Wr_ref[...], preferred_element_type=f32) + br_ref[...]   # [B, D]
        xr_g = jnp.dot(membT, xr, preferred_element_type=f32)                      # [N, D]  x_r[batch[n]]
        e = _leaky(xl + xr_g, GAT_NEG_SLOPE)
        score = jnp.sum(e * att, axis=-1, keepdims=True)                           # [N, 1]
        # segment softmax over the nodes of each graph, with a PER-GRAPH max
        seg_scores = jnp.where(membT > 0, score, jnp.float32(-1e30))               # [N, B]
        seg_max = jnp.max(seg_scores, axis=0, keepdims=True)                       # [1, B]
        node_max = jnp.sum(membT * seg_max, axis=1, keepdims=True)                 # [N, 1]
        alpha = jnp.exp(score - node_max)                                          # [N, 1]
        denom = jnp.sum(membT * alpha, axis=0, keepdims=True) + 1e-16              # [1, B]
        node_denom = jnp.sum(membT * denom, axis=1, keepdims=True)                 # [N, 1]
        alpha = alpha * pl.reciprocal(node_denom, approx=True)
        # aggregate alpha * x_l per graph, add bias, ELU (F.elu_ in the outer forward)
        h = lax.dot_general(membT, alpha * xl, TN_DIMS,
                            preferred_element_type=f32) + gbias                    # [B, D]
        h = _elu(h)
        out = gru_leaky(h, out, mWih_ref, mWhh_ref, mbih_ref, mbhh_ref, 0)
        alpha_sum = alpha_sum + alpha

    amean_ref[...] = alpha_sum * (1.0 / num_layers_self)                           # mean over t

    # ---------------- final linear head (dropout identity in eval) ---------------
    out_ref[...] = jnp.dot(out, Wlin_ref[...], preferred_element_type=f32) + blin_ref[...]


# --------------------------- parameters & forward -----------------------------
def init_params(key, D, edge_dim, out_lin, num_layers):
    """Random parameters in the stacked / pre-transposed layout the kernel expects."""
    def nxt():
        nonlocal key
        key, sub = jax.random.split(key)
        return sub

    def mat(shape, scale=0.2):
        return (scale * jax.random.normal(nxt(), shape)).astype(jnp.float32)

    L = num_layers
    # GIN_Sequential.bn1 (always active in eval) folded into scale/shift host-side.
    bn_gamma = 1.0 + mat((L, 1, D), 0.05)
    bn_beta = mat((L, 1, D), 0.05)
    bn_mean = mat((L, 1, D), 0.05)
    bn_var = 1.0 + jnp.abs(mat((L, 1, D), 0.05))
    bns = bn_gamma * lax.rsqrt(bn_var + BN_EPS)
    bnb = bn_beta - bn_mean * bns
    return dict(
        # GINEConv.lin (edge proj) + GIN_Sequential (lin1, folded bn1, lin2), stacked [L, ...]
        We=mat((L, edge_dim, D)), be=mat((L, 1, D)),
        W1=mat((L, D, D)), b1=mat((L, 1, D)), bns=bns, bnb=bnb,
        W2=mat((L, D, D)), b2=mat((L, 1, D)),
        # atom GRUCells: gates [r|z|n] on a leading axis -> lane-aligned [D, D] blocks
        aWih=mat((3 * L, D, D)), aWhh=mat((3 * L, D, D)),
        abih=mat((3 * L, 1, D)), abhh=mat((3 * L, 1, D)),
        # mol GATv2Conv (heads=1, add_self_loops=False)
        Wl=mat((D, D)), bl=mat((1, D)), Wr=mat((D, D)), br=mat((1, D)),
        att=mat((1, D)), gbias=mat((1, D)),
        # mol GRUCell
        mWih=mat((3, D, D)), mWhh=mat((3, D, D)),
        mbih=mat((3, 1, D)), mbhh=mat((3, 1, D)),
        # output head
        Wlin=mat((D, out_lin)), blin=mat((1, out_lin)),
    )


def gnn_graph_forward(params, x, edge_attr, S, A, membT, *, num_layers_self):
    """Eval-mode forward of GNN_Graph (model='GIN', batch_normalize=False).

    Single fused pallas_call. Returns (out, att_mol_mean, final_conv_acts).
    """
    f32 = jnp.float32
    N, D = x.shape
    B = membT.shape[1]
    out_lin = params['Wlin'].shape[-1]
    kernel = functools.partial(_fused_gnn_kernel, num_layers_self=num_layers_self)
    inputs = (
        x, edge_attr, S, A, membT,
        params['We'], params['be'], params['W1'], params['b1'],
        params['bns'], params['bnb'], params['W2'], params['b2'],
        params['aWih'], params['aWhh'], params['abih'], params['abhh'],
        params['Wl'], params['bl'], params['Wr'], params['br'],
        params['att'], params['gbias'],
        params['mWih'], params['mWhh'], params['mbih'], params['mbhh'],
        params['Wlin'], params['blin'],
    )
    out, att_mol_mean, final_conv_acts = pl.pallas_call(
        kernel,
        out_shape=(jax.ShapeDtypeStruct((B, out_lin), f32),
                   jax.ShapeDtypeStruct((N, 1), f32),
                   jax.ShapeDtypeStruct((N, D), f32)),
        # single invocation, whole-array VMEM blocks; explicit scoped-VMEM budget
        compiler_params=pltpu.CompilerParams(vmem_limit_bytes=32 * 1024 * 1024),
    )(*inputs)
    return out, att_mol_mean, final_conv_acts


# ------------------------------------ main ------------------------------------
if __name__ == "__main__":
    # small shapes consistent with the module (in = hidden = out = in_lin = D)
    N, B, D, edge_dim, out_lin = 16, 2, 32, 6, 8
    num_layers, num_layers_self = 3, 2
    npg = N // B
    batch = np.repeat(np.arange(B), npg)

    # deterministic small graph: bidirectional ring inside each molecule
    src, dst = [], []
    for g in range(B):
        base = g * npg
        for i in range(npg):
            a, b = base + i, base + (i + 1) % npg
            src += [a, b]
            dst += [b, a]
    src = np.asarray(src)
    dst = np.asarray(dst)
    E = src.shape[0]

    key = jax.random.PRNGKey(0)
    key, k1, k2 = jax.random.split(key, 3)
    x = jax.random.normal(k1, (N, D), dtype=jnp.float32)                  # data.x_g
    edge_attr = jax.random.normal(k2, (E, edge_dim), dtype=jnp.float32)   # data.edge_attr_g

    # one-hot gather/scatter operators: stored bf16 (0/1 exact), cast to f32 in-kernel
    S = jax.nn.one_hot(jnp.asarray(src), N, dtype=jnp.bfloat16)                      # [E, N] gather x_j
    A = jnp.transpose(jax.nn.one_hot(jnp.asarray(dst), N, dtype=jnp.bfloat16))       # [N, E] scatter-add
    membT = jax.nn.one_hot(jnp.asarray(batch), B, dtype=jnp.bfloat16)                # [N, B] membership

    params = init_params(key, D, edge_dim, out_lin, num_layers)

    fwd = jax.jit(functools.partial(gnn_graph_forward, num_layers_self=num_layers_self))
    out, att_mol_mean, final_conv_acts = fwd(params, x, edge_attr, S, A, membT)

    # att_mol_index = torch.stack([arange(N), batch]); int32 on TPU (no int64)
    att_mol_index = jnp.stack([jnp.arange(N, dtype=jnp.int32),
                               jnp.asarray(batch, dtype=jnp.int32)])

    jax.block_until_ready((out, att_mol_mean, final_conv_acts, att_mol_index))
    assert out.shape == (B, out_lin)
    assert att_mol_mean.shape == (N, 1)
    assert final_conv_acts.shape == (N, D)
    print("KERNEL_OK")
</pallas_src>

<mosaic_0001>
module attributes {stable_mosaic.version = 11 : i64} {
  func.func @_fused_gnn_kernel(%arg0: memref<16x32xf32, #tpu.memory_space<vmem>>, %arg1: memref<32x6xf32, #tpu.memory_space<vmem>>, %arg2: memref<32x16xbf16, #tpu.memory_space<vmem>>, %arg3: memref<16x32xbf16, #tpu.memory_space<vmem>>, %arg4: memref<16x2xbf16, #tpu.memory_space<vmem>>, %arg5: memref<3x6x32xf32, #tpu.memory_space<vmem>>, %arg6: memref<3x1x32xf32, #tpu.memory_space<vmem>>, %arg7: memref<3x32x32xf32, #tpu.memory_space<vmem>>, %arg8: memref<3x1x32xf32, #tpu.memory_space<vmem>>, %arg9: memref<3x1x32xf32, #tpu.memory_space<vmem>>, %arg10: memref<3x1x32xf32, #tpu.memory_space<vmem>>, %arg11: memref<3x32x32xf32, #tpu.memory_space<vmem>>, %arg12: memref<3x1x32xf32, #tpu.memory_space<vmem>>, %arg13: memref<9x32x32xf32, #tpu.memory_space<vmem>>, %arg14: memref<9x32x32xf32, #tpu.memory_space<vmem>>, %arg15: memref<9x1x32xf32, #tpu.memory_space<vmem>>, %arg16: memref<9x1x32xf32, #tpu.memory_space<vmem>>, %arg17: memref<32x32xf32, #tpu.memory_space<vmem>>, %arg18: memref<1x32xf32, #tpu.memory_space<vmem>>, %arg19: memref<32x32xf32, #tpu.memory_space<vmem>>, %arg20: memref<1x32xf32, #tpu.memory_space<vmem>>, %arg21: memref<1x32xf32, #tpu.memory_space<vmem>>, %arg22: memref<1x32xf32, #tpu.memory_space<vmem>>, %arg23: memref<3x32x32xf32, #tpu.memory_space<vmem>>, %arg24: memref<3x32x32xf32, #tpu.memory_space<vmem>>, %arg25: memref<3x1x32xf32, #tpu.memory_space<vmem>>, %arg26: memref<3x1x32xf32, #tpu.memory_space<vmem>>, %arg27: memref<32x8xf32, #tpu.memory_space<vmem>>, %arg28: memref<1x8xf32, #tpu.memory_space<vmem>>, %arg29: memref<2x8xf32, #tpu.memory_space<vmem>>, %arg30: memref<16x1xf32, #tpu.memory_space<vmem>>, %arg31: memref<16x32xf32, #tpu.memory_space<vmem>>) attributes {dimension_semantics = [], scalar_prefetch = 0 : i64, scratch_operands = 0 : i64, tpu.core_type = #tpu.core_type<tc>} {
    %c0 = arith.constant 0 : index
    %c0_0 = arith.constant 0 : index
    %0 = vector.load %arg0[%c0, %c0_0] : memref<16x32xf32, #tpu.memory_space<vmem>>, vector<16x32xf32>
    %c0_1 = arith.constant 0 : index
    %c0_2 = arith.constant 0 : index
    %1 = vector.load %arg1[%c0_1, %c0_2] : memref<32x6xf32, #tpu.memory_space<vmem>>, vector<32x6xf32>
    %c0_3 = arith.constant 0 : index
    %c0_4 = arith.constant 0 : index
    %2 = vector.load %arg2[%c0_3, %c0_4] : memref<32x16xbf16, #tpu.memory_space<vmem>>, vector<32x16xbf16>
    %3 = arith.extf %2 : vector<32x16xbf16> to vector<32x16xf32>
    %c0_5 = arith.constant 0 : index
    %c0_6 = arith.constant 0 : index
    %4 = vector.load %arg3[%c0_5, %c0_6] : memref<16x32xbf16, #tpu.memory_space<vmem>>, vector<16x32xbf16>
    %5 = arith.extf %4 : vector<16x32xbf16> to vector<16x32xf32>
    %c0_7 = arith.constant 0 : index
    %c0_8 = arith.constant 0 : index
    %6 = vector.load %arg4[%c0_7, %c0_8] : memref<16x2xbf16, #tpu.memory_space<vmem>>, vector<16x2xbf16>
    %7 = arith.extf %6 : vector<16x2xbf16> to vector<16x2xf32>
    %c0_9 = arith.constant 0 : index
    %c0_10 = arith.constant 0 : index
    %c0_11 = arith.constant 0 : index
    %8 = vector.load %arg5[%c0_9, %c0_10, %c0_11] : memref<3x6x32xf32, #tpu.memory_space<vmem>>, vector<1x6x32xf32>
    %9 = vector.shape_cast %8 : vector<1x6x32xf32> to vector<6x32xf32>
    %cst = arith.constant dense<0.000000e+00> : vector<32x32xf32>
    %10 = tpu.matmul %1, %9, %cst {dimension_numbers = #tpu.dot_dimension_numbers<[1], [0], [0], [1], [0, 0, 1, 1], [], []>} : vector<32x6xf32>, vector<6x32xf32>, vector<32x32xf32> -> vector<32x32xf32>
    %c0_12 = arith.constant 0 : index
    %c0_13 = arith.constant 0 : index
    %c0_14 = arith.constant 0 : index
    %11 = vector.load %arg6[%c0_12, %c0_13, %c0_14] : memref<3x1x32xf32, #tpu.memory_space<vmem>>, vector<1x1x32xf32>
    %12 = vector.shape_cast %11 : vector<1x1x32xf32> to vector<1x32xf32>
    %13 = vector.broadcast %12 : vector<1x32xf32> to vector<32x32xf32>
    %14 = arith.addf %10, %13 : vector<32x32xf32>
    %cst_15 = arith.constant dense<0.000000e+00> : vector<32x32xf32>
    %15 = tpu.matmul %3, %0, %cst_15 {dimension_numbers = #tpu.dot_dimension_numbers<[1], [0], [0], [1], [0, 0, 1, 1], [], []>} : vector<32x16xf32>, vector<16x32xf32>, vector<32x32xf32> -> vector<32x32xf32>
    %16 = arith.addf %15, %14 : vector<32x32xf32>
    %cst_16 = arith.constant 0.000000e+00 : f32
    %17 = vector.broadcast %cst_16 : f32 to vector<32x32xf32>
    %18 = arith.maximumf %16, %17 : vector<32x32xf32>
    %cst_17 = arith.constant dense<0.000000e+00> : vector<16x32xf32>
    %19 = tpu.matmul %5, %18, %cst_17 {dimension_numbers = #tpu.dot_dimension_numbers<[1], [0], [0], [1], [0, 0, 1, 1], [], []>} : vector<16x32xf32>, vector<32x32xf32>, vector<16x32xf32> -> vector<16x32xf32>
    %20 = arith.addf %0, %19 : vector<16x32xf32>
    %c0_18 = arith.constant 0 : index
    %c0_19 = arith.constant 0 : index
    %c0_20 = arith.constant 0 : index
    %21 = vector.load %arg7[%c0_18, %c0_19, %c0_20] : memref<3x32x32xf32, #tpu.memory_space<vmem>>, vector<1x32x32xf32>
    %22 = vector.shape_cast %21 : vector<1x32x32xf32> to vector<32x32xf32>
    %cst_21 = arith.constant dense<0.000000e+00> : vector<16x32xf32>
    %23 = tpu.matmul %20, %22, %cst_21 {dimension_numbers = #tpu.dot_dimension_numbers<[1], [0], [0], [1], [0, 0, 1, 1], [], []>} : vector<16x32xf32>, vector<32x32xf32>, vector<16x32xf32> -> vector<16x32xf32>
    %c0_22 = arith.constant 0 : index
    %c0_23 = arith.constant 0 : index
    %c0_24 = arith.constant 0 : index
    %24 = vector.load %arg8[%c0_22, %c0_23, %c0_24] : memref<3x1x32xf32, #tpu.memory_space<vmem>>, vector<1x1x32xf32>
    %25 = vector.shape_cast %24 : vector<1x1x32xf32> to vector<1x32xf32>
    %26 = vector.broadcast %25 : vector<1x32xf32> to vector<16x32xf32>
    %27 = arith.addf %23, %26 : vector<16x32xf32>
    %c0_25 = arith.constant 0 : index
    %c0_26 = arith.constant 0 : index
    %c0_27 = arith.constant 0 : index
    %28 = vector.load %arg9[%c0_25, %c0_26, %c0_27] : memref<3x1x32xf32, #tpu.memory_space<vmem>>, vector<1x1x32xf32>
    %29 = vector.shape_cast %28 : vector<1x1x32xf32> to vector<1x32xf32>
    %30 = vector.broadcast %29 : vector<1x32xf32> to vector<16x32xf32>
    %31 = arith.mulf %27, %30 : vector<16x32xf32>
    %c0_28 = arith.constant 0 : index
    %c0_29 = arith.constant 0 : index
    %c0_30 = arith.constant 0 : index
    %32 = vector.load %arg10[%c0_28, %c0_29, %c0_30] : memref<3x1x32xf32, #tpu.memory_space<vmem>>, vector<1x1x32xf32>
    %33 = vector.shape_cast %32 : vector<1x1x32xf32> to vector<1x32xf32>
    %34 = vector.broadcast %33 : vector<1x32xf32> to vector<16x32xf32>
    %35 = arith.addf %31, %34 : vector<16x32xf32>
    %cst_31 = arith.constant 0.000000e+00 : f32
    %36 = vector.broadcast %cst_31 : f32 to vector<16x32xf32>
    %37 = arith.cmpf oge, %35, %36 : vector<16x32xf32>
    %cst_32 = arith.constant 0.00999999977 : f32
    %38 = vector.broadcast %cst_32 : f32 to vector<16x32xf32>
    %39 = arith.mulf %38, %35 : vector<16x32xf32>
    %40 = arith.select %37, %35, %39 : vector<16x32xi1>, vector<16x32xf32>
    %c0_33 = arith.constant 0 : index
    %c0_34 = arith.constant 0 : index
    %c0_35 = arith.constant 0 : index
    %41 = vector.load %arg11[%c0_33, %c0_34, %c0_35] : memref<3x32x32xf32, #tpu.memory_space<vmem>>, vector<1x32x32xf32>
    %42 = vector.shape_cast %41 : vector<1x32x32xf32> to vector<32x32xf32>
    %cst_36 = arith.constant dense<0.000000e+00> : vector<16x32xf32>
    %43 = tpu.matmul %40, %42, %cst_36 {dimension_numbers = #tpu.dot_dimension_numbers<[1], [0], [0], [1], [0, 0, 1, 1], [], []>} : vector<16x32xf32>, vector<32x32xf32>, vector<16x32xf32> -> vector<16x32xf32>
    %c0_37 = arith.constant 0 : index
    %c0_38 = arith.constant 0 : index
    %c0_39 = arith.constant 0 : index
    %44 = vector.load %arg12[%c0_37, %c0_38, %c0_39] : memref<3x1x32xf32, #tpu.memory_space<vmem>>, vector<1x1x32xf32>
    %45 = vector.shape_cast %44 : vector<1x1x32xf32> to vector<1x32xf32>
    %46 = vector.broadcast %45 : vector<1x32xf32> to vector<16x32xf32>
    %47 = arith.addf %43, %46 : vector<16x32xf32>
    %cst_40 = arith.constant 0.000000e+00 : f32
    %48 = vector.broadcast %cst_40 : f32 to vector<16x32xf32>
    %49 = arith.cmpf ogt, %47, %48 : vector<16x32xf32>
    %50 = math.exp %47 : vector<16x32xf32>
    %cst_41 = arith.constant 1.000000e+00 : f32
    %51 = vector.broadcast %cst_41 : f32 to vector<16x32xf32>
    %52 = arith.subf %50, %51 : vector<16x32xf32>
    %53 = arith.select %49, %47, %52 : vector<16x32xi1>, vector<16x32xf32>
    %c0_42 = arith.constant 0 : index
    %c0_43 = arith.constant 0 : index
    %c0_44 = arith.constant 0 : index
    %54 = vector.load %arg13[%c0_42, %c0_43, %c0_44] : memref<9x32x32xf32, #tpu.memory_space<vmem>>, vector<1x32x32xf32>
    %55 = vector.shape_cast %54 : vector<1x32x32xf32> to vector<32x32xf32>
    %cst_45 = arith.constant dense<0.000000e+00> : vector<16x32xf32>
    %56 = tpu.matmul %53, %55, %cst_45 {dimension_numbers = #tpu.dot_dimension_numbers<[1], [0], [0], [1], [0, 0, 1, 1], [], []>} : vector<16x32xf32>, vector<32x32xf32>, vector<16x32xf32> -> vector<16x32xf32>
    %c0_46 = arith.constant 0 : index
    %c0_47 = arith.constant 0 : index
    %c0_48 = arith.constant 0 : index
    %57 = vector.load %arg15[%c0_46, %c0_47, %c0_48] : memref<9x1x32xf32, #tpu.memory_space<vmem>>, vector<1x1x32xf32>
    %58 = vector.shape_cast %57 : vector<1x1x32xf32> to vector<1x32xf32>
    %59 = vector.broadcast %58 : vector<1x32xf32> to vector<16x32xf32>
    %60 = arith.addf %56, %59 : vector<16x32xf32>
    %c0_49 = arith.constant 0 : index
    %c0_50 = arith.constant 0 : index
    %c0_51 = arith.constant 0 : index
    %61 = vector.load %arg14[%c0_49, %c0_50, %c0_51] : memref<9x32x32xf32, #tpu.memory_space<vmem>>, vector<1x32x32xf32>
    %62 = vector.shape_cast %61 : vector<1x32x32xf32> to vector<32x32xf32>
    %cst_52 = arith.constant dense<0.000000e+00> : vector<16x32xf32>
    %63 = tpu.matmul %0, %62, %cst_52 {dimension_numbers = #tpu.dot_dimension_numbers<[1], [0], [0], [1], [0, 0, 1, 1], [], []>} : vector<16x32xf32>, vector<32x32xf32>, vector<16x32xf32> -> vector<16x32xf32>
    %c0_53 = arith.constant 0 : index
    %c0_54 = arith.constant 0 : index
    %c0_55 = arith.constant 0 : index
    %64 = vector.load %arg16[%c0_53, %c0_54, %c0_55] : memref<9x1x32xf32, #tpu.memory_space<vmem>>, vector<1x1x32xf32>
    %65 = vector.shape_cast %64 : vector<1x1x32xf32> to vector<1x32xf32>
    %66 = vector.broadcast %65 : vector<1x32xf32> to vector<16x32xf32>
    %67 = arith.addf %63, %66 : vector<16x32xf32>
    %68 = arith.addf %60, %67 : vector<16x32xf32>
    %69 = arith.negf %68 : vector<16x32xf32>
    %70 = math.exp %69 : vector<16x32xf32>
    %cst_56 = arith.constant 1.000000e+00 : f32
    %71 = vector.broadcast %cst_56 : f32 to vector<16x32xf32>
    %72 = arith.addf %71, %70 : vector<16x32xf32>
    %73 = arith.divf %71, %72 : vector<16x32xf32>
    %c1 = arith.constant 1 : index
    %c0_57 = arith.constant 0 : index
    %c0_58 = arith.constant 0 : index
    %74 = vector.load %arg13[%c1, %c0_57, %c0_58] : memref<9x32x32xf32, #tpu.memory_space<vmem>>, vector<1x32x32xf32>
    %75 = vector.shape_cast %74 : vector<1x32x32xf32> to vector<32x32xf32>
    %cst_59 = arith.constant dense<0.000000e+00> : vector<16x32xf32>
    %76 = tpu.matmul %53, %75, %cst_59 {dimension_numbers = #tpu.dot_dimension_numbers<[1], [0], [0], [1], [0, 0, 1, 1], [], []>} : vector<16x32xf32>, vector<32x32xf32>, vector<16x32xf32> -> vector<16x32xf32>
    %c1_60 = arith.constant 1 : index
    %c0_61 = arith.constant 0 : index
    %c0_62 = arith.constant 0 : index
    %77 = vector.load %arg15[%c1_60, %c0_61, %c0_62] : memref<9x1x32xf32, #tpu.memory_space<vmem>>, vector<1x1x32xf32>
    %78 = vector.shape_cast %77 : vector<1x1x32xf32> to vector<1x32xf32>
    %79 = vector.broadcast %78 : vector<1x32xf32> to vector<16x32xf32>
    %80 = arith.addf %76, %79 : vector<16x32xf32>
    %c1_63 = arith.constant 1 : index
    %c0_64 = arith.constant 0 : index
    %c0_65 = arith.constant 0 : index
    %81 = vector.load %arg14[%c1_63, %c0_64, %c0_65] : memref<9x32x32xf32, #tpu.memory_space<vmem>>, vector<1x32x32xf32>
    %82 = vector.shape_cast %81 : vector<1x32x32xf32> to vector<32x32xf32>
    %cst_66 = arith.constant dense<0.000000e+00> : vector<16x32xf32>
    %83 = tpu.matmul %0, %82, %cst_66 {dimension_numbers = #tpu.dot_dimension_numbers<[1], [0], [0], [1], [0, 0, 1, 1], [], []>} : vector<16x32xf32>, vector<32x32xf32>, vector<16x32xf32> -> vector<16x32xf32>
    %c1_67 = arith.constant 1 : index
    %c0_68 = arith.constant 0 : index
    %c0_69 = arith.constant 0 : index
    %84 = vector.load %arg16[%c1_67, %c0_68, %c0_69] : memref<9x1x32xf32, #tpu.memory_space<vmem>>, vector<1x1x32xf32>
    %85 = vector.shape_cast %84 : vector<1x1x32xf32> to vector<1x32xf32>
    %86 = vector.broadcast %85 : vector<1x32xf32> to vector<16x32xf32>
    %87 = arith.addf %83, %86 : vector<16x32xf32>
    %88 = arith.addf %80, %87 : vector<16x32xf32>
    %89 = arith.negf %88 : vector<16x32xf32>
    %90 = math.exp %89 : vector<16x32xf32>
    %cst_70 = arith.constant 1.000000e+00 : f32
    %91 = vector.broadcast %cst_70 : f32 to vector<16x32xf32>
    %92 = arith.addf %91, %90 : vector<16x32xf32>
    %93 = arith.divf %91, %92 : vector<16x32xf32>
    %c2 = arith.constant 2 : index
    %c0_71 = arith.constant 0 : index
    %c0_72 = arith.constant 0 : index
    %94 = vector.load %arg13[%c2, %c0_71, %c0_72] : memref<9x32x32xf32, #tpu.memory_space<vmem>>, vector<1x32x32xf32>
    %95 = vector.shape_cast %94 : vector<1x32x32xf32> to vector<32x32xf32>
    %cst_73 = arith.constant dense<0.000000e+00> : vector<16x32xf32>
    %96 = tpu.matmul %53, %95, %cst_73 {dimension_numbers = #tpu.dot_dimension_numbers<[1], [0], [0], [1], [0, 0, 1, 1], [], []>} : vector<16x32xf32>, vector<32x32xf32>, vector<16x32xf32> -> vector<16x32xf32>
    %c2_74 = arith.constant 2 : index
    %c0_75 = arith.constant 0 : index
    %c0_76 = arith.constant 0 : index
    %97 = vector.load %arg15[%c2_74, %c0_75, %c0_76] : memref<9x1x32xf32, #tpu.memory_space<vmem>>, vector<1x1x32xf32>
    %98 = vector.shape_cast %97 : vector<1x1x32xf32> to vector<1x32xf32>
    %99 = vector.broadcast %98 : vector<1x32xf32> to vector<16x32xf32>
    %100 = arith.addf %96, %99 : vector<16x32xf32>
    %c2_77 = arith.constant 2 : index
    %c0_78 = arith.constant 0 : index
    %c0_79 = arith.constant 0 : index
    %101 = vector.load %arg14[%c2_77, %c0_78, %c0_79] : memref<9x32x32xf32, #tpu.memory_space<vmem>>, vector<1x32x32xf32>
    %102 = vector.shape_cast %101 : vector<1x32x32xf32> to vector<32x32xf32>
    %cst_80 = arith.constant dense<0.000000e+00> : vector<16x32xf32>
    %103 = tpu.matmul %0, %102, %cst_80 {dimension_numbers = #tpu.dot_dimension_numbers<[1], [0], [0], [1], [0, 0, 1, 1], [], []>} : vector<16x32xf32>, vector<32x32xf32>, vector<16x32xf32> -> vector<16x32xf32>
    %c2_81 = arith.constant 2 : index
    %c0_82 = arith.constant 0 : index
    %c0_83 = arith.constant 0 : index
    %104 = vector.load %arg16[%c2_81, %c0_82, %c0_83] : memref<9x1x32xf32, #tpu.memory_space<vmem>>, vector<1x1x32xf32>
    %105 = vector.shape_cast %104 : vector<1x1x32xf32> to vector<1x32xf32>
    %106 = vector.broadcast %105 : vector<1x32xf32> to vector<16x32xf32>
    %107 = arith.addf %103, %106 : vector<16x32xf32>
    %108 = arith.mulf %73, %107 : vector<16x32xf32>
    %109 = arith.addf %100, %108 : vector<16x32xf32>
    %110 = math.tanh %109 : vector<16x32xf32>
    %cst_84 = arith.constant 1.000000e+00 : f32
    %111 = vector.broadcast %cst_84 : f32 to vector<16x32xf32>
    %112 = arith.subf %111, %93 : vector<16x32xf32>
    %113 = arith.mulf %112, %110 : vector<16x32xf32>
    %114 = arith.mulf %93, %0 : vector<16x32xf32>
    %115 = arith.addf %113, %114 : vector<16x32xf32>
    %cst_85 = arith.constant 0.000000e+00 : f32
    %116 = vector.broadcast %cst_85 : f32 to vector<16x32xf32>
    %117 = arith.cmpf oge, %115, %116 : vector<16x32xf32>
    %cst_86 = arith.constant 0.00999999977 : f32
    %118 = vector.broadcast %cst_86 : f32 to vector<16x32xf32>
    %119 = arith.mulf %118, %115 : vector<16x32xf32>
    %120 = arith.select %117, %115, %119 : vector<16x32xi1>, vector<16x32xf32>
    %c1_87 = arith.constant 1 : index
    %c0_88 = arith.constant 0 : index
    %c0_89 = arith.constant 0 : index
    %121 = vector.load %arg5[%c1_87, %c0_88, %c0_89] : memref<3x6x32xf32, #tpu.memory_space<vmem>>, vector<1x6x32xf32>
    %122 = vector.shape_cast %121 : vector<1x6x32xf32> to vector<6x32xf32>
    %cst_90 = arith.constant dense<0.000000e+00> : vector<32x32xf32>
    %123 = tpu.matmul %1, %122, %cst_90 {dimension_numbers = #tpu.dot_dimension_numbers<[1], [0], [0], [1], [0, 0, 1, 1], [], []>} : vector<32x6xf32>, vector<6x32xf32>, vector<32x32xf32> -> vector<32x32xf32>
    %c1_91 = arith.constant 1 : index
    %c0_92 = arith.constant 0 : index
    %c0_93 = arith.constant 0 : index
    %124 = vector.load %arg6[%c1_91, %c0_92, %c0_93] : memref<3x1x32xf32, #tpu.memory_space<vmem>>, vector<1x1x32xf32>
    %125 = vector.shape_cast %124 : vector<1x1x32xf32> to vector<1x32xf32>
    %126 = vector.broadcast %125 : vector<1x32xf32> to vector<32x32xf32>
    %127 = arith.addf %123, %126 : vector<32x32xf32>
    %cst_94 = arith.constant dense<0.000000e+00> : vector<32x32xf32>
    %128 = tpu.matmul %3, %120, %cst_94 {dimension_numbers = #tpu.dot_dimension_numbers<[1], [0], [0], [1], [0, 0, 1, 1], [], []>} : vector<32x16xf32>, vector<16x32xf32>, vector<32x32xf32> -> vector<32x32xf32>
    %129 = arith.addf %128, %127 : vector<32x32xf32>
    %cst_95 = arith.constant 0.000000e+00 : f32
    %130 = vector.broadcast %cst_95 : f32 to vector<32x32xf32>
    %131 = arith.maximumf %129, %130 : vector<32x32xf32>
    %cst_96 = arith.constant dense<0.000000e+00> : vector<16x32xf32>
    %132 = tpu.matmul %5, %131, %cst_96 {dimension_numbers = #tpu.dot_dimension_numbers<[1], [0], [0], [1], [0, 0, 1, 1], [], []>} : vector<16x32xf32>, vector<32x32xf32>, vector<16x32xf32> -> vector<16x32xf32>
    %133 = arith.addf %120, %132 : vector<16x32xf32>
    %c1_97 = arith.constant 1 : index
    %c0_98 = arith.constant 0 : index
    %c0_99 = arith.constant 0 : index
    %134 = vector.load %arg7[%c1_97, %c0_98, %c0_99] : memref<3x32x32xf32, #tpu.memory_space<vmem>>, vector<1x32x32xf32>
    %135 = vector.shape_cast %134 : vector<1x32x32xf32> to vector<32x32xf32>
    %cst_100 = arith.constant dense<0.000000e+00> : vector<16x32xf32>
    %136 = tpu.matmul %133, %135, %cst_100 {dimension_numbers = #tpu.dot_dimension_numbers<[1], [0], [0], [1], [0, 0, 1, 1], [], []>} : vector<16x32xf32>, vector<32x32xf32>, vector<16x32xf32> -> vector<16x32xf32>
    %c1_101 = arith.constant 1 : index
    %c0_102 = arith.constant 0 : index
    %c0_103 = arith.constant 0 : index
    %137 = vector.load %arg8[%c1_101, %c0_102, %c0_103] : memref<3x1x32xf32, #tpu.memory_space<vmem>>, vector<1x1x32xf32>
    %138 = vector.shape_cast %137 : vector<1x1x32xf32> to vector<1x32xf32>
    %139 = vector.broadcast %138 : vector<1x32xf32> to vector<16x32xf32>
    %140 = arith.addf %136, %139 : vector<16x32xf32>
    %c1_104 = arith.constant 1 : index
    %c0_105 = arith.constant 0 : index
    %c0_106 = arith.constant 0 : index
    %141 = vector.load %arg9[%c1_104, %c0_105, %c0_106] : memref<3x1x32xf32, #tpu.memory_space<vmem>>, vector<1x1x32xf32>
    %142 = vector.shape_cast %141 : vector<1x1x32xf32> to vector<1x32xf32>
    %143 = vector.broadcast %142 : vector<1x32xf32> to vector<16x32xf32>
    %144 = arith.mulf %140, %143 : vector<16x32xf32>
    %c1_107 = arith.constant 1 : index
    %c0_108 = arith.constant 0 : index
    %c0_109 = arith.constant 0 : index
    %145 = vector.load %arg10[%c1_107, %c0_108, %c0_109] : memref<3x1x32xf32, #tpu.memory_space<vmem>>, vector<1x1x32xf32>
    %146 = vector.shape_cast %145 : vector<1x1x32xf32> to vector<1x32xf32>
    %147 = vector.broadcast %146 : vector<1x32xf32> to vector<16x32xf32>
    %148 = arith.addf %144, %147 : vector<16x32xf32>
    %cst_110 = arith.constant 0.000000e+00 : f32
    %149 = vector.broadcast %cst_110 : f32 to vector<16x32xf32>
    %150 = arith.cmpf oge, %148, %149 : vector<16x32xf32>
    %cst_111 = arith.constant 0.00999999977 : f32
    %151 = vector.broadcast %cst_111 : f32 to vector<16x32xf32>
    %152 = arith.mulf %151, %148 : vector<16x32xf32>
    %153 = arith.select %150, %148, %152 : vector<16x32xi1>, vector<16x32xf32>
    %c1_112 = arith.constant 1 : index
    %c0_113 = arith.constant 0 : index
    %c0_114 = arith.constant 0 : index
    %154 = vector.load %arg11[%c1_112, %c0_113, %c0_114] : memref<3x32x32xf32, #tpu.memory_space<vmem>>, vector<1x32x32xf32>
    %155 = vector.shape_cast %154 : vector<1x32x32xf32> to vector<32x32xf32>
    %cst_115 = arith.constant dense<0.000000e+00> : vector<16x32xf32>
    %156 = tpu.matmul %153, %155, %cst_115 {dimension_numbers = #tpu.dot_dimension_numbers<[1], [0], [0], [1], [0, 0, 1, 1], [], []>} : vector<16x32xf32>, vector<32x32xf32>, vector<16x32xf32> -> vector<16x32xf32>
    %c1_116 = arith.constant 1 : index
    %c0_117 = arith.constant 0 : index
    %c0_118 = arith.constant 0 : index
    %157 = vector.load %arg12[%c1_116, %c0_117, %c0_118] : memref<3x1x32xf32, #tpu.memory_space<vmem>>, vector<1x1x32xf32>
    %158 = vector.shape_cast %157 : vector<1x1x32xf32> to vector<1x32xf32>
    %159 = vector.broadcast %158 : vector<1x32xf32> to vector<16x32xf32>
    %160 = arith.addf %156, %159 : vector<16x32xf32>
    %cst_119 = arith.constant 0.000000e+00 : f32
    %161 = vector.broadcast %cst_119 : f32 to vector<16x32xf32>
    %162 = arith.cmpf ogt, %160, %161 : vector<16x32xf32>
    %163 = math.exp %160 : vector<16x32xf32>
    %cst_120 = arith.constant 1.000000e+00 : f32
    %164 = vector.broadcast %cst_120 : f32 to vector<16x32xf32>
    %165 = arith.subf %163, %164 : vector<16x32xf32>
    %166 = arith.select %162, %160, %165 : vector<16x32xi1>, vector<16x32xf32>
    %c3 = arith.constant 3 : index
    %c0_121 = arith.constant 0 : index
    %c0_122 = arith.constant 0 : index
    %167 = vector.load %arg13[%c3, %c0_121, %c0_122] : memref<9x32x32xf32, #tpu.memory_space<vmem>>, vector<1x32x32xf32>
    %168 = vector.shape_cast %167 : vector<1x32x32xf32> to vector<32x32xf32>
    %cst_123 = arith.constant dense<0.000000e+00> : vector<16x32xf32>
    %169 = tpu.matmul %166, %168, %cst_123 {dimension_numbers = #tpu.dot_dimension_numbers<[1], [0], [0], [1], [0, 0, 1, 1], [], []>} : vector<16x32xf32>, vector<32x32xf32>, vector<16x32xf32> -> vector<16x32xf32>
    %c3_124 = arith.constant 3 : index
    %c0_125 = arith.constant 0 : index
    %c0_126 = arith.constant 0 : index
    %170 = vector.load %arg15[%c3_124, %c0_125, %c0_126] : memref<9x1x32xf32, #tpu.memory_space<vmem>>, vector<1x1x32xf32>
    %171 = vector.shape_cast %170 : vector<1x1x32xf32> to vector<1x32xf32>
    %172 = vector.broadcast %171 : vector<1x32xf32> to vector<16x32xf32>
    %173 = arith.addf %169, %172 : vector<16x32xf32>
    %c3_127 = arith.constant 3 : index
    %c0_128 = arith.constant 0 : index
    %c0_129 = arith.constant 0 : index
    %174 = vector.load %arg14[%c3_127, %c0_128, %c0_129] : memref<9x32x32xf32, #tpu.memory_space<vmem>>, vector<1x32x32xf32>
    %175 = vector.shape_cast %174 : vector<1x32x32xf32> to vector<32x32xf32>
    %cst_130 = arith.constant dense<0.000000e+00> : vector<16x32xf32>
    %176 = tpu.matmul %120, %175, %cst_130 {dimension_numbers = #tpu.dot_dimension_numbers<[1], [0], [0], [1], [0, 0, 1, 1], [], []>} : vector<16x32xf32>, vector<32x32xf32>, vector<16x32xf32> -> vector<16x32xf32>
    %c3_131 = arith.constant 3 : index
    %c0_132 = arith.constant 0 : index
    %c0_133 = arith.constant 0 : index
    %177 = vector.load %arg16[%c3_131, %c0_132, %c0_133] : memref<9x1x32xf32, #tpu.memory_space<vmem>>, vector<1x1x32xf32>
    %178 = vector.shape_cast %177 : vector<1x1x32xf32> to vector<1x32xf32>
    %179 = vector.broadcast %178 : vector<1x32xf32> to vector<16x32xf32>
    %180 = arith.addf %176, %179 : vector<16x32xf32>
    %181 = arith.addf %173, %180 : vector<16x32xf32>
    %182 = arith.negf %181 : vector<16x32xf32>
    %183 = math.exp %182 : vector<16x32xf32>
    %cst_134 = arith.constant 1.000000e+00 : f32
    %184 = vector.broadcast %cst_134 : f32 to vector<16x32xf32>
    %185 = arith.addf %184, %183 : vector<16x32xf32>
    %186 = arith.divf %184, %185 : vector<16x32xf32>
    %c4 = arith.constant 4 : index
    %c0_135 = arith.constant 0 : index
    %c0_136 = arith.constant 0 : index
    %187 = vector.load %arg13[%c4, %c0_135, %c0_136] : memref<9x32x32xf32, #tpu.memory_space<vmem>>, vector<1x32x32xf32>
    %188 = vector.shape_cast %187 : vector<1x32x32xf32> to vector<32x32xf32>
    %cst_137 = arith.constant dense<0.000000e+00> : vector<16x32xf32>
    %189 = tpu.matmul %166, %188, %cst_137 {dimension_numbers = #tpu.dot_dimension_numbers<[1], [0], [0], [1], [0, 0, 1, 1], [], []>} : vector<16x32xf32>, vector<32x32xf32>, vector<16x32xf32> -> vector<16x32xf32>
    %c4_138 = arith.constant 4 : index
    %c0_139 = arith.constant 0 : index
    %c0_140 = arith.constant 0 : index
    %190 = vector.load %arg15[%c4_138, %c0_139, %c0_140] : memref<9x1x32xf32, #tpu.memory_space<vmem>>, vector<1x1x32xf32>
    %191 = vector.shape_cast %190 : vector<1x1x32xf32> to vector<1x32xf32>
    %192 = vector.broadcast %191 : vector<1x32xf32> to vector<16x32xf32>
    %193 = arith.addf %189, %192 : vector<16x32xf32>
    %c4_141 = arith.constant 4 : index
    %c0_142 = arith.constant 0 : index
    %c0_143 = arith.constant 0 : index
    %194 = vector.load %arg14[%c4_141, %c0_142, %c0_143] : memref<9x32x32xf32, #tpu.memory_space<vmem>>, vector<1x32x32xf32>
    %195 = vector.shape_cast %194 : vector<1x32x32xf32> to vector<32x32xf32>
    %cst_144 = arith.constant dense<0.000000e+00> : vector<16x32xf32>
    %196 = tpu.matmul %120, %195, %cst_144 {dimension_numbers = #tpu.dot_dimension_numbers<[1], [0], [0], [1], [0, 0, 1, 1], [], []>} : vector<16x32xf32>, vector<32x32xf32>, vector<16x32xf32> -> vector<16x32xf32>
    %c4_145 = arith.constant 4 : index
    %c0_146 = arith.constant 0 : index
    %c0_147 = arith.constant 0 : index
    %197 = vector.load %arg16[%c4_145, %c0_146, %c0_147] : memref<9x1x32xf32, #tpu.memory_space<vmem>>, vector<1x1x32xf32>
    %198 = vector.shape_cast %197 : vector<1x1x32xf32> to vector<1x32xf32>
    %199 = vector.broadcast %198 : vector<1x32xf32> to vector<16x32xf32>
    %200 = arith.addf %196, %199 : vector<16x32xf32>
    %201 = arith.addf %193, %200 : vector<16x32xf32>
    %202 = arith.negf %201 : vector<16x32xf32>
    %203 = math.exp %202 : vector<16x32xf32>
    %cst_148 = arith.constant 1.000000e+00 : f32
    %204 = vector.broadcast %cst_148 : f32 to vector<16x32xf32>
    %205 = arith.addf %204, %203 : vector<16x32xf32>
    %206 = arith.divf %204, %205 : vector<16x32xf32>
    %c5 = arith.constant 5 : index
    %c0_149 = arith.constant 0 : index
    %c0_150 = arith.constant 0 : index
    %207 = vector.load %arg13[%c5, %c0_149, %c0_150] : memref<9x32x32xf32, #tpu.memory_space<vmem>>, vector<1x32x32xf32>
    %208 = vector.shape_cast %207 : vector<1x32x32xf32> to vector<32x32xf32>
    %cst_151 = arith.constant dense<0.000000e+00> : vector<16x32xf32>
    %209 = tpu.matmul %166, %208, %cst_151 {dimension_numbers = #tpu.dot_dimension_numbers<[1], [0], [0], [1], [0, 0, 1, 1], [], []>} : vector<16x32xf32>, vector<32x32xf32>, vector<16x32xf32> -> vector<16x32xf32>
    %c5_152 = arith.constant 5 : index
    %c0_153 = arith.constant 0 : index
    %c0_154 = arith.constant 0 : index
    %210 = vector.load %arg15[%c5_152, %c0_153, %c0_154] : memref<9x1x32xf32, #tpu.memory_space<vmem>>, vector<1x1x32xf32>
    %211 = vector.shape_cast %210 : vector<1x1x32xf32> to vector<1x32xf32>
    %212 = vector.broadcast %211 : vector<1x32xf32> to vector<16x32xf32>
    %213 = arith.addf %209, %212 : vector<16x32xf32>
    %c5_155 = arith.constant 5 : index
    %c0_156 = arith.constant 0 : index
    %c0_157 = arith.constant 0 : index
    %214 = vector.load %arg14[%c5_155, %c0_156, %c0_157] : memref<9x32x32xf32, #tpu.memory_space<vmem>>, vector<1x32x32xf32>
    %215 = vector.shape_cast %214 : vector<1x32x32xf32> to vector<32x32xf32>
    %cst_158 = arith.constant dense<0.000000e+00> : vector<16x32xf32>
    %216 = tpu.matmul %120, %215, %cst_158 {dimension_numbers = #tpu.dot_dimension_numbers<[1], [0], [0], [1], [0, 0, 1, 1], [], []>} : vector<16x32xf32>, vector<32x32xf32>, vector<16x32xf32> -> vector<16x32xf32>
    %c5_159 = arith.constant 5 : index
    %c0_160 = arith.constant 0 : index
    %c0_161 = arith.constant 0 : index
    %217 = vector.load %arg16[%c5_159, %c0_160, %c0_161] : memref<9x1x32xf32, #tpu.memory_space<vmem>>, vector<1x1x32xf32>
    %218 = vector.shape_cast %217 : vector<1x1x32xf32> to vector<1x32xf32>
    %219 = vector.broadcast %218 : vector<1x32xf32> to vector<16x32xf32>
    %220 = arith.addf %216, %219 : vector<16x32xf32>
    %221 = arith.mulf %186, %220 : vector<16x32xf32>
    %222 = arith.addf %213, %221 : vector<16x32xf32>
    %223 = math.tanh %222 : vector<16x32xf32>
    %cst_162 = arith.constant 1.000000e+00 : f32
    %224 = vector.broadcast %cst_162 : f32 to vector<16x32xf32>
    %225 = arith.subf %224, %206 : vector<16x32xf32>
    %226 = arith.mulf %225, %223 : vector<16x32xf32>
    %227 = arith.mulf %206, %120 : vector<16x32xf32>
    %228 = arith.addf %226, %227 : vector<16x32xf32>
    %cst_163 = arith.constant 0.000000e+00 : f32
    %229 = vector.broadcast %cst_163 : f32 to vector<16x32xf32>
    %230 = arith.cmpf oge, %228, %229 : vector<16x32xf32>
    %cst_164 = arith.constant 0.00999999977 : f32
    %231 = vector.broadcast %cst_164 : f32 to vector<16x32xf32>
    %232 = arith.mulf %231, %228 : vector<16x32xf32>
    %233 = arith.select %230, %228, %232 : vector<16x32xi1>, vector<16x32xf32>
    %c2_165 = arith.constant 2 : index
    %c0_166 = arith.constant 0 : index
    %c0_167 = arith.constant 0 : index
    %234 = vector.load %arg5[%c2_165, %c0_166, %c0_167] : memref<3x6x32xf32, #tpu.memory_space<vmem>>, vector<1x6x32xf32>
    %235 = vector.shape_cast %234 : vector<1x6x32xf32> to vector<6x32xf32>
    %cst_168 = arith.constant dense<0.000000e+00> : vector<32x32xf32>
    %236 = tpu.matmul %1, %235, %cst_168 {dimension_numbers = #tpu.dot_dimension_numbers<[1], [0], [0], [1], [0, 0, 1, 1], [], []>} : vector<32x6xf32>, vector<6x32xf32>, vector<32x32xf32> -> vector<32x32xf32>
    %c2_169 = arith.constant 2 : index
    %c0_170 = arith.constant 0 : index
    %c0_171 = arith.constant 0 : index
    %237 = vector.load %arg6[%c2_169, %c0_170, %c0_171] : memref<3x1x32xf32, #tpu.memory_space<vmem>>, vector<1x1x32xf32>
    %238 = vector.shape_cast %237 : vector<1x1x32xf32> to vector<1x32xf32>
    %239 = vector.broadcast %238 : vector<1x32xf32> to vector<32x32xf32>
    %240 = arith.addf %236, %239 : vector<32x32xf32>
    %cst_172 = arith.constant dense<0.000000e+00> : vector<32x32xf32>
    %241 = tpu.matmul %3, %233, %cst_172 {dimension_numbers = #tpu.dot_dimension_numbers<[1], [0], [0], [1], [0, 0, 1, 1], [], []>} : vector<32x16xf32>, vector<16x32xf32>, vector<32x32xf32> -> vector<32x32xf32>
    %242 = arith.addf %241, %240 : vector<32x32xf32>
    %cst_173 = arith.constant 0.000000e+00 : f32
    %243 = vector.broadcast %cst_173 : f32 to vector<32x32xf32>
    %244 = arith.maximumf %242, %243 : vector<32x32xf32>
    %cst_174 = arith.constant dense<0.000000e+00> : vector<16x32xf32>
    %245 = tpu.matmul %5, %244, %cst_174 {dimension_numbers = #tpu.dot_dimension_numbers<[1], [0], [0], [1], [0, 0, 1, 1], [], []>} : vector<16x32xf32>, vector<32x32xf32>, vector<16x32xf32> -> vector<16x32xf32>
    %246 = arith.addf %233, %245 : vector<16x32xf32>
    %c2_175 = arith.constant 2 : index
    %c0_176 = arith.constant 0 : index
    %c0_177 = arith.constant 0 : index
    %247 = vector.load %arg7[%c2_175, %c0_176, %c0_177] : memref<3x32x32xf32, #tpu.memory_space<vmem>>, vector<1x32x32xf32>
    %248 = vector.shape_cast %247 : vector<1x32x32xf32> to vector<32x32xf32>
    %cst_178 = arith.constant dense<0.000000e+00> : vector<16x32xf32>
    %249 = tpu.matmul %246, %248, %cst_178 {dimension_numbers = #tpu.dot_dimension_numbers<[1], [0], [0], [1], [0, 0, 1, 1], [], []>} : vector<16x32xf32>, vector<32x32xf32>, vector<16x32xf32> -> vector<16x32xf32>
    %c2_179 = arith.constant 2 : index
    %c0_180 = arith.constant 0 : index
    %c0_181 = arith.constant 0 : index
    %250 = vector.load %arg8[%c2_179, %c0_180, %c0_181] : memref<3x1x32xf32, #tpu.memory_space<vmem>>, vector<1x1x32xf32>
    %251 = vector.shape_cast %250 : vector<1x1x32xf32> to vector<1x32xf32>
    %252 = vector.broadcast %251 : vector<1x32xf32> to vector<16x32xf32>
    %253 = arith.addf %249, %252 : vector<16x32xf32>
    %c2_182 = arith.constant 2 : index
    %c0_183 = arith.constant 0 : index
    %c0_184 = arith.constant 0 : index
    %254 = vector.load %arg9[%c2_182, %c0_183, %c0_184] : memref<3x1x32xf32, #tpu.memory_space<vmem>>, vector<1x1x32xf32>
    %255 = vector.shape_cast %254 : vector<1x1x32xf32> to vector<1x32xf32>
    %256 = vector.broadcast %255 : vector<1x32xf32> to vector<16x32xf32>
    %257 = arith.mulf %253, %256 : vector<16x32xf32>
    %c2_185 = arith.constant 2 : index
    %c0_186 = arith.constant 0 : index
    %c0_187 = arith.constant 0 : index
    %258 = vector.load %arg10[%c2_185, %c0_186, %c0_187] : memref<3x1x32xf32, #tpu.memory_space<vmem>>, vector<1x1x32xf32>
    %259 = vector.shape_cast %258 : vector<1x1x32xf32> to vector<1x32xf32>
    %260 = vector.broadcast %259 : vector<1x32xf32> to vector<16x32xf32>
    %261 = arith.addf %257, %260 : vector<16x32xf32>
    %cst_188 = arith.constant 0.000000e+00 : f32
    %262 = vector.broadcast %cst_188 : f32 to vector<16x32xf32>
    %263 = arith.cmpf oge, %261, %262 : vector<16x32xf32>
    %cst_189 = arith.constant 0.00999999977 : f32
    %264 = vector.broadcast %cst_189 : f32 to vector<16x32xf32>
    %265 = arith.mulf %264, %261 : vector<16x32xf32>
    %266 = arith.select %263, %261, %265 : vector<16x32xi1>, vector<16x32xf32>
    %c2_190 = arith.constant 2 : index
    %c0_191 = arith.constant 0 : index
    %c0_192 = arith.constant 0 : index
    %267 = vector.load %arg11[%c2_190, %c0_191, %c0_192] : memref<3x32x32xf32, #tpu.memory_space<vmem>>, vector<1x32x32xf32>
    %268 = vector.shape_cast %267 : vector<1x32x32xf32> to vector<32x32xf32>
    %cst_193 = arith.constant dense<0.000000e+00> : vector<16x32xf32>
    %269 = tpu.matmul %266, %268, %cst_193 {dimension_numbers = #tpu.dot_dimension_numbers<[1], [0], [0], [1], [0, 0, 1, 1], [], []>} : vector<16x32xf32>, vector<32x32xf32>, vector<16x32xf32> -> vector<16x32xf32>
    %c2_194 = arith.constant 2 : index
    %c0_195 = arith.constant 0 : index
    %c0_196 = arith.constant 0 : index
    %270 = vector.load %arg12[%c2_194, %c0_195, %c0_196] : memref<3x1x32xf32, #tpu.memory_space<vmem>>, vector<1x1x32xf32>
    %271 = vector.shape_cast %270 : vector<1x1x32xf32> to vector<1x32xf32>
    %272 = vector.broadcast %271 : vector<1x32xf32> to vector<16x32xf32>
    %273 = arith.addf %269, %272 : vector<16x32xf32>
    %cst_197 = arith.constant 0.000000e+00 : f32
    %274 = vector.broadcast %cst_197 : f32 to vector<16x32xf32>
    %275 = arith.cmpf ogt, %273, %274 : vector<16x32xf32>
    %276 = math.exp %273 : vector<16x32xf32>
    %cst_198 = arith.constant 1.000000e+00 : f32
    %277 = vector.broadcast %cst_198 : f32 to vector<16x32xf32>
    %278 = arith.subf %276, %277 : vector<16x32xf32>
    %279 = arith.select %275, %273, %278 : vector<16x32xi1>, vector<16x32xf32>
    %c6 = arith.constant 6 : index
    %c0_199 = arith.constant 0 : index
    %c0_200 = arith.constant 0 : index
    %280 = vector.load %arg13[%c6, %c0_199, %c0_200] : memref<9x32x32xf32, #tpu.memory_space<vmem>>, vector<1x32x32xf32>
    %281 = vector.shape_cast %280 : vector<1x32x32xf32> to vector<32x32xf32>
    %cst_201 = arith.constant dense<0.000000e+00> : vector<16x32xf32>
    %282 = tpu.matmul %279, %281, %cst_201 {dimension_numbers = #tpu.dot_dimension_numbers<[1], [0], [0], [1], [0, 0, 1, 1], [], []>} : vector<16x32xf32>, vector<32x32xf32>, vector<16x32xf32> -> vector<16x32xf32>
    %c6_202 = arith.constant 6 : index
    %c0_203 = arith.constant 0 : index
    %c0_204 = arith.constant 0 : index
    %283 = vector.load %arg15[%c6_202, %c0_203, %c0_204] : memref<9x1x32xf32, #tpu.memory_space<vmem>>, vector<1x1x32xf32>
    %284 = vector.shape_cast %283 : vector<1x1x32xf32> to vector<1x32xf32>
    %285 = vector.broadcast %284 : vector<1x32xf32> to vector<16x32xf32>
    %286 = arith.addf %282, %285 : vector<16x32xf32>
    %c6_205 = arith.constant 6 : index
    %c0_206 = arith.constant 0 : index
    %c0_207 = arith.constant 0 : index
    %287 = vector.load %arg14[%c6_205, %c0_206, %c0_207] : memref<9x32x32xf32, #tpu.memory_space<vmem>>, vector<1x32x32xf32>
    %288 = vector.shape_cast %287 : vector<1x32x32xf32> to vector<32x32xf32>
    %cst_208 = arith.constant dense<0.000000e+00> : vector<16x32xf32>
    %289 = tpu.matmul %233, %288, %cst_208 {dimension_numbers = #tpu.dot_dimension_numbers<[1], [0], [0], [1], [0, 0, 1, 1], [], []>} : vector<16x32xf32>, vector<32x32xf32>, vector<16x32xf32> -> vector<16x32xf32>
    %c6_209 = arith.constant 6 : index
    %c0_210 = arith.constant 0 : index
    %c0_211 = arith.constant 0 : index
    %290 = vector.load %arg16[%c6_209, %c0_210, %c0_211] : memref<9x1x32xf32, #tpu.memory_space<vmem>>, vector<1x1x32xf32>
    %291 = vector.shape_cast %290 : vector<1x1x32xf32> to vector<1x32xf32>
    %292 = vector.broadcast %291 : vector<1x32xf32> to vector<16x32xf32>
    %293 = arith.addf %289, %292 : vector<16x32xf32>
    %294 = arith.addf %286, %293 : vector<16x32xf32>
    %295 = arith.negf %294 : vector<16x32xf32>
    %296 = math.exp %295 : vector<16x32xf32>
    %cst_212 = arith.constant 1.000000e+00 : f32
    %297 = vector.broadcast %cst_212 : f32 to vector<16x32xf32>
    %298 = arith.addf %297, %296 : vector<16x32xf32>
    %299 = arith.divf %297, %298 : vector<16x32xf32>
    %c7 = arith.constant 7 : index
    %c0_213 = arith.constant 0 : index
    %c0_214 = arith.constant 0 : index
    %300 = vector.load %arg13[%c7, %c0_213, %c0_214] : memref<9x32x32xf32, #tpu.memory_space<vmem>>, vector<1x32x32xf32>
    %301 = vector.shape_cast %300 : vector<1x32x32xf32> to vector<32x32xf32>
    %cst_215 = arith.constant dense<0.000000e+00> : vector<16x32xf32>
    %302 = tpu.matmul %279, %301, %cst_215 {dimension_numbers = #tpu.dot_dimension_numbers<[1], [0], [0], [1], [0, 0, 1, 1], [], []>} : vector<16x32xf32>, vector<32x32xf32>, vector<16x32xf32> -> vector<16x32xf32>
    %c7_216 = arith.constant 7 : index
    %c0_217 = arith.constant 0 : index
    %c0_218 = arith.constant 0 : index
    %303 = vector.load %arg15[%c7_216, %c0_217, %c0_218] : memref<9x1x32xf32, #tpu.memory_space<vmem>>, vector<1x1x32xf32>
    %304 = vector.shape_cast %303 : vector<1x1x32xf32> to vector<1x32xf32>
    %305 = vector.broadcast %304 : vector<1x32xf32> to vector<16x32xf32>
    %306 = arith.addf %302, %305 : vector<16x32xf32>
    %c7_219 = arith.constant 7 : index
    %c0_220 = arith.constant 0 : index
    %c0_221 = arith.constant 0 : index
    %307 = vector.load %arg14[%c7_219, %c0_220, %c0_221] : memref<9x32x32xf32, #tpu.memory_space<vmem>>, vector<1x32x32xf32>
    %308 = vector.shape_cast %307 : vector<1x32x32xf32> to vector<32x32xf32>
    %cst_222 = arith.constant dense<0.000000e+00> : vector<16x32xf32>
    %309 = tpu.matmul %233, %308, %cst_222 {dimension_numbers = #tpu.dot_dimension_numbers<[1], [0], [0], [1], [0, 0, 1, 1], [], []>} : vector<16x32xf32>, vector<32x32xf32>, vector<16x32xf32> -> vector<16x32xf32>
    %c7_223 = arith.constant 7 : index
    %c0_224 = arith.constant 0 : index
    %c0_225 = arith.constant 0 : index
    %310 = vector.load %arg16[%c7_223, %c0_224, %c0_225] : memref<9x1x32xf32, #tpu.memory_space<vmem>>, vector<1x1x32xf32>
    %311 = vector.shape_cast %310 : vector<1x1x32xf32> to vector<1x32xf32>
    %312 = vector.broadcast %311 : vector<1x32xf32> to vector<16x32xf32>
    %313 = arith.addf %309, %312 : vector<16x32xf32>
    %314 = arith.addf %306, %313 : vector<16x32xf32>
    %315 = arith.negf %314 : vector<16x32xf32>
    %316 = math.exp %315 : vector<16x32xf32>
    %cst_226 = arith.constant 1.000000e+00 : f32
    %317 = vector.broadcast %cst_226 : f32 to vector<16x32xf32>
    %318 = arith.addf %317, %316 : vector<16x32xf32>
    %319 = arith.divf %317, %318 : vector<16x32xf32>
    %c8 = arith.constant 8 : index
    %c0_227 = arith.constant 0 : index
    %c0_228 = arith.constant 0 : index
    %320 = vector.load %arg13[%c8, %c0_227, %c0_228] : memref<9x32x32xf32, #tpu.memory_space<vmem>>, vector<1x32x32xf32>
    %321 = vector.shape_cast %320 : vector<1x32x32xf32> to vector<32x32xf32>
    %cst_229 = arith.constant dense<0.000000e+00> : vector<16x32xf32>
    %322 = tpu.matmul %279, %321, %cst_229 {dimension_numbers = #tpu.dot_dimension_numbers<[1], [0], [0], [1], [0, 0, 1, 1], [], []>} : vector<16x32xf32>, vector<32x32xf32>, vector<16x32xf32> -> vector<16x32xf32>
    %c8_230 = arith.constant 8 : index
    %c0_231 = arith.constant 0 : index
    %c0_232 = arith.constant 0 : index
    %323 = vector.load %arg15[%c8_230, %c0_231, %c0_232] : memref<9x1x32xf32, #tpu.memory_space<vmem>>, vector<1x1x32xf32>
    %324 = vector.shape_cast %323 : vector<1x1x32xf32> to vector<1x32xf32>
    %325 = vector.broadcast %324 : vector<1x32xf32> to vector<16x32xf32>
    %326 = arith.addf %322, %325 : vector<16x32xf32>
    %c8_233 = arith.constant 8 : index
    %c0_234 = arith.constant 0 : index
    %c0_235 = arith.constant 0 : index
    %327 = vector.load %arg14[%c8_233, %c0_234, %c0_235] : memref<9x32x32xf32, #tpu.memory_space<vmem>>, vector<1x32x32xf32>
    %328 = vector.shape_cast %327 : vector<1x32x32xf32> to vector<32x32xf32>
    %cst_236 = arith.constant dense<0.000000e+00> : vector<16x32xf32>
    %329 = tpu.matmul %233, %328, %cst_236 {dimension_numbers = #tpu.dot_dimension_numbers<[1], [0], [0], [1], [0, 0, 1, 1], [], []>} : vector<16x32xf32>, vector<32x32xf32>, vector<16x32xf32> -> vector<16x32xf32>
    %c8_237 = arith.constant 8 : index
    %c0_238 = arith.constant 0 : index
    %c0_239 = arith.constant 0 : index
    %330 = vector.load %arg16[%c8_237, %c0_238, %c0_239] : memref<9x1x32xf32, #tpu.memory_space<vmem>>, vector<1x1x32xf32>
    %331 = vector.shape_cast %330 : vector<1x1x32xf32> to vector<1x32xf32>
    %332 = vector.broadcast %331 : vector<1x32xf32> to vector<16x32xf32>
    %333 = arith.addf %329, %332 : vector<16x32xf32>
    %334 = arith.mulf %299, %333 : vector<16x32xf32>
    %335 = arith.addf %326, %334 : vector<16x32xf32>
    %336 = math.tanh %335 : vector<16x32xf32>
    %cst_240 = arith.constant 1.000000e+00 : f32
    %337 = vector.broadcast %cst_240 : f32 to vector<16x32xf32>
    %338 = arith.subf %337, %319 : vector<16x32xf32>
    %339 = arith.mulf %338, %336 : vector<16x32xf32>
    %340 = arith.mulf %319, %233 : vector<16x32xf32>
    %341 = arith.addf %339, %340 : vector<16x32xf32>
    %cst_241 = arith.constant 0.000000e+00 : f32
    %342 = vector.broadcast %cst_241 : f32 to vector<16x32xf32>
    %343 = arith.cmpf oge, %341, %342 : vector<16x32xf32>
    %cst_242 = arith.constant 0.00999999977 : f32
    %344 = vector.broadcast %cst_242 : f32 to vector<16x32xf32>
    %345 = arith.mulf %344, %341 : vector<16x32xf32>
    %346 = arith.select %343, %341, %345 : vector<16x32xi1>, vector<16x32xf32>
    %c0_243 = arith.constant 0 : index
    %c0_244 = arith.constant 0 : index
    %347 = vector.load %arg31[%c0_243, %c0_244] : memref<16x32xf32, #tpu.memory_space<vmem>>, vector<16x32xf32>
    tpu.vector_store %arg31[%c0_243, %c0_244], %346 {strides = array<i32>} : memref<16x32xf32, #tpu.memory_space<vmem>>, vector<16x32xf32>,
    %cst_245 = arith.constant dense<0.000000e+00> : vector<2x32xf32>
    %348 = tpu.matmul %7, %346, %cst_245 {dimension_numbers = #tpu.dot_dimension_numbers<[0], [0], [1], [1], [0, 1, 1, 1], [], []>} : vector<16x2xf32>, vector<16x32xf32>, vector<2x32xf32> -> vector<2x32xf32>
    %cst_246 = arith.constant 0.000000e+00 : f32
    %349 = vector.broadcast %cst_246 : f32 to vector<2x32xf32>
    %350 = arith.cmpf oge, %348, %349 : vector<2x32xf32>
    %cst_247 = arith.constant 0.00999999977 : f32
    %351 = vector.broadcast %cst_247 : f32 to vector<2x32xf32>
    %352 = arith.mulf %351, %348 : vector<2x32xf32>
    %353 = arith.select %350, %348, %352 : vector<2x32xi1>, vector<2x32xf32>
    %c0_248 = arith.constant 0 : index
    %c0_249 = arith.constant 0 : index
    %354 = vector.load %arg17[%c0_248, %c0_249] : memref<32x32xf32, #tpu.memory_space<vmem>>, vector<32x32xf32>
    %cst_250 = arith.constant dense<0.000000e+00> : vector<16x32xf32>
    %355 = tpu.matmul %346, %354, %cst_250 {dimension_numbers = #tpu.dot_dimension_numbers<[1], [0], [0], [1], [0, 0, 1, 1], [], []>} : vector<16x32xf32>, vector<32x32xf32>, vector<16x32xf32> -> vector<16x32xf32>
    %c0_251 = arith.constant 0 : index
    %c0_252 = arith.constant 0 : index
    %356 = vector.load %arg18[%c0_251, %c0_252] : memref<1x32xf32, #tpu.memory_space<vmem>>, vector<1x32xf32>
    %357 = vector.broadcast %356 : vector<1x32xf32> to vector<16x32xf32>
    %358 = arith.addf %355, %357 : vector<16x32xf32>
    %c0_253 = arith.constant 0 : index
    %c0_254 = arith.constant 0 : index
    %359 = vector.load %arg21[%c0_253, %c0_254] : memref<1x32xf32, #tpu.memory_space<vmem>>, vector<1x32xf32>
    %c0_255 = arith.constant 0 : index
    %c0_256 = arith.constant 0 : index
    %360 = vector.load %arg22[%c0_255, %c0_256] : memref<1x32xf32, #tpu.memory_space<vmem>>, vector<1x32xf32>
    %cst_257 = arith.constant 0.000000e+00 : f32
    %361 = vector.broadcast %cst_257 : f32 to vector<16x1xf32>
    %c0_258 = arith.constant 0 : index
    %c0_259 = arith.constant 0 : index
    %362 = vector.load %arg19[%c0_258, %c0_259] : memref<32x32xf32, #tpu.memory_space<vmem>>, vector<32x32xf32>
    %cst_260 = arith.constant dense<0.000000e+00> : vector<2x32xf32>
    %363 = tpu.matmul %353, %362, %cst_260 {dimension_numbers = #tpu.dot_dimension_numbers<[1], [0], [0], [1], [0, 0, 1, 1], [], []>} : vector<2x32xf32>, vector<32x32xf32>, vector<2x32xf32> -> vector<2x32xf32>
    %c0_261 = arith.constant 0 : index
    %c0_262 = arith.constant 0 : index
    %364 = vector.load %arg20[%c0_261, %c0_262] : memref<1x32xf32, #tpu.memory_space<vmem>>, vector<1x32xf32>
    %365 = vector.broadcast %364 : vector<1x32xf32> to vector<2x32xf32>
    %366 = arith.addf %363, %365 : vector<2x32xf32>
    %cst_263 = arith.constant dense<0.000000e+00> : vector<16x32xf32>
    %367 = tpu.matmul %7, %366, %cst_263 {dimension_numbers = #tpu.dot_dimension_numbers<[1], [0], [0], [1], [0, 0, 1, 1], [], []>} : vector<16x2xf32>, vector<2x32xf32>, vector<16x32xf32> -> vector<16x32xf32>
    %368 = arith.addf %358, %367 : vector<16x32xf32>
    %cst_264 = arith.constant 0.000000e+00 : f32
    %369 = vector.broadcast %cst_264 : f32 to vector<16x32xf32>
    %370 = arith.cmpf oge, %368, %369 : vector<16x32xf32>
    %cst_265 = arith.constant 2.000000e-01 : f32
    %371 = vector.broadcast %cst_265 : f32 to vector<16x32xf32>
    %372 = arith.mulf %371, %368 : vector<16x32xf32>
    %373 = arith.select %370, %368, %372 : vector<16x32xi1>, vector<16x32xf32>
    %374 = vector.broadcast %359 : vector<1x32xf32> to vector<16x32xf32>
    %375 = arith.mulf %373, %374 : vector<16x32xf32>
    %cst_266 = arith.constant dense<0.000000e+00> : vector<16xf32>
    %376 = vector.multi_reduction <add>, %375, %cst_266 [1] : vector<16x32xf32> to vector<16xf32>
    %377 = vector.shape_cast %376 : vector<16xf32> to vector<16x1xf32>
    %cst_267 = arith.constant 0.000000e+00 : f32
    %378 = vector.broadcast %cst_267 : f32 to vector<16x2xf32>
    %379 = arith.cmpf ogt, %7, %378 : vector<16x2xf32>
    %cst_268 = arith.constant -1.000000e+30 : f32
    %380 = vector.shape_cast %377 : vector<16x1xf32> to vector<16x1xf32>
    %381 = vector.broadcast %380 : vector<16x1xf32> to vector<16x2xf32>
    %382 = vector.broadcast %cst_268 : f32 to vector<16x2xf32>
    %383 = arith.select %379, %381, %382 : vector<16x2xi1>, vector<16x2xf32>
    %cst_269 = arith.constant dense<0xFF800000> : vector<2xf32>
    %384 = vector.multi_reduction <maximumf>, %383, %cst_269 [0] : vector<16x2xf32> to vector<2xf32>
    %385 = vector.shape_cast %384 : vector<2xf32> to vector<1x2xf32>
    %386 = vector.broadcast %385 : vector<1x2xf32> to vector<16x2xf32>
    %387 = arith.mulf %7, %386 : vector<16x2xf32>
    %cst_270 = arith.constant dense<0.000000e+00> : vector<16xf32>
    %388 = vector.multi_reduction <add>, %387, %cst_270 [1] : vector<16x2xf32> to vector<16xf32>
    %389 = vector.shape_cast %388 : vector<16xf32> to vector<16x1xf32>
    %390 = arith.subf %377, %389 : vector<16x1xf32>
    %391 = math.exp %390 : vector<16x1xf32>
    %392 = vector.broadcast %391 : vector<16x1xf32> to vector<16x2xf32>
    %393 = arith.mulf %7, %392 : vector<16x2xf32>
    %cst_271 = arith.constant dense<0.000000e+00> : vector<2xf32>
    %394 = vector.multi_reduction <add>, %393, %cst_271 [0] : vector<16x2xf32> to vector<2xf32>
    %395 = vector.shape_cast %394 : vector<2xf32> to vector<1x2xf32>
    %cst_272 = arith.constant 1.000000e-16 : f32
    %396 = vector.broadcast %cst_272 : f32 to vector<1x2xf32>
    %397 = arith.addf %395, %396 : vector<1x2xf32>
    %398 = vector.broadcast %397 : vector<1x2xf32> to vector<16x2xf32>
    %399 = arith.mulf %7, %398 : vector<16x2xf32>
    %cst_273 = arith.constant dense<0.000000e+00> : vector<16xf32>
    %400 = vector.multi_reduction <add>, %399, %cst_273 [1] : vector<16x2xf32> to vector<16xf32>
    %401 = vector.shape_cast %400 : vector<16xf32> to vector<16x1xf32>
    %402 = tpu.reciprocal %401 {approx = true} : vector<16x1xf32> -> vector<16x1xf32>
    %403 = arith.mulf %391, %402 : vector<16x1xf32>
    %404 = vector.broadcast %403 : vector<16x1xf32> to vector<16x32xf32>
    %405 = arith.mulf %404, %358 : vector<16x32xf32>
    %cst_274 = arith.constant dense<0.000000e+00> : vector<2x32xf32>
    %406 = tpu.matmul %7, %405, %cst_274 {dimension_numbers = #tpu.dot_dimension_numbers<[0], [0], [1], [1], [0, 1, 1, 1], [], []>} : vector<16x2xf32>, vector<16x32xf32>, vector<2x32xf32> -> vector<2x32xf32>
    %407 = vector.broadcast %360 : vector<1x32xf32> to vector<2x32xf32>
    %408 = arith.addf %406, %407 : vector<2x32xf32>
    %cst_275 = arith.constant 0.000000e+00 : f32
    %409 = vector.broadcast %cst_275 : f32 to vector<2x32xf32>
    %410 = arith.cmpf ogt, %408, %409 : vector<2x32xf32>
    %411 = math.exp %408 : vector<2x32xf32>
    %cst_276 = arith.constant 1.000000e+00 : f32
    %412 = vector.broadcast %cst_276 : f32 to vector<2x32xf32>
    %413 = arith.subf %411, %412 : vector<2x32xf32>
    %414 = arith.select %410, %408, %413 : vector<2x32xi1>, vector<2x32xf32>
    %c0_277 = arith.constant 0 : index
    %c0_278 = arith.constant 0 : index
    %c0_279 = arith.constant 0 : index
    %415 = vector.load %arg23[%c0_277, %c0_278, %c0_279] : memref<3x32x32xf32, #tpu.memory_space<vmem>>, vector<1x32x32xf32>
    %416 = vector.shape_cast %415 : vector<1x32x32xf32> to vector<32x32xf32>
    %cst_280 = arith.constant dense<0.000000e+00> : vector<2x32xf32>
    %417 = tpu.matmul %414, %416, %cst_280 {dimension_numbers = #tpu.dot_dimension_numbers<[1], [0], [0], [1], [0, 0, 1, 1], [], []>} : vector<2x32xf32>, vector<32x32xf32>, vector<2x32xf32> -> vector<2x32xf32>
    %c0_281 = arith.constant 0 : index
    %c0_282 = arith.constant 0 : index
    %c0_283 = arith.constant 0 : index
    %418 = vector.load %arg25[%c0_281, %c0_282, %c0_283] : memref<3x1x32xf32, #tpu.memory_space<vmem>>, vector<1x1x32xf32>
    %419 = vector.shape_cast %418 : vector<1x1x32xf32> to vector<1x32xf32>
    %420 = vector.broadcast %419 : vector<1x32xf32> to vector<2x32xf32>
    %421 = arith.addf %417, %420 : vector<2x32xf32>
    %c0_284 = arith.constant 0 : index
    %c0_285 = arith.constant 0 : index
    %c0_286 = arith.constant 0 : index
    %422 = vector.load %arg24[%c0_284, %c0_285, %c0_286] : memref<3x32x32xf32, #tpu.memory_space<vmem>>, vector<1x32x32xf32>
    %423 = vector.shape_cast %422 : vector<1x32x32xf32> to vector<32x32xf32>
    %cst_287 = arith.constant dense<0.000000e+00> : vector<2x32xf32>
    %424 = tpu.matmul %353, %423, %cst_287 {dimension_numbers = #tpu.dot_dimension_numbers<[1], [0], [0], [1], [0, 0, 1, 1], [], []>} : vector<2x32xf32>, vector<32x32xf32>, vector<2x32xf32> -> vector<2x32xf32>
    %c0_288 = arith.constant 0 : index
    %c0_289 = arith.constant 0 : index
    %c0_290 = arith.constant 0 : index
    %425 = vector.load %arg26[%c0_288, %c0_289, %c0_290] : memref<3x1x32xf32, #tpu.memory_space<vmem>>, vector<1x1x32xf32>
    %426 = vector.shape_cast %425 : vector<1x1x32xf32> to vector<1x32xf32>
    %427 = vector.broadcast %426 : vector<1x32xf32> to vector<2x32xf32>
    %428 = arith.addf %424, %427 : vector<2x32xf32>
    %429 = arith.addf %421, %428 : vector<2x32xf32>
    %430 = arith.negf %429 : vector<2x32xf32>
    %431 = math.exp %430 : vector<2x32xf32>
    %cst_291 = arith.constant 1.000000e+00 : f32
    %432 = vector.broadcast %cst_291 : f32 to vector<2x32xf32>
    %433 = arith.addf %432, %431 : vector<2x32xf32>
    %434 = arith.divf %432, %433 : vector<2x32xf32>
    %c1_292 = arith.constant 1 : index
    %c0_293 = arith.constant 0 : index
    %c0_294 = arith.constant 0 : index
    %435 = vector.load %arg23[%c1_292, %c0_293, %c0_294] : memref<3x32x32xf32, #tpu.memory_space<vmem>>, vector<1x32x32xf32>
    %436 = vector.shape_cast %435 : vector<1x32x32xf32> to vector<32x32xf32>
    %cst_295 = arith.constant dense<0.000000e+00> : vector<2x32xf32>
    %437 = tpu.matmul %414, %436, %cst_295 {dimension_numbers = #tpu.dot_dimension_numbers<[1], [0], [0], [1], [0, 0, 1, 1], [], []>} : vector<2x32xf32>, vector<32x32xf32>, vector<2x32xf32> -> vector<2x32xf32>
    %c1_296 = arith.constant 1 : index
    %c0_297 = arith.constant 0 : index
    %c0_298 = arith.constant 0 : index
    %438 = vector.load %arg25[%c1_296, %c0_297, %c0_298] : memref<3x1x32xf32, #tpu.memory_space<vmem>>, vector<1x1x32xf32>
    %439 = vector.shape_cast %438 : vector<1x1x32xf32> to vector<1x32xf32>
    %440 = vector.broadcast %439 : vector<1x32xf32> to vector<2x32xf32>
    %441 = arith.addf %437, %440 : vector<2x32xf32>
    %c1_299 = arith.constant 1 : index
    %c0_300 = arith.constant 0 : index
    %c0_301 = arith.constant 0 : index
    %442 = vector.load %arg24[%c1_299, %c0_300, %c0_301] : memref<3x32x32xf32, #tpu.memory_space<vmem>>, vector<1x32x32xf32>
    %443 = vector.shape_cast %442 : vector<1x32x32xf32> to vector<32x32xf32>
    %cst_302 = arith.constant dense<0.000000e+00> : vector<2x32xf32>
    %444 = tpu.matmul %353, %443, %cst_302 {dimension_numbers = #tpu.dot_dimension_numbers<[1], [0], [0], [1], [0, 0, 1, 1], [], []>} : vector<2x32xf32>, vector<32x32xf32>, vector<2x32xf32> -> vector<2x32xf32>
    %c1_303 = arith.constant 1 : index
    %c0_304 = arith.constant 0 : index
    %c0_305 = arith.constant 0 : index
    %445 = vector.load %arg26[%c1_303, %c0_304, %c0_305] : memref<3x1x32xf32, #tpu.memory_space<vmem>>, vector<1x1x32xf32>
    %446 = vector.shape_cast %445 : vector<1x1x32xf32> to vector<1x32xf32>
    %447 = vector.broadcast %446 : vector<1x32xf32> to vector<2x32xf32>
    %448 = arith.addf %444, %447 : vector<2x32xf32>
    %449 = arith.addf %441, %448 : vector<2x32xf32>
    %450 = arith.negf %449 : vector<2x32xf32>
    %451 = math.exp %450 : vector<2x32xf32>
    %cst_306 = arith.constant 1.000000e+00 : f32
    %452 = vector.broadcast %cst_306 : f32 to vector<2x32xf32>
    %453 = arith.addf %452, %451 : vector<2x32xf32>
    %454 = arith.divf %452, %453 : vector<2x32xf32>
    %c2_307 = arith.constant 2 : index
    %c0_308 = arith.constant 0 : index
    %c0_309 = arith.constant 0 : index
    %455 = vector.load %arg23[%c2_307, %c0_308, %c0_309] : memref<3x32x32xf32, #tpu.memory_space<vmem>>, vector<1x32x32xf32>
    %456 = vector.shape_cast %455 : vector<1x32x32xf32> to vector<32x32xf32>
    %cst_310 = arith.constant dense<0.000000e+00> : vector<2x32xf32>
    %457 = tpu.matmul %414, %456, %cst_310 {dimension_numbers = #tpu.dot_dimension_numbers<[1], [0], [0], [1], [0, 0, 1, 1], [], []>} : vector<2x32xf32>, vector<32x32xf32>, vector<2x32xf32> -> vector<2x32xf32>
    %c2_311 = arith.constant 2 : index
    %c0_312 = arith.constant 0 : index
    %c0_313 = arith.constant 0 : index
    %458 = vector.load %arg25[%c2_311, %c0_312, %c0_313] : memref<3x1x32xf32, #tpu.memory_space<vmem>>, vector<1x1x32xf32>
    %459 = vector.shape_cast %458 : vector<1x1x32xf32> to vector<1x32xf32>
    %460 = vector.broadcast %459 : vector<1x32xf32> to vector<2x32xf32>
    %461 = arith.addf %457, %460 : vector<2x32xf32>
    %c2_314 = arith.constant 2 : index
    %c0_315 = arith.constant 0 : index
    %c0_316 = arith.constant 0 : index
    %462 = vector.load %arg24[%c2_314, %c0_315, %c0_316] : memref<3x32x32xf32, #tpu.memory_space<vmem>>, vector<1x32x32xf32>
    %463 = vector.shape_cast %462 : vector<1x32x32xf32> to vector<32x32xf32>
    %cst_317 = arith.constant dense<0.000000e+00> : vector<2x32xf32>
    %464 = tpu.matmul %353, %463, %cst_317 {dimension_numbers = #tpu.dot_dimension_numbers<[1], [0], [0], [1], [0, 0, 1, 1], [], []>} : vector<2x32xf32>, vector<32x32xf32>, vector<2x32xf32> -> vector<2x32xf32>
    %c2_318 = arith.constant 2 : index
    %c0_319 = arith.constant 0 : index
    %c0_320 = arith.constant 0 : index
    %465 = vector.load %arg26[%c2_318, %c0_319, %c0_320] : memref<3x1x32xf32, #tpu.memory_space<vmem>>, vector<1x1x32xf32>
    %466 = vector.shape_cast %465 : vector<1x1x32xf32> to vector<1x32xf32>
    %467 = vector.broadcast %466 : vector<1x32xf32> to vector<2x32xf32>
    %468 = arith.addf %464, %467 : vector<2x32xf32>
    %469 = arith.mulf %434, %468 : vector<2x32xf32>
    %470 = arith.addf %461, %469 : vector<2x32xf32>
    %471 = math.tanh %470 : vector<2x32xf32>
    %cst_321 = arith.constant 1.000000e+00 : f32
    %472 = vector.broadcast %cst_321 : f32 to vector<2x32xf32>
    %473 = arith.subf %472, %454 : vector<2x32xf32>
    %474 = arith.mulf %473, %471 : vector<2x32xf32>
    %475 = arith.mulf %454, %353 : vector<2x32xf32>
    %476 = arith.addf %474, %475 : vector<2x32xf32>
    %cst_322 = arith.constant 0.000000e+00 : f32
    %477 = vector.broadcast %cst_322 : f32 to vector<2x32xf32>
    %478 = arith.cmpf oge, %476, %477 : vector<2x32xf32>
    %cst_323 = arith.constant 0.00999999977 : f32
    %479 = vector.broadcast %cst_323 : f32 to vector<2x32xf32>
    %480 = arith.mulf %479, %476 : vector<2x32xf32>
    %481 = arith.select %478, %476, %480 : vector<2x32xi1>, vector<2x32xf32>
    %482 = arith.addf %361, %403 : vector<16x1xf32>
    %c0_324 = arith.constant 0 : index
    %c0_325 = arith.constant 0 : index
    %483 = vector.load %arg19[%c0_324, %c0_325] : memref<32x32xf32, #tpu.memory_space<vmem>>, vector<32x32xf32>
    %cst_326 = arith.constant dense<0.000000e+00> : vector<2x32xf32>
    %484 = tpu.matmul %481, %483, %cst_326 {dimension_numbers = #tpu.dot_dimension_numbers<[1], [0], [0], [1], [0, 0, 1, 1], [], []>} : vector<2x32xf32>, vector<32x32xf32>, vector<2x32xf32> -> vector<2x32xf32>
    %c0_327 = arith.constant 0 : index
    %c0_328 = arith.constant 0 : index
    %485 = vector.load %arg20[%c0_327, %c0_328] : memref<1x32xf32, #tpu.memory_space<vmem>>, vector<1x32xf32>
    %486 = vector.broadcast %485 : vector<1x32xf32> to vector<2x32xf32>
    %487 = arith.addf %484, %486 : vector<2x32xf32>
    %cst_329 = arith.constant dense<0.000000e+00> : vector<16x32xf32>
    %488 = tpu.matmul %7, %487, %cst_329 {dimension_numbers = #tpu.dot_dimension_numbers<[1], [0], [0], [1], [0, 0, 1, 1], [], []>} : vector<16x2xf32>, vector<2x32xf32>, vector<16x32xf32> -> vector<16x32xf32>
    %489 = arith.addf %358, %488 : vector<16x32xf32>
    %cst_330 = arith.constant 0.000000e+00 : f32
    %490 = vector.broadcast %cst_330 : f32 to vector<16x32xf32>
    %491 = arith.cmpf oge, %489, %490 : vector<16x32xf32>
    %cst_331 = arith.constant 2.000000e-01 : f32
    %492 = vector.broadcast %cst_331 : f32 to vector<16x32xf32>
    %493 = arith.mulf %492, %489 : vector<16x32xf32>
    %494 = arith.select %491, %489, %493 : vector<16x32xi1>, vector<16x32xf32>
    %495 = vector.broadcast %359 : vector<1x32xf32> to vector<16x32xf32>
    %496 = arith.mulf %494, %495 : vector<16x32xf32>
    %cst_332 = arith.constant dense<0.000000e+00> : vector<16xf32>
    %497 = vector.multi_reduction <add>, %496, %cst_332 [1] : vector<16x32xf32> to vector<16xf32>
    %498 = vector.shape_cast %497 : vector<16xf32> to vector<16x1xf32>
    %cst_333 = arith.constant 0.000000e+00 : f32
    %499 = vector.broadcast %cst_333 : f32 to vector<16x2xf32>
    %500 = arith.cmpf ogt, %7, %499 : vector<16x2xf32>
    %cst_334 = arith.constant -1.000000e+30 : f32
    %501 = vector.shape_cast %498 : vector<16x1xf32> to vector<16x1xf32>
    %502 = vector.broadcast %501 : vector<16x1xf32> to vector<16x2xf32>
    %503 = vector.broadcast %cst_334 : f32 to vector<16x2xf32>
    %504 = arith.select %500, %502, %503 : vector<16x2xi1>, vector<16x2xf32>
    %cst_335 = arith.constant dense<0xFF800000> : vector<2xf32>
    %505 = vector.multi_reduction <maximumf>, %504, %cst_335 [0] : vector<16x2xf32> to vector<2xf32>
    %506 = vector.shape_cast %505 : vector<2xf32> to vector<1x2xf32>
    %507 = vector.broadcast %506 : vector<1x2xf32> to vector<16x2xf32>
    %508 = arith.mulf %7, %507 : vector<16x2xf32>
    %cst_336 = arith.constant dense<0.000000e+00> : vector<16xf32>
    %509 = vector.multi_reduction <add>, %508, %cst_336 [1] : vector<16x2xf32> to vector<16xf32>
    %510 = vector.shape_cast %509 : vector<16xf32> to vector<16x1xf32>
    %511 = arith.subf %498, %510 : vector<16x1xf32>
    %512 = math.exp %511 : vector<16x1xf32>
    %513 = vector.broadcast %512 : vector<16x1xf32> to vector<16x2xf32>
    %514 = arith.mulf %7, %513 : vector<16x2xf32>
    %cst_337 = arith.constant dense<0.000000e+00> : vector<2xf32>
    %515 = vector.multi_reduction <add>, %514, %cst_337 [0] : vector<16x2xf32> to vector<2xf32>
    %516 = vector.shape_cast %515 : vector<2xf32> to vector<1x2xf32>
    %cst_338 = arith.constant 1.000000e-16 : f32
    %517 = vector.broadcast %cst_338 : f32 to vector<1x2xf32>
    %518 = arith.addf %516, %517 : vector<1x2xf32>
    %519 = vector.broadcast %518 : vector<1x2xf32> to vector<16x2xf32>
    %520 = arith.mulf %7, %519 : vector<16x2xf32>
    %cst_339 = arith.constant dense<0.000000e+00> : vector<16xf32>
    %521 = vector.multi_reduction <add>, %520, %cst_339 [1] : vector<16x2xf32> to vector<16xf32>
    %522 = vector.shape_cast %521 : vector<16xf32> to vector<16x1xf32>
    %523 = tpu.reciprocal %522 {approx = true} : vector<16x1xf32> -> vector<16x1xf32>
    %524 = arith.mulf %512, %523 : vector<16x1xf32>
    %525 = vector.broadcast %524 : vector<16x1xf32> to vector<16x32xf32>
    %526 = arith.mulf %525, %358 : vector<16x32xf32>
    %cst_340 = arith.constant dense<0.000000e+00> : vector<2x32xf32>
    %527 = tpu.matmul %7, %526, %cst_340 {dimension_numbers = #tpu.dot_dimension_numbers<[0], [0], [1], [1], [0, 1, 1, 1], [], []>} : vector<16x2xf32>, vector<16x32xf32>, vector<2x32xf32> -> vector<2x32xf32>
    %528 = vector.broadcast %360 : vector<1x32xf32> to vector<2x32xf32>
    %529 = arith.addf %527, %528 : vector<2x32xf32>
    %cst_341 = arith.constant 0.000000e+00 : f32
    %530 = vector.broadcast %cst_341 : f32 to vector<2x32xf32>
    %531 = arith.cmpf ogt, %529, %530 : vector<2x32xf32>
    %532 = math.exp %529 : vector<2x32xf32>
    %cst_342 = arith.constant 1.000000e+00 : f32
    %533 = vector.broadcast %cst_342 : f32 to vector<2x32xf32>
    %534 = arith.subf %532, %533 : vector<2x32xf32>
    %535 = arith.select %531, %529, %534 : vector<2x32xi1>, vector<2x32xf32>
    %c0_343 = arith.constant 0 : index
    %c0_344 = arith.constant 0 : index
    %c0_345 = arith.constant 0 : index
    %536 = vector.load %arg23[%c0_343, %c0_344, %c0_345] : memref<3x32x32xf32, #tpu.memory_space<vmem>>, vector<1x32x32xf32>
    %537 = vector.shape_cast %536 : vector<1x32x32xf32> to vector<32x32xf32>
    %cst_346 = arith.constant dense<0.000000e+00> : vector<2x32xf32>
    %538 = tpu.matmul %535, %537, %cst_346 {dimension_numbers = #tpu.dot_dimension_numbers<[1], [0], [0], [1], [0, 0, 1, 1], [], []>} : vector<2x32xf32>, vector<32x32xf32>, vector<2x32xf32> -> vector<2x32xf32>
    %c0_347 = arith.constant 0 : index
    %c0_348 = arith.constant 0 : index
    %c0_349 = arith.constant 0 : index
    %539 = vector.load %arg25[%c0_347, %c0_348, %c0_349] : memref<3x1x32xf32, #tpu.memory_space<vmem>>, vector<1x1x32xf32>
    %540 = vector.shape_cast %539 : vector<1x1x32xf32> to vector<1x32xf32>
    %541 = vector.broadcast %540 : vector<1x32xf32> to vector<2x32xf32>
    %542 = arith.addf %538, %541 : vector<2x32xf32>
    %c0_350 = arith.constant 0 : index
    %c0_351 = arith.constant 0 : index
    %c0_352 = arith.constant 0 : index
    %543 = vector.load %arg24[%c0_350, %c0_351, %c0_352] : memref<3x32x32xf32, #tpu.memory_space<vmem>>, vector<1x32x32xf32>
    %544 = vector.shape_cast %543 : vector<1x32x32xf32> to vector<32x32xf32>
    %cst_353 = arith.constant dense<0.000000e+00> : vector<2x32xf32>
    %545 = tpu.matmul %481, %544, %cst_353 {dimension_numbers = #tpu.dot_dimension_numbers<[1], [0], [0], [1], [0, 0, 1, 1], [], []>} : vector<2x32xf32>, vector<32x32xf32>, vector<2x32xf32> -> vector<2x32xf32>
    %c0_354 = arith.constant 0 : index
    %c0_355 = arith.constant 0 : index
    %c0_356 = arith.constant 0 : index
    %546 = vector.load %arg26[%c0_354, %c0_355, %c0_356] : memref<3x1x32xf32, #tpu.memory_space<vmem>>, vector<1x1x32xf32>
    %547 = vector.shape_cast %546 : vector<1x1x32xf32> to vector<1x32xf32>
    %548 = vector.broadcast %547 : vector<1x32xf32> to vector<2x32xf32>
    %549 = arith.addf %545, %548 : vector<2x32xf32>
    %550 = arith.addf %542, %549 : vector<2x32xf32>
    %551 = arith.negf %550 : vector<2x32xf32>
    %552 = math.exp %551 : vector<2x32xf32>
    %cst_357 = arith.constant 1.000000e+00 : f32
    %553 = vector.broadcast %cst_357 : f32 to vector<2x32xf32>
    %554 = arith.addf %553, %552 : vector<2x32xf32>
    %555 = arith.divf %553, %554 : vector<2x32xf32>
    %c1_358 = arith.constant 1 : index
    %c0_359 = arith.constant 0 : index
    %c0_360 = arith.constant 0 : index
    %556 = vector.load %arg23[%c1_358, %c0_359, %c0_360] : memref<3x32x32xf32, #tpu.memory_space<vmem>>, vector<1x32x32xf32>
    %557 = vector.shape_cast %556 : vector<1x32x32xf32> to vector<32x32xf32>
    %cst_361 = arith.constant dense<0.000000e+00> : vector<2x32xf32>
    %558 = tpu.matmul %535, %557, %cst_361 {dimension_numbers = #tpu.dot_dimension_numbers<[1], [0], [0], [1], [0, 0, 1, 1], [], []>} : vector<2x32xf32>, vector<32x32xf32>, vector<2x32xf32> -> vector<2x32xf32>
    %c1_362 = arith.constant 1 : index
    %c0_363 = arith.constant 0 : index
    %c0_364 = arith.constant 0 : index
    %559 = vector.load %arg25[%c1_362, %c0_363, %c0_364] : memref<3x1x32xf32, #tpu.memory_space<vmem>>, vector<1x1x32xf32>
    %560 = vector.shape_cast %559 : vector<1x1x32xf32> to vector<1x32xf32>
    %561 = vector.broadcast %560 : vector<1x32xf32> to vector<2x32xf32>
    %562 = arith.addf %558, %561 : vector<2x32xf32>
    %c1_365 = arith.constant 1 : index
    %c0_366 = arith.constant 0 : index
    %c0_367 = arith.constant 0 : index
    %563 = vector.load %arg24[%c1_365, %c0_366, %c0_367] : memref<3x32x32xf32, #tpu.memory_space<vmem>>, vector<1x32x32xf32>
    %564 = vector.shape_cast %563 : vector<1x32x32xf32> to vector<32x32xf32>
    %cst_368 = arith.constant dense<0.000000e+00> : vector<2x32xf32>
    %565 = tpu.matmul %481, %564, %cst_368 {dimension_numbers = #tpu.dot_dimension_numbers<[1], [0], [0], [1], [0, 0, 1, 1], [], []>} : vector<2x32xf32>, vector<32x32xf32>, vector<2x32xf32> -> vector<2x32xf32>
    %c1_369 = arith.constant 1 : index
    %c0_370 = arith.constant 0 : index
    %c0_371 = arith.constant 0 : index
    %566 = vector.load %arg26[%c1_369, %c0_370, %c0_371] : memref<3x1x32xf32, #tpu.memory_space<vmem>>, vector<1x1x32xf32>
    %567 = vector.shape_cast %566 : vector<1x1x32xf32> to vector<1x32xf32>
    %568 = vector.broadcast %567 : vector<1x32xf32> to vector<2x32xf32>
    %569 = arith.addf %565, %568 : vector<2x32xf32>
    %570 = arith.addf %562, %569 : vector<2x32xf32>
    %571 = arith.negf %570 : vector<2x32xf32>
    %572 = math.exp %571 : vector<2x32xf32>
    %cst_372 = arith.constant 1.000000e+00 : f32
    %573 = vector.broadcast %cst_372 : f32 to vector<2x32xf32>
    %574 = arith.addf %573, %572 : vector<2x32xf32>
    %575 = arith.divf %573, %574 : vector<2x32xf32>
    %c2_373 = arith.constant 2 : index
    %c0_374 = arith.constant 0 : index
    %c0_375 = arith.constant 0 : index
    %576 = vector.load %arg23[%c2_373, %c0_374, %c0_375] : memref<3x32x32xf32, #tpu.memory_space<vmem>>, vector<1x32x32xf32>
    %577 = vector.shape_cast %576 : vector<1x32x32xf32> to vector<32x32xf32>
    %cst_376 = arith.constant dense<0.000000e+00> : vector<2x32xf32>
    %578 = tpu.matmul %535, %577, %cst_376 {dimension_numbers = #tpu.dot_dimension_numbers<[1], [0], [0], [1], [0, 0, 1, 1], [], []>} : vector<2x32xf32>, vector<32x32xf32>, vector<2x32xf32> -> vector<2x32xf32>
    %c2_377 = arith.constant 2 : index
    %c0_378 = arith.constant 0 : index
    %c0_379 = arith.constant 0 : index
    %579 = vector.load %arg25[%c2_377, %c0_378, %c0_379] : memref<3x1x32xf32, #tpu.memory_space<vmem>>, vector<1x1x32xf32>
    %580 = vector.shape_cast %579 : vector<1x1x32xf32> to vector<1x32xf32>
    %581 = vector.broadcast %580 : vector<1x32xf32> to vector<2x32xf32>
    %582 = arith.addf %578, %581 : vector<2x32xf32>
    %c2_380 = arith.constant 2 : index
    %c0_381 = arith.constant 0 : index
    %c0_382 = arith.constant 0 : index
    %583 = vector.load %arg24[%c2_380, %c0_381, %c0_382] : memref<3x32x32xf32, #tpu.memory_space<vmem>>, vector<1x32x32xf32>
    %584 = vector.shape_cast %583 : vector<1x32x32xf32> to vector<32x32xf32>
    %cst_383 = arith.constant dense<0.000000e+00> : vector<2x32xf32>
    %585 = tpu.matmul %481, %584, %cst_383 {dimension_numbers = #tpu.dot_dimension_numbers<[1], [0], [0], [1], [0, 0, 1, 1], [], []>} : vector<2x32xf32>, vector<32x32xf32>, vector<2x32xf32> -> vector<2x32xf32>
    %c2_384 = arith.constant 2 : index
    %c0_385 = arith.constant 0 : index
    %c0_386 = arith.constant 0 : index
    %586 = vector.load %arg26[%c2_384, %c0_385, %c0_386] : memref<3x1x32xf32, #tpu.memory_space<vmem>>, vector<1x1x32xf32>
    %587 = vector.shape_cast %586 : vector<1x1x32xf32> to vector<1x32xf32>
    %588 = vector.broadcast %587 : vector<1x32xf32> to vector<2x32xf32>
    %589 = arith.addf %585, %588 : vector<2x32xf32>
    %590 = arith.mulf %555, %589 : vector<2x32xf32>
    %591 = arith.addf %582, %590 : vector<2x32xf32>
    %592 = math.tanh %591 : vector<2x32xf32>
    %cst_387 = arith.constant 1.000000e+00 : f32
    %593 = vector.broadcast %cst_387 : f32 to vector<2x32xf32>
    %594 = arith.subf %593, %575 : vector<2x32xf32>
    %595 = arith.mulf %594, %592 : vector<2x32xf32>
    %596 = arith.mulf %575, %481 : vector<2x32xf32>
    %597 = arith.addf %595, %596 : vector<2x32xf32>
    %cst_388 = arith.constant 0.000000e+00 : f32
    %598 = vector.broadcast %cst_388 : f32 to vector<2x32xf32>
    %599 = arith.cmpf oge, %597, %598 : vector<2x32xf32>
    %cst_389 = arith.constant 0.00999999977 : f32
    %600 = vector.broadcast %cst_389 : f32 to vector<2x32xf32>
    %601 = arith.mulf %600, %597 : vector<2x32xf32>
    %602 = arith.select %599, %597, %601 : vector<2x32xi1>, vector<2x32xf32>
    %603 = arith.addf %482, %524 : vector<16x1xf32>
    %cst_390 = arith.constant 5.000000e-01 : f32
    %604 = vector.broadcast %cst_390 : f32 to vector<16x1xf32>
    %605 = arith.mulf %603, %604 : vector<16x1xf32>
    %c0_391 = arith.constant 0 : index
    %c0_392 = arith.constant 0 : index
    %606 = vector.load %arg30[%c0_391, %c0_392] : memref<16x1xf32, #tpu.memory_space<vmem>>, vector<16x1xf32>
    tpu.vector_store %arg30[%c0_391, %c0_392], %605 {strides = array<i32>} : memref<16x1xf32, #tpu.memory_space<vmem>>, vector<16x1xf32>,
    %c0_393 = arith.constant 0 : index
    %c0_394 = arith.constant 0 : index
    %607 = vector.load %arg27[%c0_393, %c0_394] : memref<32x8xf32, #tpu.memory_space<vmem>>, vector<32x8xf32>
    %cst_395 = arith.constant dense<0.000000e+00> : vector<2x8xf32>
    %608 = tpu.matmul %602, %607, %cst_395 {dimension_numbers = #tpu.dot_dimension_numbers<[1], [0], [0], [1], [0, 0, 1, 1], [], []>} : vector<2x32xf32>, vector<32x8xf32>, vector<2x8xf32> -> vector<2x8xf32>
    %c0_396 = arith.constant 0 : index
    %c0_397 = arith.constant 0 : index
    %609 = vector.load %arg28[%c0_396, %c0_397] : memref<1x8xf32, #tpu.memory_space<vmem>>, vector<1x8xf32>
    %610 = vector.broadcast %609 : vector<1x8xf32> to vector<2x8xf32>
    %611 = arith.addf %608, %610 : vector<2x8xf32>
    %c0_398 = arith.constant 0 : index
    %c0_399 = arith.constant 0 : index
    %612 = vector.load %arg29[%c0_398, %c0_399] : memref<2x8xf32, #tpu.memory_space<vmem>>, vector<2x8xf32>
    tpu.vector_store %arg29[%c0_398, %c0_399], %611 {strides = array<i32>} : memref<2x8xf32, #tpu.memory_space<vmem>>, vector<2x8xf32>,
    return
  }
}

</mosaic_0001>

<llo_original>
// kernel: gnn_graph_forward.1
$region0: #{gnn_graph_forward.1}
  #allocation0 [shape = 'u32[]', space=smem, size = 0x4, offset = 0x4, fixed_abs, tag = 'smem constant byte address 0x4 - core index']
  #allocation1 [shape = 'u32[144,128]{1,0:T(1,128)}', space=vmem, size = 0x12000, scoped, tag = 'internal scratch']
  %s0 = inlined_call_operand.smem [shape: u32[32], index: -1, kind: input, shape index: {}]
  %s1 = sld [smem:[%s0]]
  %s2 = scalar_lea.smem %s0, 1
  %s3 = sld [smem:[%s2]]
  %s4 = scalar_lea.smem %s0, 2
  %s5 = sld [smem:[%s4]]
  %s6 = scalar_lea.smem %s0, 3
  %s7 = sld [smem:[%s6]]
  %s8 = scalar_lea.smem %s0, 4
  %s9 = sld [smem:[%s8]]
  %s10 = scalar_lea.smem %s0, 5
  %s11 = sld [smem:[%s10]]
  %s12 = scalar_lea.smem %s0, 6
  %s13 = sld [smem:[%s12]]
  %s14 = scalar_lea.smem %s0, 7
  %s15 = sld [smem:[%s14]]
  %s16 = scalar_lea.smem %s0, 8
  %s17 = sld [smem:[%s16]]
  %s18 = scalar_lea.smem %s0, 9
  %s19 = sld [smem:[%s18]]
  %s20 = scalar_lea.smem %s0, 10
  %s21 = sld [smem:[%s20]]
  %s22 = scalar_lea.smem %s0, 11
  %s23 = sld [smem:[%s22]]
  %s24 = scalar_lea.smem %s0, 12
  %s25 = sld [smem:[%s24]]
  %s26 = scalar_lea.smem %s0, 13
  %s27 = sld [smem:[%s26]]
  %s28 = scalar_lea.smem %s0, 14
  %s29 = sld [smem:[%s28]]
  %s30 = scalar_lea.smem %s0, 15
  %s31 = sld [smem:[%s30]]
  %s32 = scalar_lea.smem %s0, 16
  %s33 = sld [smem:[%s32]]
  %s34 = scalar_lea.smem %s0, 17
  %s35 = sld [smem:[%s34]]
  %s36 = scalar_lea.smem %s0, 18
  %s37 = sld [smem:[%s36]]
  %s38 = scalar_lea.smem %s0, 19
  %s39 = sld [smem:[%s38]]
  %s40 = scalar_lea.smem %s0, 20
  %s41 = sld [smem:[%s40]]
  %s42 = scalar_lea.smem %s0, 21
  %s43 = sld [smem:[%s42]]
  %s44 = scalar_lea.smem %s0, 22
  %s45 = sld [smem:[%s44]]
  %s46 = scalar_lea.smem %s0, 23
  %s47 = sld [smem:[%s46]]
  %s48 = scalar_lea.smem %s0, 24
  %s49 = sld [smem:[%s48]]
  %s50 = scalar_lea.smem %s0, 25
  %s51 = sld [smem:[%s50]]
  %s52 = scalar_lea.smem %s0, 26
  %s53 = sld [smem:[%s52]]
  %s54 = scalar_lea.smem %s0, 27
  %s55 = sld [smem:[%s54]]
  %s56 = scalar_lea.smem %s0, 28
  %s57 = sld [smem:[%s56]]
  %s58 = scalar_lea.smem %s0, 29
  %s59 = sld [smem:[%s58]]
  %s60 = scalar_lea.smem %s0, 30
  %s61 = sld [smem:[%s60]]
  %s62 = scalar_lea.smem %s0, 31
  %s63 = sld [smem:[%s62]]
  %64 = xla_tuple %s59, %s61, %s63
  %s65 = sld [smem:[#allocation0]]
  $region230: #{gnn_graph_forward.1} parent=0
    _
  %s67 = ssub.s32 1, %s65
  %s68 = scalar_select 0, %s67, %s65
  $region1: #{gnn_graph_forward.1} parent=0
    #allocation2 [shape = 'u8[8192]{0}', space=vmem, size = 0x2000, scoped, tag = 'input window, operand 0, single buffered']
    #allocation3 [shape = 's32[1]{0}', space=sflag, size = 0x4, scoped, tag = 'scoped memory for gnn_graph_forward.1']
    #allocation4 [shape = 's32[1]{0}', space=sflag, size = 0x4, scoped, tag = 'scoped memory for gnn_graph_forward.1']
    #allocation5 [shape = 'u8[12288]{0}', space=vmem, size = 0x3000, scoped, tag = 'input window, operand 5, single buffered']
    #allocation6 [shape = 's32[1]{0}', space=sflag, size = 0x4, scoped, tag = 'scoped memory for gnn_graph_forward.1']
    #allocation7 [shape = 'u8[1536]{0}', space=vmem, size = 0x800, scoped, tag = 'input window, operand 6, single buffered']
    #allocation8 [shape = 'u8[1536]{0}', space=vmem, size = 0x800, scoped, tag = 'input window, operand 8, single buffered']
    #allocation9 [shape = 's32[1]{0}', space=sflag, size = 0x4, scoped, tag = 'scoped memory for gnn_graph_forward.1']
    #allocation10 [shape = 'u8[1536]{0}', space=vmem, size = 0x800, scoped, tag = 'input window, operand 9, single buffered']
    #allocation11 [shape = 'u8[1536]{0}', space=vmem, size = 0x800, scoped, tag = 'input window, operand 10, single buffered']
    #allocation12 [shape = 's32[1]{0}', space=sflag, size = 0x4, scoped, tag = 'scoped memory for gnn_graph_forward.1']
    #allocation13 [shape = 'u8[49152]{0}', space=vmem, size = 0xc000, scoped, tag = 'input window, operand 11, single buffered']
    #allocation14 [shape = 'u8[1536]{0}', space=vmem, size = 0x800, scoped, tag = 'input window, operand 12, single buffered']
    #allocation15 [shape = 's32[1]{0}', space=sflag, size = 0x4, scoped, tag = 'scoped memory for gnn_graph_forward.1']
    #allocation16 [shape = 'u8[147456]{0}', space=vmem, size = 0x24000, scoped, tag = 'input window, operand 13, single buffered']
    #allocation17 [shape = 'u8[147456]{0}', space=vmem, size = 0x24000, scoped, tag = 'input window, operand 14, single buffered']
    #allocation18 [shape = 's32[1]{0}', space=sflag, size = 0x4, scoped, tag = 'scoped memory for gnn_graph_forward.1']
    #allocation19 [shape = 'u8[4608]{0}', space=vmem, size = 0x1400, scoped, tag = 'input window, operand 15, single buffered']
    #allocation20 [shape = 'u8[4608]{0}', space=vmem, size = 0x1400, scoped, tag = 'input window, operand 16, single buffered']
    #allocation21 [shape = 's32[1]{0}', space=sflag, size = 0x4, scoped, tag = 'scoped memory for gnn_graph_forward.1']
    #allocation22 [shape = 'u8[16384]{0}', space=vmem, size = 0x4000, scoped, tag = 'input window, operand 17, single buffered']
    #allocation23 [shape = 'u8[512]{0}', space=vmem, size = 0x400, scoped, tag = 'input window, operand 18, single buffered']
    #allocation24 [shape = 's32[1]{0}', space=sflag, size = 0x4, scoped, tag = 'scoped memory for gnn_graph_forward.1']
    #allocation25 [shape = 'u8[16384]{0}', space=vmem, size = 0x4000, scoped, tag = 'input window, operand 19, single buffered']
    #allocation26 [shape = 'u8[512]{0}', space=vmem, size = 0x400, scoped, tag = 'input window, operand 20, single buffered']
    #allocation27 [shape = 's32[1]{0}', space=sflag, size = 0x4, scoped, tag = 'scoped memory for gnn_graph_forward.1']
    #allocation28 [shape = 'u8[512]{0}', space=vmem, size = 0x400, scoped, tag = 'input window, operand 21, single buffered']
    #allocation29 [shape = 'u8[512]{0}', space=vmem, size = 0x400, scoped, tag = 'input window, operand 22, single buffered']
    #allocation30 [shape = 's32[1]{0}', space=sflag, size = 0x4, scoped, tag = 'scoped memory for gnn_graph_forward.1']
    #allocation31 [shape = 'u8[49152]{0}', space=vmem, size = 0xc000, scoped, tag = 'input window, operand 24, single buffered']
    #allocation32 [shape = 'u8[1536]{0}', space=vmem, size = 0x800, scoped, tag = 'input window, operand 25, single buffered']
    #allocation33 [shape = 's32[1]{0}', space=sflag, size = 0x4, scoped, tag = 'scoped memory for gnn_graph_forward.1']
    #allocation34 [shape = 'u8[1536]{0}', space=vmem, size = 0x800, scoped, tag = 'input window, operand 26, single buffered']
    #allocation35 [shape = 'u8[512]{0}', space=vmem, size = 0x400, scoped, tag = 'input window, operand 28, single buffered']
    #allocation36 [shape = 's32[1]{0}', space=sflag, size = 0x4, scoped, tag = 'scoped memory for gnn_graph_forward.1']
    #allocation37 [shape = 'u8[1024]{0}', space=vmem, size = 0x400, scoped, tag = 'output window, operand 0, single buffered']
    #allocation38 [shape = 'u8[8192]{0}', space=vmem, size = 0x2000, scoped, tag = 'output window, operand 2, single buffered']
    #allocation39 [shape = 's32[1]{0}', space=sflag, size = 0x4, scoped, tag = 'scoped memory for gnn_graph_forward.1']
    %69 = vsyncpa [#allocation3], 0
    %70 = vsyncpa [#allocation6], 0
    %71 = vsyncpa [#allocation9], 0
    %72 = vsyncpa [#allocation12], 0
    %73 = vsyncpa [#allocation15], 0
    %74 = vsyncpa [#allocation18], 0
    %75 = vsyncpa [#allocation21], 0
    %76 = vsyncpa [#allocation24], 0
    %77 = vsyncpa [#allocation27], 0
    %78 = vsyncpa [#allocation30], 0
    %79 = vsyncpa [#allocation33], 0
    %80 = vsyncpa [#allocation36], 0
    %81 = vsyncpa [#allocation4], 0
    %82 = vsyncpa [#allocation39], 0
    // Predicated region
    $region2: #{gnn_graph_forward.1} parent=1 // pred_check
      _
    $region3: #{gnn_graph_forward.1} parent=1 // pred_check_branch
      %84 = sbr.rel (0) target = $region5
    $region4: #{gnn_graph_forward.1} parent=1 // pred_region
      %s86 = ssub.s32 256, 256
      %87 = vsyncadd [#allocation3], %s86
      %s88 = sshll.u32 [#allocation2], 4
      %s89 = int_to_ptr.vmem [resolvable:$true] %s88
      %94 = dma.hbm_to_vmem [thread:$0]  %s1, 256, %s89, [#allocation3], 128, 128, 8
    $region5: #{gnn_graph_forward.1} parent=1 // pred_fallthru
      _
    // Predicated region
    $region6: #{gnn_graph_forward.1} parent=1 // pred_check
      _
    $region7: #{gnn_graph_forward.1} parent=1 // pred_check_branch
      %96 = sbr.rel (0) target = $region9
    $region8: #{gnn_graph_forward.1} parent=1 // pred_region
      _
    $region9: #{gnn_graph_forward.1} parent=1 // pred_fallthru
      _
    // Predicated region
    $region10: #{gnn_graph_forward.1} parent=1 // pred_check
      _
    $region11: #{gnn_graph_forward.1} parent=1 // pred_check_branch
      %98 = sbr.rel (0) target = $region13
    $region12: #{gnn_graph_forward.1} parent=1 // pred_region
      _
    $region13: #{gnn_graph_forward.1} parent=1 // pred_fallthru
      _
    // Predicated region
    $region14: #{gnn_graph_forward.1} parent=1 // pred_check
      _
    $region15: #{gnn_graph_forward.1} parent=1 // pred_check_branch
      %100 = sbr.rel (0) target = $region17
    $region16: #{gnn_graph_forward.1} parent=1 // pred_region
      _
    $region17: #{gnn_graph_forward.1} parent=1 // pred_fallthru
      _
    // Predicated region
    $region18: #{gnn_graph_forward.1} parent=1 // pred_check
      _
    $region19: #{gnn_graph_forward.1} parent=1 // pred_check_branch
      %102 = sbr.rel (0) target = $region21
    $region20: #{gnn_graph_forward.1} parent=1 // pred_region
      _
    $region21: #{gnn_graph_forward.1} parent=1 // pred_fallthru
      _
    // Predicated region
    $region22: #{gnn_graph_forward.1} parent=1 // pred_check
      _
    $region23: #{gnn_graph_forward.1} parent=1 // pred_check_branch
      %104 = sbr.rel (0) target = $region25
    $region24: #{gnn_graph_forward.1} parent=1 // pred_region
      %s106 = ssub.s32 384, 384
      %107 = vsyncadd [#allocation6], %s106
      %s108 = sshll.u32 [#allocation5], 4
      %s109 = int_to_ptr.vmem [resolvable:$true] %s108
      %114 = dma.hbm_to_vmem [thread:$0]  %s11, 384, %s109, [#allocation6], 128, 128, 8
    $region25: #{gnn_graph_forward.1} parent=1 // pred_fallthru
      _
    // Predicated region
    $region26: #{gnn_graph_forward.1} parent=1 // pred_check
      _
    $region27: #{gnn_graph_forward.1} parent=1 // pred_check_branch
      %116 = sbr.rel (0) target = $region29
    $region28: #{gnn_graph_forward.1} parent=1 // pred_region
      %s118 = ssub.s32 48, 48
      %119 = vsyncadd [#allocation6], %s118
      %s120 = sshll.u32 [#allocation7], 4
      %s121 = int_to_ptr.vmem [resolvable:$true] %s120
      %126 = dma.hbm_to_vmem [thread:$0]  %s13, 48, %s121, [#allocation6], 16, 16, 1
    $region29: #{gnn_graph_forward.1} parent=1 // pred_fallthru
      _
    // Predicated region
    $region30: #{gnn_graph_forward.1} parent=1 // pred_check
      _
    $region31: #{gnn_graph_forward.1} parent=1 // pred_check_branch
      %128 = sbr.rel (0) target = $region33
    $region32: #{gnn_graph_forward.1} parent=1 // pred_region
      _
    $region33: #{gnn_graph_forward.1} parent=1 // pred_fallthru
      _
    // Predicated region
    $region34: #{gnn_graph_forward.1} parent=1 // pred_check
      _
    $region35: #{gnn_graph_forward.1} parent=1 // pred_check_branch
      %130 = sbr.rel (0) target = $region37
    $region36: #{gnn_graph_forward.1} parent=1 // pred_region
      %s132 = ssub.s32 48, 48
      %133 = vsyncadd [#allocation9], %s132
      %s134 = sshll.u32 [#allocation8], 4
      %s135 = int_to_ptr.vmem [resolvable:$true] %s134
      %140 = dma.hbm_to_vmem [thread:$0]  %s17, 48, %s135, [#allocation9], 16, 16, 1
    $region37: #{gnn_graph_forward.1} parent=1 // pred_fallthru
      _
    // Predicated region
    $region38: #{gnn_graph_forward.1} parent=1 // pred_check
      _
    $region39: #{gnn_graph_forward.1} parent=1 // pred_check_branch
      %142 = sbr.rel (0) target = $region41
    $region40: #{gnn_graph_forward.1} parent=1 // pred_region
      %s144 = ssub.s32 48, 48
      %145 = vsyncadd [#allocation9], %s144
      %s146 = sshll.u32 [#allocation10], 4
      %s147 = int_to_ptr.vmem [resolvable:$true] %s146
      %152 = dma.hbm_to_vmem [thread:$0]  %s19, 48, %s147, [#allocation9], 16, 16, 1
    $region41: #{gnn_graph_forward.1} parent=1 // pred_fallthru
      _
    // Predicated region
    $region42: #{gnn_graph_forward.1} parent=1 // pred_check
      _
    $region43: #{gnn_graph_forward.1} parent=1 // pred_check_branch
      %154 = sbr.rel (0) target = $region45
    $region44: #{gnn_graph_forward.1} parent=1 // pred_region
      %s156 = ssub.s32 48, 48
      %157 = vsyncadd [#allocation12], %s156
      %s158 = sshll.u32 [#allocation11], 4
      %s159 = int_to_ptr.vmem [resolvable:$true] %s158
      %164 = dma.hbm_to_vmem [thread:$0]  %s21, 48, %s159, [#allocation12], 16, 16, 1
    $region45: #{gnn_graph_forward.1} parent=1 // pred_fallthru
      _
    // Predicated region
    $region46: #{gnn_graph_forward.1} parent=1 // pred_check
      _
    $region47: #{gnn_graph_forward.1} parent=1 // pred_check_branch
      %166 = sbr.rel (0) target = $region49
    $region48: #{gnn_graph_forward.1} parent=1 // pred_region
      %s168 = ssub.s32 1536, 1536
      %169 = vsyncadd [#allocation12], %s168
      %s170 = sshll.u32 [#allocation13], 4
      %s171 = int_to_ptr.vmem [resolvable:$true] %s170
      %176 = dma.hbm_to_vmem [thread:$0]  %s23, 1536, %s171, [#allocation12], 128, 128, 8
    $region49: #{gnn_graph_forward.1} parent=1 // pred_fallthru
      _
    // Predicated region
    $region50: #{gnn_graph_forward.1} parent=1 // pred_check
      _
    $region51: #{gnn_graph_forward.1} parent=1 // pred_check_branch
      %178 = sbr.rel (0) target = $region53
    $region52: #{gnn_graph_forward.1} parent=1 // pred_region
      %s180 = ssub.s32 48, 48
      %181 = vsyncadd [#allocation15], %s180
      %s182 = sshll.u32 [#allocation14], 4
      %s183 = int_to_ptr.vmem [resolvable:$true] %s182
      %188 = dma.hbm_to_vmem [thread:$0]  %s25, 48, %s183, [#allocation15], 16, 16, 1
    $region53: #{gnn_graph_forward.1} parent=1 // pred_fallthru
      _
    // Predicated region
    $region54: #{gnn_graph_forward.1} parent=1 // pred_check
      _
    $region55: #{gnn_graph_forward.1} parent=1 // pred_check_branch
      %190 = sbr.rel (0) target = $region57
    $region56: #{gnn_graph_forward.1} parent=1 // pred_region
      %s192 = ssub.s32 4608, 4608
      %193 = vsyncadd [#allocation15], %s192
      %s194 = sshll.u32 [#allocation16], 4
      %s195 = int_to_ptr.vmem [resolvable:$true] %s194
      %200 = dma.hbm_to_vmem [thread:$0]  %s27, 4608, %s195, [#allocation15], 128, 128, 8
    $region57: #{gnn_graph_forward.1} parent=1 // pred_fallthru
      _
    // Predicated region
    $region58: #{gnn_graph_forward.1} parent=1 // pred_check
      _
    $region59: #{gnn_graph_forward.1} parent=1 // pred_check_branch
      %202 = sbr.rel (0) target = $region61
    $region60: #{gnn_graph_forward.1} parent=1 // pred_region
      %s204 = ssub.s32 4608, 4608
      %205 = vsyncadd [#allocation18], %s204
      %s206 = sshll.u32 [#allocation17], 4
      %s207 = int_to_ptr.vmem [resolvable:$true] %s206
      %212 = dma.hbm_to_vmem [thread:$0]  %s29, 4608, %s207, [#allocation18], 128, 128, 8
    $region61: #{gnn_graph_forward.1} parent=1 // pred_fallthru
      _
    // Predicated region
    $region62: #{gnn_graph_forward.1} parent=1 // pred_check
      _
    $region63: #{gnn_graph_forward.1} parent=1 // pred_check_branch
      %214 = sbr.rel (0) target = $region65
    $region64: #{gnn_graph_forward.1} parent=1 // pred_region
      %s216 = ssub.s32 144, 144
      %217 = vsyncadd [#allocation18], %s216
      %s218 = sshll.u32 [#allocation19], 4
      %s219 = int_to_ptr.vmem [resolvable:$true] %s218
      %224 = dma.hbm_to_vmem [thread:$0]  %s31, 144, %s219, [#allocation18], 16, 16, 1
    $region65: #{gnn_graph_forward.1} parent=1 // pred_fallthru
      _
    // Predicated region
    $region66: #{gnn_graph_forward.1} parent=1 // pred_check
      _
    $region67: #{gnn_graph_forward.1} parent=1 // pred_check_branch
      %226 = sbr.rel (0) target = $region69
    $region68: #{gnn_graph_forward.1} parent=1 // pred_region
      %s228 = ssub.s32 144, 144
      %229 = vsyncadd [#allocation21], %s228
      %s230 = sshll.u32 [#allocation20], 4
      %s231 = int_to_ptr.vmem [resolvable:$true] %s230
      %236 = dma.hbm_to_vmem [thread:$0]  %s33, 144, %s231, [#allocation21], 16, 16, 1
    $region69: #{gnn_graph_forward.1} parent=1 // pred_fallthru
      _
    // Predicated region
    $region70: #{gnn_graph_forward.1} parent=1 // pred_check
      _
    $region71: #{gnn_graph_forward.1} parent=1 // pred_check_branch
      %238 = sbr.rel (0) target = $region73
    $region72: #{gnn_graph_forward.1} parent=1 // pred_region
      %s240 = ssub.s32 512, 512
      %241 = vsyncadd [#allocation21], %s240
      %s242 = sshll.u32 [#allocation22], 4
      %s243 = int_to_ptr.vmem [resolvable:$true] %s242
      %248 = dma.hbm_to_vmem [thread:$0]  %s35, 512, %s243, [#allocation21], 128, 128, 8
    $region73: #{gnn_graph_forward.1} parent=1 // pred_fallthru
      _
    // Predicated region
    $region74: #{gnn_graph_forward.1} parent=1 // pred_check
      _
    $region75: #{gnn_graph_forward.1} parent=1 // pred_check_branch
      %250 = sbr.rel (0) target = $region77
    $region76: #{gnn_graph_forward.1} parent=1 // pred_region
      %s252 = ssub.s32 16, 16
      %253 = vsyncadd [#allocation24], %s252
      %s255 = sshll.u32 [#allocation23], 4
      %s256 = int_to_ptr.vmem [resolvable:$true] %s255
      %258 = dma.hbm_to_vmem [thread:$0]  %s37, 16, %s256, [#allocation24]
    $region77: #{gnn_graph_forward.1} parent=1 // pred_fallthru
      _
    // Predicated region
    $region78: #{gnn_graph_forward.1} parent=1 // pred_check
      _
    $region79: #{gnn_graph_forward.1} parent=1 // pred_check_branch
      %260 = sbr.rel (0) target = $region81
    $region80: #{gnn_graph_forward.1} parent=1 // pred_region
      %s262 = ssub.s32 512, 512
      %263 = vsyncadd [#allocation24], %s262
      %s264 = sshll.u32 [#allocation25], 4
      %s265 = int_to_ptr.vmem [resolvable:$true] %s264
      %270 = dma.hbm_to_vmem [thread:$0]  %s39, 512, %s265, [#allocation24], 128, 128, 8
    $region81: #{gnn_graph_forward.1} parent=1 // pred_fallthru
      _
    // Predicated region
    $region82: #{gnn_graph_forward.1} parent=1 // pred_check
      _
    $region83: #{gnn_graph_forward.1} parent=1 // pred_check_branch
      %272 = sbr.rel (0) target = $region85
    $region84: #{gnn_graph_forward.1} parent=1 // pred_region
      %s274 = ssub.s32 16, 16
      %275 = vsyncadd [#allocation27], %s274
      %s277 = sshll.u32 [#allocation26], 4
      %s278 = int_to_ptr.vmem [resolvable:$true] %s277
      %280 = dma.hbm_to_vmem [thread:$0]  %s41, 16, %s278, [#allocation27]
    $region85: #{gnn_graph_forward.1} parent=1 // pred_fallthru
      _
    // Predicated region
    $region86: #{gnn_graph_forward.1} parent=1 // pred_check
      _
    $region87: #{gnn_graph_forward.1} parent=1 // pred_check_branch
      %282 = sbr.rel (0) target = $region89
    $region88: #{gnn_graph_forward.1} parent=1 // pred_region
      %s284 = ssub.s32 16, 16
      %285 = vsyncadd [#allocation27], %s284
      %s287 = sshll.u32 [#allocation28], 4
      %s288 = int_to_ptr.vmem [resolvable:$true] %s287
      %290 = dma.hbm_to_vmem [thread:$0]  %s43, 16, %s288, [#allocation27]
    $region89: #{gnn_graph_forward.1} parent=1 // pred_fallthru
      _
    // Predicated region
    $region90: #{gnn_graph_forward.1} parent=1 // pred_check
      _
    $region91: #{gnn_graph_forward.1} parent=1 // pred_check_branch
      %292 = sbr.rel (0) target = $region93
    $region92: #{gnn_graph_forward.1} parent=1 // pred_region
      %s294 = ssub.s32 16, 16
      %295 = vsyncadd [#allocation30], %s294
      %s297 = sshll.u32 [#allocation29], 4
      %s298 = int_to_ptr.vmem [resolvable:$true] %s297
      %300 = dma.hbm_to_vmem [thread:$0]  %s45, 16, %s298, [#allocation30]
    $region93: #{gnn_graph_forward.1} parent=1 // pred_fallthru
      _
    // Predicated region
    $region94: #{gnn_graph_forward.1} parent=1 // pred_check
      _
    $region95: #{gnn_graph_forward.1} parent=1 // pred_check_branch
      %302 = sbr.rel (0) target = $region97
    $region96: #{gnn_graph_forward.1} parent=1 // pred_region
      _
    $region97: #{gnn_graph_forward.1} parent=1 // pred_fallthru
      _
    // Predicated region
    $region98: #{gnn_graph_forward.1} parent=1 // pred_check
      _
    $region99: #{gnn_graph_forward.1} parent=1 // pred_check_branch
      %304 = sbr.rel (0) target = $region101
    $region100: #{gnn_graph_forward.1} parent=1 // pred_region
      %s306 = ssub.s32 1536, 1536
      %307 = vsyncadd [#allocation30], %s306
      %s308 = sshll.u32 [#allocation31], 4
      %s309 = int_to_ptr.vmem [resolvable:$true] %s308
      %314 = dma.hbm_to_vmem [thread:$0]  %s49, 1536, %s309, [#allocation30], 128, 128, 8
    $region101: #{gnn_graph_forward.1} parent=1 // pred_fallthru
      _
    // Predicated region
    $region102: #{gnn_graph_forward.1} parent=1 // pred_check
      _
    $region103: #{gnn_graph_forward.1} parent=1 // pred_check_branch
      %316 = sbr.rel (0) target = $region105
    $region104: #{gnn_graph_forward.1} parent=1 // pred_region
      %s318 = ssub.s32 48, 48
      %319 = vsyncadd [#allocation33], %s318
      %s320 = sshll.u32 [#allocation32], 4
      %s321 = int_to_ptr.vmem [resolvable:$true] %s320
      %326 = dma.hbm_to_vmem [thread:$0]  %s51, 48, %s321, [#allocation33], 16, 16, 1
    $region105: #{gnn_graph_forward.1} parent=1 // pred_fallthru
      _
    // Predicated region
    $region106: #{gnn_graph_forward.1} parent=1 // pred_check
      _
    $region107: #{gnn_graph_forward.1} parent=1 // pred_check_branch
      %328 = sbr.rel (0) target = $region109
    $region108: #{gnn_graph_forward.1} parent=1 // pred_region
      %s330 = ssub.s32 48, 48
      %331 = vsyncadd [#allocation33], %s330
      %s332 = sshll.u32 [#allocation34], 4
      %s333 = int_to_ptr.vmem [resolvable:$true] %s332
      %338 = dma.hbm_to_vmem [thread:$0]  %s53, 48, %s333, [#allocation33], 16, 16, 1
    $region109: #{gnn_graph_forward.1} parent=1 // pred_fallthru
      _
    // Predicated region
    $region110: #{gnn_graph_forward.1} parent=1 // pred_check
      _
    $region111: #{gnn_graph_forward.1} parent=1 // pred_check_branch
      %340 = sbr.rel (0) target = $region113
    $region112: #{gnn_graph_forward.1} parent=1 // pred_region
      _
    $region113: #{gnn_graph_forward.1} parent=1 // pred_fallthru
      _
    // Predicated region
    $region114: #{gnn_graph_forward.1} parent=1 // pred_check
      _
    $region115: #{gnn_graph_forward.1} parent=1 // pred_check_branch
      %342 = sbr.rel (0) target = $region117
    $region116: #{gnn_graph_forward.1} parent=1 // pred_region
      %s344 = ssub.s32 16, 16
      %345 = vsyncadd [#allocation36], %s344
      %s347 = sshll.u32 [#allocation35], 4
      %s348 = int_to_ptr.vmem [resolvable:$true] %s347
      %350 = dma.hbm_to_vmem [thread:$0]  %s57, 16, %s348, [#allocation36]
    $region117: #{gnn_graph_forward.1} parent=1 // pred_fallthru
      _
    // Predicated region
    $region118: #{gnn_graph_forward.1} parent=1 // pred_check
      _
    $region119: #{gnn_graph_forward.1} parent=1 // pred_check_branch
      %352 = sbr.rel (0) target = $region121
    $region120: #{gnn_graph_forward.1} parent=1 // pred_region
      %353 = dma.done [#allocation3], 256
    $region121: #{gnn_graph_forward.1} parent=1 // pred_fallthru
      _
    // Predicated region
    $region122: #{gnn_graph_forward.1} parent=1 // pred_check
      _
    $region123: #{gnn_graph_forward.1} parent=1 // pred_check_branch
      %355 = sbr.rel (0) target = $region125
    $region124: #{gnn_graph_forward.1} parent=1 // pred_region
      %356 = dma.done [#allocation6], 384
    $region125: #{gnn_graph_forward.1} parent=1 // pred_fallthru
      _
    // Predicated region
    $region126: #{gnn_graph_forward.1} parent=1 // pred_check
      _
    $region127: #{gnn_graph_forward.1} parent=1 // pred_check_branch
      %358 = sbr.rel (0) target = $region129
    $region128: #{gnn_graph_forward.1} parent=1 // pred_region
      %359 = dma.done [#allocation6], 48
    $region129: #{gnn_graph_forward.1} parent=1 // pred_fallthru
      _
    // Predicated region
    $region130: #{gnn_graph_forward.1} parent=1 // pred_check
      _
    $region131: #{gnn_graph_forward.1} parent=1 // pred_check_branch
      %361 = sbr.rel (0) target = $region133
    $region132: #{gnn_graph_forward.1} parent=1 // pred_region
      %362 = dma.done [#allocation9], 48
    $region133: #{gnn_graph_forward.1} parent=1 // pred_fallthru
      _
    // Predicated region
    $region134: #{gnn_graph_forward.1} parent=1 // pred_check
      _
    $region135: #{gnn_graph_forward.1} parent=1 // pred_check_branch
      %364 = sbr.rel (0) target = $region137
    $region136: #{gnn_graph_forward.1} parent=1 // pred_region
      %365 = dma.done [#allocation9], 48
    $region137: #{gnn_graph_forward.1} parent=1 // pred_fallthru
      _
    // Predicated region
    $region138: #{gnn_graph_forward.1} parent=1 // pred_check
      _
    $region139: #{gnn_graph_forward.1} parent=1 // pred_check_branch
      %367 = sbr.rel (0) target = $region141
    $region140: #{gnn_graph_forward.1} parent=1 // pred_region
      %368 = dma.done [#allocation12], 48
    $region141: #{gnn_graph_forward.1} parent=1 // pred_fallthru
      _
    // Predicated region
    $region142: #{gnn_graph_forward.1} parent=1 // pred_check
      _
    $region143: #{gnn_graph_forward.1} parent=1 // pred_check_branch
      %370 = sbr.rel (0) target = $region145
    $region144: #{gnn_graph_forward.1} parent=1 // pred_region
      %371 = dma.done [#allocation12], 1536
    $region145: #{gnn_graph_forward.1} parent=1 // pred_fallthru
      _
    // Predicated region
    $region146: #{gnn_graph_forward.1} parent=1 // pred_check
      _
    $region147: #{gnn_graph_forward.1} parent=1 // pred_check_branch
      %373 = sbr.rel (0) target = $region149
    $region148: #{gnn_graph_forward.1} parent=1 // pred_region
      %374 = dma.done [#allocation15], 48
    $region149: #{gnn_graph_forward.1} parent=1 // pred_fallthru
      _
    // Predicated region
    $region150: #{gnn_graph_forward.1} parent=1 // pred_check
      _
    $region151: #{gnn_graph_forward.1} parent=1 // pred_check_branch
      %376 = sbr.rel (0) target = $region153
    $region152: #{gnn_graph_forward.1} parent=1 // pred_region
      %377 = dma.done [#allocation15], 4608
    $region153: #{gnn_graph_forward.1} parent=1 // pred_fallthru
      _
    // Predicated region
    $region154: #{gnn_graph_forward.1} parent=1 // pred_check
      _
    $region155: #{gnn_graph_forward.1} parent=1 // pred_check_branch
      %379 = sbr.rel (0) target = $region157
    $region156: #{gnn_graph_forward.1} parent=1 // pred_region
      %380 = dma.done [#allocation18], 4608
    $region157: #{gnn_graph_forward.1} parent=1 // pred_fallthru
      _
    // Predicated region
    $region158: #{gnn_graph_forward.1} parent=1 // pred_check
      _
    $region159: #{gnn_graph_forward.1} parent=1 // pred_check_branch
      %382 = sbr.rel (0) target = $region161
    $region160: #{gnn_graph_forward.1} parent=1 // pred_region
      %383 = dma.done [#allocation18], 144
    $region161: #{gnn_graph_forward.1} parent=1 // pred_fallthru
      _
    // Predicated region
    $region162: #{gnn_graph_forward.1} parent=1 // pred_check
      _
    $region163: #{gnn_graph_forward.1} parent=1 // pred_check_branch
      %385 = sbr.rel (0) target = $region165
    $region164: #{gnn_graph_forward.1} parent=1 // pred_region
      %386 = dma.done [#allocation21], 144
    $region165: #{gnn_graph_forward.1} parent=1 // pred_fallthru
      _
    // Predicated region
    $region166: #{gnn_graph_forward.1} parent=1 // pred_check
      _
    $region167: #{gnn_graph_forward.1} parent=1 // pred_check_branch
      %388 = sbr.rel (0) target = $region169
    $region168: #{gnn_graph_forward.1} parent=1 // pred_region
      %389 = dma.done [#allocation21], 512
    $region169: #{gnn_graph_forward.1} parent=1 // pred_fallthru
      _
    // Predicated region
    $region170: #{gnn_graph_forward.1} parent=1 // pred_check
      _
    $region171: #{gnn_graph_forward.1} parent=1 // pred_check_branch
      %391 = sbr.rel (0) target = $region173
    $region172: #{gnn_graph_forward.1} parent=1 // pred_region
      %392 = dma.done [#allocation24], 16
    $region173: #{gnn_graph_forward.1} parent=1 // pred_fallthru
      _
    // Predicated region
    $region174: #{gnn_graph_forward.1} parent=1 // pred_check
      _
    $region175: #{gnn_graph_forward.1} parent=1 // pred_check_branch
      %394 = sbr.rel (0) target = $region177
    $region176: #{gnn_graph_forward.1} parent=1 // pred_region
      %395 = dma.done [#allocation24], 512
    $region177: #{gnn_graph_forward.1} parent=1 // pred_fallthru
      _
    // Predicated region
    $region178: #{gnn_graph_forward.1} parent=1 // pred_check
      _
    $region179: #{gnn_graph_forward.1} parent=1 // pred_check_branch
      %397 = sbr.rel (0) target = $region181
    $region180: #{gnn_graph_forward.1} parent=1 // pred_region
      %398 = dma.done [#allocation27], 16
    $region181: #{gnn_graph_forward.1} parent=1 // pred_fallthru
      _
    // Predicated region
    $region182: #{gnn_graph_forward.1} parent=1 // pred_check
      _
    $region183: #{gnn_graph_forward.1} parent=1 // pred_check_branch
      %400 = sbr.rel (0) target = $region185
    $region184: #{gnn_graph_forward.1} parent=1 // pred_region
      %401 = dma.done [#allocation27], 16
    $region185: #{gnn_graph_forward.1} parent=1 // pred_fallthru
      _
    // Predicated region
    $region186: #{gnn_graph_forward.1} parent=1 // pred_check
      _
    $region187: #{gnn_graph_forward.1} parent=1 // pred_check_branch
      %403 = sbr.rel (0) target = $region189
    $region188: #{gnn_graph_forward.1} parent=1 // pred_region
      %404 = dma.done [#allocation30], 16
    $region189: #{gnn_graph_forward.1} parent=1 // pred_fallthru
      _
    // Predicated region
    $region190: #{gnn_graph_forward.1} parent=1 // pred_check
      _
    $region191: #{gnn_graph_forward.1} parent=1 // pred_check_branch
      %406 = sbr.rel (0) target = $region193
    $region192: #{gnn_graph_forward.1} parent=1 // pred_region
      %407 = dma.done [#allocation30], 1536
    $region193: #{gnn_graph_forward.1} parent=1 // pred_fallthru
      _
    // Predicated region
    $region194: #{gnn_graph_forward.1} parent=1 // pred_check
      _
    $region195: #{gnn_graph_forward.1} parent=1 // pred_check_branch
      %409 = sbr.rel (0) target = $region197
    $region196: #{gnn_graph_forward.1} parent=1 // pred_region
      %410 = dma.done [#allocation33], 48
    $region197: #{gnn_graph_forward.1} parent=1 // pred_fallthru
      _
    // Predicated region
    $region198: #{gnn_graph_forward.1} parent=1 // pred_check
      _
    $region199: #{gnn_graph_forward.1} parent=1 // pred_check_branch
      %412 = sbr.rel (0) target = $region201
    $region200: #{gnn_graph_forward.1} parent=1 // pred_region
      %413 = dma.done [#allocation33], 48
    $region201: #{gnn_graph_forward.1} parent=1 // pred_fallthru
      _
    // Predicated region
    $region202: #{gnn_graph_forward.1} parent=1 // pred_check
      _
    $region203: #{gnn_graph_forward.1} parent=1 // pred_check_branch
      %415 = sbr.rel (0) target = $region205
    $region204: #{gnn_graph_forward.1} parent=1 // pred_region
      %416 = dma.done [#allocation36], 16
    $region205: #{gnn_graph_forward.1} parent=1 // pred_fallthru
      _
    %v417 = vld [vmem:[#allocation2] sm:$0xff]
    %v418 = vld [vmem:[#allocation2 + $0x8] sm:$0xff]
    %v419 = vld [vmem:[%s3] sm:$0xff]
    %v420 = vld [vmem:[%s3 + $0x8] sm:$0xff]
    %v421 = vld [vmem:[%s3 + $0x10] sm:$0xff]
    %v422 = vld [vmem:[%s3 + $0x18] sm:$0xff]
    %v423 = vld [vmem:[%s5] sm:$0xf]
    %v424 = vld [vmem:[%s5 + $0x4] sm:$0xf]
    %v425 = vld [vmem:[%s5 + $0x8] sm:$0xf]
    %v426 = vld [vmem:[%s5 + $0xc] sm:$0xf]
    %v427 = vunpack.c.l.bf16 %v423
    %v428 = vunpack.c.l.bf16 %v424
    %v429 = vunpack.c.l.bf16 %v425
    %v430 = vunpack.c.l.bf16 %v426
    %v431 = vld [vmem:[%s7] sm:$0xf]
    %v432 = vld [vmem:[%s7 + $0x4] sm:$0xf]
    %v433 = vunpack.c.l.bf16 %v431
    %v434 = vunpack.c.l.bf16 %v432
    %v435 = vld [vmem:[%s9] sm:$0xf]
    %v436 = vld [vmem:[%s9 + $0x4] sm:$0xf]
    %v437 = vunpack.c.l.bf16 %v435
    %v438 = vunpack.c.l.bf16 %v436
    %v439 = vld [vmem:[#allocation5] sm:$0x3f]
    %v440 = vld [vmem:[#allocation7] sm:$0x1]
    %v442 = vlaneseq
    %v443 = vshrl.u32 %v442, 7
    %v444 = vsub.s32 0, %v443
    %v445 = vrot.slane %v440, %v444
    %vm447 = vcmask 48128
    %v449 = vsel %vm447, %v419, 0
    %v452 = vsel %vm447, %v420, 0
    %v455 = vsel %vm447, %v421, 0
    %v458 = vsel %vm447, %v422, 0
    %vm460 = vcmask 1045504
    %v462 = vsel %vm460, %v439, 0
    %464 = vmatprep.subr.mxu0 0.0
    %465 = vmatpush1.msra.mxu0 %v462
    %466 = vmatprep.subr.mxu0 0.0
    %467 = vmatpush1.msra.mxu0 0.0
    %468 = vmatprep.subr.mxu0 0.0
    %469 = vmatpush1.msra.mxu0 0.0
    %470 = vmatprep.subr.mxu0 0.0
    %471 = vmatpush1.msra.mxu0 0.0
    %472 = vmatprep.subr.mxu0 0.0
    %473 = vmatpush1.msra.mxu0 0.0
    %474 = vmatprep.subr.mxu0 0.0
    %475 = vmatpush1.msra.mxu0 0.0
    %476 = vmatprep.subr.mxu0 0.0
    %477 = vmatpush1.msra.mxu0 0.0
    %478 = vmatprep.subr.mxu0 0.0
    %479 = vmatpush1.msra.mxu0 0.0
    %480 = vmatprep.subr.mxu0 0.0
    %481 = vmatpush1.msra.mxu0 0.0
    %482 = vmatprep.subr.mxu0 0.0
    %483 = vmatpush1.msra.mxu0 0.0
    %484 = vmatprep.subr.mxu0 0.0
    %485 = vmatpush1.msra.mxu0 0.0
    %486 = vmatprep.subr.mxu0 0.0
    %487 = vmatpush1.msra.mxu0 0.0
    %488 = vmatprep.subr.mxu0 0.0
    %489 = vmatpush1.msra.mxu0 0.0
    %490 = vmatprep.subr.mxu0 0.0
    %491 = vmatpush1.msra.mxu0 0.0
    %492 = vmatprep.subr.mxu0 0.0
    %493 = vmatpush1.msra.mxu0 0.0
    %494 = vmatprep.subr.mxu0 0.0
    %495 = vmatpush1.msra.mxu0 0.0
    %496 = vmatprep.subr.mxu0 0.0
    %497 = vmatpush1.msra.mxu0 0.0
    %498 = vmatprep.subr.mxu0 0.0
    %499 = vmatpush1.msra.mxu0 0.0
    %500 = vmatprep.subr.mxu0 0.0
    %501 = vmatpush1.msra.mxu0 0.0
    %502 = vmatprep.subr.mxu0 0.0
    %503 = vmatpush1.msra.mxu0 0.0
    %504 = vmatprep.subr.mxu0 0.0
    %505 = vmatpush1.msra.mxu0 0.0
    %506 = vmatprep.subr.mxu0 0.0
    %507 = vmatpush1.msra.mxu0 0.0
    %508 = vmatprep.subr.mxu0 0.0
    %509 = vmatpush1.msra.mxu0 0.0
    %510 = vmatprep.subr.mxu0 0.0
    %511 = vmatpush1.msra.mxu0 0.0
    %512 = vmatprep.subr.mxu0 0.0
    %513 = vmatpush1.msra.mxu0 0.0
    %514 = vmatprep.subr.mxu0 0.0
    %515 = vmatpush1.msra.mxu0 0.0
    %516 = vmatprep.subr.mxu0 0.0
    %517 = vmatpush1.msra.mxu0 0.0
    %518 = vmatprep.subr.mxu0 0.0
    %519 = vmatpush1.msra.mxu0 0.0
    %520 = vmatprep.subr.mxu0 0.0
    %521 = vmatpush1.msra.mxu0 0.0
    %522 = vmatprep.subr.mxu0 0.0
    %523 = vmatpush1.msra.mxu0 0.0
    %524 = vmatprep.subr.mxu0 0.0
    %525 = vmatpush1.msra.mxu0 0.0
    %526 = vmatprep.subr.mxu0 0.0
    %527 = vmatpush1.msra.mxu0 0.0
    %528 = vmatprep.mubr.f32.mxu0 0.0
    %529 = vmatmul.mubr.f32.gmra.mrb[0].mxu0 %v449
    %v530 = vpop.f32.mrb[0].mxu0
    %v531 = vadd.f32 %v445, %v530
    %v532 = vpop.f32.mrb[0].mxu0
    %533 = vmatprep.mubr.f32.mxu0 0.0
    %534 = vmatmul.mubr.f32.gmra.mrb[0].mxu0 %v452
    %v535 = vpop.f32.mrb[0].mxu0
    %v536 = vadd.f32 %v445, %v535
    %v537 = vpop.f32.mrb[0].mxu0
    %538 = vmatprep.mubr.f32.mxu0 0.0
    %539 = vmatmul.mubr.f32.gmra.mrb[0].mxu0 %v455
    %v540 = vpop.f32.mrb[0].mxu0
    %v541 = vadd.f32 %v445, %v540
    %v542 = vpop.f32.mrb[0].mxu0
    %543 = vmatprep.mubr.f32.mxu0 0.0
    %544 = vmatmul.mubr.f32.gmra.mrb[0].mxu0 %v458
    %v545 = vpop.f32.mrb[0].mxu0
    %v546 = vadd.f32 %v445, %v545
    %v547 = vpop.f32.mrb[0].mxu0
    %548 = vdwg.mxu0
    %vm549 = vcmask 130048
    %v551 = vsel %vm549, %v427, 0
    %v554 = vsel %vm549, %v428, 0
    %v557 = vsel %vm549, %v429, 0
    %v560 = vsel %vm549, %v430, 0
    %562 = vmatprep.subr.mxu0 0.0
    %563 = vmatpush1.msra.mxu0 %v417
    %564 = vmatprep.subr.mxu0 0.0
    %565 = vmatpush1.msra.mxu0 %v418
    %566 = vmatprep.subr.mxu0 0.0
    %567 = vmatpush1.msra.mxu0 0.0
    %568 = vmatprep.subr.mxu0 0.0
    %569 = vmatpush1.msra.mxu0 0.0
    %570 = vmatprep.subr.mxu0 0.0
    %571 = vmatpush1.msra.mxu0 0.0
    %572 = vmatprep.subr.mxu0 0.0
    %573 = vmatpush1.msra.mxu0 0.0
    %574 = vmatprep.subr.mxu0 0.0
    %575 = vmatpush1.msra.mxu0 0.0
    %576 = vmatprep.subr.mxu0 0.0
    %577 = vmatpush1.msra.mxu0 0.0
    %578 = vmatprep.subr.mxu0 0.0
    %579 = vmatpush1.msra.mxu0 0.0
    %580 = vmatprep.subr.mxu0 0.0
    %581 = vmatpush1.msra.mxu0 0.0
    %582 = vmatprep.subr.mxu0 0.0
    %583 = vmatpush1.msra.mxu0 0.0
    %584 = vmatprep.subr.mxu0 0.0
    %585 = vmatpush1.msra.mxu0 0.0
    %586 = vmatprep.subr.mxu0 0.0
    %587 = vmatpush1.msra.mxu0 0.0
    %588 = vmatprep.subr.mxu0 0.0
    %589 = vmatpush1.msra.mxu0 0.0
    %590 = vmatprep.subr.mxu0 0.0
    %591 = vmatpush1.msra.mxu0 0.0
    %592 = vmatprep.subr.mxu0 0.0
    %593 = vmatpush1.msra.mxu0 0.0
    %594 = vmatprep.subr.mxu0 0.0
    %595 = vmatpush1.msra.mxu0 0.0
    %596 = vmatprep.subr.mxu0 0.0
    %597 = vmatpush1.msra.mxu0 0.0
    %598 = vmatprep.subr.mxu0 0.0
    %599 = vmatpush1.msra.mxu0 0.0
    %600 = vmatprep.subr.mxu0 0.0
    %601 = vmatpush1.msra.mxu0 0.0
    %602 = vmatprep.subr.mxu0 0.0
    %603 = vmatpush1.msra.mxu0 0.0
    %604 = vmatprep.subr.mxu0 0.0
    %605 = vmatpush1.msra.mxu0 0.0
    %606 = vmatprep.subr.mxu0 0.0
    %607 = vmatpush1.msra.mxu0 0.0
    %608 = vmatprep.subr.mxu0 0.0
    %609 = vmatpush1.msra.mxu0 0.0
    %610 = vmatprep.subr.mxu0 0.0
    %611 = vmatpush1.msra.mxu0 0.0
    %612 = vmatprep.subr.mxu0 0.0
    %613 = vmatpush1.msra.mxu0 0.0
    %614 = vmatprep.subr.mxu0 0.0
    %615 = vmatpush1.msra.mxu0 0.0
    %616 = vmatprep.subr.mxu0 0.0
    %617 = vmatpush1.msra.mxu0 0.0
    %618 = vmatprep.subr.mxu0 0.0
    %619 = vmatpush1.msra.mxu0 0.0
    %620 = vmatprep.subr.mxu0 0.0
    %621 = vmatpush1.msra.mxu0 0.0
    %622 = vmatprep.subr.mxu0 0.0
    %623 = vmatpush1.msra.mxu0 0.0
    %624 = vmatprep.subr.mxu0 0.0
    %625 = vmatpush1.msra.mxu0 0.0
    %626 = vmatprep.mubr.f32.mxu0 0.0
    %627 = vmatmul.mubr.f32.gmra.mrb[0].mxu0 %v551
    %v628 = vpop.f32.mrb[0].mxu0
    %v629 = vadd.f32 %v531, %v628
    %v630 = vpop.f32.mrb[0].mxu0
    %631 = vmatprep.mubr.f32.mxu0 0.0
    %632 = vmatmul.mubr.f32.gmra.mrb[0].mxu0 %v554
    %v633 = vpop.f32.mrb[0].mxu0
    %v634 = vadd.f32 %v536, %v633
    %v635 = vpop.f32.mrb[0].mxu0
    %636 = vmatprep.mubr.f32.mxu0 0.0
    %637 = vmatmul.mubr.f32.gmra.mrb[0].mxu0 %v557
    %v638 = vpop.f32.mrb[0].mxu0
    %v639 = vadd.f32 %v541, %v638
    %v640 = vpop.f32.mrb[0].mxu0
    %641 = vmatprep.mubr.f32.mxu0 0.0
    %642 = vmatmul.mubr.f32.gmra.mrb[0].mxu0 %v560
    %v643 = vpop.f32.mrb[0].mxu0
    %v644 = vadd.f32 %v546, %v643
    %v645 = vpop.f32.mrb[0].mxu0
    %646 = vdwg.mxu0
    %v647 = vmax.f32 %v629, 0.0
    %v648 = vmax.f32 %v634, 0.0
    %v649 = vmax.f32 %v639, 0.0
    %v650 = vmax.f32 %v644, 0.0
    %vm651 = vcmask 261120
    %v653 = vsel %vm651, %v433, 0
    %v656 = vsel %vm651, %v434, 0
    %658 = vmatprep.subr.mxu0 0.0
    %659 = vmatpush1.msra.mxu0 %v647
    %660 = vmatprep.subr.mxu0 0.0
    %661 = vmatpush1.msra.mxu0 %v648
    %662 = vmatprep.subr.mxu0 0.0
    %663 = vmatpush1.msra.mxu0 %v649
    %664 = vmatprep.subr.mxu0 0.0
    %665 = vmatpush1.msra.mxu0 %v650
    %666 = vmatprep.subr.mxu0 0.0
    %667 = vmatpush1.msra.mxu0 0.0
    %668 = vmatprep.subr.mxu0 0.0
    %669 = vmatpush1.msra.mxu0 0.0
    %670 = vmatprep.subr.mxu0 0.0
    %671 = vmatpush1.msra.mxu0 0.0
    %672 = vmatprep.subr.mxu0 0.0
    %673 = vmatpush1.msra.mxu0 0.0
    %674 = vmatprep.subr.mxu0 0.0
    %675 = vmatpush1.msra.mxu0 0.0
    %676 = vmatprep.subr.mxu0 0.0
    %677 = vmatpush1.msra.mxu0 0.0
    %678 = vmatprep.subr.mxu0 0.0
    %679 = vmatpush1.msra.mxu0 0.0
    %680 = vmatprep.subr.mxu0 0.0
    %681 = vmatpush1.msra.mxu0 0.0
    %682 = vmatprep.subr.mxu0 0.0
    %683 = vmatpush1.msra.mxu0 0.0
    %684 = vmatprep.subr.mxu0 0.0
    %685 = vmatpush1.msra.mxu0 0.0
    %686 = vmatprep.subr.mxu0 0.0
    %687 = vmatpush1.msra.mxu0 0.0
    %688 = vmatprep.subr.mxu0 0.0
    %689 = vmatpush1.msra.mxu0 0.0
    %690 = vmatprep.subr.mxu0 0.0
    %691 = vmatpush1.msra.mxu0 0.0
    %692 = vmatprep.subr.mxu0 0.0
    %693 = vmatpush1.msra.mxu0 0.0
    %694 = vmatprep.subr.mxu0 0.0
    %695 = vmatpush1.msra.mxu0 0.0
    %696 = vmatprep.subr.mxu0 0.0
    %697 = vmatpush1.msra.mxu0 0.0
    %698 = vmatprep.subr.mxu0 0.0
    %699 = vmatpush1.msra.mxu0 0.0
    %700 = vmatprep.subr.mxu0 0.0
    %701 = vmatpush1.msra.mxu0 0.0
    %702 = vmatprep.subr.mxu0 0.0
    %703 = vmatpush1.msra.mxu0 0.0
    %704 = vmatprep.subr.mxu0 0.0
    %705 = vmatpush1.msra.mxu0 0.0
    %706 = vmatprep.subr.mxu0 0.0
    %707 = vmatpush1.msra.mxu0 0.0
    %708 = vmatprep.subr.mxu0 0.0
    %709 = vmatpush1.msra.mxu0 0.0
    %710 = vmatprep.subr.mxu0 0.0
    %711 = vmatpush1.msra.mxu0 0.0
    %712 = vmatprep.subr.mxu0 0.0
    %713 = vmatpush1.msra.mxu0 0.0
    %714 = vmatprep.subr.mxu0 0.0
    %715 = vmatpush1.msra.mxu0 0.0
    %716 = vmatprep.subr.mxu0 0.0
    %717 = vmatpush1.msra.mxu0 0.0
    %718 = vmatprep.subr.mxu0 0.0
    %719 = vmatpush1.msra.mxu0 0.0
    %720 = vmatprep.subr.mxu0 0.0
    %721 = vmatpush1.msra.mxu0 0.0
    %722 = vmatprep.mubr.f32.mxu0 0.0
    %723 = vmatmul.mubr.f32.gmra.mrb[0].mxu0 %v653
    %v724 = vpop.f32.mrb[0].mxu0
    %v725 = vadd.f32 0.0, %v724
    %v726 = vpop.f32.mrb[0].mxu0
    %727 = vmatprep.mubr.f32.mxu0 0.0
    %728 = vmatmul.mubr.f32.gmra.mrb[0].mxu0 %v656
    %v729 = vpop.f32.mrb[0].mxu0
    %v730 = vadd.f32 0.0, %v729
    %v731 = vpop.f32.mrb[0].mxu0
    %732 = vdwg.mxu0
    %v733 = vadd.f32 %v417, %v725
    %v734 = vadd.f32 %v418, %v730
    %v735 = vld [vmem:[%s15] sm:$0xff]
    %v736 = vld [vmem:[%s15 + $0x8] sm:$0xff]
    %v737 = vld [vmem:[%s15 + $0x10] sm:$0xff]
    %v738 = vld [vmem:[%s15 + $0x18] sm:$0xff]
    %v739 = vld [vmem:[#allocation8] sm:$0x1]
    %v741 = vlaneseq
    %v742 = vshrl.u32 %v741, 7
    %v743 = vsub.s32 0, %v742
    %v744 = vrot.slane %v739, %v743
    %v747 = vsel %vm651, %v733, 0
    %v750 = vsel %vm651, %v734, 0
    %752 = vmatprep.subr.mxu0 0.0
    %753 = vmatpush1.msra.mxu0 %v735
    %754 = vmatprep.subr.mxu0 0.0
    %755 = vmatpush1.msra.mxu0 %v736
    %756 = vmatprep.subr.mxu0 0.0
    %757 = vmatpush1.msra.mxu0 %v737
    %758 = vmatprep.subr.mxu0 0.0
    %759 = vmatpush1.msra.mxu0 %v738
    %760 = vmatprep.subr.mxu0 0.0
    %761 = vmatpush1.msra.mxu0 0.0
    %762 = vmatprep.subr.mxu0 0.0
    %763 = vmatpush1.msra.mxu0 0.0
    %764 = vmatprep.subr.mxu0 0.0
    %765 = vmatpush1.msra.mxu0 0.0
    %766 = vmatprep.subr.mxu0 0.0
    %767 = vmatpush1.msra.mxu0 0.0
    %768 = vmatprep.subr.mxu0 0.0
    %769 = vmatpush1.msra.mxu0 0.0
    %770 = vmatprep.subr.mxu0 0.0
    %771 = vmatpush1.msra.mxu0 0.0
    %772 = vmatprep.subr.mxu0 0.0
    %773 = vmatpush1.msra.mxu0 0.0
    %774 = vmatprep.subr.mxu0 0.0
    %775 = vmatpush1.msra.mxu0 0.0
    %776 = vmatprep.subr.mxu0 0.0
    %777 = vmatpush1.msra.mxu0 0.0
    %778 = vmatprep.subr.mxu0 0.0
    %779 = vmatpush1.msra.mxu0 0.0
    %780 = vmatprep.subr.mxu0 0.0
    %781 = vmatpush1.msra.mxu0 0.0
    %782 = vmatprep.subr.mxu0 0.0
    %783 = vmatpush1.msra.mxu0 0.0
    %784 = vmatprep.subr.mxu0 0.0
    %785 = vmatpush1.msra.mxu0 0.0
    %786 = vmatprep.subr.mxu0 0.0
    %787 = vmatpush1.msra.mxu0 0.0
    %788 = vmatprep.subr.mxu0 0.0
    %789 = vmatpush1.msra.mxu0 0.0
    %790 = vmatprep.subr.mxu0 0.0
    %791 = vmatpush1.msra.mxu0 0.0
    %792 = vmatprep.subr.mxu0 0.0
    %793 = vmatpush1.msra.mxu0 0.0
    %794 = vmatprep.subr.mxu0 0.0
    %795 = vmatpush1.msra.mxu0 0.0
    %796 = vmatprep.subr.mxu0 0.0
    %797 = vmatpush1.msra.mxu0 0.0
    %798 = vmatprep.subr.mxu0 0.0
    %799 = vmatpush1.msra.mxu0 0.0
    %800 = vmatprep.subr.mxu0 0.0
    %801 = vmatpush1.msra.mxu0 0.0
    %802 = vmatprep.subr.mxu0 0.0
    %803 = vmatpush1.msra.mxu0 0.0
    %804 = vmatprep.subr.mxu0 0.0
    %805 = vmatpush1.msra.mxu0 0.0
    %806 = vmatprep.subr.mxu0 0.0
    %807 = vmatpush1.msra.mxu0 0.0
    %808 = vmatprep.subr.mxu0 0.0
    %809 = vmatpush1.msra.mxu0 0.0
    %810 = vmatprep.subr.mxu0 0.0
    %811 = vmatpush1.msra.mxu0 0.0
    %812 = vmatprep.subr.mxu0 0.0
    %813 = vmatpush1.msra.mxu0 0.0
    %814 = vmatprep.subr.mxu0 0.0
    %815 = vmatpush1.msra.mxu0 0.0
    %816 = vmatprep.mubr.f32.mxu0 0.0
    %817 = vmatmul.mubr.f32.gmra.mrb[0].mxu0 %v747
    %v818 = vpop.f32.mrb[0].mxu0
    %v819 = vadd.f32 %v744, %v818
    %v820 = vpop.f32.mrb[0].mxu0
    %821 = vmatprep.mubr.f32.mxu0 0.0
    %822 = vmatmul.mubr.f32.gmra.mrb[0].mxu0 %v750
    %v823 = vpop.f32.mrb[0].mxu0
    %v824 = vadd.f32 %v744, %v823
    %v825 = vpop.f32.mrb[0].mxu0
    %826 = vdwg.mxu0
    %v827 = vld [vmem:[#allocation10] sm:$0x1]
    %v829 = vlaneseq
    %v830 = vshrl.u32 %v829, 7
    %v831 = vsub.s32 0, %v830
    %v832 = vrot.slane %v827, %v831
    %v834 = vmul.f32 %v819, %v832
    %v835 = vmul.f32 %v824, %v832
    %v836 = vld [vmem:[#allocation11] sm:$0x1]
    %v838 = vlaneseq
    %v839 = vshrl.u32 %v838, 7
    %v840 = vsub.s32 0, %v839
    %v841 = vrot.slane %v836, %v840
    %v843 = vadd.f32 %v834, %v841
    %v844 = vadd.f32 %v835, %v841
    %vm845 = vcmp.ge.f32.partialorder %v843, 0.0
    %vm846 = vcmp.ge.f32.partialorder %v844, 0.0
    %v847 = vmul.f32 %v843, 0.01
    %v848 = vmul.f32 %v844, 0.01
    %v849 = vsel %vm845, %v843, %v847
    %v850 = vsel %vm846, %v844, %v848
    %v851 = vld [vmem:[#allocation13] sm:$0xff]
    %v852 = vld [vmem:[#allocation13 + $0x8] sm:$0xff]
    %v853 = vld [vmem:[#allocation13 + $0x10] sm:$0xff]
    %v854 = vld [vmem:[#allocation13 + $0x18] sm:$0xff]
    %v855 = vld [vmem:[#allocation14] sm:$0x1]
    %v857 = vlaneseq
    %v858 = vshrl.u32 %v857, 7
    %v859 = vsub.s32 0, %v858
    %v860 = vrot.slane %v855, %v859
    %v863 = vsel %vm651, %v849, 0
    %v866 = vsel %vm651, %v850, 0
    %868 = vmatprep.subr.mxu0 0.0
    %869 = vmatpush1.msra.mxu0 %v851
    %870 = vmatprep.subr.mxu0 0.0
    %871 = vmatpush1.msra.mxu0 %v852
    %872 = vmatprep.subr.mxu0 0.0
    %873 = vmatpush1.msra.mxu0 %v853
    %874 = vmatprep.subr.mxu0 0.0
    %875 = vmatpush1.msra.mxu0 %v854
    %876 = vmatprep.subr.mxu0 0.0
    %877 = vmatpush1.msra.mxu0 0.0
    %878 = vmatprep.subr.mxu0 0.0
    %879 = vmatpush1.msra.mxu0 0.0
    %880 = vmatprep.subr.mxu0 0.0
    %881 = vmatpush1.msra.mxu0 0.0
    %882 = vmatprep.subr.mxu0 0.0
    %883 = vmatpush1.msra.mxu0 0.0
    %884 = vmatprep.subr.mxu0 0.0
    %885 = vmatpush1.msra.mxu0 0.0
    %886 = vmatprep.subr.mxu0 0.0
    %887 = vmatpush1.msra.mxu0 0.0
    %888 = vmatprep.subr.mxu0 0.0
    %889 = vmatpush1.msra.mxu0 0.0
    %890 = vmatprep.subr.mxu0 0.0
    %891 = vmatpush1.msra.mxu0 0.0
    %892 = vmatprep.subr.mxu0 0.0
    %893 = vmatpush1.msra.mxu0 0.0
    %894 = vmatprep.subr.mxu0 0.0
    %895 = vmatpush1.msra.mxu0 0.0
    %896 = vmatprep.subr.mxu0 0.0
    %897 = vmatpush1.msra.mxu0 0.0
    %898 = vmatprep.subr.mxu0 0.0
    %899 = vmatpush1.msra.mxu0 0.0
    %900 = vmatprep.subr.mxu0 0.0
    %901 = vmatpush1.msra.mxu0 0.0
    %902 = vmatprep.subr.mxu0 0.0
    %903 = vmatpush1.msra.mxu0 0.0
    %904 = vmatprep.subr.mxu0 0.0
    %905 = vmatpush1.msra.mxu0 0.0
    %906 = vmatprep.subr.mxu0 0.0
    %907 = vmatpush1.msra.mxu0 0.0
    %908 = vmatprep.subr.mxu0 0.0
    %909 = vmatpush1.msra.mxu0 0.0
    %910 = vmatprep.subr.mxu0 0.0
    %911 = vmatpush1.msra.mxu0 0.0
    %912 = vmatprep.subr.mxu0 0.0
    %913 = vmatpush1.msra.mxu0 0.0
    %914 = vmatprep.subr.mxu0 0.0
    %915 = vmatpush1.msra.mxu0 0.0
    %916 = vmatprep.subr.mxu0 0.0
    %917 = vmatpush1.msra.mxu0 0.0
    %918 = vmatprep.subr.mxu0 0.0
    %919 = vmatpush1.msra.mxu0 0.0
    %920 = vmatprep.subr.mxu0 0.0
    %921 = vmatpush1.msra.mxu0 0.0
    %922 = vmatprep.subr.mxu0 0.0
    %923 = vmatpush1.msra.mxu0 0.0
    %924 = vmatprep.subr.mxu0 0.0
    %925 = vmatpush1.msra.mxu0 0.0
    %926 = vmatprep.subr.mxu0 0.0
    %927 = vmatpush1.msra.mxu0 0.0
    %928 = vmatprep.subr.mxu0 0.0
    %929 = vmatpush1.msra.mxu0 0.0
    %930 = vmatprep.subr.mxu0 0.0
    %931 = vmatpush1.msra.mxu0 0.0
    %932 = vmatprep.mubr.f32.mxu0 0.0
    %933 = vmatmul.mubr.f32.gmra.mrb[0].mxu0 %v863
    %v934 = vpop.f32.mrb[0].mxu0
    %v935 = vadd.f32 %v860, %v934
    %v936 = vpop.f32.mrb[0].mxu0
    %937 = vmatprep.mubr.f32.mxu0 0.0
    %938 = vmatmul.mubr.f32.gmra.mrb[0].mxu0 %v866
    %v939 = vpop.f32.mrb[0].mxu0
    %v940 = vadd.f32 %v860, %v939
    %v941 = vpop.f32.mrb[0].mxu0
    %942 = vdwg.mxu0
    %vm943 = vcmp.gt.f32.partialorder %v935, 0.0
    %vm944 = vcmp.gt.f32.partialorder %v940, 0.0
    %v945 = vmul.f32 %v935, 1.442695
    %v946 = vpow.pop %v945
    %v947 = vmul.f32 %v940, 1.442695
    %v948 = vpow.pop %v947
    %v949 = vsub.f32 %v946, 1.0
    %v950 = vsub.f32 %v948, 1.0
    %v951 = vsel %vm943, %v935, %v949
    %v952 = vsel %vm944, %v940, %v950
    %v953 = vld [vmem:[#allocation16] sm:$0xff]
    %v954 = vld [vmem:[#allocation16 + $0x8] sm:$0xff]
    %v955 = vld [vmem:[#allocation16 + $0x10] sm:$0xff]
    %v956 = vld [vmem:[#allocation16 + $0x18] sm:$0xff]
    %v957 = vld [vmem:[#allocation19] sm:$0x1]
    %v959 = vlaneseq
    %v960 = vshrl.u32 %v959, 7
    %v961 = vsub.s32 0, %v960
    %v962 = vrot.slane %v957, %v961
    %v965 = vsel %vm651, %v951, 0
    %v968 = vsel %vm651, %v952, 0
    %970 = vmatprep.subr.mxu0 0.0
    %971 = vmatpush1.msra.mxu0 %v953
    %972 = vmatprep.subr.mxu0 0.0
    %973 = vmatpush1.msra.mxu0 %v954
    %974 = vmatprep.subr.mxu0 0.0
    %975 = vmatpush1.msra.mxu0 %v955
    %976 = vmatprep.subr.mxu0 0.0
    %977 = vmatpush1.msra.mxu0 %v956
    %978 = vmatprep.subr.mxu0 0.0
    %979 = vmatpush1.msra.mxu0 0.0
    %980 = vmatprep.subr.mxu0 0.0
    %981 = vmatpush1.msra.mxu0 0.0
    %982 = vmatprep.subr.mxu0 0.0
    %983 = vmatpush1.msra.mxu0 0.0
    %984 = vmatprep.subr.mxu0 0.0
    %985 = vmatpush1.msra.mxu0 0.0
    %986 = vmatprep.subr.mxu0 0.0
    %987 = vmatpush1.msra.mxu0 0.0
    %988 = vmatprep.subr.mxu0 0.0
    %989 = vmatpush1.msra.mxu0 0.0
    %990 = vmatprep.subr.mxu0 0.0
    %991 = vmatpush1.msra.mxu0 0.0
    %992 = vmatprep.subr.mxu0 0.0
    %993 = vmatpush1.msra.mxu0 0.0
    %994 = vmatprep.subr.mxu0 0.0
    %995 = vmatpush1.msra.mxu0 0.0
    %996 = vmatprep.subr.mxu0 0.0
    %997 = vmatpush1.msra.mxu0 0.0
    %998 = vmatprep.subr.mxu0 0.0
    %999 = vmatpush1.msra.mxu0 0.0
    %1000 = vmatprep.subr.mxu0 0.0
    %1001 = vmatpush1.msra.mxu0 0.0
    %1002 = vmatprep.subr.mxu0 0.0
    %1003 = vmatpush1.msra.mxu0 0.0
    %1004 = vmatprep.subr.mxu0 0.0
    %1005 = vmatpush1.msra.mxu0 0.0
    %1006 = vmatprep.subr.mxu0 0.0
    %1007 = vmatpush1.msra.mxu0 0.0
    %1008 = vmatprep.subr.mxu0 0.0
    %1009 = vmatpush1.msra.mxu0 0.0
    %1010 = vmatprep.subr.mxu0 0.0
    %1011 = vmatpush1.msra.mxu0 0.0
    %1012 = vmatprep.subr.mxu0 0.0
    %1013 = vmatpush1.msra.mxu0 0.0
    %1014 = vmatprep.subr.mxu0 0.0
    %1015 = vmatpush1.msra.mxu0 0.0
    %1016 = vmatprep.subr.mxu0 0.0
    %1017 = vmatpush1.msra.mxu0 0.0
    %1018 = vmatprep.subr.mxu0 0.0
    %1019 = vmatpush1.msra.mxu0 0.0
    %1020 = vmatprep.subr.mxu0 0.0
    %1021 = vmatpush1.msra.mxu0 0.0
    %1022 = vmatprep.subr.mxu0 0.0
    %1023 = vmatpush1.msra.mxu0 0.0
    %1024 = vmatprep.subr.mxu0 0.0
    %1025 = vmatpush1.msra.mxu0 0.0
    %1026 = vmatprep.subr.mxu0 0.0
    %1027 = vmatpush1.msra.mxu0 0.0
    %1028 = vmatprep.subr.mxu0 0.0
    %1029 = vmatpush1.msra.mxu0 0.0
    %1030 = vmatprep.subr.mxu0 0.0
    %1031 = vmatpush1.msra.mxu0 0.0
    %1032 = vmatprep.subr.mxu0 0.0
    %1033 = vmatpush1.msra.mxu0 0.0
    %1034 = vmatprep.mubr.f32.mxu0 0.0
    %1035 = vmatmul.mubr.f32.gmra.mrb[0].mxu0 %v965
    %v1036 = vpop.f32.mrb[0].mxu0
    %v1037 = vadd.f32 %v962, %v1036
    %v1038 = vpop.f32.mrb[0].mxu0
    %1039 = vmatprep.mubr.f32.mxu0 0.0
    %1040 = vmatmul.mubr.f32.gmra.mrb[0].mxu0 %v968
    %v1041 = vpop.f32.mrb[0].mxu0
    %v1042 = vadd.f32 %v962, %v1041
    %v1043 = vpop.f32.mrb[0].mxu0
    %1044 = vdwg.mxu0
    %v1045 = vld [vmem:[#allocation17] sm:$0xff]
    %v1046 = vld [vmem:[#allocation17 + $0x8] sm:$0xff]
    %v1047 = vld [vmem:[#allocation17 + $0x10] sm:$0xff]
    %v1048 = vld [vmem:[#allocation17 + $0x18] sm:$0xff]
    %v1049 = vld [vmem:[#allocation20] sm:$0x1]
    %v1051 = vlaneseq
    %v1052 = vshrl.u32 %v1051, 7
    %v1053 = vsub.s32 0, %v1052
    %v1054 = vrot.slane %v1049, %v1053
    %v1057 = vsel %vm651, %v417, 0
    %v1060 = vsel %vm651, %v418, 0
    %1062 = vmatprep.subr.mxu0 0.0
    %1063 = vmatpush1.msra.mxu0 %v1045
    %1064 = vmatprep.subr.mxu0 0.0
    %1065 = vmatpush1.msra.mxu0 %v1046
    %1066 = vmatprep.subr.mxu0 0.0
    %1067 = vmatpush1.msra.mxu0 %v1047
    %1068 = vmatprep.subr.mxu0 0.0
    %1069 = vmatpush1.msra.mxu0 %v1048
    %1070 = vmatprep.subr.mxu0 0.0
    %1071 = vmatpush1.msra.mxu0 0.0
    %1072 = vmatprep.subr.mxu0 0.0
    %1073 = vmatpush1.msra.mxu0 0.0
    %1074 = vmatprep.subr.mxu0 0.0
    %1075 = vmatpush1.msra.mxu0 0.0
    %1076 = vmatprep.subr.mxu0 0.0
    %1077 = vmatpush1.msra.mxu0 0.0
    %1078 = vmatprep.subr.mxu0 0.0
    %1079 = vmatpush1.msra.mxu0 0.0
    %1080 = vmatprep.subr.mxu0 0.0
    %1081 = vmatpush1.msra.mxu0 0.0
    %1082 = vmatprep.subr.mxu0 0.0
    %1083 = vmatpush1.msra.mxu0 0.0
    %1084 = vmatprep.subr.mxu0 0.0
    %1085 = vmatpush1.msra.mxu0 0.0
    %1086 = vmatprep.subr.mxu0 0.0
    %1087 = vmatpush1.msra.mxu0 0.0
    %1088 = vmatprep.subr.mxu0 0.0
    %1089 = vmatpush1.msra.mxu0 0.0
    %1090 = vmatprep.subr.mxu0 0.0
    %1091 = vmatpush1.msra.mxu0 0.0
    %1092 = vmatprep.subr.mxu0 0.0
    %1093 = vmatpush1.msra.mxu0 0.0
    %1094 = vmatprep.subr.mxu0 0.0
    %1095 = vmatpush1.msra.mxu0 0.0
    %1096 = vmatprep.subr.mxu0 0.0
    %1097 = vmatpush1.msra.mxu0 0.0
    %1098 = vmatprep.subr.mxu0 0.0
    %1099 = vmatpush1.msra.mxu0 0.0
    %1100 = vmatprep.subr.mxu0 0.0
    %1101 = vmatpush1.msra.mxu0 0.0
    %1102 = vmatprep.subr.mxu0 0.0
    %1103 = vmatpush1.msra.mxu0 0.0
    %1104 = vmatprep.subr.mxu0 0.0
    %1105 = vmatpush1.msra.mxu0 0.0
    %1106 = vmatprep.subr.mxu0 0.0
    %1107 = vmatpush1.msra.mxu0 0.0
    %1108 = vmatprep.subr.mxu0 0.0
    %1109 = vmatpush1.msra.mxu0 0.0
    %1110 = vmatprep.subr.mxu0 0.0
    %1111 = vmatpush1.msra.mxu0 0.0
    %1112 = vmatprep.subr.mxu0 0.0
    %1113 = vmatpush1.msra.mxu0 0.0
    %1114 = vmatprep.subr.mxu0 0.0
    %1115 = vmatpush1.msra.mxu0 0.0
    %1116 = vmatprep.subr.mxu0 0.0
    %1117 = vmatpush1.msra.mxu0 0.0
    %1118 = vmatprep.subr.mxu0 0.0
    %1119 = vmatpush1.msra.mxu0 0.0
    %1120 = vmatprep.subr.mxu0 0.0
    %1121 = vmatpush1.msra.mxu0 0.0
    %1122 = vmatprep.subr.mxu0 0.0
    %1123 = vmatpush1.msra.mxu0 0.0
    %1124 = vmatprep.subr.mxu0 0.0
    %1125 = vmatpush1.msra.mxu0 0.0
    %1126 = vmatprep.mubr.f32.mxu0 0.0
    %1127 = vmatmul.mubr.f32.gmra.mrb[0].mxu0 %v1057
    %v1128 = vpop.f32.mrb[0].mxu0
    %v1129 = vadd.f32 %v1054, %v1128
    %v1130 = vpop.f32.mrb[0].mxu0
    %1131 = vmatprep.mubr.f32.mxu0 0.0
    %1132 = vmatmul.mubr.f32.gmra.mrb[0].mxu0 %v1060
    %v1133 = vpop.f32.mrb[0].mxu0
    %v1134 = vadd.f32 %v1054, %v1133
    %v1135 = vpop.f32.mrb[0].mxu0
    %1136 = vdwg.mxu0
    %v1137 = vadd.f32 %v1037, %v1129
    %v1138 = vadd.f32 %v1042, %v1134
    %v1139 = vxor.u32 %v1137, 2147483648
    %v1140 = vxor.u32 %v1138, 2147483648
    %v1141 = vmul.f32 %v1139, 1.442695
    %v1142 = vpow.pop %v1141
    %v1143 = vmul.f32 %v1140, 1.442695
    %v1144 = vpow.pop %v1143
    %v1145 = vadd.f32 %v1142, 1.0
    %v1146 = vadd.f32 %v1144, 1.0
    %v1147 = vrcp.pop %v1145
    %v1148 = vmul.f32 1.0, %v1147
    %v1149 = vrcp.pop %v1146
    %v1150 = vmul.f32 1.0, %v1149
    %s1151 = scalar_lea.vmem [#allocation16], 32
    %v1152 = vld [vmem:[%s1151] sm:$0xff]
    %v1153 = vld [vmem:[%s1151 + $0x8] sm:$0xff]
    %v1154 = vld [vmem:[%s1151 + $0x10] sm:$0xff]
    %v1155 = vld [vmem:[%s1151 + $0x18] sm:$0xff]
    %s1156 = scalar_lea.vmem [#allocation19], 1
    %v1157 = vld [vmem:[%s1156] sm:$0x1]
    %v1159 = vlaneseq
    %v1160 = vshrl.u32 %v1159, 7
    %v1161 = vsub.s32 0, %v1160
    %v1162 = vrot.slane %v1157, %v1161
    %1164 = vmatprep.subr.mxu0 0.0
    %1165 = vmatpush1.msra.mxu0 %v1152
    %1166 = vmatprep.subr.mxu0 0.0
    %1167 = vmatpush1.msra.mxu0 %v1153
    %1168 = vmatprep.subr.mxu0 0.0
    %1169 = vmatpush1.msra.mxu0 %v1154
    %1170 = vmatprep.subr.mxu0 0.0
    %1171 = vmatpush1.msra.mxu0 %v1155
    %1172 = vmatprep.subr.mxu0 0.0
    %1173 = vmatpush1.msra.mxu0 0.0
    %1174 = vmatprep.subr.mxu0 0.0
    %1175 = vmatpush1.msra.mxu0 0.0
    %1176 = vmatprep.subr.mxu0 0.0
    %1177 = vmatpush1.msra.mxu0 0.0
    %1178 = vmatprep.subr.mxu0 0.0
    %1179 = vmatpush1.msra.mxu0 0.0
    %1180 = vmatprep.subr.mxu0 0.0
    %1181 = vmatpush1.msra.mxu0 0.0
    %1182 = vmatprep.subr.mxu0 0.0
    %1183 = vmatpush1.msra.mxu0 0.0
    %1184 = vmatprep.subr.mxu0 0.0
    %1185 = vmatpush1.msra.mxu0 0.0
    %1186 = vmatprep.subr.mxu0 0.0
    %1187 = vmatpush1.msra.mxu0 0.0
    %1188 = vmatprep.subr.mxu0 0.0
    %1189 = vmatpush1.msra.mxu0 0.0
    %1190 = vmatprep.subr.mxu0 0.0
    %1191 = vmatpush1.msra.mxu0 0.0
    %1192 = vmatprep.subr.mxu0 0.0
    %1193 = vmatpush1.msra.mxu0 0.0
    %1194 = vmatprep.subr.mxu0 0.0
    %1195 = vmatpush1.msra.mxu0 0.0
    %1196 = vmatprep.subr.mxu0 0.0
    %1197 = vmatpush1.msra.mxu0 0.0
    %1198 = vmatprep.subr.mxu0 0.0
    %1199 = vmatpush1.msra.mxu0 0.0
    %1200 = vmatprep.subr.mxu0 0.0
    %1201 = vmatpush1.msra.mxu0 0.0
    %1202 = vmatprep.subr.mxu0 0.0
    %1203 = vmatpush1.msra.mxu0 0.0
    %1204 = vmatprep.subr.mxu0 0.0
    %1205 = vmatpush1.msra.mxu0 0.0
    %1206 = vmatprep.subr.mxu0 0.0
    %1207 = vmatpush1.msra.mxu0 0.0
    %1208 = vmatprep.subr.mxu0 0.0
    %1209 = vmatpush1.msra.mxu0 0.0
    %1210 = vmatprep.subr.mxu0 0.0
    %1211 = vmatpush1.msra.mxu0 0.0
    %1212 = vmatprep.subr.mxu0 0.0
    %1213 = vmatpush1.msra.mxu0 0.0
    %1214 = vmatprep.subr.mxu0 0.0
    %1215 = vmatpush1.msra.mxu0 0.0
    %1216 = vmatprep.subr.mxu0 0.0
    %1217 = vmatpush1.msra.mxu0 0.0
    %1218 = vmatprep.subr.mxu0 0.0
    %1219 = vmatpush1.msra.mxu0 0.0
    %1220 = vmatprep.subr.mxu0 0.0
    %1221 = vmatpush1.msra.mxu0 0.0
    %1222 = vmatprep.subr.mxu0 0.0
    %1223 = vmatpush1.msra.mxu0 0.0
    %1224 = vmatprep.subr.mxu0 0.0
    %1225 = vmatpush1.msra.mxu0 0.0
    %1226 = vmatprep.subr.mxu0 0.0
    %1227 = vmatpush1.msra.mxu0 0.0
    %1228 = vmatprep.mubr.f32.mxu0 0.0
    %1229 = vmatmul.mubr.f32.gmra.mrb[0].mxu0 %v965
    %v1230 = vpop.f32.mrb[0].mxu0
    %v1231 = vadd.f32 %v1162, %v1230
    %v1232 = vpop.f32.mrb[0].mxu0
    %1233 = vmatprep.mubr.f32.mxu0 0.0
    %1234 = vmatmul.mubr.f32.gmra.mrb[0].mxu0 %v968
    %v1235 = vpop.f32.mrb[0].mxu0
    %v1236 = vadd.f32 %v1162, %v1235
    %v1237 = vpop.f32.mrb[0].mxu0
    %1238 = vdwg.mxu0
    %s1239 = scalar_lea.vmem [#allocation17], 32
    %v1240 = vld [vmem:[%s1239] sm:$0xff]
    %v1241 = vld [vmem:[%s1239 + $0x8] sm:$0xff]
    %v1242 = vld [vmem:[%s1239 + $0x10] sm:$0xff]
    %v1243 = vld [vmem:[%s1239 + $0x18] sm:$0xff]
    %s1244 = scalar_lea.vmem [#allocation20], 1
    %v1245 = vld [vmem:[%s1244] sm:$0x1]
    %v1247 = vlaneseq
    %v1248 = vshrl.u32 %v1247, 7
    %v1249 = vsub.s32 0, %v1248
    %v1250 = vrot.slane %v1245, %v1249
    %1252 = vmatprep.subr.mxu0 0.0
    %1253 = vmatpush1.msra.mxu0 %v1240
    %1254 = vmatprep.subr.mxu0 0.0
    %1255 = vmatpush1.msra.mxu0 %v1241
    %1256 = vmatprep.subr.mxu0 0.0
    %1257 = vmatpush1.msra.mxu0 %v1242
    %1258 = vmatprep.subr.mxu0 0.0
    %1259 = vmatpush1.msra.mxu0 %v1243
    %1260 = vmatprep.subr.mxu0 0.0
    %1261 = vmatpush1.msra.mxu0 0.0
    %1262 = vmatprep.subr.mxu0 0.0
    %1263 = vmatpush1.msra.mxu0 0.0
    %1264 = vmatprep.subr.mxu0 0.0
    %1265 = vmatpush1.msra.mxu0 0.0
    %1266 = vmatprep.subr.mxu0 0.0
    %1267 = vmatpush1.msra.mxu0 0.0
    %1268 = vmatprep.subr.mxu0 0.0
    %1269 = vmatpush1.msra.mxu0 0.0
    %1270 = vmatprep.subr.mxu0 0.0
    %1271 = vmatpush1.msra.mxu0 0.0
    %1272 = vmatprep.subr.mxu0 0.0
    %1273 = vmatpush1.msra.mxu0 0.0
    %1274 = vmatprep.subr.mxu0 0.0
    %1275 = vmatpush1.msra.mxu0 0.0
    %1276 = vmatprep.subr.mxu0 0.0
    %1277 = vmatpush1.msra.mxu0 0.0
    %1278 = vmatprep.subr.mxu0 0.0
    %1279 = vmatpush1.msra.mxu0 0.0
    %1280 = vmatprep.subr.mxu0 0.0
    %1281 = vmatpush1.msra.mxu0 0.0
    %1282 = vmatprep.subr.mxu0 0.0
    %1283 = vmatpush1.msra.mxu0 0.0
    %1284 = vmatprep.subr.mxu0 0.0
    %1285 = vmatpush1.msra.mxu0 0.0
    %1286 = vmatprep.subr.mxu0 0.0
    %1287 = vmatpush1.msra.mxu0 0.0
    %1288 = vmatprep.subr.mxu0 0.0
    %1289 = vmatpush1.msra.mxu0 0.0
    %1290 = vmatprep.subr.mxu0 0.0
    %1291 = vmatpush1.msra.mxu0 0.0
    %1292 = vmatprep.subr.mxu0 0.0
    %1293 = vmatpush1.msra.mxu0 0.0
    %1294 = vmatprep.subr.mxu0 0.0
    %1295 = vmatpush1.msra.mxu0 0.0
    %1296 = vmatprep.subr.mxu0 0.0
    %1297 = vmatpush1.msra.mxu0 0.0
    %1298 = vmatprep.subr.mxu0 0.0
    %1299 = vmatpush1.msra.mxu0 0.0
    %1300 = vmatprep.subr.mxu0 0.0
    %1301 = vmatpush1.msra.mxu0 0.0
    %1302 = vmatprep.subr.mxu0 0.0
    %1303 = vmatpush1.msra.mxu0 0.0
    %1304 = vmatprep.subr.mxu0 0.0
    %1305 = vmatpush1.msra.mxu0 0.0
    %1306 = vmatprep.subr.mxu0 0.0
    %1307 = vmatpush1.msra.mxu0 0.0
    %1308 = vmatprep.subr.mxu0 0.0
    %1309 = vmatpush1.msra.mxu0 0.0
    %1310 = vmatprep.subr.mxu0 0.0
    %1311 = vmatpush1.msra.mxu0 0.0
    %1312 = vmatprep.subr.mxu0 0.0
    %1313 = vmatpush1.msra.mxu0 0.0
    %1314 = vmatprep.subr.mxu0 0.0
    %1315 = vmatpush1.msra.mxu0 0.0
    %1316 = vmatprep.mubr.f32.mxu0 0.0
    %1317 = vmatmul.mubr.f32.gmra.mrb[0].mxu0 %v1057
    %v1318 = vpop.f32.mrb[0].mxu0
    %v1319 = vadd.f32 %v1250, %v1318
    %v1320 = vpop.f32.mrb[0].mxu0
    %1321 = vmatprep.mubr.f32.mxu0 0.0
    %1322 = vmatmul.mubr.f32.gmra.mrb[0].mxu0 %v1060
    %v1323 = vpop.f32.mrb[0].mxu0
    %v1324 = vadd.f32 %v1250, %v1323
    %v1325 = vpop.f32.mrb[0].mxu0
    %1326 = vdwg.mxu0
    %v1327 = vadd.f32 %v1231, %v1319
    %v1328 = vadd.f32 %v1236, %v1324
    %v1329 = vxor.u32 %v1327, 2147483648
    %v1330 = vxor.u32 %v1328, 2147483648
    %v1331 = vmul.f32 %v1329, 1.442695
    %v1332 = vpow.pop %v1331
    %v1333 = vmul.f32 %v1330, 1.442695
    %v1334 = vpow.pop %v1333
    %v1335 = vadd.f32 %v1332, 1.0
    %v1336 = vadd.f32 %v1334, 1.0
    %v1337 = vrcp.pop %v1335
    %v1338 = vmul.f32 1.0, %v1337
    %v1339 = vrcp.pop %v1336
    %v1340 = vmul.f32 1.0, %v1339
    %s1341 = scalar_lea.vmem [#allocation16], 64
    %v1342 = vld [vmem:[%s1341] sm:$0xff]
    %v1343 = vld [vmem:[%s1341 + $0x8] sm:$0xff]
    %v1344 = vld [vmem:[%s1341 + $0x10] sm:$0xff]
    %v1345 = vld [vmem:[%s1341 + $0x18] sm:$0xff]
    %s1346 = scalar_lea.vmem [#allocation19], 2
    %v1347 = vld [vmem:[%s1346] sm:$0x1]
    %v1349 = vlaneseq
    %v1350 = vshrl.u32 %v1349, 7
    %v1351 = vsub.s32 0, %v1350
    %v1352 = vrot.slane %v1347, %v1351
    %1354 = vmatprep.subr.mxu0 0.0
    %1355 = vmatpush1.msra.mxu0 %v1342
    %1356 = vmatprep.subr.mxu0 0.0
    %1357 = vmatpush1.msra.mxu0 %v1343
    %1358 = vmatprep.subr.mxu0 0.0
    %1359 = vmatpush1.msra.mxu0 %v1344
    %1360 = vmatprep.subr.mxu0 0.0
    %1361 = vmatpush1.msra.mxu0 %v1345
    %1362 = vmatprep.subr.mxu0 0.0
    %1363 = vmatpush1.msra.mxu0 0.0
    %1364 = vmatprep.subr.mxu0 0.0
    %1365 = vmatpush1.msra.mxu0 0.0
    %1366 = vmatprep.subr.mxu0 0.0
    %1367 = vmatpush1.msra.mxu0 0.0
    %1368 = vmatprep.subr.mxu0 0.0
    %1369 = vmatpush1.msra.mxu0 0.0
    %1370 = vmatprep.subr.mxu0 0.0
    %1371 = vmatpush1.msra.mxu0 0.0
    %1372 = vmatprep.subr.mxu0 0.0
    %1373 = vmatpush1.msra.mxu0 0.0
    %1374 = vmatprep.subr.mxu0 0.0
    %1375 = vmatpush1.msra.mxu0 0.0
    %1376 = vmatprep.subr.mxu0 0.0
    %1377 = vmatpush1.msra.mxu0 0.0
    %1378 = vmatprep.subr.mxu0 0.0
    %1379 = vmatpush1.msra.mxu0 0.0
    %1380 = vmatprep.subr.mxu0 0.0
    %1381 = vmatpush1.msra.mxu0 0.0
    %1382 = vmatprep.subr.mxu0 0.0
    %1383 = vmatpush1.msra.mxu0 0.0
    %1384 = vmatprep.subr.mxu0 0.0
    %1385 = vmatpush1.msra.mxu0 0.0
    %1386 = vmatprep.subr.mxu0 0.0
    %1387 = vmatpush1.msra.mxu0 0.0
    %1388 = vmatprep.subr.mxu0 0.0
    %1389 = vmatpush1.msra.mxu0 0.0
    %1390 = vmatprep.subr.mxu0 0.0
    %1391 = vmatpush1.msra.mxu0 0.0
    %1392 = vmatprep.subr.mxu0 0.0
    %1393 = vmatpush1.msra.mxu0 0.0
    %1394 = vmatprep.subr.mxu0 0.0
    %1395 = vmatpush1.msra.mxu0 0.0
    %1396 = vmatprep.subr.mxu0 0.0
    %1397 = vmatpush1.msra.mxu0 0.0
    %1398 = vmatprep.subr.mxu0 0.0
    %1399 = vmatpush1.msra.mxu0 0.0
    %1400 = vmatprep.subr.mxu0 0.0
    %1401 = vmatpush1.msra.mxu0 0.0
    %1402 = vmatprep.subr.mxu0 0.0
    %1403 = vmatpush1.msra.mxu0 0.0
    %1404 = vmatprep.subr.mxu0 0.0
    %1405 = vmatpush1.msra.mxu0 0.0
    %1406 = vmatprep.subr.mxu0 0.0
    %1407 = vmatpush1.msra.mxu0 0.0
    %1408 = vmatprep.subr.mxu0 0.0
    %1409 = vmatpush1.msra.mxu0 0.0
    %1410 = vmatprep.subr.mxu0 0.0
    %1411 = vmatpush1.msra.mxu0 0.0
    %1412 = vmatprep.subr.mxu0 0.0
    %1413 = vmatpush1.msra.mxu0 0.0
    %1414 = vmatprep.subr.mxu0 0.0
    %1415 = vmatpush1.msra.mxu0 0.0
    %1416 = vmatprep.subr.mxu0 0.0
    %1417 = vmatpush1.msra.mxu0 0.0
    %1418 = vmatprep.mubr.f32.mxu0 0.0
    %1419 = vmatmul.mubr.f32.gmra.mrb[0].mxu0 %v965
    %v1420 = vpop.f32.mrb[0].mxu0
    %v1421 = vadd.f32 %v1352, %v1420
    %v1422 = vpop.f32.mrb[0].mxu0
    %1423 = vmatprep.mubr.f32.mxu0 0.0
    %1424 = vmatmul.mubr.f32.gmra.mrb[0].mxu0 %v968
    %v1425 = vpop.f32.mrb[0].mxu0
    %v1426 = vadd.f32 %v1352, %v1425
    %v1427 = vpop.f32.mrb[0].mxu0
    %1428 = vdwg.mxu0
    %s1429 = scalar_lea.vmem [#allocation17], 64
    %v1430 = vld [vmem:[%s1429] sm:$0xff]
    %v1431 = vld [vmem:[%s1429 + $0x8] sm:$0xff]
    %v1432 = vld [vmem:[%s1429 + $0x10] sm:$0xff]
    %v1433 = vld [vmem:[%s1429 + $0x18] sm:$0xff]
    %s1434 = scalar_lea.vmem [#allocation20], 2
    %v1435 = vld [vmem:[%s1434] sm:$0x1]
    %v1437 = vlaneseq
    %v1438 = vshrl.u32 %v1437, 7
    %v1439 = vsub.s32 0, %v1438
    %v1440 = vrot.slane %v1435, %v1439
    %1442 = vmatprep.subr.mxu0 0.0
    %1443 = vmatpush1.msra.mxu0 %v1430
    %1444 = vmatprep.subr.mxu0 0.0
    %1445 = vmatpush1.msra.mxu0 %v1431
    %1446 = vmatprep.subr.mxu0 0.0
    %1447 = vmatpush1.msra.mxu0 %v1432
    %1448 = vmatprep.subr.mxu0 0.0
    %1449 = vmatpush1.msra.mxu0 %v1433
    %1450 = vmatprep.subr.mxu0 0.0
    %1451 = vmatpush1.msra.mxu0 0.0
    %1452 = vmatprep.subr.mxu0 0.0
    %1453 = vmatpush1.msra.mxu0 0.0
    %1454 = vmatprep.subr.mxu0 0.0
    %1455 = vmatpush1.msra.mxu0 0.0
    %1456 = vmatprep.subr.mxu0 0.0
    %1457 = vmatpush1.msra.mxu0 0.0
    %1458 = vmatprep.subr.mxu0 0.0
    %1459 = vmatpush1.msra.mxu0 0.0
    %1460 = vmatprep.subr.mxu0 0.0
    %1461 = vmatpush1.msra.mxu0 0.0
    %1462 = vmatprep.subr.mxu0 0.0
    %1463 = vmatpush1.msra.mxu0 0.0
    %1464 = vmatprep.subr.mxu0 0.0
    %1465 = vmatpush1.msra.mxu0 0.0
    %1466 = vmatprep.subr.mxu0 0.0
    %1467 = vmatpush1.msra.mxu0 0.0
    %1468 = vmatprep.subr.mxu0 0.0
    %1469 = vmatpush1.msra.mxu0 0.0
    %1470 = vmatprep.subr.mxu0 0.0
    %1471 = vmatpush1.msra.mxu0 0.0
    %1472 = vmatprep.subr.mxu0 0.0
    %1473 = vmatpush1.msra.mxu0 0.0
    %1474 = vmatprep.subr.mxu0 0.0
    %1475 = vmatpush1.msra.mxu0 0.0
    %1476 = vmatprep.subr.mxu0 0.0
    %1477 = vmatpush1.msra.mxu0 0.0
    %1478 = vmatprep.subr.mxu0 0.0
    %1479 = vmatpush1.msra.mxu0 0.0
    %1480 = vmatprep.subr.mxu0 0.0
    %1481 = vmatpush1.msra.mxu0 0.0
    %1482 = vmatprep.subr.mxu0 0.0
    %1483 = vmatpush1.msra.mxu0 0.0
    %1484 = vmatprep.subr.mxu0 0.0
    %1485 = vmatpush1.msra.mxu0 0.0
    %1486 = vmatprep.subr.mxu0 0.0
    %1487 = vmatpush1.msra.mxu0 0.0
    %1488 = vmatprep.subr.mxu0 0.0
    %1489 = vmatpush1.msra.mxu0 0.0
    %1490 = vmatprep.subr.mxu0 0.0
    %1491 = vmatpush1.msra.mxu0 0.0
    %1492 = vmatprep.subr.mxu0 0.0
    %1493 = vmatpush1.msra.mxu0 0.0
    %1494 = vmatprep.subr.mxu0 0.0
    %1495 = vmatpush1.msra.mxu0 0.0
    %1496 = vmatprep.subr.mxu0 0.0
    %1497 = vmatpush1.msra.mxu0 0.0
    %1498 = vmatprep.subr.mxu0 0.0
    %1499 = vmatpush1.msra.mxu0 0.0
    %1500 = vmatprep.subr.mxu0 0.0
    %1501 = vmatpush1.msra.mxu0 0.0
    %1502 = vmatprep.subr.mxu0 0.0
    %1503 = vmatpush1.msra.mxu0 0.0
    %1504 = vmatprep.subr.mxu0 0.0
    %1505 = vmatpush1.msra.mxu0 0.0
    %1506 = vmatprep.mubr.f32.mxu0 0.0
    %1507 = vmatmul.mubr.f32.gmra.mrb[0].mxu0 %v1057
    %v1508 = vpop.f32.mrb[0].mxu0
    %v1509 = vadd.f32 %v1440, %v1508
    %v1510 = vpop.f32.mrb[0].mxu0
    %1511 = vmatprep.mubr.f32.mxu0 0.0
    %1512 = vmatmul.mubr.f32.gmra.mrb[0].mxu0 %v1060
    %v1513 = vpop.f32.mrb[0].mxu0
    %v1514 = vadd.f32 %v1440, %v1513
    %v1515 = vpop.f32.mrb[0].mxu0
    %1516 = vdwg.mxu0
    %v1517 = vmul.f32 %v1148, %v1509
    %v1518 = vmul.f32 %v1150, %v1514
    %v1519 = vadd.f32 %v1421, %v1517
    %v1520 = vadd.f32 %v1426, %v1518
    %v1521 = vtanh.pop %v1519
    %v1522 = vtanh.pop %v1520
    %v1523 = vsub.f32 1.0, %v1338
    %v1524 = vsub.f32 1.0, %v1340
    %v1525 = vmul.f32 %v1523, %v1521
    %v1526 = vmul.f32 %v1524, %v1522
    %v1527 = vmul.f32 %v1338, %v417
    %v1528 = vmul.f32 %v1340, %v418
    %v1529 = vadd.f32 %v1525, %v1527
    %v1530 = vadd.f32 %v1526, %v1528
    %vm1531 = vcmp.ge.f32.partialorder %v1529, 0.0
    %vm1532 = vcmp.ge.f32.partialorder %v1530, 0.0
    %v1533 = vmul.f32 %v1529, 0.01
    %v1534 = vmul.f32 %v1530, 0.01
    %v1535 = vsel %vm1531, %v1529, %v1533
    %v1536 = vsel %vm1532, %v1530, %v1534
    %s1537 = scalar_lea.vmem [#allocation5], 8
    %v1538 = vld [vmem:[%s1537] sm:$0x3f]
    %s1539 = scalar_lea.vmem [#allocation7], 1
    %v1540 = vld [vmem:[%s1539] sm:$0x1]
    %v1542 = vlaneseq
    %v1543 = vshrl.u32 %v1542, 7
    %v1544 = vsub.s32 0, %v1543
    %v1545 = vrot.slane %v1540, %v1544
    %v1548 = vsel %vm460, %v1538, 0
    %1550 = vmatprep.subr.mxu0 0.0
    %1551 = vmatpush1.msra.mxu0 %v1548
    %1552 = vmatprep.subr.mxu0 0.0
    %1553 = vmatpush1.msra.mxu0 0.0
    %1554 = vmatprep.subr.mxu0 0.0
    %1555 = vmatpush1.msra.mxu0 0.0
    %1556 = vmatprep.subr.mxu0 0.0
    %1557 = vmatpush1.msra.mxu0 0.0
    %1558 = vmatprep.subr.mxu0 0.0
    %1559 = vmatpush1.msra.mxu0 0.0
    %1560 = vmatprep.subr.mxu0 0.0
    %1561 = vmatpush1.msra.mxu0 0.0
    %1562 = vmatprep.subr.mxu0 0.0
    %1563 = vmatpush1.msra.mxu0 0.0
    %1564 = vmatprep.subr.mxu0 0.0
    %1565 = vmatpush1.msra.mxu0 0.0
    %1566 = vmatprep.subr.mxu0 0.0
    %1567 = vmatpush1.msra.mxu0 0.0
    %1568 = vmatprep.subr.mxu0 0.0
    %1569 = vmatpush1.msra.mxu0 0.0
    %1570 = vmatprep.subr.mxu0 0.0
    %1571 = vmatpush1.msra.mxu0 0.0
    %1572 = vmatprep.subr.mxu0 0.0
    %1573 = vmatpush1.msra.mxu0 0.0
    %1574 = vmatprep.subr.mxu0 0.0
    %1575 = vmatpush1.msra.mxu0 0.0
    %1576 = vmatprep.subr.mxu0 0.0
    %1577 = vmatpush1.msra.mxu0 0.0
    %1578 = vmatprep.subr.mxu0 0.0
    %1579 = vmatpush1.msra.mxu0 0.0
    %1580 = vmatprep.subr.mxu0 0.0
    %1581 = vmatpush1.msra.mxu0 0.0
    %1582 = vmatprep.subr.mxu0 0.0
    %1583 = vmatpush1.msra.mxu0 0.0
    %1584 = vmatprep.subr.mxu0 0.0
    %1585 = vmatpush1.msra.mxu0 0.0
    %1586 = vmatprep.subr.mxu0 0.0
    %1587 = vmatpush1.msra.mxu0 0.0
    %1588 = vmatprep.subr.mxu0 0.0
    %1589 = vmatpush1.msra.mxu0 0.0
    %1590 = vmatprep.subr.mxu0 0.0
    %1591 = vmatpush1.msra.mxu0 0.0
    %1592 = vmatprep.subr.mxu0 0.0
    %1593 = vmatpush1.msra.mxu0 0.0
    %1594 = vmatprep.subr.mxu0 0.0
    %1595 = vmatpush1.msra.mxu0 0.0
    %1596 = vmatprep.subr.mxu0 0.0
    %1597 = vmatpush1.msra.mxu0 0.0
    %1598 = vmatprep.subr.mxu0 0.0
    %1599 = vmatpush1.msra.mxu0 0.0
    %1600 = vmatprep.subr.mxu0 0.0
    %1601 = vmatpush1.msra.mxu0 0.0
    %1602 = vmatprep.subr.mxu0 0.0
    %1603 = vmatpush1.msra.mxu0 0.0
    %1604 = vmatprep.subr.mxu0 0.0
    %1605 = vmatpush1.msra.mxu0 0.0
    %1606 = vmatprep.subr.mxu0 0.0
    %1607 = vmatpush1.msra.mxu0 0.0
    %1608 = vmatprep.subr.mxu0 0.0
    %1609 = vmatpush1.msra.mxu0 0.0
    %1610 = vmatprep.subr.mxu0 0.0
    %1611 = vmatpush1.msra.mxu0 0.0
    %1612 = vmatprep.subr.mxu0 0.0
    %1613 = vmatpush1.msra.mxu0 0.0
    %1614 = vmatprep.mubr.f32.mxu0 0.0
    %1615 = vmatmul.mubr.f32.gmra.mrb[0].mxu0 %v449
    %v1616 = vpop.f32.mrb[0].mxu0
    %v1617 = vadd.f32 %v1545, %v1616
    %v1618 = vpop.f32.mrb[0].mxu0
    %1619 = vmatprep.mubr.f32.mxu0 0.0
    %1620 = vmatmul.mubr.f32.gmra.mrb[0].mxu0 %v452
    %v1621 = vpop.f32.mrb[0].mxu0
    %v1622 = vadd.f32 %v1545, %v1621
    %v1623 = vpop.f32.mrb[0].mxu0
    %1624 = vmatprep.mubr.f32.mxu0 0.0
    %1625 = vmatmul.mubr.f32.gmra.mrb[0].mxu0 %v455
    %v1626 = vpop.f32.mrb[0].mxu0
    %v1627 = vadd.f32 %v1545, %v1626
    %v1628 = vpop.f32.mrb[0].mxu0
    %1629 = vmatprep.mubr.f32.mxu0 0.0
    %1630 = vmatmul.mubr.f32.gmra.mrb[0].mxu0 %v458
    %v1631 = vpop.f32.mrb[0].mxu0
    %v1632 = vadd.f32 %v1545, %v1631
    %v1633 = vpop.f32.mrb[0].mxu0
    %1634 = vdwg.mxu0
    %1635 = vmatprep.subr.mxu0 0.0
    %1636 = vmatpush1.msra.mxu0 %v1535
    %1637 = vmatprep.subr.mxu0 0.0
    %1638 = vmatpush1.msra.mxu0 %v1536
    %1639 = vmatprep.subr.mxu0 0.0
    %1640 = vmatpush1.msra.mxu0 0.0
    %1641 = vmatprep.subr.mxu0 0.0
    %1642 = vmatpush1.msra.mxu0 0.0
    %1643 = vmatprep.subr.mxu0 0.0
    %1644 = vmatpush1.msra.mxu0 0.0
    %1645 = vmatprep.subr.mxu0 0.0
    %1646 = vmatpush1.msra.mxu0 0.0
    %1647 = vmatprep.subr.mxu0 0.0
    %1648 = vmatpush1.msra.mxu0 0.0
    %1649 = vmatprep.subr.mxu0 0.0
    %1650 = vmatpush1.msra.mxu0 0.0
    %1651 = vmatprep.subr.mxu0 0.0
    %1652 = vmatpush1.msra.mxu0 0.0
    %1653 = vmatprep.subr.mxu0 0.0
    %1654 = vmatpush1.msra.mxu0 0.0
    %1655 = vmatprep.subr.mxu0 0.0
    %1656 = vmatpush1.msra.mxu0 0.0
    %1657 = vmatprep.subr.mxu0 0.0
    %1658 = vmatpush1.msra.mxu0 0.0
    %1659 = vmatprep.subr.mxu0 0.0
    %1660 = vmatpush1.msra.mxu0 0.0
    %1661 = vmatprep.subr.mxu0 0.0
    %1662 = vmatpush1.msra.mxu0 0.0
    %1663 = vmatprep.subr.mxu0 0.0
    %1664 = vmatpush1.msra.mxu0 0.0
    %1665 = vmatprep.subr.mxu0 0.0
    %1666 = vmatpush1.msra.mxu0 0.0
    %1667 = vmatprep.subr.mxu0 0.0
    %1668 = vmatpush1.msra.mxu0 0.0
    %1669 = vmatprep.subr.mxu0 0.0
    %1670 = vmatpush1.msra.mxu0 0.0
    %1671 = vmatprep.subr.mxu0 0.0
    %1672 = vmatpush1.msra.mxu0 0.0
    %1673 = vmatprep.subr.mxu0 0.0
    %1674 = vmatpush1.msra.mxu0 0.0
    %1675 = vmatprep.subr.mxu0 0.0
    %1676 = vmatpush1.msra.mxu0 0.0
    %1677 = vmatprep.subr.mxu0 0.0
    %1678 = vmatpush1.msra.mxu0 0.0
    %1679 = vmatprep.subr.mxu0 0.0
    %1680 = vmatpush1.msra.mxu0 0.0
    %1681 = vmatprep.subr.mxu0 0.0
    %1682 = vmatpush1.msra.mxu0 0.0
    %1683 = vmatprep.subr.mxu0 0.0
    %1684 = vmatpush1.msra.mxu0 0.0
    %1685 = vmatprep.subr.mxu0 0.0
    %1686 = vmatpush1.msra.mxu0 0.0
    %1687 = vmatprep.subr.mxu0 0.0
    %1688 = vmatpush1.msra.mxu0 0.0
    %1689 = vmatprep.subr.mxu0 0.0
    %1690 = vmatpush1.msra.mxu0 0.0
    %1691 = vmatprep.subr.mxu0 0.0
    %1692 = vmatpush1.msra.mxu0 0.0
    %1693 = vmatprep.subr.mxu0 0.0
    %1694 = vmatpush1.msra.mxu0 0.0
    %1695 = vmatprep.subr.mxu0 0.0
    %1696 = vmatpush1.msra.mxu0 0.0
    %1697 = vmatprep.subr.mxu0 0.0
    %1698 = vmatpush1.msra.mxu0 0.0
    %1699 = vmatprep.mubr.f32.mxu0 0.0
    %1700 = vmatmul.mubr.f32.gmra.mrb[0].mxu0 %v551
    %v1701 = vpop.f32.mrb[0].mxu0
    %v1702 = vadd.f32 %v1617, %v1701
    %v1703 = vpop.f32.mrb[0].mxu0
    %1704 = vmatprep.mubr.f32.mxu0 0.0
    %1705 = vmatmul.mubr.f32.gmra.mrb[0].mxu0 %v554
    %v1706 = vpop.f32.mrb[0].mxu0
    %v1707 = vadd.f32 %v1622, %v1706
    %v1708 = vpop.f32.mrb[0].mxu0
    %1709 = vmatprep.mubr.f32.mxu0 0.0
    %1710 = vmatmul.mubr.f32.gmra.mrb[0].mxu0 %v557
    %v1711 = vpop.f32.mrb[0].mxu0
    %v1712 = vadd.f32 %v1627, %v1711
    %v1713 = vpop.f32.mrb[0].mxu0
    %1714 = vmatprep.mubr.f32.mxu0 0.0
    %1715 = vmatmul.mubr.f32.gmra.mrb[0].mxu0 %v560
    %v1716 = vpop.f32.mrb[0].mxu0
    %v1717 = vadd.f32 %v1632, %v1716
    %v1718 = vpop.f32.mrb[0].mxu0
    %1719 = vdwg.mxu0
    %v1720 = vmax.f32 %v1702, 0.0
    %v1721 = vmax.f32 %v1707, 0.0
    %v1722 = vmax.f32 %v1712, 0.0
    %v1723 = vmax.f32 %v1717, 0.0
    %1724 = vmatprep.subr.mxu0 0.0
    %1725 = vmatpush1.msra.mxu0 %v1720
    %1726 = vmatprep.subr.mxu0 0.0
    %1727 = vmatpush1.msra.mxu0 %v1721
    %1728 = vmatprep.subr.mxu0 0.0
    %1729 = vmatpush1.msra.mxu0 %v1722
    %1730 = vmatprep.subr.mxu0 0.0
    %1731 = vmatpush1.msra.mxu0 %v1723
    %1732 = vmatprep.subr.mxu0 0.0
    %1733 = vmatpush1.msra.mxu0 0.0
    %1734 = vmatprep.subr.mxu0 0.0
    %1735 = vmatpush1.msra.mxu0 0.0
    %1736 = vmatprep.subr.mxu0 0.0
    %1737 = vmatpush1.msra.mxu0 0.0
    %1738 = vmatprep.subr.mxu0 0.0
    %1739 = vmatpush1.msra.mxu0 0.0
    %1740 = vmatprep.subr.mxu0 0.0
    %1741 = vmatpush1.msra.mxu0 0.0
    %1742 = vmatprep.subr.mxu0 0.0
    %1743 = vmatpush1.msra.mxu0 0.0
    %1744 = vmatprep.subr.mxu0 0.0
    %1745 = vmatpush1.msra.mxu0 0.0
    %1746 = vmatprep.subr.mxu0 0.0
    %1747 = vmatpush1.msra.mxu0 0.0
    %1748 = vmatprep.subr.mxu0 0.0
    %1749 = vmatpush1.msra.mxu0 0.0
    %1750 = vmatprep.subr.mxu0 0.0
    %1751 = vmatpush1.msra.mxu0 0.0
    %1752 = vmatprep.subr.mxu0 0.0
    %1753 = vmatpush1.msra.mxu0 0.0
    %1754 = vmatprep.subr.mxu0 0.0
    %1755 = vmatpush1.msra.mxu0 0.0
    %1756 = vmatprep.subr.mxu0 0.0
    %1757 = vmatpush1.msra.mxu0 0.0
    %1758 = vmatprep.subr.mxu0 0.0
    %1759 = vmatpush1.msra.mxu0 0.0
    %1760 = vmatprep.subr.mxu0 0.0
    %1761 = vmatpush1.msra.mxu0 0.0
    %1762 = vmatprep.subr.mxu0 0.0
    %1763 = vmatpush1.msra.mxu0 0.0
    %1764 = vmatprep.subr.mxu0 0.0
    %1765 = vmatpush1.msra.mxu0 0.0
    %1766 = vmatprep.subr.mxu0 0.0
    %1767 = vmatpush1.msra.mxu0 0.0
    %1768 = vmatprep.subr.mxu0 0.0
    %1769 = vmatpush1.msra.mxu0 0.0
    %1770 = vmatprep.subr.mxu0 0.0
    %1771 = vmatpush1.msra.mxu0 0.0
    %1772 = vmatprep.subr.mxu0 0.0
    %1773 = vmatpush1.msra.mxu0 0.0
    %1774 = vmatprep.subr.mxu0 0.0
    %1775 = vmatpush1.msra.mxu0 0.0
    %1776 = vmatprep.subr.mxu0 0.0
    %1777 = vmatpush1.msra.mxu0 0.0
    %1778 = vmatprep.subr.mxu0 0.0
    %1779 = vmatpush1.msra.mxu0 0.0
    %1780 = vmatprep.subr.mxu0 0.0
    %1781 = vmatpush1.msra.mxu0 0.0
    %1782 = vmatprep.subr.mxu0 0.0
    %1783 = vmatpush1.msra.mxu0 0.0
    %1784 = vmatprep.subr.mxu0 0.0
    %1785 = vmatpush1.msra.mxu0 0.0
    %1786 = vmatprep.subr.mxu0 0.0
    %1787 = vmatpush1.msra.mxu0 0.0
    %1788 = vmatprep.mubr.f32.mxu0 0.0
    %1789 = vmatmul.mubr.f32.gmra.mrb[0].mxu0 %v653
    %v1790 = vpop.f32.mrb[0].mxu0
    %v1791 = vadd.f32 0.0, %v1790
    %v1792 = vpop.f32.mrb[0].mxu0
    %1793 = vmatprep.mubr.f32.mxu0 0.0
    %1794 = vmatmul.mubr.f32.gmra.mrb[0].mxu0 %v656
    %v1795 = vpop.f32.mrb[0].mxu0
    %v1796 = vadd.f32 0.0, %v1795
    %v1797 = vpop.f32.mrb[0].mxu0
    %1798 = vdwg.mxu0
    %v1799 = vadd.f32 %v1535, %v1791
    %v1800 = vadd.f32 %v1536, %v1796
    %s1801 = scalar_lea.vmem %s15, 32
    %v1802 = vld [vmem:[%s1801] sm:$0xff]
    %v1803 = vld [vmem:[%s1801 + $0x8] sm:$0xff]
    %v1804 = vld [vmem:[%s1801 + $0x10] sm:$0xff]
    %v1805 = vld [vmem:[%s1801 + $0x18] sm:$0xff]
    %s1806 = scalar_lea.vmem [#allocation8], 1
    %v1807 = vld [vmem:[%s1806] sm:$0x1]
    %v1809 = vlaneseq
    %v1810 = vshrl.u32 %v1809, 7
    %v1811 = vsub.s32 0, %v1810
    %v1812 = vrot.slane %v1807, %v1811
    %v1815 = vsel %vm651, %v1799, 0
    %v1818 = vsel %vm651, %v1800, 0
    %1820 = vmatprep.subr.mxu0 0.0
    %1821 = vmatpush1.msra.mxu0 %v1802
    %1822 = vmatprep.subr.mxu0 0.0
    %1823 = vmatpush1.msra.mxu0 %v1803
    %1824 = vmatprep.subr.mxu0 0.0
    %1825 = vmatpush1.msra.mxu0 %v1804
    %1826 = vmatprep.subr.mxu0 0.0
    %1827 = vmatpush1.msra.mxu0 %v1805
    %1828 = vmatprep.subr.mxu0 0.0
    %1829 = vmatpush1.msra.mxu0 0.0
    %1830 = vmatprep.subr.mxu0 0.0
    %1831 = vmatpush1.msra.mxu0 0.0
    %1832 = vmatprep.subr.mxu0 0.0
    %1833 = vmatpush1.msra.mxu0 0.0
    %1834 = vmatprep.subr.mxu0 0.0
    %1835 = vmatpush1.msra.mxu0 0.0
    %1836 = vmatprep.subr.mxu0 0.0
    %1837 = vmatpush1.msra.mxu0 0.0
    %1838 = vmatprep.subr.mxu0 0.0
    %1839 = vmatpush1.msra.mxu0 0.0
    %1840 = vmatprep.subr.mxu0 0.0
    %1841 = vmatpush1.msra.mxu0 0.0
    %1842 = vmatprep.subr.mxu0 0.0
    %1843 = vmatpush1.msra.mxu0 0.0
    %1844 = vmatprep.subr.mxu0 0.0
    %1845 = vmatpush1.msra.mxu0 0.0
    %1846 = vmatprep.subr.mxu0 0.0
    %1847 = vmatpush1.msra.mxu0 0.0
    %1848 = vmatprep.subr.mxu0 0.0
    %1849 = vmatpush1.msra.mxu0 0.0
    %1850 = vmatprep.subr.mxu0 0.0
    %1851 = vmatpush1.msra.mxu0 0.0
    %1852 = vmatprep.subr.mxu0 0.0
    %1853 = vmatpush1.msra.mxu0 0.0
    %1854 = vmatprep.subr.mxu0 0.0
    %1855 = vmatpush1.msra.mxu0 0.0
    %1856 = vmatprep.subr.mxu0 0.0
    %1857 = vmatpush1.msra.mxu0 0.0
    %1858 = vmatprep.subr.mxu0 0.0
    %1859 = vmatpush1.msra.mxu0 0.0
    %1860 = vmatprep.subr.mxu0 0.0
    %1861 = vmatpush1.msra.mxu0 0.0
    %1862 = vmatprep.subr.mxu0 0.0
    %1863 = vmatpush1.msra.mxu0 0.0
    %1864 = vmatprep.subr.mxu0 0.0
    %1865 = vmatpush1.msra.mxu0 0.0
    %1866 = vmatprep.subr.mxu0 0.0
    %1867 = vmatpush1.msra.mxu0 0.0
    %1868 = vmatprep.subr.mxu0 0.0
    %1869 = vmatpush1.msra.mxu0 0.0
    %1870 = vmatprep.subr.mxu0 0.0
    %1871 = vmatpush1.msra.mxu0 0.0
    %1872 = vmatprep.subr.mxu0 0.0
    %1873 = vmatpush1.msra.mxu0 0.0
    %1874 = vmatprep.subr.mxu0 0.0
    %1875 = vmatpush1.msra.mxu0 0.0
    %1876 = vmatprep.subr.mxu0 0.0
    %1877 = vmatpush1.msra.mxu0 0.0
    %1878 = vmatprep.subr.mxu0 0.0
    %1879 = vmatpush1.msra.mxu0 0.0
    %1880 = vmatprep.subr.mxu0 0.0
    %1881 = vmatpush1.msra.mxu0 0.0
    %1882 = vmatprep.subr.mxu0 0.0
    %1883 = vmatpush1.msra.mxu0 0.0
    %1884 = vmatprep.mubr.f32.mxu0 0.0
    %1885 = vmatmul.mubr.f32.gmra.mrb[0].mxu0 %v1815
    %v1886 = vpop.f32.mrb[0].mxu0
    %v1887 = vadd.f32 %v1812, %v1886
    %v1888 = vpop.f32.mrb[0].mxu0
    %1889 = vmatprep.mubr.f32.mxu0 0.0
    %1890 = vmatmul.mubr.f32.gmra.mrb[0].mxu0 %v1818
    %v1891 = vpop.f32.mrb[0].mxu0
    %v1892 = vadd.f32 %v1812, %v1891
    %v1893 = vpop.f32.mrb[0].mxu0
    %1894 = vdwg.mxu0
    %s1895 = scalar_lea.vmem [#allocation10], 1
    %v1896 = vld [vmem:[%s1895] sm:$0x1]
    %v1898 = vlaneseq
    %v1899 = vshrl.u32 %v1898, 7
    %v1900 = vsub.s32 0, %v1899
    %v1901 = vrot.slane %v1896, %v1900
    %v1903 = vmul.f32 %v1887, %v1901
    %v1904 = vmul.f32 %v1892, %v1901
    %s1905 = scalar_lea.vmem [#allocation11], 1
    %v1906 = vld [vmem:[%s1905] sm:$0x1]
    %v1908 = vlaneseq
    %v1909 = vshrl.u32 %v1908, 7
    %v1910 = vsub.s32 0, %v1909
    %v1911 = vrot.slane %v1906, %v1910
    %v1913 = vadd.f32 %v1903, %v1911
    %v1914 = vadd.f32 %v1904, %v1911
    %vm1915 = vcmp.ge.f32.partialorder %v1913, 0.0
    %vm1916 = vcmp.ge.f32.partialorder %v1914, 0.0
    %v1917 = vmul.f32 %v1913, 0.01
    %v1918 = vmul.f32 %v1914, 0.01
    %v1919 = vsel %vm1915, %v1913, %v1917
    %v1920 = vsel %vm1916, %v1914, %v1918
    %s1921 = scalar_lea.vmem [#allocation13], 32
    %v1922 = vld [vmem:[%s1921] sm:$0xff]
    %v1923 = vld [vmem:[%s1921 + $0x8] sm:$0xff]
    %v1924 = vld [vmem:[%s1921 + $0x10] sm:$0xff]
    %v1925 = vld [vmem:[%s1921 + $0x18] sm:$0xff]
    %s1926 = scalar_lea.vmem [#allocation14], 1
    %v1927 = vld [vmem:[%s1926] sm:$0x1]
    %v1929 = vlaneseq
    %v1930 = vshrl.u32 %v1929, 7
    %v1931 = vsub.s32 0, %v1930
    %v1932 = vrot.slane %v1927, %v1931
    %v1935 = vsel %vm651, %v1919, 0
    %v1938 = vsel %vm651, %v1920, 0
    %1940 = vmatprep.subr.mxu0 0.0
    %1941 = vmatpush1.msra.mxu0 %v1922
    %1942 = vmatprep.subr.mxu0 0.0
    %1943 = vmatpush1.msra.mxu0 %v1923
    %1944 = vmatprep.subr.mxu0 0.0
    %1945 = vmatpush1.msra.mxu0 %v1924
    %1946 = vmatprep.subr.mxu0 0.0
    %1947 = vmatpush1.msra.mxu0 %v1925
    %1948 = vmatprep.subr.mxu0 0.0
    %1949 = vmatpush1.msra.mxu0 0.0
    %1950 = vmatprep.subr.mxu0 0.0
    %1951 = vmatpush1.msra.mxu0 0.0
    %1952 = vmatprep.subr.mxu0 0.0
    %1953 = vmatpush1.msra.mxu0 0.0
    %1954 = vmatprep.subr.mxu0 0.0
    %1955 = vmatpush1.msra.mxu0 0.0
    %1956 = vmatprep.subr.mxu0 0.0
    %1957 = vmatpush1.msra.mxu0 0.0
    %1958 = vmatprep.subr.mxu0 0.0
    %1959 = vmatpush1.msra.mxu0 0.0
    %1960 = vmatprep.subr.mxu0 0.0
    %1961 = vmatpush1.msra.mxu0 0.0
    %1962 = vmatprep.subr.mxu0 0.0
    %1963 = vmatpush1.msra.mxu0 0.0
    %1964 = vmatprep.subr.mxu0 0.0
    %1965 = vmatpush1.msra.mxu0 0.0
    %1966 = vmatprep.subr.mxu0 0.0
    %1967 = vmatpush1.msra.mxu0 0.0
    %1968 = vmatprep.subr.mxu0 0.0
    %1969 = vmatpush1.msra.mxu0 0.0
    %1970 = vmatprep.subr.mxu0 0.0
    %1971 = vmatpush1.msra.mxu0 0.0
    %1972 = vmatprep.subr.mxu0 0.0
    %1973 = vmatpush1.msra.mxu0 0.0
    %1974 = vmatprep.subr.mxu0 0.0
    %1975 = vmatpush1.msra.mxu0 0.0
    %1976 = vmatprep.subr.mxu0 0.0
    %1977 = vmatpush1.msra.mxu0 0.0
    %1978 = vmatprep.subr.mxu0 0.0
    %1979 = vmatpush1.msra.mxu0 0.0
    %1980 = vmatprep.subr.mxu0 0.0
    %1981 = vmatpush1.msra.mxu0 0.0
    %1982 = vmatprep.subr.mxu0 0.0
    %1983 = vmatpush1.msra.mxu0 0.0
    %1984 = vmatprep.subr.mxu0 0.0
    %1985 = vmatpush1.msra.mxu0 0.0
    %1986 = vmatprep.subr.mxu0 0.0
    %1987 = vmatpush1.msra.mxu0 0.0
    %1988 = vmatprep.subr.mxu0 0.0
    %1989 = vmatpush1.msra.mxu0 0.0
    %1990 = vmatprep.subr.mxu0 0.0
    %1991 = vmatpush1.msra.mxu0 0.0
    %1992 = vmatprep.subr.mxu0 0.0
    %1993 = vmatpush1.msra.mxu0 0.0
    %1994 = vmatprep.subr.mxu0 0.0
    %1995 = vmatpush1.msra.mxu0 0.0
    %1996 = vmatprep.subr.mxu0 0.0
    %1997 = vmatpush1.msra.mxu0 0.0
    %1998 = vmatprep.subr.mxu0 0.0
    %1999 = vmatpush1.msra.mxu0 0.0
    %2000 = vmatprep.subr.mxu0 0.0
    %2001 = vmatpush1.msra.mxu0 0.0
    %2002 = vmatprep.subr.mxu0 0.0
    %2003 = vmatpush1.msra.mxu0 0.0
    %2004 = vmatprep.mubr.f32.mxu0 0.0
    %2005 = vmatmul.mubr.f32.gmra.mrb[0].mxu0 %v1935
    %v2006 = vpop.f32.mrb[0].mxu0
    %v2007 = vadd.f32 %v1932, %v2006
    %v2008 = vpop.f32.mrb[0].mxu0
    %2009 = vmatprep.mubr.f32.mxu0 0.0
    %2010 = vmatmul.mubr.f32.gmra.mrb[0].mxu0 %v1938
    %v2011 = vpop.f32.mrb[0].mxu0
    %v2012 = vadd.f32 %v1932, %v2011
    %v2013 = vpop.f32.mrb[0].mxu0
    %2014 = vdwg.mxu0
    %vm2015 = vcmp.gt.f32.partialorder %v2007, 0.0
    %vm2016 = vcmp.gt.f32.partialorder %v2012, 0.0
    %v2017 = vmul.f32 %v2007, 1.442695
    %v2018 = vpow.pop %v2017
    %v2019 = vmul.f32 %v2012, 1.442695
    %v2020 = vpow.pop %v2019
    %v2021 = vsub.f32 %v2018, 1.0
    %v2022 = vsub.f32 %v2020, 1.0
    %v2023 = vsel %vm2015, %v2007, %v2021
    %v2024 = vsel %vm2016, %v2012, %v2022
    %s2025 = scalar_lea.vmem [#allocation16], 96
    %v2026 = vld [vmem:[%s2025] sm:$0xff]
    %v2027 = vld [vmem:[%s2025 + $0x8] sm:$0xff]
    %v2028 = vld [vmem:[%s2025 + $0x10] sm:$0xff]
    %v2029 = vld [vmem:[%s2025 + $0x18] sm:$0xff]
    %s2030 = scalar_lea.vmem [#allocation19], 3
    %v2031 = vld [vmem:[%s2030] sm:$0x1]
    %v2033 = vlaneseq
    %v2034 = vshrl.u32 %v2033, 7
    %v2035 = vsub.s32 0, %v2034
    %v2036 = vrot.slane %v2031, %v2035
    %v2039 = vsel %vm651, %v2023, 0
    %v2042 = vsel %vm651, %v2024, 0
    %2044 = vmatprep.subr.mxu0 0.0
    %2045 = vmatpush1.msra.mxu0 %v2026
    %2046 = vmatprep.subr.mxu0 0.0
    %2047 = vmatpush1.msra.mxu0 %v2027
    %2048 = vmatprep.subr.mxu0 0.0
    %2049 = vmatpush1.msra.mxu0 %v2028
    %2050 = vmatprep.subr.mxu0 0.0
    %2051 = vmatpush1.msra.mxu0 %v2029
    %2052 = vmatprep.subr.mxu0 0.0
    %2053 = vmatpush1.msra.mxu0 0.0
    %2054 = vmatprep.subr.mxu0 0.0
    %2055 = vmatpush1.msra.mxu0 0.0
    %2056 = vmatprep.subr.mxu0 0.0
    %2057 = vmatpush1.msra.mxu0 0.0
    %2058 = vmatprep.subr.mxu0 0.0
    %2059 = vmatpush1.msra.mxu0 0.0
    %2060 = vmatprep.subr.mxu0 0.0
    %2061 = vmatpush1.msra.mxu0 0.0
    %2062 = vmatprep.subr.mxu0 0.0
    %2063 = vmatpush1.msra.mxu0 0.0
    %2064 = vmatprep.subr.mxu0 0.0
    %2065 = vmatpush1.msra.mxu0 0.0
    %2066 = vmatprep.subr.mxu0 0.0
    %2067 = vmatpush1.msra.mxu0 0.0
    %2068 = vmatprep.subr.mxu0 0.0
    %2069 = vmatpush1.msra.mxu0 0.0
    %2070 = vmatprep.subr.mxu0 0.0
    %2071 = vmatpush1.msra.mxu0 0.0
    %2072 = vmatprep.subr.mxu0 0.0
    %2073 = vmatpush1.msra.mxu0 0.0
    %2074 = vmatprep.subr.mxu0 0.0
    %2075 = vmatpush1.msra.mxu0 0.0
    %2076 = vmatprep.subr.mxu0 0.0
    %2077 = vmatpush1.msra.mxu0 0.0
    %2078 = vmatprep.subr.mxu0 0.0
    %2079 = vmatpush1.msra.mxu0 0.0
    %2080 = vmatprep.subr.mxu0 0.0
    %2081 = vmatpush1.msra.mxu0 0.0
    %2082 = vmatprep.subr.mxu0 0.0
    %2083 = vmatpush1.msra.mxu0 0.0
    %2084 = vmatprep.subr.mxu0 0.0
    %2085 = vmatpush1.msra.mxu0 0.0
    %2086 = vmatprep.subr.mxu0 0.0
    %2087 = vmatpush1.msra.mxu0 0.0
    %2088 = vmatprep.subr.mxu0 0.0
    %2089 = vmatpush1.msra.mxu0 0.0
    %2090 = vmatprep.subr.mxu0 0.0
    %2091 = vmatpush1.msra.mxu0 0.0
    %2092 = vmatprep.subr.mxu0 0.0
    %2093 = vmatpush1.msra.mxu0 0.0
    %2094 = vmatprep.subr.mxu0 0.0
    %2095 = vmatpush1.msra.mxu0 0.0
    %2096 = vmatprep.subr.mxu0 0.0
    %2097 = vmatpush1.msra.mxu0 0.0
    %2098 = vmatprep.subr.mxu0 0.0
    %2099 = vmatpush1.msra.mxu0 0.0
    %2100 = vmatprep.subr.mxu0 0.0
    %2101 = vmatpush1.msra.mxu0 0.0
    %2102 = vmatprep.subr.mxu0 0.0
    %2103 = vmatpush1.msra.mxu0 0.0
    %2104 = vmatprep.subr.mxu0 0.0
    %2105 = vmatpush1.msra.mxu0 0.0
    %2106 = vmatprep.subr.mxu0 0.0
    %2107 = vmatpush1.msra.mxu0 0.0
    %2108 = vmatprep.mubr.f32.mxu0 0.0
    %2109 = vmatmul.mubr.f32.gmra.mrb[0].mxu0 %v2039
    %v2110 = vpop.f32.mrb[0].mxu0
    %v2111 = vadd.f32 %v2036, %v2110
    %v2112 = vpop.f32.mrb[0].mxu0
    %2113 = vmatprep.mubr.f32.mxu0 0.0
    %2114 = vmatmul.mubr.f32.gmra.mrb[0].mxu0 %v2042
    %v2115 = vpop.f32.mrb[0].mxu0
    %v2116 = vadd.f32 %v2036, %v2115
    %v2117 = vpop.f32.mrb[0].mxu0
    %2118 = vdwg.mxu0
    %s2119 = scalar_lea.vmem [#allocation17], 96
    %v2120 = vld [vmem:[%s2119] sm:$0xff]
    %v2121 = vld [vmem:[%s2119 + $0x8] sm:$0xff]
    %v2122 = vld [vmem:[%s2119 + $0x10] sm:$0xff]
    %v2123 = vld [vmem:[%s2119 + $0x18] sm:$0xff]
    %s2124 = scalar_lea.vmem [#allocation20], 3
    %v2125 = vld [vmem:[%s2124] sm:$0x1]
    %v2127 = vlaneseq
    %v2128 = vshrl.u32 %v2127, 7
    %v2129 = vsub.s32 0, %v2128
    %v2130 = vrot.slane %v2125, %v2129
    %v2133 = vsel %vm651, %v1535, 0
    %v2136 = vsel %vm651, %v1536, 0
    %2138 = vmatprep.subr.mxu0 0.0
    %2139 = vmatpush1.msra.mxu0 %v2120
    %2140 = vmatprep.subr.mxu0 0.0
    %2141 = vmatpush1.msra.mxu0 %v2121
    %2142 = vmatprep.subr.mxu0 0.0
    %2143 = vmatpush1.msra.mxu0 %v2122
    %2144 = vmatprep.subr.mxu0 0.0
    %2145 = vmatpush1.msra.mxu0 %v2123
    %2146 = vmatprep.subr.mxu0 0.0
    %2147 = vmatpush1.msra.mxu0 0.0
    %2148 = vmatprep.subr.mxu0 0.0
    %2149 = vmatpush1.msra.mxu0 0.0
    %2150 = vmatprep.subr.mxu0 0.0
    %2151 = vmatpush1.msra.mxu0 0.0
    %2152 = vmatprep.subr.mxu0 0.0
    %2153 = vmatpush1.msra.mxu0 0.0
    %2154 = vmatprep.subr.mxu0 0.0
    %2155 = vmatpush1.msra.mxu0 0.0
    %2156 = vmatprep.subr.mxu0 0.0
    %2157 = vmatpush1.msra.mxu0 0.0
    %2158 = vmatprep.subr.mxu0 0.0
    %2159 = vmatpush1.msra.mxu0 0.0
    %2160 = vmatprep.subr.mxu0 0.0
    %2161 = vmatpush1.msra.mxu0 0.0
    %2162 = vmatprep.subr.mxu0 0.0
    %2163 = vmatpush1.msra.mxu0 0.0
    %2164 = vmatprep.subr.mxu0 0.0
    %2165 = vmatpush1.msra.mxu0 0.0
    %2166 = vmatprep.subr.mxu0 0.0
    %2167 = vmatpush1.msra.mxu0 0.0
    %2168 = vmatprep.subr.mxu0 0.0
    %2169 = vmatpush1.msra.mxu0 0.0
    %2170 = vmatprep.subr.mxu0 0.0
    %2171 = vmatpush1.msra.mxu0 0.0
    %2172 = vmatprep.subr.mxu0 0.0
    %2173 = vmatpush1.msra.mxu0 0.0
    %2174 = vmatprep.subr.mxu0 0.0
    %2175 = vmatpush1.msra.mxu0 0.0
    %2176 = vmatprep.subr.mxu0 0.0
    %2177 = vmatpush1.msra.mxu0 0.0
    %2178 = vmatprep.subr.mxu0 0.0
    %2179 = vmatpush1.msra.mxu0 0.0
    %2180 = vmatprep.subr.mxu0 0.0
    %2181 = vmatpush1.msra.mxu0 0.0
    %2182 = vmatprep.subr.mxu0 0.0
    %2183 = vmatpush1.msra.mxu0 0.0
    %2184 = vmatprep.subr.mxu0 0.0
    %2185 = vmatpush1.msra.mxu0 0.0
    %2186 = vmatprep.subr.mxu0 0.0
    %2187 = vmatpush1.msra.mxu0 0.0
    %2188 = vmatprep.subr.mxu0 0.0
    %2189 = vmatpush1.msra.mxu0 0.0
    %2190 = vmatprep.subr.mxu0 0.0
    %2191 = vmatpush1.msra.mxu0 0.0
    %2192 = vmatprep.subr.mxu0 0.0
    %2193 = vmatpush1.msra.mxu0 0.0
    %2194 = vmatprep.subr.mxu0 0.0
    %2195 = vmatpush1.msra.mxu0 0.0
    %2196 = vmatprep.subr.mxu0 0.0
    %2197 = vmatpush1.msra.mxu0 0.0
    %2198 = vmatprep.subr.mxu0 0.0
    %2199 = vmatpush1.msra.mxu0 0.0
    %2200 = vmatprep.subr.mxu0 0.0
    %2201 = vmatpush1.msra.mxu0 0.0
    %2202 = vmatprep.mubr.f32.mxu0 0.0
    %2203 = vmatmul.mubr.f32.gmra.mrb[0].mxu0 %v2133
    %v2204 = vpop.f32.mrb[0].mxu0
    %v2205 = vadd.f32 %v2130, %v2204
    %v2206 = vpop.f32.mrb[0].mxu0
    %2207 = vmatprep.mubr.f32.mxu0 0.0
    %2208 = vmatmul.mubr.f32.gmra.mrb[0].mxu0 %v2136
    %v2209 = vpop.f32.mrb[0].mxu0
    %v2210 = vadd.f32 %v2130, %v2209
    %v2211 = vpop.f32.mrb[0].mxu0
    %2212 = vdwg.mxu0
    %v2213 = vadd.f32 %v2111, %v2205
    %v2214 = vadd.f32 %v2116, %v2210
    %v2215 = vxor.u32 %v2213, 2147483648
    %v2216 = vxor.u32 %v2214, 2147483648
    %v2217 = vmul.f32 %v2215, 1.442695
    %v2218 = vpow.pop %v2217
    %v2219 = vmul.f32 %v2216, 1.442695
    %v2220 = vpow.pop %v2219
    %v2221 = vadd.f32 %v2218, 1.0
    %v2222 = vadd.f32 %v2220, 1.0
    %v2223 = vrcp.pop %v2221
    %v2224 = vmul.f32 1.0, %v2223
    %v2225 = vrcp.pop %v2222
    %v2226 = vmul.f32 1.0, %v2225
    %s2227 = scalar_lea.vmem [#allocation16], 128
    %v2228 = vld [vmem:[%s2227] sm:$0xff]
    %v2229 = vld [vmem:[%s2227 + $0x8] sm:$0xff]
    %v2230 = vld [vmem:[%s2227 + $0x10] sm:$0xff]
    %v2231 = vld [vmem:[%s2227 + $0x18] sm:$0xff]
    %s2232 = scalar_lea.vmem [#allocation19], 4
    %v2233 = vld [vmem:[%s2232] sm:$0x1]
    %v2235 = vlaneseq
    %v2236 = vshrl.u32 %v2235, 7
    %v2237 = vsub.s32 0, %v2236
    %v2238 = vrot.slane %v2233, %v2237
    %2240 = vmatprep.subr.mxu0 0.0
    %2241 = vmatpush1.msra.mxu0 %v2228
    %2242 = vmatprep.subr.mxu0 0.0
    %2243 = vmatpush1.msra.mxu0 %v2229
    %2244 = vmatprep.subr.mxu0 0.0
    %2245 = vmatpush1.msra.mxu0 %v2230
    %2246 = vmatprep.subr.mxu0 0.0
    %2247 = vmatpush1.msra.mxu0 %v2231
    %2248 = vmatprep.subr.mxu0 0.0
    %2249 = vmatpush1.msra.mxu0 0.0
    %2250 = vmatprep.subr.mxu0 0.0
    %2251 = vmatpush1.msra.mxu0 0.0
    %2252 = vmatprep.subr.mxu0 0.0
    %2253 = vmatpush1.msra.mxu0 0.0
    %2254 = vmatprep.subr.mxu0 0.0
    %2255 = vmatpush1.msra.mxu0 0.0
    %2256 = vmatprep.subr.mxu0 0.0
    %2257 = vmatpush1.msra.mxu0 0.0
    %2258 = vmatprep.subr.mxu0 0.0
    %2259 = vmatpush1.msra.mxu0 0.0
    %2260 = vmatprep.subr.mxu0 0.0
    %2261 = vmatpush1.msra.mxu0 0.0
    %2262 = vmatprep.subr.mxu0 0.0
    %2263 = vmatpush1.msra.mxu0 0.0
    %2264 = vmatprep.subr.mxu0 0.0
    %2265 = vmatpush1.msra.mxu0 0.0
    %2266 = vmatprep.subr.mxu0 0.0
    %2267 = vmatpush1.msra.mxu0 0.0
    %2268 = vmatprep.subr.mxu0 0.0
    %2269 = vmatpush1.msra.mxu0 0.0
    %2270 = vmatprep.subr.mxu0 0.0
    %2271 = vmatpush1.msra.mxu0 0.0
    %2272 = vmatprep.subr.mxu0 0.0
    %2273 = vmatpush1.msra.mxu0 0.0
    %2274 = vmatprep.subr.mxu0 0.0
    %2275 = vmatpush1.msra.mxu0 0.0
    %2276 = vmatprep.subr.mxu0 0.0
    %2277 = vmatpush1.msra.mxu0 0.0
    %2278 = vmatprep.subr.mxu0 0.0
    %2279 = vmatpush1.msra.mxu0 0.0
    %2280 = vmatprep.subr.mxu0 0.0
    %2281 = vmatpush1.msra.mxu0 0.0
    %2282 = vmatprep.subr.mxu0 0.0
    %2283 = vmatpush1.msra.mxu0 0.0
    %2284 = vmatprep.subr.mxu0 0.0
    %2285 = vmatpush1.msra.mxu0 0.0
    %2286 = vmatprep.subr.mxu0 0.0
    %2287 = vmatpush1.msra.mxu0 0.0
    %2288 = vmatprep.subr.mxu0 0.0
    %2289 = vmatpush1.msra.mxu0 0.0
    %2290 = vmatprep.subr.mxu0 0.0
    %2291 = vmatpush1.msra.mxu0 0.0
    %2292 = vmatprep.subr.mxu0 0.0
    %2293 = vmatpush1.msra.mxu0 0.0
    %2294 = vmatprep.subr.mxu0 0.0
    %2295 = vmatpush1.msra.mxu0 0.0
    %2296 = vmatprep.subr.mxu0 0.0
    %2297 = vmatpush1.msra.mxu0 0.0
    %2298 = vmatprep.subr.mxu0 0.0
    %2299 = vmatpush1.msra.mxu0 0.0
    %2300 = vmatprep.subr.mxu0 0.0
    %2301 = vmatpush1.msra.mxu0 0.0
    %2302 = vmatprep.subr.mxu0 0.0
    %2303 = vmatpush1.msra.mxu0 0.0
    %2304 = vmatprep.mubr.f32.mxu0 0.0
    %2305 = vmatmul.mubr.f32.gmra.mrb[0].mxu0 %v2039
    %v2306 = vpop.f32.mrb[0].mxu0
    %v2307 = vadd.f32 %v2238, %v2306
    %v2308 = vpop.f32.mrb[0].mxu0
    %2309 = vmatprep.mubr.f32.mxu0 0.0
    %2310 = vmatmul.mubr.f32.gmra.mrb[0].mxu0 %v2042
    %v2311 = vpop.f32.mrb[0].mxu0
    %v2312 = vadd.f32 %v2238, %v2311
    %v2313 = vpop.f32.mrb[0].mxu0
    %2314 = vdwg.mxu0
    %s2315 = scalar_lea.vmem [#allocation17], 128
    %v2316 = vld [vmem:[%s2315] sm:$0xff]
    %v2317 = vld [vmem:[%s2315 + $0x8] sm:$0xff]
    %v2318 = vld [vmem:[%s2315 + $0x10] sm:$0xff]
    %v2319 = vld [vmem:[%s2315 + $0x18] sm:$0xff]
    %s2320 = scalar_lea.vmem [#allocation20], 4
    %v2321 = vld [vmem:[%s2320] sm:$0x1]
    %v2323 = vlaneseq
    %v2324 = vshrl.u32 %v2323, 7
    %v2325 = vsub.s32 0, %v2324
    %v2326 = vrot.slane %v2321, %v2325
    %2328 = vmatprep.subr.mxu0 0.0
    %2329 = vmatpush1.msra.mxu0 %v2316
    %2330 = vmatprep.subr.mxu0 0.0
    %2331 = vmatpush1.msra.mxu0 %v2317
    %2332 = vmatprep.subr.mxu0 0.0
    %2333 = vmatpush1.msra.mxu0 %v2318
    %2334 = vmatprep.subr.mxu0 0.0
    %2335 = vmatpush1.msra.mxu0 %v2319
    %2336 = vmatprep.subr.mxu0 0.0
    %2337 = vmatpush1.msra.mxu0 0.0
    %2338 = vmatprep.subr.mxu0 0.0
    %2339 = vmatpush1.msra.mxu0 0.0
    %2340 = vmatprep.subr.mxu0 0.0
    %2341 = vmatpush1.msra.mxu0 0.0
    %2342 = vmatprep.subr.mxu0 0.0
    %2343 = vmatpush1.msra.mxu0 0.0
    %2344 = vmatprep.subr.mxu0 0.0
    %2345 = vmatpush1.msra.mxu0 0.0
    %2346 = vmatprep.subr.mxu0 0.0
    %2347 = vmatpush1.msra.mxu0 0.0
    %2348 = vmatprep.subr.mxu0 0.0
    %2349 = vmatpush1.msra.mxu0 0.0
    %2350 = vmatprep.subr.mxu0 0.0
    %2351 = vmatpush1.msra.mxu0 0.0
    %2352 = vmatprep.subr.mxu0 0.0
    %2353 = vmatpush1.msra.mxu0 0.0
    %2354 = vmatprep.subr.mxu0 0.0
    %2355 = vmatpush1.msra.mxu0 0.0
    %2356 = vmatprep.subr.mxu0 0.0
    %2357 = vmatpush1.msra.mxu0 0.0
    %2358 = vmatprep.subr.mxu0 0.0
    %2359 = vmatpush1.msra.mxu0 0.0
    %2360 = vmatprep.subr.mxu0 0.0
    %2361 = vmatpush1.msra.mxu0 0.0
    %2362 = vmatprep.subr.mxu0 0.0
    %2363 = vmatpush1.msra.mxu0 0.0
    %2364 = vmatprep.subr.mxu0 0.0
    %2365 = vmatpush1.msra.mxu0 0.0
    %2366 = vmatprep.subr.mxu0 0.0
    %2367 = vmatpush1.msra.mxu0 0.0
    %2368 = vmatprep.subr.mxu0 0.0
    %2369 = vmatpush1.msra.mxu0 0.0
    %2370 = vmatprep.subr.mxu0 0.0
    %2371 = vmatpush1.msra.mxu0 0.0
    %2372 = vmatprep.subr.mxu0 0.0
    %2373 = vmatpush1.msra.mxu0 0.0
    %2374 = vmatprep.subr.mxu0 0.0
    %2375 = vmatpush1.msra.mxu0 0.0
    %2376 = vmatprep.subr.mxu0 0.0
    %2377 = vmatpush1.msra.mxu0 0.0
    %2378 = vmatprep.subr.mxu0 0.0
    %2379 = vmatpush1.msra.mxu0 0.0
    %2380 = vmatprep.subr.mxu0 0.0
    %2381 = vmatpush1.msra.mxu0 0.0
    %2382 = vmatprep.subr.mxu0 0.0
    %2383 = vmatpush1.msra.mxu0 0.0
    %2384 = vmatprep.subr.mxu0 0.0
    %2385 = vmatpush1.msra.mxu0 0.0
    %2386 = vmatprep.subr.mxu0 0.0
    %2387 = vmatpush1.msra.mxu0 0.0
    %2388 = vmatprep.subr.mxu0 0.0
    %2389 = vmatpush1.msra.mxu0 0.0
    %2390 = vmatprep.subr.mxu0 0.0
    %2391 = vmatpush1.msra.mxu0 0.0
    %2392 = vmatprep.mubr.f32.mxu0 0.0
    %2393 = vmatmul.mubr.f32.gmra.mrb[0].mxu0 %v2133
    %v2394 = vpop.f32.mrb[0].mxu0
    %v2395 = vadd.f32 %v2326, %v2394
    %v2396 = vpop.f32.mrb[0].mxu0
    %2397 = vmatprep.mubr.f32.mxu0 0.0
    %2398 = vmatmul.mubr.f32.gmra.mrb[0].mxu0 %v2136
    %v2399 = vpop.f32.mrb[0].mxu0
    %v2400 = vadd.f32 %v2326, %v2399
    %v2401 = vpop.f32.mrb[0].mxu0
    %2402 = vdwg.mxu0
    %v2403 = vadd.f32 %v2307, %v2395
    %v2404 = vadd.f32 %v2312, %v2400
    %v2405 = vxor.u32 %v2403, 2147483648
    %v2406 = vxor.u32 %v2404, 2147483648
    %v2407 = vmul.f32 %v2405, 1.442695
    %v2408 = vpow.pop %v2407
    %v2409 = vmul.f32 %v2406, 1.442695
    %v2410 = vpow.pop %v2409
    %v2411 = vadd.f32 %v2408, 1.0
    %v2412 = vadd.f32 %v2410, 1.0
    %v2413 = vrcp.pop %v2411
    %v2414 = vmul.f32 1.0, %v2413
    %v2415 = vrcp.pop %v2412
    %v2416 = vmul.f32 1.0, %v2415
    %s2417 = scalar_lea.vmem [#allocation16], 160
    %v2418 = vld [vmem:[%s2417] sm:$0xff]
    %v2419 = vld [vmem:[%s2417 + $0x8] sm:$0xff]
    %v2420 = vld [vmem:[%s2417 + $0x10] sm:$0xff]
    %v2421 = vld [vmem:[%s2417 + $0x18] sm:$0xff]
    %s2422 = scalar_lea.vmem [#allocation19], 5
    %v2423 = vld [vmem:[%s2422] sm:$0x1]
    %v2425 = vlaneseq
    %v2426 = vshrl.u32 %v2425, 7
    %v2427 = vsub.s32 0, %v2426
    %v2428 = vrot.slane %v2423, %v2427
    %2430 = vmatprep.subr.mxu0 0.0
    %2431 = vmatpush1.msra.mxu0 %v2418
    %2432 = vmatprep.subr.mxu0 0.0
    %2433 = vmatpush1.msra.mxu0 %v2419
    %2434 = vmatprep.subr.mxu0 0.0
    %2435 = vmatpush1.msra.mxu0 %v2420
    %2436 = vmatprep.subr.mxu0 0.0
    %2437 = vmatpush1.msra.mxu0 %v2421
    %2438 = vmatprep.subr.mxu0 0.0
    %2439 = vmatpush1.msra.mxu0 0.0
    %2440 = vmatprep.subr.mxu0 0.0
    %2441 = vmatpush1.msra.mxu0 0.0
    %2442 = vmatprep.subr.mxu0 0.0
    %2443 = vmatpush1.msra.mxu0 0.0
    %2444 = vmatprep.subr.mxu0 0.0
    %2445 = vmatpush1.msra.mxu0 0.0
    %2446 = vmatprep.subr.mxu0 0.0
    %2447 = vmatpush1.msra.mxu0 0.0
    %2448 = vmatprep.subr.mxu0 0.0
    %2449 = vmatpush1.msra.mxu0 0.0
    %2450 = vmatprep.subr.mxu0 0.0
    %2451 = vmatpush1.msra.mxu0 0.0
    %2452 = vmatprep.subr.mxu0 0.0
    %2453 = vmatpush1.msra.mxu0 0.0
    %2454 = vmatprep.subr.mxu0 0.0
    %2455 = vmatpush1.msra.mxu0 0.0
    %2456 = vmatprep.subr.mxu0 0.0
    %2457 = vmatpush1.msra.mxu0 0.0
    %2458 = vmatprep.subr.mxu0 0.0
    %2459 = vmatpush1.msra.mxu0 0.0
    %2460 = vmatprep.subr.mxu0 0.0
    %2461 = vmatpush1.msra.mxu0 0.0
    %2462 = vmatprep.subr.mxu0 0.0
    %2463 = vmatpush1.msra.mxu0 0.0
    %2464 = vmatprep.subr.mxu0 0.0
    %2465 = vmatpush1.msra.mxu0 0.0
    %2466 = vmatprep.subr.mxu0 0.0
    %2467 = vmatpush1.msra.mxu0 0.0
    %2468 = vmatprep.subr.mxu0 0.0
    %2469 = vmatpush1.msra.mxu0 0.0
    %2470 = vmatprep.subr.mxu0 0.0
    %2471 = vmatpush1.msra.mxu0 0.0
    %2472 = vmatprep.subr.mxu0 0.0
    %2473 = vmatpush1.msra.mxu0 0.0
    %2474 = vmatprep.subr.mxu0 0.0
    %2475 = vmatpush1.msra.mxu0 0.0
    %2476 = vmatprep.subr.mxu0 0.0
    %2477 = vmatpush1.msra.mxu0 0.0
    %2478 = vmatprep.subr.mxu0 0.0
    %2479 = vmatpush1.msra.mxu0 0.0
    %2480 = vmatprep.subr.mxu0 0.0
    %2481 = vmatpush1.msra.mxu0 0.0
    %2482 = vmatprep.subr.mxu0 0.0
    %2483 = vmatpush1.msra.mxu0 0.0
    %2484 = vmatprep.subr.mxu0 0.0
    %2485 = vmatpush1.msra.mxu0 0.0
    %2486 = vmatprep.subr.mxu0 0.0
    %2487 = vmatpush1.msra.mxu0 0.0
    %2488 = vmatprep.subr.mxu0 0.0
    %2489 = vmatpush1.msra.mxu0 0.0
    %2490 = vmatprep.subr.mxu0 0.0
    %2491 = vmatpush1.msra.mxu0 0.0
    %2492 = vmatprep.subr.mxu0 0.0
    %2493 = vmatpush1.msra.mxu0 0.0
    %2494 = vmatprep.mubr.f32.mxu0 0.0
    %2495 = vmatmul.mubr.f32.gmra.mrb[0].mxu0 %v2039
    %v2496 = vpop.f32.mrb[0].mxu0
    %v2497 = vadd.f32 %v2428, %v2496
    %v2498 = vpop.f32.mrb[0].mxu0
    %2499 = vmatprep.mubr.f32.mxu0 0.0
    %2500 = vmatmul.mubr.f32.gmra.mrb[0].mxu0 %v2042
    %v2501 = vpop.f32.mrb[0].mxu0
    %v2502 = vadd.f32 %v2428, %v2501
    %v2503 = vpop.f32.mrb[0].mxu0
    %2504 = vdwg.mxu0
    %s2505 = scalar_lea.vmem [#allocation17], 160
    %v2506 = vld [vmem:[%s2505] sm:$0xff]
    %v2507 = vld [vmem:[%s2505 + $0x8] sm:$0xff]
    %v2508 = vld [vmem:[%s2505 + $0x10] sm:$0xff]
    %v2509 = vld [vmem:[%s2505 + $0x18] sm:$0xff]
    %s2510 = scalar_lea.vmem [#allocation20], 5
    %v2511 = vld [vmem:[%s2510] sm:$0x1]
    %v2513 = vlaneseq
    %v2514 = vshrl.u32 %v2513, 7
    %v2515 = vsub.s32 0, %v2514
    %v2516 = vrot.slane %v2511, %v2515
    %2518 = vmatprep.subr.mxu0 0.0
    %2519 = vmatpush1.msra.mxu0 %v2506
    %2520 = vmatprep.subr.mxu0 0.0
    %2521 = vmatpush1.msra.mxu0 %v2507
    %2522 = vmatprep.subr.mxu0 0.0
    %2523 = vmatpush1.msra.mxu0 %v2508
    %2524 = vmatprep.subr.mxu0 0.0
    %2525 = vmatpush1.msra.mxu0 %v2509
    %2526 = vmatprep.subr.mxu0 0.0
    %2527 = vmatpush1.msra.mxu0 0.0
    %2528 = vmatprep.subr.mxu0 0.0
    %2529 = vmatpush1.msra.mxu0 0.0
    %2530 = vmatprep.subr.mxu0 0.0
    %2531 = vmatpush1.msra.mxu0 0.0
    %2532 = vmatprep.subr.mxu0 0.0
    %2533 = vmatpush1.msra.mxu0 0.0
    %2534 = vmatprep.subr.mxu0 0.0
    %2535 = vmatpush1.msra.mxu0 0.0
    %2536 = vmatprep.subr.mxu0 0.0
    %2537 = vmatpush1.msra.mxu0 0.0
    %2538 = vmatprep.subr.mxu0 0.0
    %2539 = vmatpush1.msra.mxu0 0.0
    %2540 = vmatprep.subr.mxu0 0.0
    %2541 = vmatpush1.msra.mxu0 0.0
    %2542 = vmatprep.subr.mxu0 0.0
    %2543 = vmatpush1.msra.mxu0 0.0
    %2544 = vmatprep.subr.mxu0 0.0
    %2545 = vmatpush1.msra.mxu0 0.0
    %2546 = vmatprep.subr.mxu0 0.0
    %2547 = vmatpush1.msra.mxu0 0.0
    %2548 = vmatprep.subr.mxu0 0.0
    %2549 = vmatpush1.msra.mxu0 0.0
    %2550 = vmatprep.subr.mxu0 0.0
    %2551 = vmatpush1.msra.mxu0 0.0
    %2552 = vmatprep.subr.mxu0 0.0
    %2553 = vmatpush1.msra.mxu0 0.0
    %2554 = vmatprep.subr.mxu0 0.0
    %2555 = vmatpush1.msra.mxu0 0.0
    %2556 = vmatprep.subr.mxu0 0.0
    %2557 = vmatpush1.msra.mxu0 0.0
    %2558 = vmatprep.subr.mxu0 0.0
    %2559 = vmatpush1.msra.mxu0 0.0
    %2560 = vmatprep.subr.mxu0 0.0
    %2561 = vmatpush1.msra.mxu0 0.0
    %2562 = vmatprep.subr.mxu0 0.0
    %2563 = vmatpush1.msra.mxu0 0.0
    %2564 = vmatprep.subr.mxu0 0.0
    %2565 = vmatpush1.msra.mxu0 0.0
    %2566 = vmatprep.subr.mxu0 0.0
    %2567 = vmatpush1.msra.mxu0 0.0
    %2568 = vmatprep.subr.mxu0 0.0
    %2569 = vmatpush1.msra.mxu0 0.0
    %2570 = vmatprep.subr.mxu0 0.0
    %2571 = vmatpush1.msra.mxu0 0.0
    %2572 = vmatprep.subr.mxu0 0.0
    %2573 = vmatpush1.msra.mxu0 0.0
    %2574 = vmatprep.subr.mxu0 0.0
    %2575 = vmatpush1.msra.mxu0 0.0
    %2576 = vmatprep.subr.mxu0 0.0
    %2577 = vmatpush1.msra.mxu0 0.0
    %2578 = vmatprep.subr.mxu0 0.0
    %2579 = vmatpush1.msra.mxu0 0.0
    %2580 = vmatprep.subr.mxu0 0.0
    %2581 = vmatpush1.msra.mxu0 0.0
    %2582 = vmatprep.mubr.f32.mxu0 0.0
    %2583 = vmatmul.mubr.f32.gmra.mrb[0].mxu0 %v2133
    %v2584 = vpop.f32.mrb[0].mxu0
    %v2585 = vadd.f32 %v2516, %v2584
    %v2586 = vpop.f32.mrb[0].mxu0
    %2587 = vmatprep.mubr.f32.mxu0 0.0
    %2588 = vmatmul.mubr.f32.gmra.mrb[0].mxu0 %v2136
    %v2589 = vpop.f32.mrb[0].mxu0
    %v2590 = vadd.f32 %v2516, %v2589
    %v2591 = vpop.f32.mrb[0].mxu0
    %2592 = vdwg.mxu0
    %v2593 = vmul.f32 %v2224, %v2585
    %v2594 = vmul.f32 %v2226, %v2590
    %v2595 = vadd.f32 %v2497, %v2593
    %v2596 = vadd.f32 %v2502, %v2594
    %v2597 = vtanh.pop %v2595
    %v2598 = vtanh.pop %v2596
    %v2599 = vsub.f32 1.0, %v2414
    %v2600 = vsub.f32 1.0, %v2416
    %v2601 = vmul.f32 %v2599, %v2597
    %v2602 = vmul.f32 %v2600, %v2598
    %v2603 = vmul.f32 %v2414, %v1535
    %v2604 = vmul.f32 %v2416, %v1536
    %v2605 = vadd.f32 %v2601, %v2603
    %v2606 = vadd.f32 %v2602, %v2604
    %vm2607 = vcmp.ge.f32.partialorder %v2605, 0.0
    %vm2608 = vcmp.ge.f32.partialorder %v2606, 0.0
    %v2609 = vmul.f32 %v2605, 0.01
    %v2610 = vmul.f32 %v2606, 0.01
    %v2611 = vsel %vm2607, %v2605, %v2609
    %v2612 = vsel %vm2608, %v2606, %v2610
    %s2613 = scalar_lea.vmem [#allocation5], 16
    %v2614 = vld [vmem:[%s2613] sm:$0x3f]
    %s2615 = scalar_lea.vmem [#allocation7], 2
    %v2616 = vld [vmem:[%s2615] sm:$0x1]
    %v2618 = vlaneseq
    %v2619 = vshrl.u32 %v2618, 7
    %v2620 = vsub.s32 0, %v2619
    %v2621 = vrot.slane %v2616, %v2620
    %v2624 = vsel %vm460, %v2614, 0
    %2626 = vmatprep.subr.mxu0 0.0
    %2627 = vmatpush1.msra.mxu0 %v2624
    %2628 = vmatprep.subr.mxu0 0.0
    %2629 = vmatpush1.msra.mxu0 0.0
    %2630 = vmatprep.subr.mxu0 0.0
    %2631 = vmatpush1.msra.mxu0 0.0
    %2632 = vmatprep.subr.mxu0 0.0
    %2633 = vmatpush1.msra.mxu0 0.0
    %2634 = vmatprep.subr.mxu0 0.0
    %2635 = vmatpush1.msra.mxu0 0.0
    %2636 = vmatprep.subr.mxu0 0.0
    %2637 = vmatpush1.msra.mxu0 0.0
    %2638 = vmatprep.subr.mxu0 0.0
    %2639 = vmatpush1.msra.mxu0 0.0
    %2640 = vmatprep.subr.mxu0 0.0
    %2641 = vmatpush1.msra.mxu0 0.0
    %2642 = vmatprep.subr.mxu0 0.0
    %2643 = vmatpush1.msra.mxu0 0.0
    %2644 = vmatprep.subr.mxu0 0.0
    %2645 = vmatpush1.msra.mxu0 0.0
    %2646 = vmatprep.subr.mxu0 0.0
    %2647 = vmatpush1.msra.mxu0 0.0
    %2648 = vmatprep.subr.mxu0 0.0
    %2649 = vmatpush1.msra.mxu0 0.0
    %2650 = vmatprep.subr.mxu0 0.0
    %2651 = vmatpush1.msra.mxu0 0.0
    %2652 = vmatprep.subr.mxu0 0.0
    %2653 = vmatpush1.msra.mxu0 0.0
    %2654 = vmatprep.subr.mxu0 0.0
    %2655 = vmatpush1.msra.mxu0 0.0
    %2656 = vmatprep.subr.mxu0 0.0
    %2657 = vmatpush1.msra.mxu0 0.0
    %2658 = vmatprep.subr.mxu0 0.0
    %2659 = vmatpush1.msra.mxu0 0.0
    %2660 = vmatprep.subr.mxu0 0.0
    %2661 = vmatpush1.msra.mxu0 0.0
    %2662 = vmatprep.subr.mxu0 0.0
    %2663 = vmatpush1.msra.mxu0 0.0
    %2664 = vmatprep.subr.mxu0 0.0
    %2665 = vmatpush1.msra.mxu0 0.0
    %2666 = vmatprep.subr.mxu0 0.0
    %2667 = vmatpush1.msra.mxu0 0.0
    %2668 = vmatprep.subr.mxu0 0.0
    %2669 = vmatpush1.msra.mxu0 0.0
    %2670 = vmatprep.subr.mxu0 0.0
    %2671 = vmatpush1.msra.mxu0 0.0
    %2672 = vmatprep.subr.mxu0 0.0
    %2673 = vmatpush1.msra.mxu0 0.0
    %2674 = vmatprep.subr.mxu0 0.0
    %2675 = vmatpush1.msra.mxu0 0.0
    %2676 = vmatprep.subr.mxu0 0.0
    %2677 = vmatpush1.msra.mxu0 0.0
    %2678 = vmatprep.subr.mxu0 0.0
    %2679 = vmatpush1.msra.mxu0 0.0
    %2680 = vmatprep.subr.mxu0 0.0
    %2681 = vmatpush1.msra.mxu0 0.0
    %2682 = vmatprep.subr.mxu0 0.0
    %2683 = vmatpush1.msra.mxu0 0.0
    %2684 = vmatprep.subr.mxu0 0.0
    %2685 = vmatpush1.msra.mxu0 0.0
    %2686 = vmatprep.subr.mxu0 0.0
    %2687 = vmatpush1.msra.mxu0 0.0
    %2688 = vmatprep.subr.mxu0 0.0
    %2689 = vmatpush1.msra.mxu0 0.0
    %2690 = vmatprep.mubr.f32.mxu0 0.0
    %2691 = vmatmul.mubr.f32.gmra.mrb[0].mxu0 %v449
    %v2692 = vpop.f32.mrb[0].mxu0
    %v2693 = vadd.f32 %v2621, %v2692
    %v2694 = vpop.f32.mrb[0].mxu0
    %2695 = vmatprep.mubr.f32.mxu0 0.0
    %2696 = vmatmul.mubr.f32.gmra.mrb[0].mxu0 %v452
    %v2697 = vpop.f32.mrb[0].mxu0
    %v2698 = vadd.f32 %v2621, %v2697
    %v2699 = vpop.f32.mrb[0].mxu0
    %2700 = vmatprep.mubr.f32.mxu0 0.0
    %2701 = vmatmul.mubr.f32.gmra.mrb[0].mxu0 %v455
    %v2702 = vpop.f32.mrb[0].mxu0
    %v2703 = vadd.f32 %v2621, %v2702
    %v2704 = vpop.f32.mrb[0].mxu0
    %2705 = vmatprep.mubr.f32.mxu0 0.0
    %2706 = vmatmul.mubr.f32.gmra.mrb[0].mxu0 %v458
    %v2707 = vpop.f32.mrb[0].mxu0
    %v2708 = vadd.f32 %v2621, %v2707
    %v2709 = vpop.f32.mrb[0].mxu0
    %2710 = vdwg.mxu0
    %2711 = vmatprep.subr.mxu0 0.0
    %2712 = vmatpush1.msra.mxu0 %v2611
    %2713 = vmatprep.subr.mxu0 0.0
    %2714 = vmatpush1.msra.mxu0 %v2612
    %2715 = vmatprep.subr.mxu0 0.0
    %2716 = vmatpush1.msra.mxu0 0.0
    %2717 = vmatprep.subr.mxu0 0.0
    %2718 = vmatpush1.msra.mxu0 0.0
    %2719 = vmatprep.subr.mxu0 0.0
    %2720 = vmatpush1.msra.mxu0 0.0
    %2721 = vmatprep.subr.mxu0 0.0
    %2722 = vmatpush1.msra.mxu0 0.0
    %2723 = vmatprep.subr.mxu0 0.0
    %2724 = vmatpush1.msra.mxu0 0.0
    %2725 = vmatprep.subr.mxu0 0.0
    %2726 = vmatpush1.msra.mxu0 0.0
    %2727 = vmatprep.subr.mxu0 0.0
    %2728 = vmatpush1.msra.mxu0 0.0
    %2729 = vmatprep.subr.mxu0 0.0
    %2730 = vmatpush1.msra.mxu0 0.0
    %2731 = vmatprep.subr.mxu0 0.0
    %2732 = vmatpush1.msra.mxu0 0.0
    %2733 = vmatprep.subr.mxu0 0.0
    %2734 = vmatpush1.msra.mxu0 0.0
    %2735 = vmatprep.subr.mxu0 0.0
    %2736 = vmatpush1.msra.mxu0 0.0
    %2737 = vmatprep.subr.mxu0 0.0
    %2738 = vmatpush1.msra.mxu0 0.0
    %2739 = vmatprep.subr.mxu0 0.0
    %2740 = vmatpush1.msra.mxu0 0.0
    %2741 = vmatprep.subr.mxu0 0.0
    %2742 = vmatpush1.msra.mxu0 0.0
    %2743 = vmatprep.subr.mxu0 0.0
    %2744 = vmatpush1.msra.mxu0 0.0
    %2745 = vmatprep.subr.mxu0 0.0
    %2746 = vmatpush1.msra.mxu0 0.0
    %2747 = vmatprep.subr.mxu0 0.0
    %2748 = vmatpush1.msra.mxu0 0.0
    %2749 = vmatprep.subr.mxu0 0.0
    %2750 = vmatpush1.msra.mxu0 0.0
    %2751 = vmatprep.subr.mxu0 0.0
    %2752 = vmatpush1.msra.mxu0 0.0
    %2753 = vmatprep.subr.mxu0 0.0
    %2754 = vmatpush1.msra.mxu0 0.0
    %2755 = vmatprep.subr.mxu0 0.0
    %2756 = vmatpush1.msra.mxu0 0.0
    %2757 = vmatprep.subr.mxu0 0.0
    %2758 = vmatpush1.msra.mxu0 0.0
    %2759 = vmatprep.subr.mxu0 0.0
    %2760 = vmatpush1.msra.mxu0 0.0
    %2761 = vmatprep.subr.mxu0 0.0
    %2762 = vmatpush1.msra.mxu0 0.0
    %2763 = vmatprep.subr.mxu0 0.0
    %2764 = vmatpush1.msra.mxu0 0.0
    %2765 = vmatprep.subr.mxu0 0.0
    %2766 = vmatpush1.msra.mxu0 0.0
    %2767 = vmatprep.subr.mxu0 0.0
    %2768 = vmatpush1.msra.mxu0 0.0
    %2769 = vmatprep.subr.mxu0 0.0
    %2770 = vmatpush1.msra.mxu0 0.0
    %2771 = vmatprep.subr.mxu0 0.0
    %2772 = vmatpush1.msra.mxu0 0.0
    %2773 = vmatprep.subr.mxu0 0.0
    %2774 = vmatpush1.msra.mxu0 0.0
    %2775 = vmatprep.mubr.f32.mxu0 0.0
    %2776 = vmatmul.mubr.f32.gmra.mrb[0].mxu0 %v551
    %v2777 = vpop.f32.mrb[0].mxu0
    %v2778 = vadd.f32 %v2693, %v2777
    %v2779 = vpop.f32.mrb[0].mxu0
    %2780 = vmatprep.mubr.f32.mxu0 0.0
    %2781 = vmatmul.mubr.f32.gmra.mrb[0].mxu0 %v554
    %v2782 = vpop.f32.mrb[0].mxu0
    %v2783 = vadd.f32 %v2698, %v2782
    %v2784 = vpop.f32.mrb[0].mxu0
    %2785 = vmatprep.mubr.f32.mxu0 0.0
    %2786 = vmatmul.mubr.f32.gmra.mrb[0].mxu0 %v557
    %v2787 = vpop.f32.mrb[0].mxu0
    %v2788 = vadd.f32 %v2703, %v2787
    %v2789 = vpop.f32.mrb[0].mxu0
    %2790 = vmatprep.mubr.f32.mxu0 0.0
    %2791 = vmatmul.mubr.f32.gmra.mrb[0].mxu0 %v560
    %v2792 = vpop.f32.mrb[0].mxu0
    %v2793 = vadd.f32 %v2708, %v2792
    %v2794 = vpop.f32.mrb[0].mxu0
    %2795 = vdwg.mxu0
    %v2796 = vmax.f32 %v2778, 0.0
    %v2797 = vmax.f32 %v2783, 0.0
    %v2798 = vmax.f32 %v2788, 0.0
    %v2799 = vmax.f32 %v2793, 0.0
    %2800 = vmatprep.subr.mxu0 0.0
    %2801 = vmatpush1.msra.mxu0 %v2796
    %2802 = vmatprep.subr.mxu0 0.0
    %2803 = vmatpush1.msra.mxu0 %v2797
    %2804 = vmatprep.subr.mxu0 0.0
    %2805 = vmatpush1.msra.mxu0 %v2798
    %2806 = vmatprep.subr.mxu0 0.0
    %2807 = vmatpush1.msra.mxu0 %v2799
    %2808 = vmatprep.subr.mxu0 0.0
    %2809 = vmatpush1.msra.mxu0 0.0
    %2810 = vmatprep.subr.mxu0 0.0
    %2811 = vmatpush1.msra.mxu0 0.0
    %2812 = vmatprep.subr.mxu0 0.0
    %2813 = vmatpush1.msra.mxu0 0.0
    %2814 = vmatprep.subr.mxu0 0.0
    %2815 = vmatpush1.msra.mxu0 0.0
    %2816 = vmatprep.subr.mxu0 0.0
    %2817 = vmatpush1.msra.mxu0 0.0
    %2818 = vmatprep.subr.mxu0 0.0
    %2819 = vmatpush1.msra.mxu0 0.0
    %2820 = vmatprep.subr.mxu0 0.0
    %2821 = vmatpush1.msra.mxu0 0.0
    %2822 = vmatprep.subr.mxu0 0.0
    %2823 = vmatpush1.msra.mxu0 0.0
    %2824 = vmatprep.subr.mxu0 0.0
    %2825 = vmatpush1.msra.mxu0 0.0
    %2826 = vmatprep.subr.mxu0 0.0
    %2827 = vmatpush1.msra.mxu0 0.0
    %2828 = vmatprep.subr.mxu0 0.0
    %2829 = vmatpush1.msra.mxu0 0.0
    %2830 = vmatprep.subr.mxu0 0.0
    %2831 = vmatpush1.msra.mxu0 0.0
    %2832 = vmatprep.subr.mxu0 0.0
    %2833 = vmatpush1.msra.mxu0 0.0
    %2834 = vmatprep.subr.mxu0 0.0
    %2835 = vmatpush1.msra.mxu0 0.0
    %2836 = vmatprep.subr.mxu0 0.0
    %2837 = vmatpush1.msra.mxu0 0.0
    %2838 = vmatprep.subr.mxu0 0.0
    %2839 = vmatpush1.msra.mxu0 0.0
    %2840 = vmatprep.subr.mxu0 0.0
    %2841 = vmatpush1.msra.mxu0 0.0
    %2842 = vmatprep.subr.mxu0 0.0
    %2843 = vmatpush1.msra.mxu0 0.0
    %2844 = vmatprep.subr.mxu0 0.0
    %2845 = vmatpush1.msra.mxu0 0.0
    %2846 = vmatprep.subr.mxu0 0.0
    %2847 = vmatpush1.msra.mxu0 0.0
    %2848 = vmatprep.subr.mxu0 0.0
    %2849 = vmatpush1.msra.mxu0 0.0
    %2850 = vmatprep.subr.mxu0 0.0
    %2851 = vmatpush1.msra.mxu0 0.0
    %2852 = vmatprep.subr.mxu0 0.0
    %2853 = vmatpush1.msra.mxu0 0.0
    %2854 = vmatprep.subr.mxu0 0.0
    %2855 = vmatpush1.msra.mxu0 0.0
    %2856 = vmatprep.subr.mxu0 0.0
    %2857 = vmatpush1.msra.mxu0 0.0
    %2858 = vmatprep.subr.mxu0 0.0
    %2859 = vmatpush1.msra.mxu0 0.0
    %2860 = vmatprep.subr.mxu0 0.0
    %2861 = vmatpush1.msra.mxu0 0.0
    %2862 = vmatprep.subr.mxu0 0.0
    %2863 = vmatpush1.msra.mxu0 0.0
    %2864 = vmatprep.mubr.f32.mxu0 0.0
    %2865 = vmatmul.mubr.f32.gmra.mrb[0].mxu0 %v653
    %v2866 = vpop.f32.mrb[0].mxu0
    %v2867 = vadd.f32 0.0, %v2866
    %v2868 = vpop.f32.mrb[0].mxu0
    %2869 = vmatprep.mubr.f32.mxu0 0.0
    %2870 = vmatmul.mubr.f32.gmra.mrb[0].mxu0 %v656
    %v2871 = vpop.f32.mrb[0].mxu0
    %v2872 = vadd.f32 0.0, %v2871
    %v2873 = vpop.f32.mrb[0].mxu0
    %2874 = vdwg.mxu0
    %v2875 = vadd.f32 %v2611, %v2867
    %v2876 = vadd.f32 %v2612, %v2872
    %s2877 = scalar_lea.vmem %s15, 64
    %v2878 = vld [vmem:[%s2877] sm:$0xff]
    %v2879 = vld [vmem:[%s2877 + $0x8] sm:$0xff]
    %v2880 = vld [vmem:[%s2877 + $0x10] sm:$0xff]
    %v2881 = vld [vmem:[%s2877 + $0x18] sm:$0xff]
    %s2882 = scalar_lea.vmem [#allocation8], 2
    %v2883 = vld [vmem:[%s2882] sm:$0x1]
    %v2885 = vlaneseq
    %v2886 = vshrl.u32 %v2885, 7
    %v2887 = vsub.s32 0, %v2886
    %v2888 = vrot.slane %v2883, %v2887
    %v2891 = vsel %vm651, %v2875, 0
    %v2894 = vsel %vm651, %v2876, 0
    %2896 = vmatprep.subr.mxu0 0.0
    %2897 = vmatpush1.msra.mxu0 %v2878
    %2898 = vmatprep.subr.mxu0 0.0
    %2899 = vmatpush1.msra.mxu0 %v2879
    %2900 = vmatprep.subr.mxu0 0.0
    %2901 = vmatpush1.msra.mxu0 %v2880
    %2902 = vmatprep.subr.mxu0 0.0
    %2903 = vmatpush1.msra.mxu0 %v2881
    %2904 = vmatprep.subr.mxu0 0.0
    %2905 = vmatpush1.msra.mxu0 0.0
    %2906 = vmatprep.subr.mxu0 0.0
    %2907 = vmatpush1.msra.mxu0 0.0
    %2908 = vmatprep.subr.mxu0 0.0
    %2909 = vmatpush1.msra.mxu0 0.0
    %2910 = vmatprep.subr.mxu0 0.0
    %2911 = vmatpush1.msra.mxu0 0.0
    %2912 = vmatprep.subr.mxu0 0.0
    %2913 = vmatpush1.msra.mxu0 0.0
    %2914 = vmatprep.subr.mxu0 0.0
    %2915 = vmatpush1.msra.mxu0 0.0
    %2916 = vmatprep.subr.mxu0 0.0
    %2917 = vmatpush1.msra.mxu0 0.0
    %2918 = vmatprep.subr.mxu0 0.0
    %2919 = vmatpush1.msra.mxu0 0.0
    %2920 = vmatprep.subr.mxu0 0.0
    %2921 = vmatpush1.msra.mxu0 0.0
    %2922 = vmatprep.subr.mxu0 0.0
    %2923 = vmatpush1.msra.mxu0 0.0
    %2924 = vmatprep.subr.mxu0 0.0
    %2925 = vmatpush1.msra.mxu0 0.0
    %2926 = vmatprep.subr.mxu0 0.0
    %2927 = vmatpush1.msra.mxu0 0.0
    %2928 = vmatprep.subr.mxu0 0.0
    %2929 = vmatpush1.msra.mxu0 0.0
    %2930 = vmatprep.subr.mxu0 0.0
    %2931 = vmatpush1.msra.mxu0 0.0
    %2932 = vmatprep.subr.mxu0 0.0
    %2933 = vmatpush1.msra.mxu0 0.0
    %2934 = vmatprep.subr.mxu0 0.0
    %2935 = vmatpush1.msra.mxu0 0.0
    %2936 = vmatprep.subr.mxu0 0.0
    %2937 = vmatpush1.msra.mxu0 0.0
    %2938 = vmatprep.subr.mxu0 0.0
    %2939 = vmatpush1.msra.mxu0 0.0
    %2940 = vmatprep.subr.mxu0 0.0
    %2941 = vmatpush1.msra.mxu0 0.0
    %2942 = vmatprep.subr.mxu0 0.0
    %2943 = vmatpush1.msra.mxu0 0.0
    %2944 = vmatprep.subr.mxu0 0.0
    %2945 = vmatpush1.msra.mxu0 0.0
    %2946 = vmatprep.subr.mxu0 0.0
    %2947 = vmatpush1.msra.mxu0 0.0
    %2948 = vmatprep.subr.mxu0 0.0
    %2949 = vmatpush1.msra.mxu0 0.0
    %2950 = vmatprep.subr.mxu0 0.0
    %2951 = vmatpush1.msra.mxu0 0.0
    %2952 = vmatprep.subr.mxu0 0.0
    %2953 = vmatpush1.msra.mxu0 0.0
    %2954 = vmatprep.subr.mxu0 0.0
    %2955 = vmatpush1.msra.mxu0 0.0
    %2956 = vmatprep.subr.mxu0 0.0
    %2957 = vmatpush1.msra.mxu0 0.0
    %2958 = vmatprep.subr.mxu0 0.0
    %2959 = vmatpush1.msra.mxu0 0.0
    %2960 = vmatprep.mubr.f32.mxu0 0.0
    %2961 = vmatmul.mubr.f32.gmra.mrb[0].mxu0 %v2891
    %v2962 = vpop.f32.mrb[0].mxu0
    %v2963 = vadd.f32 %v2888, %v2962
    %v2964 = vpop.f32.mrb[0].mxu0
    %2965 = vmatprep.mubr.f32.mxu0 0.0
    %2966 = vmatmul.mubr.f32.gmra.mrb[0].mxu0 %v2894
    %v2967 = vpop.f32.mrb[0].mxu0
    %v2968 = vadd.f32 %v2888, %v2967
    %v2969 = vpop.f32.mrb[0].mxu0
    %2970 = vdwg.mxu0
    %s2971 = scalar_lea.vmem [#allocation10], 2
    %v2972 = vld [vmem:[%s2971] sm:$0x1]
    %v2974 = vlaneseq
    %v2975 = vshrl.u32 %v2974, 7
    %v2976 = vsub.s32 0, %v2975
    %v2977 = vrot.slane %v2972, %v2976
    %v2979 = vmul.f32 %v2963, %v2977
    %v2980 = vmul.f32 %v2968, %v2977
    %s2981 = scalar_lea.vmem [#allocation11], 2
    %v2982 = vld [vmem:[%s2981] sm:$0x1]
    %v2984 = vlaneseq
    %v2985 = vshrl.u32 %v2984, 7
    %v2986 = vsub.s32 0, %v2985
    %v2987 = vrot.slane %v2982, %v2986
    %v2989 = vadd.f32 %v2979, %v2987
    %v2990 = vadd.f32 %v2980, %v2987
    %vm2991 = vcmp.ge.f32.partialorder %v2989, 0.0
    %vm2992 = vcmp.ge.f32.partialorder %v2990, 0.0
    %v2993 = vmul.f32 %v2989, 0.01
    %v2994 = vmul.f32 %v2990, 0.01
    %v2995 = vsel %vm2991, %v2989, %v2993
    %v2996 = vsel %vm2992, %v2990, %v2994
    %s2997 = scalar_lea.vmem [#allocation13], 64
    %v2998 = vld [vmem:[%s2997] sm:$0xff]
    %v2999 = vld [vmem:[%s2997 + $0x8] sm:$0xff]
    %v3000 = vld [vmem:[%s2997 + $0x10] sm:$0xff]
    %v3001 = vld [vmem:[%s2997 + $0x18] sm:$0xff]
    %s3002 = scalar_lea.vmem [#allocation14], 2
    %v3003 = vld [vmem:[%s3002] sm:$0x1]
    %v3005 = vlaneseq
    %v3006 = vshrl.u32 %v3005, 7
    %v3007 = vsub.s32 0, %v3006
    %v3008 = vrot.slane %v3003, %v3007
    %v3011 = vsel %vm651, %v2995, 0
    %v3014 = vsel %vm651, %v2996, 0
    %3016 = vmatprep.subr.mxu0 0.0
    %3017 = vmatpush1.msra.mxu0 %v2998
    %3018 = vmatprep.subr.mxu0 0.0
    %3019 = vmatpush1.msra.mxu0 %v2999
    %3020 = vmatprep.subr.mxu0 0.0
    %3021 = vmatpush1.msra.mxu0 %v3000
    %3022 = vmatprep.subr.mxu0 0.0
    %3023 = vmatpush1.msra.mxu0 %v3001
    %3024 = vmatprep.subr.mxu0 0.0
    %3025 = vmatpush1.msra.mxu0 0.0
    %3026 = vmatprep.subr.mxu0 0.0
    %3027 = vmatpush1.msra.mxu0 0.0
    %3028 = vmatprep.subr.mxu0 0.0
    %3029 = vmatpush1.msra.mxu0 0.0
    %3030 = vmatprep.subr.mxu0 0.0
    %3031 = vmatpush1.msra.mxu0 0.0
    %3032 = vmatprep.subr.mxu0 0.0
    %3033 = vmatpush1.msra.mxu0 0.0
    %3034 = vmatprep.subr.mxu0 0.0
    %3035 = vmatpush1.msra.mxu0 0.0
    %3036 = vmatprep.subr.mxu0 0.0
    %3037 = vmatpush1.msra.mxu0 0.0
    %3038 = vmatprep.subr.mxu0 0.0
    %3039 = vmatpush1.msra.mxu0 0.0
    %3040 = vmatprep.subr.mxu0 0.0
    %3041 = vmatpush1.msra.mxu0 0.0
    %3042 = vmatprep.subr.mxu0 0.0
    %3043 = vmatpush1.msra.mxu0 0.0
    %3044 = vmatprep.subr.mxu0 0.0
    %3045 = vmatpush1.msra.mxu0 0.0
    %3046 = vmatprep.subr.mxu0 0.0
    %3047 = vmatpush1.msra.mxu0 0.0
    %3048 = vmatprep.subr.mxu0 0.0
    %3049 = vmatpush1.msra.mxu0 0.0
    %3050 = vmatprep.subr.mxu0 0.0
    %3051 = vmatpush1.msra.mxu0 0.0
    %3052 = vmatprep.subr.mxu0 0.0
    %3053 = vmatpush1.msra.mxu0 0.0
    %3054 = vmatprep.subr.mxu0 0.0
    %3055 = vmatpush1.msra.mxu0 0.0
    %3056 = vmatprep.subr.mxu0 0.0
    %3057 = vmatpush1.msra.mxu0 0.0
    %3058 = vmatprep.subr.mxu0 0.0
    %3059 = vmatpush1.msra.mxu0 0.0
    %3060 = vmatprep.subr.mxu0 0.0
    %3061 = vmatpush1.msra.mxu0 0.0
    %3062 = vmatprep.subr.mxu0 0.0
    %3063 = vmatpush1.msra.mxu0 0.0
    %3064 = vmatprep.subr.mxu0 0.0
    %3065 = vmatpush1.msra.mxu0 0.0
    %3066 = vmatprep.subr.mxu0 0.0
    %3067 = vmatpush1.msra.mxu0 0.0
    %3068 = vmatprep.subr.mxu0 0.0
    %3069 = vmatpush1.msra.mxu0 0.0
    %3070 = vmatprep.subr.mxu0 0.0
    %3071 = vmatpush1.msra.mxu0 0.0
    %3072 = vmatprep.subr.mxu0 0.0
    %3073 = vmatpush1.msra.mxu0 0.0
    %3074 = vmatprep.subr.mxu0 0.0
    %3075 = vmatpush1.msra.mxu0 0.0
    %3076 = vmatprep.subr.mxu0 0.0
    %3077 = vmatpush1.msra.mxu0 0.0
    %3078 = vmatprep.subr.mxu0 0.0
    %3079 = vmatpush1.msra.mxu0 0.0
    %3080 = vmatprep.mubr.f32.mxu0 0.0
    %3081 = vmatmul.mubr.f32.gmra.mrb[0].mxu0 %v3011
    %v3082 = vpop.f32.mrb[0].mxu0
    %v3083 = vadd.f32 %v3008, %v3082
    %v3084 = vpop.f32.mrb[0].mxu0
    %3085 = vmatprep.mubr.f32.mxu0 0.0
    %3086 = vmatmul.mubr.f32.gmra.mrb[0].mxu0 %v3014
    %v3087 = vpop.f32.mrb[0].mxu0
    %v3088 = vadd.f32 %v3008, %v3087
    %v3089 = vpop.f32.mrb[0].mxu0
    %3090 = vdwg.mxu0
    %vm3091 = vcmp.gt.f32.partialorder %v3083, 0.0
    %vm3092 = vcmp.gt.f32.partialorder %v3088, 0.0
    %v3093 = vmul.f32 %v3083, 1.442695
    %v3094 = vpow.pop %v3093
    %v3095 = vmul.f32 %v3088, 1.442695
    %v3096 = vpow.pop %v3095
    %v3097 = vsub.f32 %v3094, 1.0
    %v3098 = vsub.f32 %v3096, 1.0
    %v3099 = vsel %vm3091, %v3083, %v3097
    %v3100 = vsel %vm3092, %v3088, %v3098
    %s3101 = scalar_lea.vmem [#allocation16], 192
    %v3102 = vld [vmem:[%s3101] sm:$0xff]
    %v3103 = vld [vmem:[%s3101 + $0x8] sm:$0xff]
    %v3104 = vld [vmem:[%s3101 + $0x10] sm:$0xff]
    %v3105 = vld [vmem:[%s3101 + $0x18] sm:$0xff]
    %s3106 = scalar_lea.vmem [#allocation19], 6
    %v3107 = vld [vmem:[%s3106] sm:$0x1]
    %v3109 = vlaneseq
    %v3110 = vshrl.u32 %v3109, 7
    %v3111 = vsub.s32 0, %v3110
    %v3112 = vrot.slane %v3107, %v3111
    %v3115 = vsel %vm651, %v3099, 0
    %v3118 = vsel %vm651, %v3100, 0
    %3120 = vmatprep.subr.mxu0 0.0
    %3121 = vmatpush1.msra.mxu0 %v3102
    %3122 = vmatprep.subr.mxu0 0.0
    %3123 = vmatpush1.msra.mxu0 %v3103
    %3124 = vmatprep.subr.mxu0 0.0
    %3125 = vmatpush1.msra.mxu0 %v3104
    %3126 = vmatprep.subr.mxu0 0.0
    %3127 = vmatpush1.msra.mxu0 %v3105
    %3128 = vmatprep.subr.mxu0 0.0
    %3129 = vmatpush1.msra.mxu0 0.0
    %3130 = vmatprep.subr.mxu0 0.0
    %3131 = vmatpush1.msra.mxu0 0.0
    %3132 = vmatprep.subr.mxu0 0.0
    %3133 = vmatpush1.msra.mxu0 0.0
    %3134 = vmatprep.subr.mxu0 0.0
    %3135 = vmatpush1.msra.mxu0 0.0
    %3136 = vmatprep.subr.mxu0 0.0
    %3137 = vmatpush1.msra.mxu0 0.0
    %3138 = vmatprep.subr.mxu0 0.0
    %3139 = vmatpush1.msra.mxu0 0.0
    %3140 = vmatprep.subr.mxu0 0.0
    %3141 = vmatpush1.msra.mxu0 0.0
    %3142 = vmatprep.subr.mxu0 0.0
    %3143 = vmatpush1.msra.mxu0 0.0
    %3144 = vmatprep.subr.mxu0 0.0
    %3145 = vmatpush1.msra.mxu0 0.0
    %3146 = vmatprep.subr.mxu0 0.0
    %3147 = vmatpush1.msra.mxu0 0.0
    %3148 = vmatprep.subr.mxu0 0.0
    %3149 = vmatpush1.msra.mxu0 0.0
    %3150 = vmatprep.subr.mxu0 0.0
    %3151 = vmatpush1.msra.mxu0 0.0
    %3152 = vmatprep.subr.mxu0 0.0
    %3153 = vmatpush1.msra.mxu0 0.0
    %3154 = vmatprep.subr.mxu0 0.0
    %3155 = vmatpush1.msra.mxu0 0.0
    %3156 = vmatprep.subr.mxu0 0.0
    %3157 = vmatpush1.msra.mxu0 0.0
    %3158 = vmatprep.subr.mxu0 0.0
    %3159 = vmatpush1.msra.mxu0 0.0
    %3160 = vmatprep.subr.mxu0 0.0
    %3161 = vmatpush1.msra.mxu0 0.0
    %3162 = vmatprep.subr.mxu0 0.0
    %3163 = vmatpush1.msra.mxu0 0.0
    %3164 = vmatprep.subr.mxu0 0.0
    %3165 = vmatpush1.msra.mxu0 0.0
    %3166 = vmatprep.subr.mxu0 0.0
    %3167 = vmatpush1.msra.mxu0 0.0
    %3168 = vmatprep.subr.mxu0 0.0
    %3169 = vmatpush1.msra.mxu0 0.0
    %3170 = vmatprep.subr.mxu0 0.0
    %3171 = vmatpush1.msra.mxu0 0.0
    %3172 = vmatprep.subr.mxu0 0.0
    %3173 = vmatpush1.msra.mxu0 0.0
    %3174 = vmatprep.subr.mxu0 0.0
    %3175 = vmatpush1.msra.mxu0 0.0
    %3176 = vmatprep.subr.mxu0 0.0
    %3177 = vmatpush1.msra.mxu0 0.0
    %3178 = vmatprep.subr.mxu0 0.0
    %3179 = vmatpush1.msra.mxu0 0.0
    %3180 = vmatprep.subr.mxu0 0.0
    %3181 = vmatpush1.msra.mxu0 0.0
    %3182 = vmatprep.subr.mxu0 0.0
    %3183 = vmatpush1.msra.mxu0 0.0
    %3184 = vmatprep.mubr.f32.mxu0 0.0
    %3185 = vmatmul.mubr.f32.gmra.mrb[0].mxu0 %v3115
    %v3186 = vpop.f32.mrb[0].mxu0
    %v3187 = vadd.f32 %v3112, %v3186
    %v3188 = vpop.f32.mrb[0].mxu0
    %3189 = vmatprep.mubr.f32.mxu0 0.0
    %3190 = vmatmul.mubr.f32.gmra.mrb[0].mxu0 %v3118
    %v3191 = vpop.f32.mrb[0].mxu0
    %v3192 = vadd.f32 %v3112, %v3191
    %v3193 = vpop.f32.mrb[0].mxu0
    %3194 = vdwg.mxu0
    %s3195 = scalar_lea.vmem [#allocation17], 192
    %v3196 = vld [vmem:[%s3195] sm:$0xff]
    %v3197 = vld [vmem:[%s3195 + $0x8] sm:$0xff]
    %v3198 = vld [vmem:[%s3195 + $0x10] sm:$0xff]
    %v3199 = vld [vmem:[%s3195 + $0x18] sm:$0xff]
    %s3200 = scalar_lea.vmem [#allocation20], 6
    %v3201 = vld [vmem:[%s3200] sm:$0x1]
    %v3203 = vlaneseq
    %v3204 = vshrl.u32 %v3203, 7
    %v3205 = vsub.s32 0, %v3204
    %v3206 = vrot.slane %v3201, %v3205
    %v3209 = vsel %vm651, %v2611, 0
    %v3212 = vsel %vm651, %v2612, 0
    %3214 = vmatprep.subr.mxu0 0.0
    %3215 = vmatpush1.msra.mxu0 %v3196
    %3216 = vmatprep.subr.mxu0 0.0
    %3217 = vmatpush1.msra.mxu0 %v3197
    %3218 = vmatprep.subr.mxu0 0.0
    %3219 = vmatpush1.msra.mxu0 %v3198
    %3220 = vmatprep.subr.mxu0 0.0
    %3221 = vmatpush1.msra.mxu0 %v3199
    %3222 = vmatprep.subr.mxu0 0.0
    %3223 = vmatpush1.msra.mxu0 0.0
    %3224 = vmatprep.subr.mxu0 0.0
    %3225 = vmatpush1.msra.mxu0 0.0
    %3226 = vmatprep.subr.mxu0 0.0
    %3227 = vmatpush1.msra.mxu0 0.0
    %3228 = vmatprep.subr.mxu0 0.0
    %3229 = vmatpush1.msra.mxu0 0.0
    %3230 = vmatprep.subr.mxu0 0.0
    %3231 = vmatpush1.msra.mxu0 0.0
    %3232 = vmatprep.subr.mxu0 0.0
    %3233 = vmatpush1.msra.mxu0 0.0
    %3234 = vmatprep.subr.mxu0 0.0
    %3235 = vmatpush1.msra.mxu0 0.0
    %3236 = vmatprep.subr.mxu0 0.0
    %3237 = vmatpush1.msra.mxu0 0.0
    %3238 = vmatprep.subr.mxu0 0.0
    %3239 = vmatpush1.msra.mxu0 0.0
    %3240 = vmatprep.subr.mxu0 0.0
    %3241 = vmatpush1.msra.mxu0 0.0
    %3242 = vmatprep.subr.mxu0 0.0
    %3243 = vmatpush1.msra.mxu0 0.0
    %3244 = vmatprep.subr.mxu0 0.0
    %3245 = vmatpush1.msra.mxu0 0.0
    %3246 = vmatprep.subr.mxu0 0.0
    %3247 = vmatpush1.msra.mxu0 0.0
    %3248 = vmatprep.subr.mxu0 0.0
    %3249 = vmatpush1.msra.mxu0 0.0
    %3250 = vmatprep.subr.mxu0 0.0
    %3251 = vmatpush1.msra.mxu0 0.0
    %3252 = vmatprep.subr.mxu0 0.0
    %3253 = vmatpush1.msra.mxu0 0.0
    %3254 = vmatprep.subr.mxu0 0.0
    %3255 = vmatpush1.msra.mxu0 0.0
    %3256 = vmatprep.subr.mxu0 0.0
    %3257 = vmatpush1.msra.mxu0 0.0
    %3258 = vmatprep.subr.mxu0 0.0
    %3259 = vmatpush1.msra.mxu0 0.0
    %3260 = vmatprep.subr.mxu0 0.0
    %3261 = vmatpush1.msra.mxu0 0.0
    %3262 = vmatprep.subr.mxu0 0.0
    %3263 = vmatpush1.msra.mxu0 0.0
    %3264 = vmatprep.subr.mxu0 0.0
    %3265 = vmatpush1.msra.mxu0 0.0
    %3266 = vmatprep.subr.mxu0 0.0
    %3267 = vmatpush1.msra.mxu0 0.0
    %3268 = vmatprep.subr.mxu0 0.0
    %3269 = vmatpush1.msra.mxu0 0.0
    %3270 = vmatprep.subr.mxu0 0.0
    %3271 = vmatpush1.msra.mxu0 0.0
    %3272 = vmatprep.subr.mxu0 0.0
    %3273 = vmatpush1.msra.mxu0 0.0
    %3274 = vmatprep.subr.mxu0 0.0
    %3275 = vmatpush1.msra.mxu0 0.0
    %3276 = vmatprep.subr.mxu0 0.0
    %3277 = vmatpush1.msra.mxu0 0.0
    %3278 = vmatprep.mubr.f32.mxu0 0.0
    %3279 = vmatmul.mubr.f32.gmra.mrb[0].mxu0 %v3209
    %v3280 = vpop.f32.mrb[0].mxu0
    %v3281 = vadd.f32 %v3206, %v3280
    %v3282 = vpop.f32.mrb[0].mxu0
    %3283 = vmatprep.mubr.f32.mxu0 0.0
    %3284 = vmatmul.mubr.f32.gmra.mrb[0].mxu0 %v3212
    %v3285 = vpop.f32.mrb[0].mxu0
    %v3286 = vadd.f32 %v3206, %v3285
    %v3287 = vpop.f32.mrb[0].mxu0
    %3288 = vdwg.mxu0
    %v3289 = vadd.f32 %v3187, %v3281
    %v3290 = vadd.f32 %v3192, %v3286
    %v3291 = vxor.u32 %v3289, 2147483648
    %v3292 = vxor.u32 %v3290, 2147483648
    %v3293 = vmul.f32 %v3291, 1.442695
    %v3294 = vpow.pop %v3293
    %v3295 = vmul.f32 %v3292, 1.442695
    %v3296 = vpow.pop %v3295
    %v3297 = vadd.f32 %v3294, 1.0
    %v3298 = vadd.f32 %v3296, 1.0
    %v3299 = vrcp.pop %v3297
    %v3300 = vmul.f32 1.0, %v3299
    %v3301 = vrcp.pop %v3298
    %v3302 = vmul.f32 1.0, %v3301
    %s3303 = scalar_lea.vmem [#allocation16], 224
    %v3304 = vld [vmem:[%s3303] sm:$0xff]
    %v3305 = vld [vmem:[%s3303 + $0x8] sm:$0xff]
    %v3306 = vld [vmem:[%s3303 + $0x10] sm:$0xff]
    %v3307 = vld [vmem:[%s3303 + $0x18] sm:$0xff]
    %s3308 = scalar_lea.vmem [#allocation19], 7
    %v3309 = vld [vmem:[%s3308] sm:$0x1]
    %v3311 = vlaneseq
    %v3312 = vshrl.u32 %v3311, 7
    %v3313 = vsub.s32 0, %v3312
    %v3314 = vrot.slane %v3309, %v3313
    %3316 = vmatprep.subr.mxu0 0.0
    %3317 = vmatpush1.msra.mxu0 %v3304
    %3318 = vmatprep.subr.mxu0 0.0
    %3319 = vmatpush1.msra.mxu0 %v3305
    %3320 = vmatprep.subr.mxu0 0.0
    %3321 = vmatpush1.msra.mxu0 %v3306
    %3322 = vmatprep.subr.mxu0 0.0
    %3323 = vmatpush1.msra.mxu0 %v3307
    %3324 = vmatprep.subr.mxu0 0.0
    %3325 = vmatpush1.msra.mxu0 0.0
    %3326 = vmatprep.subr.mxu0 0.0
    %3327 = vmatpush1.msra.mxu0 0.0
    %3328 = vmatprep.subr.mxu0 0.0
    %3329 = vmatpush1.msra.mxu0 0.0
    %3330 = vmatprep.subr.mxu0 0.0
    %3331 = vmatpush1.msra.mxu0 0.0
    %3332 = vmatprep.subr.mxu0 0.0
    %3333 = vmatpush1.msra.mxu0 0.0
    %3334 = vmatprep.subr.mxu0 0.0
    %3335 = vmatpush1.msra.mxu0 0.0
    %3336 = vmatprep.subr.mxu0 0.0
    %3337 = vmatpush1.msra.mxu0 0.0
    %3338 = vmatprep.subr.mxu0 0.0
    %3339 = vmatpush1.msra.mxu0 0.0
    %3340 = vmatprep.subr.mxu0 0.0
    %3341 = vmatpush1.msra.mxu0 0.0
    %3342 = vmatprep.subr.mxu0 0.0
    %3343 = vmatpush1.msra.mxu0 0.0
    %3344 = vmatprep.subr.mxu0 0.0
    %3345 = vmatpush1.msra.mxu0 0.0
    %3346 = vmatprep.subr.mxu0 0.0
    %3347 = vmatpush1.msra.mxu0 0.0
    %3348 = vmatprep.subr.mxu0 0.0
    %3349 = vmatpush1.msra.mxu0 0.0
    %3350 = vmatprep.subr.mxu0 0.0
    %3351 = vmatpush1.msra.mxu0 0.0
    %3352 = vmatprep.subr.mxu0 0.0
    %3353 = vmatpush1.msra.mxu0 0.0
    %3354 = vmatprep.subr.mxu0 0.0
    %3355 = vmatpush1.msra.mxu0 0.0
    %3356 = vmatprep.subr.mxu0 0.0
    %3357 = vmatpush1.msra.mxu0 0.0
    %3358 = vmatprep.subr.mxu0 0.0
    %3359 = vmatpush1.msra.mxu0 0.0
    %3360 = vmatprep.subr.mxu0 0.0
    %3361 = vmatpush1.msra.mxu0 0.0
    %3362 = vmatprep.subr.mxu0 0.0
    %3363 = vmatpush1.msra.mxu0 0.0
    %3364 = vmatprep.subr.mxu0 0.0
    %3365 = vmatpush1.msra.mxu0 0.0
    %3366 = vmatprep.subr.mxu0 0.0
    %3367 = vmatpush1.msra.mxu0 0.0
    %3368 = vmatprep.subr.mxu0 0.0
    %3369 = vmatpush1.msra.mxu0 0.0
    %3370 = vmatprep.subr.mxu0 0.0
    %3371 = vmatpush1.msra.mxu0 0.0
    %3372 = vmatprep.subr.mxu0 0.0
    %3373 = vmatpush1.msra.mxu0 0.0
    %3374 = vmatprep.subr.mxu0 0.0
    %3375 = vmatpush1.msra.mxu0 0.0
    %3376 = vmatprep.subr.mxu0 0.0
    %3377 = vmatpush1.msra.mxu0 0.0
    %3378 = vmatprep.subr.mxu0 0.0
    %3379 = vmatpush1.msra.mxu0 0.0
    %3380 = vmatprep.mubr.f32.mxu0 0.0
    %3381 = vmatmul.mubr.f32.gmra.mrb[0].mxu0 %v3115
    %v3382 = vpop.f32.mrb[0].mxu0
    %v3383 = vadd.f32 %v3314, %v3382
    %v3384 = vpop.f32.mrb[0].mxu0
    %3385 = vmatprep.mubr.f32.mxu0 0.0
    %3386 = vmatmul.mubr.f32.gmra.mrb[0].mxu0 %v3118
    %v3387 = vpop.f32.mrb[0].mxu0
    %v3388 = vadd.f32 %v3314, %v3387
    %v3389 = vpop.f32.mrb[0].mxu0
    %3390 = vdwg.mxu0
    %s3391 = scalar_lea.vmem [#allocation17], 224
    %v3392 = vld [vmem:[%s3391] sm:$0xff]
    %v3393 = vld [vmem:[%s3391 + $0x8] sm:$0xff]
    %v3394 = vld [vmem:[%s3391 + $0x10] sm:$0xff]
    %v3395 = vld [vmem:[%s3391 + $0x18] sm:$0xff]
    %s3396 = scalar_lea.vmem [#allocation20], 7
    %v3397 = vld [vmem:[%s3396] sm:$0x1]
    %v3399 = vlaneseq
    %v3400 = vshrl.u32 %v3399, 7
    %v3401 = vsub.s32 0, %v3400
    %v3402 = vrot.slane %v3397, %v3401
    %3404 = vmatprep.subr.mxu0 0.0
    %3405 = vmatpush1.msra.mxu0 %v3392
    %3406 = vmatprep.subr.mxu0 0.0
    %3407 = vmatpush1.msra.mxu0 %v3393
    %3408 = vmatprep.subr.mxu0 0.0
    %3409 = vmatpush1.msra.mxu0 %v3394
    %3410 = vmatprep.subr.mxu0 0.0
    %3411 = vmatpush1.msra.mxu0 %v3395
    %3412 = vmatprep.subr.mxu0 0.0
    %3413 = vmatpush1.msra.mxu0 0.0
    %3414 = vmatprep.subr.mxu0 0.0
    %3415 = vmatpush1.msra.mxu0 0.0
    %3416 = vmatprep.subr.mxu0 0.0
    %3417 = vmatpush1.msra.mxu0 0.0
    %3418 = vmatprep.subr.mxu0 0.0
    %3419 = vmatpush1.msra.mxu0 0.0
    %3420 = vmatprep.subr.mxu0 0.0
    %3421 = vmatpush1.msra.mxu0 0.0
    %3422 = vmatprep.subr.mxu0 0.0
    %3423 = vmatpush1.msra.mxu0 0.0
    %3424 = vmatprep.subr.mxu0 0.0
    %3425 = vmatpush1.msra.mxu0 0.0
    %3426 = vmatprep.subr.mxu0 0.0
    %3427 = vmatpush1.msra.mxu0 0.0
    %3428 = vmatprep.subr.mxu0 0.0
    %3429 = vmatpush1.msra.mxu0 0.0
    %3430 = vmatprep.subr.mxu0 0.0
    %3431 = vmatpush1.msra.mxu0 0.0
    %3432 = vmatprep.subr.mxu0 0.0
    %3433 = vmatpush1.msra.mxu0 0.0
    %3434 = vmatprep.subr.mxu0 0.0
    %3435 = vmatpush1.msra.mxu0 0.0
    %3436 = vmatprep.subr.mxu0 0.0
    %3437 = vmatpush1.msra.mxu0 0.0
    %3438 = vmatprep.subr.mxu0 0.0
    %3439 = vmatpush1.msra.mxu0 0.0
    %3440 = vmatprep.subr.mxu0 0.0
    %3441 = vmatpush1.msra.mxu0 0.0
    %3442 = vmatprep.subr.mxu0 0.0
    %3443 = vmatpush1.msra.mxu0 0.0
    %3444 = vmatprep.subr.mxu0 0.0
    %3445 = vmatpush1.msra.mxu0 0.0
    %3446 = vmatprep.subr.mxu0 0.0
    %3447 = vmatpush1.msra.mxu0 0.0
    %3448 = vmatprep.subr.mxu0 0.0
    %3449 = vmatpush1.msra.mxu0 0.0
    %3450 = vmatprep.subr.mxu0 0.0
    %3451 = vmatpush1.msra.mxu0 0.0
    %3452 = vmatprep.subr.mxu0 0.0
    %3453 = vmatpush1.msra.mxu0 0.0
    %3454 = vmatprep.subr.mxu0 0.0
    %3455 = vmatpush1.msra.mxu0 0.0
    %3456 = vmatprep.subr.mxu0 0.0
    %3457 = vmatpush1.msra.mxu0 0.0
    %3458 = vmatprep.subr.mxu0 0.0
    %3459 = vmatpush1.msra.mxu0 0.0
    %3460 = vmatprep.subr.mxu0 0.0
    %3461 = vmatpush1.msra.mxu0 0.0
    %3462 = vmatprep.subr.mxu0 0.0
    %3463 = vmatpush1.msra.mxu0 0.0
    %3464 = vmatprep.subr.mxu0 0.0
    %3465 = vmatpush1.msra.mxu0 0.0
    %3466 = vmatprep.subr.mxu0 0.0
    %3467 = vmatpush1.msra.mxu0 0.0
    %3468 = vmatprep.mubr.f32.mxu0 0.0
    %3469 = vmatmul.mubr.f32.gmra.mrb[0].mxu0 %v3209
    %v3470 = vpop.f32.mrb[0].mxu0
    %v3471 = vadd.f32 %v3402, %v3470
    %v3472 = vpop.f32.mrb[0].mxu0
    %3473 = vmatprep.mubr.f32.mxu0 0.0
    %3474 = vmatmul.mubr.f32.gmra.mrb[0].mxu0 %v3212
    %v3475 = vpop.f32.mrb[0].mxu0
    %v3476 = vadd.f32 %v3402, %v3475
    %v3477 = vpop.f32.mrb[0].mxu0
    %3478 = vdwg.mxu0
    %v3479 = vadd.f32 %v3383, %v3471
    %v3480 = vadd.f32 %v3388, %v3476
    %v3481 = vxor.u32 %v3479, 2147483648
    %v3482 = vxor.u32 %v3480, 2147483648
    %v3483 = vmul.f32 %v3481, 1.442695
    %v3484 = vpow.pop %v3483
    %v3485 = vmul.f32 %v3482, 1.442695
    %v3486 = vpow.pop %v3485
    %v3487 = vadd.f32 %v3484, 1.0
    %v3488 = vadd.f32 %v3486, 1.0
    %v3489 = vrcp.pop %v3487
    %v3490 = vmul.f32 1.0, %v3489
    %v3491 = vrcp.pop %v3488
    %v3492 = vmul.f32 1.0, %v3491
    %s3493 = scalar_lea.vmem [#allocation16], 256
    %v3494 = vld [vmem:[%s3493] sm:$0xff]
    %v3495 = vld [vmem:[%s3493 + $0x8] sm:$0xff]
    %v3496 = vld [vmem:[%s3493 + $0x10] sm:$0xff]
    %v3497 = vld [vmem:[%s3493 + $0x18] sm:$0xff]
    %s3498 = scalar_lea.vmem [#allocation19], 8
    %v3499 = vld [vmem:[%s3498] sm:$0x1]
    %v3501 = vlaneseq
    %v3502 = vshrl.u32 %v3501, 7
    %v3503 = vsub.s32 0, %v3502
    %v3504 = vrot.slane %v3499, %v3503
    %3506 = vmatprep.subr.mxu0 0.0
    %3507 = vmatpush1.msra.mxu0 %v3494
    %3508 = vmatprep.subr.mxu0 0.0
    %3509 = vmatpush1.msra.mxu0 %v3495
    %3510 = vmatprep.subr.mxu0 0.0
    %3511 = vmatpush1.msra.mxu0 %v3496
    %3512 = vmatprep.subr.mxu0 0.0
    %3513 = vmatpush1.msra.mxu0 %v3497
    %3514 = vmatprep.subr.mxu0 0.0
    %3515 = vmatpush1.msra.mxu0 0.0
    %3516 = vmatprep.subr.mxu0 0.0
    %3517 = vmatpush1.msra.mxu0 0.0
    %3518 = vmatprep.subr.mxu0 0.0
    %3519 = vmatpush1.msra.mxu0 0.0
    %3520 = vmatprep.subr.mxu0 0.0
    %3521 = vmatpush1.msra.mxu0 0.0
    %3522 = vmatprep.subr.mxu0 0.0
    %3523 = vmatpush1.msra.mxu0 0.0
    %3524 = vmatprep.subr.mxu0 0.0
    %3525 = vmatpush1.msra.mxu0 0.0
    %3526 = vmatprep.subr.mxu0 0.0
    %3527 = vmatpush1.msra.mxu0 0.0
    %3528 = vmatprep.subr.mxu0 0.0
    %3529 = vmatpush1.msra.mxu0 0.0
    %3530 = vmatprep.subr.mxu0 0.0
    %3531 = vmatpush1.msra.mxu0 0.0
    %3532 = vmatprep.subr.mxu0 0.0
    %3533 = vmatpush1.msra.mxu0 0.0
    %3534 = vmatprep.subr.mxu0 0.0
    %3535 = vmatpush1.msra.mxu0 0.0
    %3536 = vmatprep.subr.mxu0 0.0
    %3537 = vmatpush1.msra.mxu0 0.0
    %3538 = vmatprep.subr.mxu0 0.0
    %3539 = vmatpush1.msra.mxu0 0.0
    %3540 = vmatprep.subr.mxu0 0.0
    %3541 = vmatpush1.msra.mxu0 0.0
    %3542 = vmatprep.subr.mxu0 0.0
    %3543 = vmatpush1.msra.mxu0 0.0
    %3544 = vmatprep.subr.mxu0 0.0
    %3545 = vmatpush1.msra.mxu0 0.0
    %3546 = vmatprep.subr.mxu0 0.0
    %3547 = vmatpush1.msra.mxu0 0.0
    %3548 = vmatprep.subr.mxu0 0.0
    %3549 = vmatpush1.msra.mxu0 0.0
    %3550 = vmatprep.subr.mxu0 0.0
    %3551 = vmatpush1.msra.mxu0 0.0
    %3552 = vmatprep.subr.mxu0 0.0
    %3553 = vmatpush1.msra.mxu0 0.0
    %3554 = vmatprep.subr.mxu0 0.0
    %3555 = vmatpush1.msra.mxu0 0.0
    %3556 = vmatprep.subr.mxu0 0.0
    %3557 = vmatpush1.msra.mxu0 0.0
    %3558 = vmatprep.subr.mxu0 0.0
    %3559 = vmatpush1.msra.mxu0 0.0
    %3560 = vmatprep.subr.mxu0 0.0
    %3561 = vmatpush1.msra.mxu0 0.0
    %3562 = vmatprep.subr.mxu0 0.0
    %3563 = vmatpush1.msra.mxu0 0.0
    %3564 = vmatprep.subr.mxu0 0.0
    %3565 = vmatpush1.msra.mxu0 0.0
    %3566 = vmatprep.subr.mxu0 0.0
    %3567 = vmatpush1.msra.mxu0 0.0
    %3568 = vmatprep.subr.mxu0 0.0
    %3569 = vmatpush1.msra.mxu0 0.0
    %3570 = vmatprep.mubr.f32.mxu0 0.0
    %3571 = vmatmul.mubr.f32.gmra.mrb[0].mxu0 %v3115
    %v3572 = vpop.f32.mrb[0].mxu0
    %v3573 = vadd.f32 %v3504, %v3572
    %v3574 = vpop.f32.mrb[0].mxu0
    %3575 = vmatprep.mubr.f32.mxu0 0.0
    %3576 = vmatmul.mubr.f32.gmra.mrb[0].mxu0 %v3118
    %v3577 = vpop.f32.mrb[0].mxu0
    %v3578 = vadd.f32 %v3504, %v3577
    %v3579 = vpop.f32.mrb[0].mxu0
    %3580 = vdwg.mxu0
    %s3581 = scalar_lea.vmem [#allocation17], 256
    %v3582 = vld [vmem:[%s3581] sm:$0xff]
    %v3583 = vld [vmem:[%s3581 + $0x8] sm:$0xff]
    %v3584 = vld [vmem:[%s3581 + $0x10] sm:$0xff]
    %v3585 = vld [vmem:[%s3581 + $0x18] sm:$0xff]
    %s3586 = scalar_lea.vmem [#allocation20], 8
    %v3587 = vld [vmem:[%s3586] sm:$0x1]
    %v3589 = vlaneseq
    %v3590 = vshrl.u32 %v3589, 7
    %v3591 = vsub.s32 0, %v3590
    %v3592 = vrot.slane %v3587, %v3591
    %3594 = vmatprep.subr.mxu0 0.0
    %3595 = vmatpush1.msra.mxu0 %v3582
    %3596 = vmatprep.subr.mxu0 0.0
    %3597 = vmatpush1.msra.mxu0 %v3583
    %3598 = vmatprep.subr.mxu0 0.0
    %3599 = vmatpush1.msra.mxu0 %v3584
    %3600 = vmatprep.subr.mxu0 0.0
    %3601 = vmatpush1.msra.mxu0 %v3585
    %3602 = vmatprep.subr.mxu0 0.0
    %3603 = vmatpush1.msra.mxu0 0.0
    %3604 = vmatprep.subr.mxu0 0.0
    %3605 = vmatpush1.msra.mxu0 0.0
    %3606 = vmatprep.subr.mxu0 0.0
    %3607 = vmatpush1.msra.mxu0 0.0
    %3608 = vmatprep.subr.mxu0 0.0
    %3609 = vmatpush1.msra.mxu0 0.0
    %3610 = vmatprep.subr.mxu0 0.0
    %3611 = vmatpush1.msra.mxu0 0.0
    %3612 = vmatprep.subr.mxu0 0.0
    %3613 = vmatpush1.msra.mxu0 0.0
    %3614 = vmatprep.subr.mxu0 0.0
    %3615 = vmatpush1.msra.mxu0 0.0
    %3616 = vmatprep.subr.mxu0 0.0
    %3617 = vmatpush1.msra.mxu0 0.0
    %3618 = vmatprep.subr.mxu0 0.0
    %3619 = vmatpush1.msra.mxu0 0.0
    %3620 = vmatprep.subr.mxu0 0.0
    %3621 = vmatpush1.msra.mxu0 0.0
    %3622 = vmatprep.subr.mxu0 0.0
    %3623 = vmatpush1.msra.mxu0 0.0
    %3624 = vmatprep.subr.mxu0 0.0
    %3625 = vmatpush1.msra.mxu0 0.0
    %3626 = vmatprep.subr.mxu0 0.0
    %3627 = vmatpush1.msra.mxu0 0.0
    %3628 = vmatprep.subr.mxu0 0.0
    %3629 = vmatpush1.msra.mxu0 0.0
    %3630 = vmatprep.subr.mxu0 0.0
    %3631 = vmatpush1.msra.mxu0 0.0
    %3632 = vmatprep.subr.mxu0 0.0
    %3633 = vmatpush1.msra.mxu0 0.0
    %3634 = vmatprep.subr.mxu0 0.0
    %3635 = vmatpush1.msra.mxu0 0.0
    %3636 = vmatprep.subr.mxu0 0.0
    %3637 = vmatpush1.msra.mxu0 0.0
    %3638 = vmatprep.subr.mxu0 0.0
    %3639 = vmatpush1.msra.mxu0 0.0
    %3640 = vmatprep.subr.mxu0 0.0
    %3641 = vmatpush1.msra.mxu0 0.0
    %3642 = vmatprep.subr.mxu0 0.0
    %3643 = vmatpush1.msra.mxu0 0.0
    %3644 = vmatprep.subr.mxu0 0.0
    %3645 = vmatpush1.msra.mxu0 0.0
    %3646 = vmatprep.subr.mxu0 0.0
    %3647 = vmatpush1.msra.mxu0 0.0
    %3648 = vmatprep.subr.mxu0 0.0
    %3649 = vmatpush1.msra.mxu0 0.0
    %3650 = vmatprep.subr.mxu0 0.0
    %3651 = vmatpush1.msra.mxu0 0.0
    %3652 = vmatprep.subr.mxu0 0.0
    %3653 = vmatpush1.msra.mxu0 0.0
    %3654 = vmatprep.subr.mxu0 0.0
    %3655 = vmatpush1.msra.mxu0 0.0
    %3656 = vmatprep.subr.mxu0 0.0
    %3657 = vmatpush1.msra.mxu0 0.0
    %3658 = vmatprep.mubr.f32.mxu0 0.0
    %3659 = vmatmul.mubr.f32.gmra.mrb[0].mxu0 %v3209
    %v3660 = vpop.f32.mrb[0].mxu0
    %v3661 = vadd.f32 %v3592, %v3660
    %v3662 = vpop.f32.mrb[0].mxu0
    %3663 = vmatprep.mubr.f32.mxu0 0.0
    %3664 = vmatmul.mubr.f32.gmra.mrb[0].mxu0 %v3212
    %v3665 = vpop.f32.mrb[0].mxu0
    %v3666 = vadd.f32 %v3592, %v3665
    %v3667 = vpop.f32.mrb[0].mxu0
    %3668 = vdwg.mxu0
    %v3669 = vmul.f32 %v3300, %v3661
    %v3670 = vmul.f32 %v3302, %v3666
    %v3671 = vadd.f32 %v3573, %v3669
    %v3672 = vadd.f32 %v3578, %v3670
    %v3673 = vtanh.pop %v3671
    %v3674 = vtanh.pop %v3672
    %v3675 = vsub.f32 1.0, %v3490
    %v3676 = vsub.f32 1.0, %v3492
    %v3677 = vmul.f32 %v3675, %v3673
    %v3678 = vmul.f32 %v3676, %v3674
    %v3679 = vmul.f32 %v3490, %v2611
    %v3680 = vmul.f32 %v3492, %v2612
    %v3681 = vadd.f32 %v3677, %v3679
    %v3682 = vadd.f32 %v3678, %v3680
    %vm3683 = vcmp.ge.f32.partialorder %v3681, 0.0
    %vm3684 = vcmp.ge.f32.partialorder %v3682, 0.0
    %v3685 = vmul.f32 %v3681, 0.01
    %v3686 = vmul.f32 %v3682, 0.01
    %v3687 = vsel %vm3683, %v3681, %v3685
    %v3688 = vsel %vm3684, %v3682, %v3686
    %3689 = vst.msk [vmem:[#allocation38] sm:$0xff] %vm651, %v3687
    %3690 = vst.msk [vmem:[#allocation38 + $0x8] sm:$0xff] %vm651, %v3688
    %3691 = vxpose.xlu0.b32.start [1/16] %v437, 128
    %3692 = vxpose.xlu0.b32.cont [2/16] %v438, 128
    %3693 = vxpose.xlu0.b32.cont [3/16] 0.0, 128
    %3694 = vxpose.xlu0.b32.cont [4/16] 0.0, 128
    %3695 = vxpose.xlu0.b32.cont [5/16] 0.0, 128
    %3696 = vxpose.xlu0.b32.cont [6/16] 0.0, 128
    %3697 = vxpose.xlu0.b32.cont [7/16] 0.0, 128
    %3698 = vxpose.xlu0.b32.cont [8/16] 0.0, 128
    %3699 = vxpose.xlu0.b32.cont [9/16] 0.0, 128
    %3700 = vxpose.xlu0.b32.cont [10/16] 0.0, 128
    %3701 = vxpose.xlu0.b32.cont [11/16] 0.0, 128
    %3702 = vxpose.xlu0.b32.cont [12/16] 0.0, 128
    %3703 = vxpose.xlu0.b32.cont [13/16] 0.0, 128
    %3704 = vxpose.xlu0.b32.cont [14/16] 0.0, 128
    %3705 = vxpose.xlu0.b32.cont [15/16] 0.0, 128
    %3706 = vxpose.xlu0.b32.end [16/16] 0.0, 128
    %v3707 = vpop.trf.xlu0
    %v3708 = vpop.trf.xlu0
    %v3709 = vpop.trf.xlu0
    %v3710 = vpop.trf.xlu0
    %v3711 = vpop.trf.xlu0
    %v3712 = vpop.trf.xlu0
    %v3713 = vpop.trf.xlu0
    %v3714 = vpop.trf.xlu0
    %v3715 = vpop.trf.xlu0
    %v3716 = vpop.trf.xlu0
    %v3717 = vpop.trf.xlu0
    %v3718 = vpop.trf.xlu0
    %v3719 = vpop.trf.xlu0
    %v3720 = vpop.trf.xlu0
    %v3721 = vpop.trf.xlu0
    %v3722 = vpop.trf.xlu0
    %v3724 = vsel %vm549, %v3707, 0
    %3726 = vmatprep.subr.mxu0 0.0
    %3727 = vmatpush1.msra.mxu0 %v3687
    %3728 = vmatprep.subr.mxu0 0.0
    %3729 = vmatpush1.msra.mxu0 %v3688
    %3730 = vmatprep.subr.mxu0 0.0
    %3731 = vmatpush1.msra.mxu0 0.0
    %3732 = vmatprep.subr.mxu0 0.0
    %3733 = vmatpush1.msra.mxu0 0.0
    %3734 = vmatprep.subr.mxu0 0.0
    %3735 = vmatpush1.msra.mxu0 0.0
    %3736 = vmatprep.subr.mxu0 0.0
    %3737 = vmatpush1.msra.mxu0 0.0
    %3738 = vmatprep.subr.mxu0 0.0
    %3739 = vmatpush1.msra.mxu0 0.0
    %3740 = vmatprep.subr.mxu0 0.0
    %3741 = vmatpush1.msra.mxu0 0.0
    %3742 = vmatprep.subr.mxu0 0.0
    %3743 = vmatpush1.msra.mxu0 0.0
    %3744 = vmatprep.subr.mxu0 0.0
    %3745 = vmatpush1.msra.mxu0 0.0
    %3746 = vmatprep.subr.mxu0 0.0
    %3747 = vmatpush1.msra.mxu0 0.0
    %3748 = vmatprep.subr.mxu0 0.0
    %3749 = vmatpush1.msra.mxu0 0.0
    %3750 = vmatprep.subr.mxu0 0.0
    %3751 = vmatpush1.msra.mxu0 0.0
    %3752 = vmatprep.subr.mxu0 0.0
    %3753 = vmatpush1.msra.mxu0 0.0
    %3754 = vmatprep.subr.mxu0 0.0
    %3755 = vmatpush1.msra.mxu0 0.0
    %3756 = vmatprep.subr.mxu0 0.0
    %3757 = vmatpush1.msra.mxu0 0.0
    %3758 = vmatprep.subr.mxu0 0.0
    %3759 = vmatpush1.msra.mxu0 0.0
    %3760 = vmatprep.subr.mxu0 0.0
    %3761 = vmatpush1.msra.mxu0 0.0
    %3762 = vmatprep.subr.mxu0 0.0
    %3763 = vmatpush1.msra.mxu0 0.0
    %3764 = vmatprep.subr.mxu0 0.0
    %3765 = vmatpush1.msra.mxu0 0.0
    %3766 = vmatprep.subr.mxu0 0.0
    %3767 = vmatpush1.msra.mxu0 0.0
    %3768 = vmatprep.subr.mxu0 0.0
    %3769 = vmatpush1.msra.mxu0 0.0
    %3770 = vmatprep.subr.mxu0 0.0
    %3771 = vmatpush1.msra.mxu0 0.0
    %3772 = vmatprep.subr.mxu0 0.0
    %3773 = vmatpush1.msra.mxu0 0.0
    %3774 = vmatprep.subr.mxu0 0.0
    %3775 = vmatpush1.msra.mxu0 0.0
    %3776 = vmatprep.subr.mxu0 0.0
    %3777 = vmatpush1.msra.mxu0 0.0
    %3778 = vmatprep.subr.mxu0 0.0
    %3779 = vmatpush1.msra.mxu0 0.0
    %3780 = vmatprep.subr.mxu0 0.0
    %3781 = vmatpush1.msra.mxu0 0.0
    %3782 = vmatprep.subr.mxu0 0.0
    %3783 = vmatpush1.msra.mxu0 0.0
    %3784 = vmatprep.subr.mxu0 0.0
    %3785 = vmatpush1.msra.mxu0 0.0
    %3786 = vmatprep.subr.mxu0 0.0
    %3787 = vmatpush1.msra.mxu0 0.0
    %3788 = vmatprep.subr.mxu0 0.0
    %3789 = vmatpush1.msra.mxu0 0.0
    %3790 = vmatprep.mubr.f32.mxu0 0.0
    %3791 = vmatmul.mubr.f32.gmra.mrb[0].mxu0 %v3724
    %v3792 = vpop.f32.mrb[0].mxu0
    %v3793 = vadd.f32 0.0, %v3792
    %v3794 = vpop.f32.mrb[0].mxu0
    %3795 = vdwg.mxu0
    %vm3796 = vcmp.ge.f32.partialorder %v3793, 0.0
    %v3797 = vmul.f32 %v3793, 0.01
    %v3798 = vsel %vm3796, %v3793, %v3797
    %v3799 = vld [vmem:[#allocation22] sm:$0xff]
    %v3800 = vld [vmem:[#allocation22 + $0x8] sm:$0xff]
    %v3801 = vld [vmem:[#allocation22 + $0x10] sm:$0xff]
    %v3802 = vld [vmem:[#allocation22 + $0x18] sm:$0xff]
    %v3803 = vld [vmem:[#allocation23] sm:$0x1]
    %v3805 = vlaneseq
    %v3806 = vshrl.u32 %v3805, 7
    %v3807 = vsub.s32 0, %v3806
    %v3808 = vrot.slane %v3803, %v3807
    %v3811 = vsel %vm651, %v3687, 0
    %v3814 = vsel %vm651, %v3688, 0
    %3816 = vmatprep.subr.mxu0 0.0
    %3817 = vmatpush1.msra.mxu0 %v3799
    %3818 = vmatprep.subr.mxu0 0.0
    %3819 = vmatpush1.msra.mxu0 %v3800
    %3820 = vmatprep.subr.mxu0 0.0
    %3821 = vmatpush1.msra.mxu0 %v3801
    %3822 = vmatprep.subr.mxu0 0.0
    %3823 = vmatpush1.msra.mxu0 %v3802
    %3824 = vmatprep.subr.mxu0 0.0
    %3825 = vmatpush1.msra.mxu0 0.0
    %3826 = vmatprep.subr.mxu0 0.0
    %3827 = vmatpush1.msra.mxu0 0.0
    %3828 = vmatprep.subr.mxu0 0.0
    %3829 = vmatpush1.msra.mxu0 0.0
    %3830 = vmatprep.subr.mxu0 0.0
    %3831 = vmatpush1.msra.mxu0 0.0
    %3832 = vmatprep.subr.mxu0 0.0
    %3833 = vmatpush1.msra.mxu0 0.0
    %3834 = vmatprep.subr.mxu0 0.0
    %3835 = vmatpush1.msra.mxu0 0.0
    %3836 = vmatprep.subr.mxu0 0.0
    %3837 = vmatpush1.msra.mxu0 0.0
    %3838 = vmatprep.subr.mxu0 0.0
    %3839 = vmatpush1.msra.mxu0 0.0
    %3840 = vmatprep.subr.mxu0 0.0
    %3841 = vmatpush1.msra.mxu0 0.0
    %3842 = vmatprep.subr.mxu0 0.0
    %3843 = vmatpush1.msra.mxu0 0.0
    %3844 = vmatprep.subr.mxu0 0.0
    %3845 = vmatpush1.msra.mxu0 0.0
    %3846 = vmatprep.subr.mxu0 0.0
    %3847 = vmatpush1.msra.mxu0 0.0
    %3848 = vmatprep.subr.mxu0 0.0
    %3849 = vmatpush1.msra.mxu0 0.0
    %3850 = vmatprep.subr.mxu0 0.0
    %3851 = vmatpush1.msra.mxu0 0.0
    %3852 = vmatprep.subr.mxu0 0.0
    %3853 = vmatpush1.msra.mxu0 0.0
    %3854 = vmatprep.subr.mxu0 0.0
    %3855 = vmatpush1.msra.mxu0 0.0
    %3856 = vmatprep.subr.mxu0 0.0
    %3857 = vmatpush1.msra.mxu0 0.0
    %3858 = vmatprep.subr.mxu0 0.0
    %3859 = vmatpush1.msra.mxu0 0.0
    %3860 = vmatprep.subr.mxu0 0.0
    %3861 = vmatpush1.msra.mxu0 0.0
    %3862 = vmatprep.subr.mxu0 0.0
    %3863 = vmatpush1.msra.mxu0 0.0
    %3864 = vmatprep.subr.mxu0 0.0
    %3865 = vmatpush1.msra.mxu0 0.0
    %3866 = vmatprep.subr.mxu0 0.0
    %3867 = vmatpush1.msra.mxu0 0.0
    %3868 = vmatprep.subr.mxu0 0.0
    %3869 = vmatpush1.msra.mxu0 0.0
    %3870 = vmatprep.subr.mxu0 0.0
    %3871 = vmatpush1.msra.mxu0 0.0
    %3872 = vmatprep.subr.mxu0 0.0
    %3873 = vmatpush1.msra.mxu0 0.0
    %3874 = vmatprep.subr.mxu0 0.0
    %3875 = vmatpush1.msra.mxu0 0.0
    %3876 = vmatprep.subr.mxu0 0.0
    %3877 = vmatpush1.msra.mxu0 0.0
    %3878 = vmatprep.subr.mxu0 0.0
    %3879 = vmatpush1.msra.mxu0 0.0
    %3880 = vmatprep.mubr.f32.mxu0 0.0
    %3881 = vmatmul.mubr.f32.gmra.mrb[0].mxu0 %v3811
    %v3882 = vpop.f32.mrb[0].mxu0
    %v3883 = vadd.f32 %v3808, %v3882
    %v3884 = vpop.f32.mrb[0].mxu0
    %3885 = vmatprep.mubr.f32.mxu0 0.0
    %3886 = vmatmul.mubr.f32.gmra.mrb[0].mxu0 %v3814
    %v3887 = vpop.f32.mrb[0].mxu0
    %v3888 = vadd.f32 %v3808, %v3887
    %v3889 = vpop.f32.mrb[0].mxu0
    %3890 = vdwg.mxu0
    %v3891 = vld [vmem:[#allocation28] sm:$0x1]
    %v3892 = vld [vmem:[#allocation29] sm:$0x1]
    %v3893 = vld [vmem:[#allocation25] sm:$0xff]
    %v3894 = vld [vmem:[#allocation25 + $0x8] sm:$0xff]
    %v3895 = vld [vmem:[#allocation25 + $0x10] sm:$0xff]
    %v3896 = vld [vmem:[#allocation25 + $0x18] sm:$0xff]
    %v3897 = vld [vmem:[#allocation26] sm:$0x1]
    %v3899 = vlaneseq
    %v3900 = vshrl.u32 %v3899, 7
    %v3901 = vsub.s32 0, %v3900
    %v3902 = vrot.slane %v3897, %v3901
    %v3905 = vsel %vm651, %v3798, 0
    %3907 = vmatprep.subr.mxu0 0.0
    %3908 = vmatpush1.msra.mxu0 %v3893
    %3909 = vmatprep.subr.mxu0 0.0
    %3910 = vmatpush1.msra.mxu0 %v3894
    %3911 = vmatprep.subr.mxu0 0.0
    %3912 = vmatpush1.msra.mxu0 %v3895
    %3913 = vmatprep.subr.mxu0 0.0
    %3914 = vmatpush1.msra.mxu0 %v3896
    %3915 = vmatprep.subr.mxu0 0.0
    %3916 = vmatpush1.msra.mxu0 0.0
    %3917 = vmatprep.subr.mxu0 0.0
    %3918 = vmatpush1.msra.mxu0 0.0
    %3919 = vmatprep.subr.mxu0 0.0
    %3920 = vmatpush1.msra.mxu0 0.0
    %3921 = vmatprep.subr.mxu0 0.0
    %3922 = vmatpush1.msra.mxu0 0.0
    %3923 = vmatprep.subr.mxu0 0.0
    %3924 = vmatpush1.msra.mxu0 0.0
    %3925 = vmatprep.subr.mxu0 0.0
    %3926 = vmatpush1.msra.mxu0 0.0
    %3927 = vmatprep.subr.mxu0 0.0
    %3928 = vmatpush1.msra.mxu0 0.0
    %3929 = vmatprep.subr.mxu0 0.0
    %3930 = vmatpush1.msra.mxu0 0.0
    %3931 = vmatprep.subr.mxu0 0.0
    %3932 = vmatpush1.msra.mxu0 0.0
    %3933 = vmatprep.subr.mxu0 0.0
    %3934 = vmatpush1.msra.mxu0 0.0
    %3935 = vmatprep.subr.mxu0 0.0
    %3936 = vmatpush1.msra.mxu0 0.0
    %3937 = vmatprep.subr.mxu0 0.0
    %3938 = vmatpush1.msra.mxu0 0.0
    %3939 = vmatprep.subr.mxu0 0.0
    %3940 = vmatpush1.msra.mxu0 0.0
    %3941 = vmatprep.subr.mxu0 0.0
    %3942 = vmatpush1.msra.mxu0 0.0
    %3943 = vmatprep.subr.mxu0 0.0
    %3944 = vmatpush1.msra.mxu0 0.0
    %3945 = vmatprep.subr.mxu0 0.0
    %3946 = vmatpush1.msra.mxu0 0.0
    %3947 = vmatprep.subr.mxu0 0.0
    %3948 = vmatpush1.msra.mxu0 0.0
    %3949 = vmatprep.subr.mxu0 0.0
    %3950 = vmatpush1.msra.mxu0 0.0
    %3951 = vmatprep.subr.mxu0 0.0
    %3952 = vmatpush1.msra.mxu0 0.0
    %3953 = vmatprep.subr.mxu0 0.0
    %3954 = vmatpush1.msra.mxu0 0.0
    %3955 = vmatprep.subr.mxu0 0.0
    %3956 = vmatpush1.msra.mxu0 0.0
    %3957 = vmatprep.subr.mxu0 0.0
    %3958 = vmatpush1.msra.mxu0 0.0
    %3959 = vmatprep.subr.mxu0 0.0
    %3960 = vmatpush1.msra.mxu0 0.0
    %3961 = vmatprep.subr.mxu0 0.0
    %3962 = vmatpush1.msra.mxu0 0.0
    %3963 = vmatprep.subr.mxu0 0.0
    %3964 = vmatpush1.msra.mxu0 0.0
    %3965 = vmatprep.subr.mxu0 0.0
    %3966 = vmatpush1.msra.mxu0 0.0
    %3967 = vmatprep.subr.mxu0 0.0
    %3968 = vmatpush1.msra.mxu0 0.0
    %3969 = vmatprep.subr.mxu0 0.0
    %3970 = vmatpush1.msra.mxu0 0.0
    %3971 = vmatprep.mubr.f32.mxu0 0.0
    %3972 = vmatmul.mubr.f32.gmra.mrb[0].mxu0 %v3905
    %v3973 = vpop.f32.mrb[0].mxu0
    %v3974 = vadd.f32 %v3902, %v3973
    %v3975 = vpop.f32.mrb[0].mxu0
    %3976 = vdwg.mxu0
    %vm3977 = vcmask 15360
    %v3979 = vsel %vm3977, %v437, 0
    %v3982 = vsel %vm3977, %v438, 0
    %vm3984 = vcmask 1041408
    %v3986 = vsel %vm3984, %v3974, 0
    %3988 = vmatprep.subr.mxu0 0.0
    %3989 = vmatpush1.msra.mxu0 %v3986
    %3990 = vmatprep.subr.mxu0 0.0
    %3991 = vmatpush1.msra.mxu0 0.0
    %3992 = vmatprep.subr.mxu0 0.0
    %3993 = vmatpush1.msra.mxu0 0.0
    %3994 = vmatprep.subr.mxu0 0.0
    %3995 = vmatpush1.msra.mxu0 0.0
    %3996 = vmatprep.subr.mxu0 0.0
    %3997 = vmatpush1.msra.mxu0 0.0
    %3998 = vmatprep.subr.mxu0 0.0
    %3999 = vmatpush1.msra.mxu0 0.0
    %4000 = vmatprep.subr.mxu0 0.0
    %4001 = vmatpush1.msra.mxu0 0.0
    %4002 = vmatprep.subr.mxu0 0.0
    %4003 = vmatpush1.msra.mxu0 0.0
    %4004 = vmatprep.subr.mxu0 0.0
    %4005 = vmatpush1.msra.mxu0 0.0
    %4006 = vmatprep.subr.mxu0 0.0
    %4007 = vmatpush1.msra.mxu0 0.0
    %4008 = vmatprep.subr.mxu0 0.0
    %4009 = vmatpush1.msra.mxu0 0.0
    %4010 = vmatprep.subr.mxu0 0.0
    %4011 = vmatpush1.msra.mxu0 0.0
    %4012 = vmatprep.subr.mxu0 0.0
    %4013 = vmatpush1.msra.mxu0 0.0
    %4014 = vmatprep.subr.mxu0 0.0
    %4015 = vmatpush1.msra.mxu0 0.0
    %4016 = vmatprep.subr.mxu0 0.0
    %4017 = vmatpush1.msra.mxu0 0.0
    %4018 = vmatprep.subr.mxu0 0.0
    %4019 = vmatpush1.msra.mxu0 0.0
    %4020 = vmatprep.subr.mxu0 0.0
    %4021 = vmatpush1.msra.mxu0 0.0
    %4022 = vmatprep.subr.mxu0 0.0
    %4023 = vmatpush1.msra.mxu0 0.0
    %4024 = vmatprep.subr.mxu0 0.0
    %4025 = vmatpush1.msra.mxu0 0.0
    %4026 = vmatprep.subr.mxu0 0.0
    %4027 = vmatpush1.msra.mxu0 0.0
    %4028 = vmatprep.subr.mxu0 0.0
    %4029 = vmatpush1.msra.mxu0 0.0
    %4030 = vmatprep.subr.mxu0 0.0
    %4031 = vmatpush1.msra.mxu0 0.0
    %4032 = vmatprep.subr.mxu0 0.0
    %4033 = vmatpush1.msra.mxu0 0.0
    %4034 = vmatprep.subr.mxu0 0.0
    %4035 = vmatpush1.msra.mxu0 0.0
    %4036 = vmatprep.subr.mxu0 0.0
    %4037 = vmatpush1.msra.mxu0 0.0
    %4038 = vmatprep.subr.mxu0 0.0
    %4039 = vmatpush1.msra.mxu0 0.0
    %4040 = vmatprep.subr.mxu0 0.0
    %4041 = vmatpush1.msra.mxu0 0.0
    %4042 = vmatprep.subr.mxu0 0.0
    %4043 = vmatpush1.msra.mxu0 0.0
    %4044 = vmatprep.subr.mxu0 0.0
    %4045 = vmatpush1.msra.mxu0 0.0
    %4046 = vmatprep.subr.mxu0 0.0
    %4047 = vmatpush1.msra.mxu0 0.0
    %4048 = vmatprep.subr.mxu0 0.0
    %4049 = vmatpush1.msra.mxu0 0.0
    %4050 = vmatprep.subr.mxu0 0.0
    %4051 = vmatpush1.msra.mxu0 0.0
    %4052 = vmatprep.mubr.f32.mxu0 0.0
    %4053 = vmatmul.mubr.f32.gmra.mrb[0].mxu0 %v3979
    %v4054 = vpop.f32.mrb[0].mxu0
    %v4055 = vadd.f32 0.0, %v4054
    %v4056 = vpop.f32.mrb[0].mxu0
    %4057 = vmatprep.mubr.f32.mxu0 0.0
    %4058 = vmatmul.mubr.f32.gmra.mrb[0].mxu0 %v3982
    %v4059 = vpop.f32.mrb[0].mxu0
    %v4060 = vadd.f32 0.0, %v4059
    %v4061 = vpop.f32.mrb[0].mxu0
    %4062 = vdwg.mxu0
    %v4063 = vadd.f32 %v3883, %v4055
    %v4064 = vadd.f32 %v3888, %v4060
    %vm4065 = vcmp.ge.f32.partialorder %v4063, 0.0
    %vm4066 = vcmp.ge.f32.partialorder %v4064, 0.0
    %v4067 = vmul.f32 %v4063, 0.2
    %v4068 = vmul.f32 %v4064, 0.2
    %v4069 = vsel %vm4065, %v4063, %v4067
    %v4070 = vsel %vm4066, %v4064, %v4068
    %v4072 = vlaneseq
    %v4073 = vshrl.u32 %v4072, 7
    %v4074 = vsub.s32 0, %v4073
    %v4075 = vrot.slane %v3891, %v4074
    %v4077 = vmul.f32 %v4069, %v4075
    %v4078 = vmul.f32 %v4070, %v4075
    %v4079 = vsel %vm651, %v4077, 0.0
    %4080 = vadd.xlane.f32.xlu0 %v4079
    %v4081 = vpop.xlane.xlu0 %4080
    %v4082 = vsel %vm651, %v4078, 0.0
    %4083 = vadd.xlane.f32.xlu0 %v4082
    %v4084 = vpop.xlane.xlu0 %4083
    %vm4085 = vcmp.gt.f32.partialorder %v437, 0.0
    %vm4086 = vcmp.gt.f32.partialorder %v438, 0.0
    %v4087 = vsel %vm4085, %v4081, -1e+30
    %v4088 = vsel %vm4086, %v4084, -1e+30
    %v4089 = vsel %vm3977, %v4087, -inf
    %v4090 = vsel %vm3977, %v4088, -inf
    %v4091 = vmax.f32 %v4089, %v4090
    %v4092 = vrot.slane %v4091, 4
    %v4093 = vmax.f32 %v4091, %v4092
    %v4094 = vrot.slane %v4093, 2
    %v4095 = vmax.f32 %v4093, %v4094
    %v4096 = vrot.slane %v4095, 1
    %v4097 = vmax.f32 %v4095, %v4096
    %v4098 = vmul.f32 %v437, %v4097
    %v4099 = vmul.f32 %v438, %v4097
    %v4100 = vsel %vm3977, %v4098, 0.0
    %4101 = vadd.xlane.f32.xlu0 %v4100
    %v4102 = vpop.xlane.xlu0 %4101
    %v4103 = vsel %vm3977, %v4099, 0.0
    %4104 = vadd.xlane.f32.xlu0 %v4103
    %v4105 = vpop.xlane.xlu0 %4104
    %v4106 = vsub.f32 %v4081, %v4102
    %v4107 = vsub.f32 %v4084, %v4105
    %v4108 = vmul.f32 %v4106, 1.442695
    %v4109 = vpow.pop %v4108
    %v4110 = vmul.f32 %v4107, 1.442695
    %v4111 = vpow.pop %v4110
    %v4112 = vmul.f32 %v437, %v4109
    %v4113 = vmul.f32 %v438, %v4111
    %v4114 = vsel %vm3977, %v4112, 0.0
    %v4115 = vsel %vm3977, %v4113, 0.0
    %v4116 = vadd.f32 %v4114, %v4115
    %v4117 = vrot.slane %v4116, 4
    %v4118 = vadd.f32 %v4116, %v4117
    %v4119 = vrot.slane %v4118, 2
    %v4120 = vadd.f32 %v4118, %v4119
    %v4121 = vrot.slane %v4120, 1
    %v4122 = vadd.f32 %v4120, %v4121
    %v4123 = vadd.f32 %v4122, 1e-16
    %v4124 = vmul.f32 %v437, %v4123
    %v4125 = vmul.f32 %v438, %v4123
    %v4126 = vsel %vm3977, %v4124, 0.0
    %4127 = vadd.xlane.f32.xlu0 %v4126
    %v4128 = vpop.xlane.xlu0 %4127
    %v4129 = vsel %vm3977, %v4125, 0.0
    %4130 = vadd.xlane.f32.xlu0 %v4129
    %v4131 = vpop.xlane.xlu0 %4130
    %v4132 = vrcp.pop %v4128
    %v4133 = vrcp.pop %v4131
    %v4134 = vmul.f32 %v4109, %v4132
    %v4135 = vmul.f32 %v4111, %v4133
    %v4136 = vmul.f32 %v4134, %v3883
    %v4137 = vmul.f32 %v4135, %v3888
    %v4139 = vlaneseq
    %v4140 = vshrl.u32 %v4139, 7
    %v4141 = vsub.s32 0, %v4140
    %v4142 = vrot.slane %v3892, %v4141
    %4144 = vmatprep.subr.mxu0 0.0
    %4145 = vmatpush1.msra.mxu0 %v4136
    %4146 = vmatprep.subr.mxu0 0.0
    %4147 = vmatpush1.msra.mxu0 %v4137
    %4148 = vmatprep.subr.mxu0 0.0
    %4149 = vmatpush1.msra.mxu0 0.0
    %4150 = vmatprep.subr.mxu0 0.0
    %4151 = vmatpush1.msra.mxu0 0.0
    %4152 = vmatprep.subr.mxu0 0.0
    %4153 = vmatpush1.msra.mxu0 0.0
    %4154 = vmatprep.subr.mxu0 0.0
    %4155 = vmatpush1.msra.mxu0 0.0
    %4156 = vmatprep.subr.mxu0 0.0
    %4157 = vmatpush1.msra.mxu0 0.0
    %4158 = vmatprep.subr.mxu0 0.0
    %4159 = vmatpush1.msra.mxu0 0.0
    %4160 = vmatprep.subr.mxu0 0.0
    %4161 = vmatpush1.msra.mxu0 0.0
    %4162 = vmatprep.subr.mxu0 0.0
    %4163 = vmatpush1.msra.mxu0 0.0
    %4164 = vmatprep.subr.mxu0 0.0
    %4165 = vmatpush1.msra.mxu0 0.0
    %4166 = vmatprep.subr.mxu0 0.0
    %4167 = vmatpush1.msra.mxu0 0.0
    %4168 = vmatprep.subr.mxu0 0.0
    %4169 = vmatpush1.msra.mxu0 0.0
    %4170 = vmatprep.subr.mxu0 0.0
    %4171 = vmatpush1.msra.mxu0 0.0
    %4172 = vmatprep.subr.mxu0 0.0
    %4173 = vmatpush1.msra.mxu0 0.0
    %4174 = vmatprep.subr.mxu0 0.0
    %4175 = vmatpush1.msra.mxu0 0.0
    %4176 = vmatprep.subr.mxu0 0.0
    %4177 = vmatpush1.msra.mxu0 0.0
    %4178 = vmatprep.subr.mxu0 0.0
    %4179 = vmatpush1.msra.mxu0 0.0
    %4180 = vmatprep.subr.mxu0 0.0
    %4181 = vmatpush1.msra.mxu0 0.0
    %4182 = vmatprep.subr.mxu0 0.0
    %4183 = vmatpush1.msra.mxu0 0.0
    %4184 = vmatprep.subr.mxu0 0.0
    %4185 = vmatpush1.msra.mxu0 0.0
    %4186 = vmatprep.subr.mxu0 0.0
    %4187 = vmatpush1.msra.mxu0 0.0
    %4188 = vmatprep.subr.mxu0 0.0
    %4189 = vmatpush1.msra.mxu0 0.0
    %4190 = vmatprep.subr.mxu0 0.0
    %4191 = vmatpush1.msra.mxu0 0.0
    %4192 = vmatprep.subr.mxu0 0.0
    %4193 = vmatpush1.msra.mxu0 0.0
    %4194 = vmatprep.subr.mxu0 0.0
    %4195 = vmatpush1.msra.mxu0 0.0
    %4196 = vmatprep.subr.mxu0 0.0
    %4197 = vmatpush1.msra.mxu0 0.0
    %4198 = vmatprep.subr.mxu0 0.0
    %4199 = vmatpush1.msra.mxu0 0.0
    %4200 = vmatprep.subr.mxu0 0.0
    %4201 = vmatpush1.msra.mxu0 0.0
    %4202 = vmatprep.subr.mxu0 0.0
    %4203 = vmatpush1.msra.mxu0 0.0
    %4204 = vmatprep.subr.mxu0 0.0
    %4205 = vmatpush1.msra.mxu0 0.0
    %4206 = vmatprep.subr.mxu0 0.0
    %4207 = vmatpush1.msra.mxu0 0.0
    %4208 = vmatprep.mubr.f32.mxu0 0.0
    %4209 = vmatmul.mubr.f32.gmra.mrb[0].mxu0 %v3724
    %v4210 = vpop.f32.mrb[0].mxu0
    %v4211 = vadd.f32 %v4142, %v4210
    %v4212 = vpop.f32.mrb[0].mxu0
    %4213 = vdwg.mxu0
    %vm4214 = vcmp.gt.f32.partialorder %v4211, 0.0
    %v4215 = vmul.f32 %v4211, 1.442695
    %v4216 = vpow.pop %v4215
    %v4217 = vsub.f32 %v4216, 1.0
    %v4218 = vsel %vm4214, %v4211, %v4217
    %v4219 = vld [vmem:[%s47] sm:$0xff]
    %v4220 = vld [vmem:[%s47 + $0x8] sm:$0xff]
    %v4221 = vld [vmem:[%s47 + $0x10] sm:$0xff]
    %v4222 = vld [vmem:[%s47 + $0x18] sm:$0xff]
    %v4223 = vld [vmem:[#allocation32] sm:$0x1]
    %v4225 = vlaneseq
    %v4226 = vshrl.u32 %v4225, 7
    %v4227 = vsub.s32 0, %v4226
    %v4228 = vrot.slane %v4223, %v4227
    %v4231 = vsel %vm651, %v4218, 0
    %4233 = vmatprep.subr.mxu0 0.0
    %4234 = vmatpush1.msra.mxu0 %v4219
    %4235 = vmatprep.subr.mxu0 0.0
    %4236 = vmatpush1.msra.mxu0 %v4220
    %4237 = vmatprep.subr.mxu0 0.0
    %4238 = vmatpush1.msra.mxu0 %v4221
    %4239 = vmatprep.subr.mxu0 0.0
    %4240 = vmatpush1.msra.mxu0 %v4222
    %4241 = vmatprep.subr.mxu0 0.0
    %4242 = vmatpush1.msra.mxu0 0.0
    %4243 = vmatprep.subr.mxu0 0.0
    %4244 = vmatpush1.msra.mxu0 0.0
    %4245 = vmatprep.subr.mxu0 0.0
    %4246 = vmatpush1.msra.mxu0 0.0
    %4247 = vmatprep.subr.mxu0 0.0
    %4248 = vmatpush1.msra.mxu0 0.0
    %4249 = vmatprep.subr.mxu0 0.0
    %4250 = vmatpush1.msra.mxu0 0.0
    %4251 = vmatprep.subr.mxu0 0.0
    %4252 = vmatpush1.msra.mxu0 0.0
    %4253 = vmatprep.subr.mxu0 0.0
    %4254 = vmatpush1.msra.mxu0 0.0
    %4255 = vmatprep.subr.mxu0 0.0
    %4256 = vmatpush1.msra.mxu0 0.0
    %4257 = vmatprep.subr.mxu0 0.0
    %4258 = vmatpush1.msra.mxu0 0.0
    %4259 = vmatprep.subr.mxu0 0.0
    %4260 = vmatpush1.msra.mxu0 0.0
    %4261 = vmatprep.subr.mxu0 0.0
    %4262 = vmatpush1.msra.mxu0 0.0
    %4263 = vmatprep.subr.mxu0 0.0
    %4264 = vmatpush1.msra.mxu0 0.0
    %4265 = vmatprep.subr.mxu0 0.0
    %4266 = vmatpush1.msra.mxu0 0.0
    %4267 = vmatprep.subr.mxu0 0.0
    %4268 = vmatpush1.msra.mxu0 0.0
    %4269 = vmatprep.subr.mxu0 0.0
    %4270 = vmatpush1.msra.mxu0 0.0
    %4271 = vmatprep.subr.mxu0 0.0
    %4272 = vmatpush1.msra.mxu0 0.0
    %4273 = vmatprep.subr.mxu0 0.0
    %4274 = vmatpush1.msra.mxu0 0.0
    %4275 = vmatprep.subr.mxu0 0.0
    %4276 = vmatpush1.msra.mxu0 0.0
    %4277 = vmatprep.subr.mxu0 0.0
    %4278 = vmatpush1.msra.mxu0 0.0
    %4279 = vmatprep.subr.mxu0 0.0
    %4280 = vmatpush1.msra.mxu0 0.0
    %4281 = vmatprep.subr.mxu0 0.0
    %4282 = vmatpush1.msra.mxu0 0.0
    %4283 = vmatprep.subr.mxu0 0.0
    %4284 = vmatpush1.msra.mxu0 0.0
    %4285 = vmatprep.subr.mxu0 0.0
    %4286 = vmatpush1.msra.mxu0 0.0
    %4287 = vmatprep.subr.mxu0 0.0
    %4288 = vmatpush1.msra.mxu0 0.0
    %4289 = vmatprep.subr.mxu0 0.0
    %4290 = vmatpush1.msra.mxu0 0.0
    %4291 = vmatprep.subr.mxu0 0.0
    %4292 = vmatpush1.msra.mxu0 0.0
    %4293 = vmatprep.subr.mxu0 0.0
    %4294 = vmatpush1.msra.mxu0 0.0
    %4295 = vmatprep.subr.mxu0 0.0
    %4296 = vmatpush1.msra.mxu0 0.0
    %4297 = vmatprep.mubr.f32.mxu0 0.0
    %4298 = vmatmul.mubr.f32.gmra.mrb[0].mxu0 %v4231
    %v4299 = vpop.f32.mrb[0].mxu0
    %v4300 = vadd.f32 %v4228, %v4299
    %v4301 = vpop.f32.mrb[0].mxu0
    %4302 = vdwg.mxu0
    %v4303 = vld [vmem:[#allocation31] sm:$0xff]
    %v4304 = vld [vmem:[#allocation31 + $0x8] sm:$0xff]
    %v4305 = vld [vmem:[#allocation31 + $0x10] sm:$0xff]
    %v4306 = vld [vmem:[#allocation31 + $0x18] sm:$0xff]
    %v4307 = vld [vmem:[#allocation34] sm:$0x1]
    %v4309 = vlaneseq
    %v4310 = vshrl.u32 %v4309, 7
    %v4311 = vsub.s32 0, %v4310
    %v4312 = vrot.slane %v4307, %v4311
    %4314 = vmatprep.subr.mxu0 0.0
    %4315 = vmatpush1.msra.mxu0 %v4303
    %4316 = vmatprep.subr.mxu0 0.0
    %4317 = vmatpush1.msra.mxu0 %v4304
    %4318 = vmatprep.subr.mxu0 0.0
    %4319 = vmatpush1.msra.mxu0 %v4305
    %4320 = vmatprep.subr.mxu0 0.0
    %4321 = vmatpush1.msra.mxu0 %v4306
    %4322 = vmatprep.subr.mxu0 0.0
    %4323 = vmatpush1.msra.mxu0 0.0
    %4324 = vmatprep.subr.mxu0 0.0
    %4325 = vmatpush1.msra.mxu0 0.0
    %4326 = vmatprep.subr.mxu0 0.0
    %4327 = vmatpush1.msra.mxu0 0.0
    %4328 = vmatprep.subr.mxu0 0.0
    %4329 = vmatpush1.msra.mxu0 0.0
    %4330 = vmatprep.subr.mxu0 0.0
    %4331 = vmatpush1.msra.mxu0 0.0
    %4332 = vmatprep.subr.mxu0 0.0
    %4333 = vmatpush1.msra.mxu0 0.0
    %4334 = vmatprep.subr.mxu0 0.0
    %4335 = vmatpush1.msra.mxu0 0.0
    %4336 = vmatprep.subr.mxu0 0.0
    %4337 = vmatpush1.msra.mxu0 0.0
    %4338 = vmatprep.subr.mxu0 0.0
    %4339 = vmatpush1.msra.mxu0 0.0
    %4340 = vmatprep.subr.mxu0 0.0
    %4341 = vmatpush1.msra.mxu0 0.0
    %4342 = vmatprep.subr.mxu0 0.0
    %4343 = vmatpush1.msra.mxu0 0.0
    %4344 = vmatprep.subr.mxu0 0.0
    %4345 = vmatpush1.msra.mxu0 0.0
    %4346 = vmatprep.subr.mxu0 0.0
    %4347 = vmatpush1.msra.mxu0 0.0
    %4348 = vmatprep.subr.mxu0 0.0
    %4349 = vmatpush1.msra.mxu0 0.0
    %4350 = vmatprep.subr.mxu0 0.0
    %4351 = vmatpush1.msra.mxu0 0.0
    %4352 = vmatprep.subr.mxu0 0.0
    %4353 = vmatpush1.msra.mxu0 0.0
    %4354 = vmatprep.subr.mxu0 0.0
    %4355 = vmatpush1.msra.mxu0 0.0
    %4356 = vmatprep.subr.mxu0 0.0
    %4357 = vmatpush1.msra.mxu0 0.0
    %4358 = vmatprep.subr.mxu0 0.0
    %4359 = vmatpush1.msra.mxu0 0.0
    %4360 = vmatprep.subr.mxu0 0.0
    %4361 = vmatpush1.msra.mxu0 0.0
    %4362 = vmatprep.subr.mxu0 0.0
    %4363 = vmatpush1.msra.mxu0 0.0
    %4364 = vmatprep.subr.mxu0 0.0
    %4365 = vmatpush1.msra.mxu0 0.0
    %4366 = vmatprep.subr.mxu0 0.0
    %4367 = vmatpush1.msra.mxu0 0.0
    %4368 = vmatprep.subr.mxu0 0.0
    %4369 = vmatpush1.msra.mxu0 0.0
    %4370 = vmatprep.subr.mxu0 0.0
    %4371 = vmatpush1.msra.mxu0 0.0
    %4372 = vmatprep.subr.mxu0 0.0
    %4373 = vmatpush1.msra.mxu0 0.0
    %4374 = vmatprep.subr.mxu0 0.0
    %4375 = vmatpush1.msra.mxu0 0.0
    %4376 = vmatprep.subr.mxu0 0.0
    %4377 = vmatpush1.msra.mxu0 0.0
    %4378 = vmatprep.mubr.f32.mxu0 0.0
    %4379 = vmatmul.mubr.f32.gmra.mrb[0].mxu0 %v3905
    %v4380 = vpop.f32.mrb[0].mxu0
    %v4381 = vadd.f32 %v4312, %v4380
    %v4382 = vpop.f32.mrb[0].mxu0
    %4383 = vdwg.mxu0
    %v4384 = vadd.f32 %v4300, %v4381
    %v4385 = vxor.u32 %v4384, 2147483648
    %v4386 = vmul.f32 %v4385, 1.442695
    %v4387 = vpow.pop %v4386
    %v4388 = vadd.f32 %v4387, 1.0
    %v4389 = vrcp.pop %v4388
    %v4390 = vmul.f32 1.0, %v4389
    %s4391 = scalar_lea.vmem %s47, 32
    %v4392 = vld [vmem:[%s4391] sm:$0xff]
    %v4393 = vld [vmem:[%s4391 + $0x8] sm:$0xff]
    %v4394 = vld [vmem:[%s4391 + $0x10] sm:$0xff]
    %v4395 = vld [vmem:[%s4391 + $0x18] sm:$0xff]
    %s4396 = scalar_lea.vmem [#allocation32], 1
    %v4397 = vld [vmem:[%s4396] sm:$0x1]
    %v4399 = vlaneseq
    %v4400 = vshrl.u32 %v4399, 7
    %v4401 = vsub.s32 0, %v4400
    %v4402 = vrot.slane %v4397, %v4401
    %4404 = vmatprep.subr.mxu0 0.0
    %4405 = vmatpush1.msra.mxu0 %v4392
    %4406 = vmatprep.subr.mxu0 0.0
    %4407 = vmatpush1.msra.mxu0 %v4393
    %4408 = vmatprep.subr.mxu0 0.0
    %4409 = vmatpush1.msra.mxu0 %v4394
    %4410 = vmatprep.subr.mxu0 0.0
    %4411 = vmatpush1.msra.mxu0 %v4395
    %4412 = vmatprep.subr.mxu0 0.0
    %4413 = vmatpush1.msra.mxu0 0.0
    %4414 = vmatprep.subr.mxu0 0.0
    %4415 = vmatpush1.msra.mxu0 0.0
    %4416 = vmatprep.subr.mxu0 0.0
    %4417 = vmatpush1.msra.mxu0 0.0
    %4418 = vmatprep.subr.mxu0 0.0
    %4419 = vmatpush1.msra.mxu0 0.0
    %4420 = vmatprep.subr.mxu0 0.0
    %4421 = vmatpush1.msra.mxu0 0.0
    %4422 = vmatprep.subr.mxu0 0.0
    %4423 = vmatpush1.msra.mxu0 0.0
    %4424 = vmatprep.subr.mxu0 0.0
    %4425 = vmatpush1.msra.mxu0 0.0
    %4426 = vmatprep.subr.mxu0 0.0
    %4427 = vmatpush1.msra.mxu0 0.0
    %4428 = vmatprep.subr.mxu0 0.0
    %4429 = vmatpush1.msra.mxu0 0.0
    %4430 = vmatprep.subr.mxu0 0.0
    %4431 = vmatpush1.msra.mxu0 0.0
    %4432 = vmatprep.subr.mxu0 0.0
    %4433 = vmatpush1.msra.mxu0 0.0
    %4434 = vmatprep.subr.mxu0 0.0
    %4435 = vmatpush1.msra.mxu0 0.0
    %4436 = vmatprep.subr.mxu0 0.0
    %4437 = vmatpush1.msra.mxu0 0.0
    %4438 = vmatprep.subr.mxu0 0.0
    %4439 = vmatpush1.msra.mxu0 0.0
    %4440 = vmatprep.subr.mxu0 0.0
    %4441 = vmatpush1.msra.mxu0 0.0
    %4442 = vmatprep.subr.mxu0 0.0
    %4443 = vmatpush1.msra.mxu0 0.0
    %4444 = vmatprep.subr.mxu0 0.0
    %4445 = vmatpush1.msra.mxu0 0.0
    %4446 = vmatprep.subr.mxu0 0.0
    %4447 = vmatpush1.msra.mxu0 0.0
    %4448 = vmatprep.subr.mxu0 0.0
    %4449 = vmatpush1.msra.mxu0 0.0
    %4450 = vmatprep.subr.mxu0 0.0
    %4451 = vmatpush1.msra.mxu0 0.0
    %4452 = vmatprep.subr.mxu0 0.0
    %4453 = vmatpush1.msra.mxu0 0.0
    %4454 = vmatprep.subr.mxu0 0.0
    %4455 = vmatpush1.msra.mxu0 0.0
    %4456 = vmatprep.subr.mxu0 0.0
    %4457 = vmatpush1.msra.mxu0 0.0
    %4458 = vmatprep.subr.mxu0 0.0
    %4459 = vmatpush1.msra.mxu0 0.0
    %4460 = vmatprep.subr.mxu0 0.0
    %4461 = vmatpush1.msra.mxu0 0.0
    %4462 = vmatprep.subr.mxu0 0.0
    %4463 = vmatpush1.msra.mxu0 0.0
    %4464 = vmatprep.subr.mxu0 0.0
    %4465 = vmatpush1.msra.mxu0 0.0
    %4466 = vmatprep.subr.mxu0 0.0
    %4467 = vmatpush1.msra.mxu0 0.0
    %4468 = vmatprep.mubr.f32.mxu0 0.0
    %4469 = vmatmul.mubr.f32.gmra.mrb[0].mxu0 %v4231
    %v4470 = vpop.f32.mrb[0].mxu0
    %v4471 = vadd.f32 %v4402, %v4470
    %v4472 = vpop.f32.mrb[0].mxu0
    %4473 = vdwg.mxu0
    %s4474 = scalar_lea.vmem [#allocation31], 32
    %v4475 = vld [vmem:[%s4474] sm:$0xff]
    %v4476 = vld [vmem:[%s4474 + $0x8] sm:$0xff]
    %v4477 = vld [vmem:[%s4474 + $0x10] sm:$0xff]
    %v4478 = vld [vmem:[%s4474 + $0x18] sm:$0xff]
    %s4479 = scalar_lea.vmem [#allocation34], 1
    %v4480 = vld [vmem:[%s4479] sm:$0x1]
    %v4482 = vlaneseq
    %v4483 = vshrl.u32 %v4482, 7
    %v4484 = vsub.s32 0, %v4483
    %v4485 = vrot.slane %v4480, %v4484
    %4487 = vmatprep.subr.mxu0 0.0
    %4488 = vmatpush1.msra.mxu0 %v4475
    %4489 = vmatprep.subr.mxu0 0.0
    %4490 = vmatpush1.msra.mxu0 %v4476
    %4491 = vmatprep.subr.mxu0 0.0
    %4492 = vmatpush1.msra.mxu0 %v4477
    %4493 = vmatprep.subr.mxu0 0.0
    %4494 = vmatpush1.msra.mxu0 %v4478
    %4495 = vmatprep.subr.mxu0 0.0
    %4496 = vmatpush1.msra.mxu0 0.0
    %4497 = vmatprep.subr.mxu0 0.0
    %4498 = vmatpush1.msra.mxu0 0.0
    %4499 = vmatprep.subr.mxu0 0.0
    %4500 = vmatpush1.msra.mxu0 0.0
    %4501 = vmatprep.subr.mxu0 0.0
    %4502 = vmatpush1.msra.mxu0 0.0
    %4503 = vmatprep.subr.mxu0 0.0
    %4504 = vmatpush1.msra.mxu0 0.0
    %4505 = vmatprep.subr.mxu0 0.0
    %4506 = vmatpush1.msra.mxu0 0.0
    %4507 = vmatprep.subr.mxu0 0.0
    %4508 = vmatpush1.msra.mxu0 0.0
    %4509 = vmatprep.subr.mxu0 0.0
    %4510 = vmatpush1.msra.mxu0 0.0
    %4511 = vmatprep.subr.mxu0 0.0
    %4512 = vmatpush1.msra.mxu0 0.0
    %4513 = vmatprep.subr.mxu0 0.0
    %4514 = vmatpush1.msra.mxu0 0.0
    %4515 = vmatprep.subr.mxu0 0.0
    %4516 = vmatpush1.msra.mxu0 0.0
    %4517 = vmatprep.subr.mxu0 0.0
    %4518 = vmatpush1.msra.mxu0 0.0
    %4519 = vmatprep.subr.mxu0 0.0
    %4520 = vmatpush1.msra.mxu0 0.0
    %4521 = vmatprep.subr.mxu0 0.0
    %4522 = vmatpush1.msra.mxu0 0.0
    %4523 = vmatprep.subr.mxu0 0.0
    %4524 = vmatpush1.msra.mxu0 0.0
    %4525 = vmatprep.subr.mxu0 0.0
    %4526 = vmatpush1.msra.mxu0 0.0
    %4527 = vmatprep.subr.mxu0 0.0
    %4528 = vmatpush1.msra.mxu0 0.0
    %4529 = vmatprep.subr.mxu0 0.0
    %4530 = vmatpush1.msra.mxu0 0.0
    %4531 = vmatprep.subr.mxu0 0.0
    %4532 = vmatpush1.msra.mxu0 0.0
    %4533 = vmatprep.subr.mxu0 0.0
    %4534 = vmatpush1.msra.mxu0 0.0
    %4535 = vmatprep.subr.mxu0 0.0
    %4536 = vmatpush1.msra.mxu0 0.0
    %4537 = vmatprep.subr.mxu0 0.0
    %4538 = vmatpush1.msra.mxu0 0.0
    %4539 = vmatprep.subr.mxu0 0.0
    %4540 = vmatpush1.msra.mxu0 0.0
    %4541 = vmatprep.subr.mxu0 0.0
    %4542 = vmatpush1.msra.mxu0 0.0
    %4543 = vmatprep.subr.mxu0 0.0
    %4544 = vmatpush1.msra.mxu0 0.0
    %4545 = vmatprep.subr.mxu0 0.0
    %4546 = vmatpush1.msra.mxu0 0.0
    %4547 = vmatprep.subr.mxu0 0.0
    %4548 = vmatpush1.msra.mxu0 0.0
    %4549 = vmatprep.subr.mxu0 0.0
    %4550 = vmatpush1.msra.mxu0 0.0
    %4551 = vmatprep.mubr.f32.mxu0 0.0
    %4552 = vmatmul.mubr.f32.gmra.mrb[0].mxu0 %v3905
    %v4553 = vpop.f32.mrb[0].mxu0
    %v4554 = vadd.f32 %v4485, %v4553
    %v4555 = vpop.f32.mrb[0].mxu0
    %4556 = vdwg.mxu0
    %v4557 = vadd.f32 %v4471, %v4554
    %v4558 = vxor.u32 %v4557, 2147483648
    %v4559 = vmul.f32 %v4558, 1.442695
    %v4560 = vpow.pop %v4559
    %v4561 = vadd.f32 %v4560, 1.0
    %v4562 = vrcp.pop %v4561
    %v4563 = vmul.f32 1.0, %v4562
    %s4564 = scalar_lea.vmem %s47, 64
    %v4565 = vld [vmem:[%s4564] sm:$0xff]
    %v4566 = vld [vmem:[%s4564 + $0x8] sm:$0xff]
    %v4567 = vld [vmem:[%s4564 + $0x10] sm:$0xff]
    %v4568 = vld [vmem:[%s4564 + $0x18] sm:$0xff]
    %s4569 = scalar_lea.vmem [#allocation32], 2
    %v4570 = vld [vmem:[%s4569] sm:$0x1]
    %v4572 = vlaneseq
    %v4573 = vshrl.u32 %v4572, 7
    %v4574 = vsub.s32 0, %v4573
    %v4575 = vrot.slane %v4570, %v4574
    %4577 = vmatprep.subr.mxu0 0.0
    %4578 = vmatpush1.msra.mxu0 %v4565
    %4579 = vmatprep.subr.mxu0 0.0
    %4580 = vmatpush1.msra.mxu0 %v4566
    %4581 = vmatprep.subr.mxu0 0.0
    %4582 = vmatpush1.msra.mxu0 %v4567
    %4583 = vmatprep.subr.mxu0 0.0
    %4584 = vmatpush1.msra.mxu0 %v4568
    %4585 = vmatprep.subr.mxu0 0.0
    %4586 = vmatpush1.msra.mxu0 0.0
    %4587 = vmatprep.subr.mxu0 0.0
    %4588 = vmatpush1.msra.mxu0 0.0
    %4589 = vmatprep.subr.mxu0 0.0
    %4590 = vmatpush1.msra.mxu0 0.0
    %4591 = vmatprep.subr.mxu0 0.0
    %4592 = vmatpush1.msra.mxu0 0.0
    %4593 = vmatprep.subr.mxu0 0.0
    %4594 = vmatpush1.msra.mxu0 0.0
    %4595 = vmatprep.subr.mxu0 0.0
    %4596 = vmatpush1.msra.mxu0 0.0
    %4597 = vmatprep.subr.mxu0 0.0
    %4598 = vmatpush1.msra.mxu0 0.0
    %4599 = vmatprep.subr.mxu0 0.0
    %4600 = vmatpush1.msra.mxu0 0.0
    %4601 = vmatprep.subr.mxu0 0.0
    %4602 = vmatpush1.msra.mxu0 0.0
    %4603 = vmatprep.subr.mxu0 0.0
    %4604 = vmatpush1.msra.mxu0 0.0
    %4605 = vmatprep.subr.mxu0 0.0
    %4606 = vmatpush1.msra.mxu0 0.0
    %4607 = vmatprep.subr.mxu0 0.0
    %4608 = vmatpush1.msra.mxu0 0.0
    %4609 = vmatprep.subr.mxu0 0.0
    %4610 = vmatpush1.msra.mxu0 0.0
    %4611 = vmatprep.subr.mxu0 0.0
    %4612 = vmatpush1.msra.mxu0 0.0
    %4613 = vmatprep.subr.mxu0 0.0
    %4614 = vmatpush1.msra.mxu0 0.0
    %4615 = vmatprep.subr.mxu0 0.0
    %4616 = vmatpush1.msra.mxu0 0.0
    %4617 = vmatprep.subr.mxu0 0.0
    %4618 = vmatpush1.msra.mxu0 0.0
    %4619 = vmatprep.subr.mxu0 0.0
    %4620 = vmatpush1.msra.mxu0 0.0
    %4621 = vmatprep.subr.mxu0 0.0
    %4622 = vmatpush1.msra.mxu0 0.0
    %4623 = vmatprep.subr.mxu0 0.0
    %4624 = vmatpush1.msra.mxu0 0.0
    %4625 = vmatprep.subr.mxu0 0.0
    %4626 = vmatpush1.msra.mxu0 0.0
    %4627 = vmatprep.subr.mxu0 0.0
    %4628 = vmatpush1.msra.mxu0 0.0
    %4629 = vmatprep.subr.mxu0 0.0
    %4630 = vmatpush1.msra.mxu0 0.0
    %4631 = vmatprep.subr.mxu0 0.0
    %4632 = vmatpush1.msra.mxu0 0.0
    %4633 = vmatprep.subr.mxu0 0.0
    %4634 = vmatpush1.msra.mxu0 0.0
    %4635 = vmatprep.subr.mxu0 0.0
    %4636 = vmatpush1.msra.mxu0 0.0
    %4637 = vmatprep.subr.mxu0 0.0
    %4638 = vmatpush1.msra.mxu0 0.0
    %4639 = vmatprep.subr.mxu0 0.0
    %4640 = vmatpush1.msra.mxu0 0.0
    %4641 = vmatprep.mubr.f32.mxu0 0.0
    %4642 = vmatmul.mubr.f32.gmra.mrb[0].mxu0 %v4231
    %v4643 = vpop.f32.mrb[0].mxu0
    %v4644 = vadd.f32 %v4575, %v4643
    %v4645 = vpop.f32.mrb[0].mxu0
    %4646 = vdwg.mxu0
    %s4647 = scalar_lea.vmem [#allocation31], 64
    %v4648 = vld [vmem:[%s4647] sm:$0xff]
    %v4649 = vld [vmem:[%s4647 + $0x8] sm:$0xff]
    %v4650 = vld [vmem:[%s4647 + $0x10] sm:$0xff]
    %v4651 = vld [vmem:[%s4647 + $0x18] sm:$0xff]
    %s4652 = scalar_lea.vmem [#allocation34], 2
    %v4653 = vld [vmem:[%s4652] sm:$0x1]
    %v4655 = vlaneseq
    %v4656 = vshrl.u32 %v4655, 7
    %v4657 = vsub.s32 0, %v4656
    %v4658 = vrot.slane %v4653, %v4657
    %4660 = vmatprep.subr.mxu0 0.0
    %4661 = vmatpush1.msra.mxu0 %v4648
    %4662 = vmatprep.subr.mxu0 0.0
    %4663 = vmatpush1.msra.mxu0 %v4649
    %4664 = vmatprep.subr.mxu0 0.0
    %4665 = vmatpush1.msra.mxu0 %v4650
    %4666 = vmatprep.subr.mxu0 0.0
    %4667 = vmatpush1.msra.mxu0 %v4651
    %4668 = vmatprep.subr.mxu0 0.0
    %4669 = vmatpush1.msra.mxu0 0.0
    %4670 = vmatprep.subr.mxu0 0.0
    %4671 = vmatpush1.msra.mxu0 0.0
    %4672 = vmatprep.subr.mxu0 0.0
    %4673 = vmatpush1.msra.mxu0 0.0
    %4674 = vmatprep.subr.mxu0 0.0
    %4675 = vmatpush1.msra.mxu0 0.0
    %4676 = vmatprep.subr.mxu0 0.0
    %4677 = vmatpush1.msra.mxu0 0.0
    %4678 = vmatprep.subr.mxu0 0.0
    %4679 = vmatpush1.msra.mxu0 0.0
    %4680 = vmatprep.subr.mxu0 0.0
    %4681 = vmatpush1.msra.mxu0 0.0
    %4682 = vmatprep.subr.mxu0 0.0
    %4683 = vmatpush1.msra.mxu0 0.0
    %4684 = vmatprep.subr.mxu0 0.0
    %4685 = vmatpush1.msra.mxu0 0.0
    %4686 = vmatprep.subr.mxu0 0.0
    %4687 = vmatpush1.msra.mxu0 0.0
    %4688 = vmatprep.subr.mxu0 0.0
    %4689 = vmatpush1.msra.mxu0 0.0
    %4690 = vmatprep.subr.mxu0 0.0
    %4691 = vmatpush1.msra.mxu0 0.0
    %4692 = vmatprep.subr.mxu0 0.0
    %4693 = vmatpush1.msra.mxu0 0.0
    %4694 = vmatprep.subr.mxu0 0.0
    %4695 = vmatpush1.msra.mxu0 0.0
    %4696 = vmatprep.subr.mxu0 0.0
    %4697 = vmatpush1.msra.mxu0 0.0
    %4698 = vmatprep.subr.mxu0 0.0
    %4699 = vmatpush1.msra.mxu0 0.0
    %4700 = vmatprep.subr.mxu0 0.0
    %4701 = vmatpush1.msra.mxu0 0.0
    %4702 = vmatprep.subr.mxu0 0.0
    %4703 = vmatpush1.msra.mxu0 0.0
    %4704 = vmatprep.subr.mxu0 0.0
    %4705 = vmatpush1.msra.mxu0 0.0
    %4706 = vmatprep.subr.mxu0 0.0
    %4707 = vmatpush1.msra.mxu0 0.0
    %4708 = vmatprep.subr.mxu0 0.0
    %4709 = vmatpush1.msra.mxu0 0.0
    %4710 = vmatprep.subr.mxu0 0.0
    %4711 = vmatpush1.msra.mxu0 0.0
    %4712 = vmatprep.subr.mxu0 0.0
    %4713 = vmatpush1.msra.mxu0 0.0
    %4714 = vmatprep.subr.mxu0 0.0
    %4715 = vmatpush1.msra.mxu0 0.0
    %4716 = vmatprep.subr.mxu0 0.0
    %4717 = vmatpush1.msra.mxu0 0.0
    %4718 = vmatprep.subr.mxu0 0.0
    %4719 = vmatpush1.msra.mxu0 0.0
    %4720 = vmatprep.subr.mxu0 0.0
    %4721 = vmatpush1.msra.mxu0 0.0
    %4722 = vmatprep.subr.mxu0 0.0
    %4723 = vmatpush1.msra.mxu0 0.0
    %4724 = vmatprep.mubr.f32.mxu0 0.0
    %4725 = vmatmul.mubr.f32.gmra.mrb[0].mxu0 %v3905
    %v4726 = vpop.f32.mrb[0].mxu0
    %v4727 = vadd.f32 %v4658, %v4726
    %v4728 = vpop.f32.mrb[0].mxu0
    %4729 = vdwg.mxu0
    %v4730 = vmul.f32 %v4390, %v4727
    %v4731 = vadd.f32 %v4644, %v4730
    %v4732 = vtanh.pop %v4731
    %v4733 = vsub.f32 1.0, %v4563
    %v4734 = vmul.f32 %v4733, %v4732
    %v4735 = vmul.f32 %v4563, %v3798
    %v4736 = vadd.f32 %v4734, %v4735
    %vm4737 = vcmp.ge.f32.partialorder %v4736, 0.0
    %v4738 = vmul.f32 %v4736, 0.01
    %v4739 = vsel %vm4737, %v4736, %v4738
    %v4740 = vadd.f32 %v4134, 0.0
    %v4741 = vadd.f32 %v4135, 0.0
    %v4743 = vsel %vm651, %v4739, 0
    %4745 = vmatprep.subr.mxu0 0.0
    %4746 = vmatpush1.msra.mxu0 %v3893
    %4747 = vmatprep.subr.mxu0 0.0
    %4748 = vmatpush1.msra.mxu0 %v3894
    %4749 = vmatprep.subr.mxu0 0.0
    %4750 = vmatpush1.msra.mxu0 %v3895
    %4751 = vmatprep.subr.mxu0 0.0
    %4752 = vmatpush1.msra.mxu0 %v3896
    %4753 = vmatprep.subr.mxu0 0.0
    %4754 = vmatpush1.msra.mxu0 0.0
    %4755 = vmatprep.subr.mxu0 0.0
    %4756 = vmatpush1.msra.mxu0 0.0
    %4757 = vmatprep.subr.mxu0 0.0
    %4758 = vmatpush1.msra.mxu0 0.0
    %4759 = vmatprep.subr.mxu0 0.0
    %4760 = vmatpush1.msra.mxu0 0.0
    %4761 = vmatprep.subr.mxu0 0.0
    %4762 = vmatpush1.msra.mxu0 0.0
    %4763 = vmatprep.subr.mxu0 0.0
    %4764 = vmatpush1.msra.mxu0 0.0
    %4765 = vmatprep.subr.mxu0 0.0
    %4766 = vmatpush1.msra.mxu0 0.0
    %4767 = vmatprep.subr.mxu0 0.0
    %4768 = vmatpush1.msra.mxu0 0.0
    %4769 = vmatprep.subr.mxu0 0.0
    %4770 = vmatpush1.msra.mxu0 0.0
    %4771 = vmatprep.subr.mxu0 0.0
    %4772 = vmatpush1.msra.mxu0 0.0
    %4773 = vmatprep.subr.mxu0 0.0
    %4774 = vmatpush1.msra.mxu0 0.0
    %4775 = vmatprep.subr.mxu0 0.0
    %4776 = vmatpush1.msra.mxu0 0.0
    %4777 = vmatprep.subr.mxu0 0.0
    %4778 = vmatpush1.msra.mxu0 0.0
    %4779 = vmatprep.subr.mxu0 0.0
    %4780 = vmatpush1.msra.mxu0 0.0
    %4781 = vmatprep.subr.mxu0 0.0
    %4782 = vmatpush1.msra.mxu0 0.0
    %4783 = vmatprep.subr.mxu0 0.0
    %4784 = vmatpush1.msra.mxu0 0.0
    %4785 = vmatprep.subr.mxu0 0.0
    %4786 = vmatpush1.msra.mxu0 0.0
    %4787 = vmatprep.subr.mxu0 0.0
    %4788 = vmatpush1.msra.mxu0 0.0
    %4789 = vmatprep.subr.mxu0 0.0
    %4790 = vmatpush1.msra.mxu0 0.0
    %4791 = vmatprep.subr.mxu0 0.0
    %4792 = vmatpush1.msra.mxu0 0.0
    %4793 = vmatprep.subr.mxu0 0.0
    %4794 = vmatpush1.msra.mxu0 0.0
    %4795 = vmatprep.subr.mxu0 0.0
    %4796 = vmatpush1.msra.mxu0 0.0
    %4797 = vmatprep.subr.mxu0 0.0
    %4798 = vmatpush1.msra.mxu0 0.0
    %4799 = vmatprep.subr.mxu0 0.0
    %4800 = vmatpush1.msra.mxu0 0.0
    %4801 = vmatprep.subr.mxu0 0.0
    %4802 = vmatpush1.msra.mxu0 0.0
    %4803 = vmatprep.subr.mxu0 0.0
    %4804 = vmatpush1.msra.mxu0 0.0
    %4805 = vmatprep.subr.mxu0 0.0
    %4806 = vmatpush1.msra.mxu0 0.0
    %4807 = vmatprep.subr.mxu0 0.0
    %4808 = vmatpush1.msra.mxu0 0.0
    %4809 = vmatprep.mubr.f32.mxu0 0.0
    %4810 = vmatmul.mubr.f32.gmra.mrb[0].mxu0 %v4743
    %v4811 = vpop.f32.mrb[0].mxu0
    %v4812 = vadd.f32 %v3902, %v4811
    %v4813 = vpop.f32.mrb[0].mxu0
    %4814 = vdwg.mxu0
    %v4816 = vsel %vm3984, %v4812, 0
    %4818 = vmatprep.subr.mxu0 0.0
    %4819 = vmatpush1.msra.mxu0 %v4816
    %4820 = vmatprep.subr.mxu0 0.0
    %4821 = vmatpush1.msra.mxu0 0.0
    %4822 = vmatprep.subr.mxu0 0.0
    %4823 = vmatpush1.msra.mxu0 0.0
    %4824 = vmatprep.subr.mxu0 0.0
    %4825 = vmatpush1.msra.mxu0 0.0
    %4826 = vmatprep.subr.mxu0 0.0
    %4827 = vmatpush1.msra.mxu0 0.0
    %4828 = vmatprep.subr.mxu0 0.0
    %4829 = vmatpush1.msra.mxu0 0.0
    %4830 = vmatprep.subr.mxu0 0.0
    %4831 = vmatpush1.msra.mxu0 0.0
    %4832 = vmatprep.subr.mxu0 0.0
    %4833 = vmatpush1.msra.mxu0 0.0
    %4834 = vmatprep.subr.mxu0 0.0
    %4835 = vmatpush1.msra.mxu0 0.0
    %4836 = vmatprep.subr.mxu0 0.0
    %4837 = vmatpush1.msra.mxu0 0.0
    %4838 = vmatprep.subr.mxu0 0.0
    %4839 = vmatpush1.msra.mxu0 0.0
    %4840 = vmatprep.subr.mxu0 0.0
    %4841 = vmatpush1.msra.mxu0 0.0
    %4842 = vmatprep.subr.mxu0 0.0
    %4843 = vmatpush1.msra.mxu0 0.0
    %4844 = vmatprep.subr.mxu0 0.0
    %4845 = vmatpush1.msra.mxu0 0.0
    %4846 = vmatprep.subr.mxu0 0.0
    %4847 = vmatpush1.msra.mxu0 0.0
    %4848 = vmatprep.subr.mxu0 0.0
    %4849 = vmatpush1.msra.mxu0 0.0
    %4850 = vmatprep.subr.mxu0 0.0
    %4851 = vmatpush1.msra.mxu0 0.0
    %4852 = vmatprep.subr.mxu0 0.0
    %4853 = vmatpush1.msra.mxu0 0.0
    %4854 = vmatprep.subr.mxu0 0.0
    %4855 = vmatpush1.msra.mxu0 0.0
    %4856 = vmatprep.subr.mxu0 0.0
    %4857 = vmatpush1.msra.mxu0 0.0
    %4858 = vmatprep.subr.mxu0 0.0
    %4859 = vmatpush1.msra.mxu0 0.0
    %4860 = vmatprep.subr.mxu0 0.0
    %4861 = vmatpush1.msra.mxu0 0.0
    %4862 = vmatprep.subr.mxu0 0.0
    %4863 = vmatpush1.msra.mxu0 0.0
    %4864 = vmatprep.subr.mxu0 0.0
    %4865 = vmatpush1.msra.mxu0 0.0
    %4866 = vmatprep.subr.mxu0 0.0
    %4867 = vmatpush1.msra.mxu0 0.0
    %4868 = vmatprep.subr.mxu0 0.0
    %4869 = vmatpush1.msra.mxu0 0.0
    %4870 = vmatprep.subr.mxu0 0.0
    %4871 = vmatpush1.msra.mxu0 0.0
    %4872 = vmatprep.subr.mxu0 0.0
    %4873 = vmatpush1.msra.mxu0 0.0
    %4874 = vmatprep.subr.mxu0 0.0
    %4875 = vmatpush1.msra.mxu0 0.0
    %4876 = vmatprep.subr.mxu0 0.0
    %4877 = vmatpush1.msra.mxu0 0.0
    %4878 = vmatprep.subr.mxu0 0.0
    %4879 = vmatpush1.msra.mxu0 0.0
    %4880 = vmatprep.subr.mxu0 0.0
    %4881 = vmatpush1.msra.mxu0 0.0
    %4882 = vmatprep.mubr.f32.mxu0 0.0
    %4883 = vmatmul.mubr.f32.gmra.mrb[0].mxu0 %v3979
    %v4884 = vpop.f32.mrb[0].mxu0
    %v4885 = vadd.f32 0.0, %v4884
    %v4886 = vpop.f32.mrb[0].mxu0
    %4887 = vmatprep.mubr.f32.mxu0 0.0
    %4888 = vmatmul.mubr.f32.gmra.mrb[0].mxu0 %v3982
    %v4889 = vpop.f32.mrb[0].mxu0
    %v4890 = vadd.f32 0.0, %v4889
    %v4891 = vpop.f32.mrb[0].mxu0
    %4892 = vdwg.mxu0
    %v4893 = vadd.f32 %v3883, %v4885
    %v4894 = vadd.f32 %v3888, %v4890
    %vm4895 = vcmp.ge.f32.partialorder %v4893, 0.0
    %vm4896 = vcmp.ge.f32.partialorder %v4894, 0.0
    %v4897 = vmul.f32 %v4893, 0.2
    %v4898 = vmul.f32 %v4894, 0.2
    %v4899 = vsel %vm4895, %v4893, %v4897
    %v4900 = vsel %vm4896, %v4894, %v4898
    %v4901 = vmul.f32 %v4899, %v4075
    %v4902 = vmul.f32 %v4900, %v4075
    %v4903 = vsel %vm651, %v4901, 0.0
    %4904 = vadd.xlane.f32.xlu0 %v4903
    %v4905 = vpop.xlane.xlu0 %4904
    %v4906 = vsel %vm651, %v4902, 0.0
    %4907 = vadd.xlane.f32.xlu0 %v4906
    %v4908 = vpop.xlane.xlu0 %4907
    %v4909 = vsel %vm4085, %v4905, -1e+30
    %v4910 = vsel %vm4086, %v4908, -1e+30
    %v4911 = vsel %vm3977, %v4909, -inf
    %v4912 = vsel %vm3977, %v4910, -inf
    %v4913 = vmax.f32 %v4911, %v4912
    %v4914 = vrot.slane %v4913, 4
    %v4915 = vmax.f32 %v4913, %v4914
    %v4916 = vrot.slane %v4915, 2
    %v4917 = vmax.f32 %v4915, %v4916
    %v4918 = vrot.slane %v4917, 1
    %v4919 = vmax.f32 %v4917, %v4918
    %v4920 = vmul.f32 %v437, %v4919
    %v4921 = vmul.f32 %v438, %v4919
    %v4922 = vsel %vm3977, %v4920, 0.0
    %4923 = vadd.xlane.f32.xlu0 %v4922
    %v4924 = vpop.xlane.xlu0 %4923
    %v4925 = vsel %vm3977, %v4921, 0.0
    %4926 = vadd.xlane.f32.xlu0 %v4925
    %v4927 = vpop.xlane.xlu0 %4926
    %v4928 = vsub.f32 %v4905, %v4924
    %v4929 = vsub.f32 %v4908, %v4927
    %v4930 = vmul.f32 %v4928, 1.442695
    %v4931 = vpow.pop %v4930
    %v4932 = vmul.f32 %v4929, 1.442695
    %v4933 = vpow.pop %v4932
    %v4934 = vmul.f32 %v437, %v4931
    %v4935 = vmul.f32 %v438, %v4933
    %v4936 = vsel %vm3977, %v4934, 0.0
    %v4937 = vsel %vm3977, %v4935, 0.0
    %v4938 = vadd.f32 %v4936, %v4937
    %v4939 = vrot.slane %v4938, 4
    %v4940 = vadd.f32 %v4938, %v4939
    %v4941 = vrot.slane %v4940, 2
    %v4942 = vadd.f32 %v4940, %v4941
    %v4943 = vrot.slane %v4942, 1
    %v4944 = vadd.f32 %v4942, %v4943
    %v4945 = vadd.f32 %v4944, 1e-16
    %v4946 = vmul.f32 %v437, %v4945
    %v4947 = vmul.f32 %v438, %v4945
    %v4948 = vsel %vm3977, %v4946, 0.0
    %4949 = vadd.xlane.f32.xlu0 %v4948
    %v4950 = vpop.xlane.xlu0 %4949
    %v4951 = vsel %vm3977, %v4947, 0.0
    %4952 = vadd.xlane.f32.xlu0 %v4951
    %v4953 = vpop.xlane.xlu0 %4952
    %v4954 = vrcp.pop %v4950
    %v4955 = vrcp.pop %v4953
    %v4956 = vmul.f32 %v4931, %v4954
    %v4957 = vmul.f32 %v4933, %v4955
    %v4958 = vmul.f32 %v4956, %v3883
    %v4959 = vmul.f32 %v4957, %v3888
    %4960 = vmatprep.subr.mxu0 0.0
    %4961 = vmatpush1.msra.mxu0 %v4958
    %4962 = vmatprep.subr.mxu0 0.0
    %4963 = vmatpush1.msra.mxu0 %v4959
    %4964 = vmatprep.subr.mxu0 0.0
    %4965 = vmatpush1.msra.mxu0 0.0
    %4966 = vmatprep.subr.mxu0 0.0
    %4967 = vmatpush1.msra.mxu0 0.0
    %4968 = vmatprep.subr.mxu0 0.0
    %4969 = vmatpush1.msra.mxu0 0.0
    %4970 = vmatprep.subr.mxu0 0.0
    %4971 = vmatpush1.msra.mxu0 0.0
    %4972 = vmatprep.subr.mxu0 0.0
    %4973 = vmatpush1.msra.mxu0 0.0
    %4974 = vmatprep.subr.mxu0 0.0
    %4975 = vmatpush1.msra.mxu0 0.0
    %4976 = vmatprep.subr.mxu0 0.0
    %4977 = vmatpush1.msra.mxu0 0.0
    %4978 = vmatprep.subr.mxu0 0.0
    %4979 = vmatpush1.msra.mxu0 0.0
    %4980 = vmatprep.subr.mxu0 0.0
    %4981 = vmatpush1.msra.mxu0 0.0
    %4982 = vmatprep.subr.mxu0 0.0
    %4983 = vmatpush1.msra.mxu0 0.0
    %4984 = vmatprep.subr.mxu0 0.0
    %4985 = vmatpush1.msra.mxu0 0.0
    %4986 = vmatprep.subr.mxu0 0.0
    %4987 = vmatpush1.msra.mxu0 0.0
    %4988 = vmatprep.subr.mxu0 0.0
    %4989 = vmatpush1.msra.mxu0 0.0
    %4990 = vmatprep.subr.mxu0 0.0
    %4991 = vmatpush1.msra.mxu0 0.0
    %4992 = vmatprep.subr.mxu0 0.0
    %4993 = vmatpush1.msra.mxu0 0.0
    %4994 = vmatprep.subr.mxu0 0.0
    %4995 = vmatpush1.msra.mxu0 0.0
    %4996 = vmatprep.subr.mxu0 0.0
    %4997 = vmatpush1.msra.mxu0 0.0
    %4998 = vmatprep.subr.mxu0 0.0
    %4999 = vmatpush1.msra.mxu0 0.0
    %5000 = vmatprep.subr.mxu0 0.0
    %5001 = vmatpush1.msra.mxu0 0.0
    %5002 = vmatprep.subr.mxu0 0.0
    %5003 = vmatpush1.msra.mxu0 0.0
    %5004 = vmatprep.subr.mxu0 0.0
    %5005 = vmatpush1.msra.mxu0 0.0
    %5006 = vmatprep.subr.mxu0 0.0
    %5007 = vmatpush1.msra.mxu0 0.0
    %5008 = vmatprep.subr.mxu0 0.0
    %5009 = vmatpush1.msra.mxu0 0.0
    %5010 = vmatprep.subr.mxu0 0.0
    %5011 = vmatpush1.msra.mxu0 0.0
    %5012 = vmatprep.subr.mxu0 0.0
    %5013 = vmatpush1.msra.mxu0 0.0
    %5014 = vmatprep.subr.mxu0 0.0
    %5015 = vmatpush1.msra.mxu0 0.0
    %5016 = vmatprep.subr.mxu0 0.0
    %5017 = vmatpush1.msra.mxu0 0.0
    %5018 = vmatprep.subr.mxu0 0.0
    %5019 = vmatpush1.msra.mxu0 0.0
    %5020 = vmatprep.subr.mxu0 0.0
    %5021 = vmatpush1.msra.mxu0 0.0
    %5022 = vmatprep.subr.mxu0 0.0
    %5023 = vmatpush1.msra.mxu0 0.0
    %5024 = vmatprep.mubr.f32.mxu0 0.0
    %5025 = vmatmul.mubr.f32.gmra.mrb[0].mxu0 %v3724
    %v5026 = vpop.f32.mrb[0].mxu0
    %v5027 = vadd.f32 %v4142, %v5026
    %v5028 = vpop.f32.mrb[0].mxu0
    %5029 = vdwg.mxu0
    %vm5030 = vcmp.gt.f32.partialorder %v5027, 0.0
    %v5031 = vmul.f32 %v5027, 1.442695
    %v5032 = vpow.pop %v5031
    %v5033 = vsub.f32 %v5032, 1.0
    %v5034 = vsel %vm5030, %v5027, %v5033
    %v5036 = vsel %vm651, %v5034, 0
    %5038 = vmatprep.subr.mxu0 0.0
    %5039 = vmatpush1.msra.mxu0 %v4219
    %5040 = vmatprep.subr.mxu0 0.0
    %5041 = vmatpush1.msra.mxu0 %v4220
    %5042 = vmatprep.subr.mxu0 0.0
    %5043 = vmatpush1.msra.mxu0 %v4221
    %5044 = vmatprep.subr.mxu0 0.0
    %5045 = vmatpush1.msra.mxu0 %v4222
    %5046 = vmatprep.subr.mxu0 0.0
    %5047 = vmatpush1.msra.mxu0 0.0
    %5048 = vmatprep.subr.mxu0 0.0
    %5049 = vmatpush1.msra.mxu0 0.0
    %5050 = vmatprep.subr.mxu0 0.0
    %5051 = vmatpush1.msra.mxu0 0.0
    %5052 = vmatprep.subr.mxu0 0.0
    %5053 = vmatpush1.msra.mxu0 0.0
    %5054 = vmatprep.subr.mxu0 0.0
    %5055 = vmatpush1.msra.mxu0 0.0
    %5056 = vmatprep.subr.mxu0 0.0
    %5057 = vmatpush1.msra.mxu0 0.0
    %5058 = vmatprep.subr.mxu0 0.0
    %5059 = vmatpush1.msra.mxu0 0.0
    %5060 = vmatprep.subr.mxu0 0.0
    %5061 = vmatpush1.msra.mxu0 0.0
    %5062 = vmatprep.subr.mxu0 0.0
    %5063 = vmatpush1.msra.mxu0 0.0
    %5064 = vmatprep.subr.mxu0 0.0
    %5065 = vmatpush1.msra.mxu0 0.0
    %5066 = vmatprep.subr.mxu0 0.0
    %5067 = vmatpush1.msra.mxu0 0.0
    %5068 = vmatprep.subr.mxu0 0.0
    %5069 = vmatpush1.msra.mxu0 0.0
    %5070 = vmatprep.subr.mxu0 0.0
    %5071 = vmatpush1.msra.mxu0 0.0
    %5072 = vmatprep.subr.mxu0 0.0
    %5073 = vmatpush1.msra.mxu0 0.0
    %5074 = vmatprep.subr.mxu0 0.0
    %5075 = vmatpush1.msra.mxu0 0.0
    %5076 = vmatprep.subr.mxu0 0.0
    %5077 = vmatpush1.msra.mxu0 0.0
    %5078 = vmatprep.subr.mxu0 0.0
    %5079 = vmatpush1.msra.mxu0 0.0
    %5080 = vmatprep.subr.mxu0 0.0
    %5081 = vmatpush1.msra.mxu0 0.0
    %5082 = vmatprep.subr.mxu0 0.0
    %5083 = vmatpush1.msra.mxu0 0.0
    %5084 = vmatprep.subr.mxu0 0.0
    %5085 = vmatpush1.msra.mxu0 0.0
    %5086 = vmatprep.subr.mxu0 0.0
    %5087 = vmatpush1.msra.mxu0 0.0
    %5088 = vmatprep.subr.mxu0 0.0
    %5089 = vmatpush1.msra.mxu0 0.0
    %5090 = vmatprep.subr.mxu0 0.0
    %5091 = vmatpush1.msra.mxu0 0.0
    %5092 = vmatprep.subr.mxu0 0.0
    %5093 = vmatpush1.msra.mxu0 0.0
    %5094 = vmatprep.subr.mxu0 0.0
    %5095 = vmatpush1.msra.mxu0 0.0
    %5096 = vmatprep.subr.mxu0 0.0
    %5097 = vmatpush1.msra.mxu0 0.0
    %5098 = vmatprep.subr.mxu0 0.0
    %5099 = vmatpush1.msra.mxu0 0.0
    %5100 = vmatprep.subr.mxu0 0.0
    %5101 = vmatpush1.msra.mxu0 0.0
    %5102 = vmatprep.mubr.f32.mxu0 0.0
    %5103 = vmatmul.mubr.f32.gmra.mrb[0].mxu0 %v5036
    %v5104 = vpop.f32.mrb[0].mxu0
    %v5105 = vadd.f32 %v4228, %v5104
    %v5106 = vpop.f32.mrb[0].mxu0
    %5107 = vdwg.mxu0
    %5108 = vmatprep.subr.mxu0 0.0
    %5109 = vmatpush1.msra.mxu0 %v4303
    %5110 = vmatprep.subr.mxu0 0.0
    %5111 = vmatpush1.msra.mxu0 %v4304
    %5112 = vmatprep.subr.mxu0 0.0
    %5113 = vmatpush1.msra.mxu0 %v4305
    %5114 = vmatprep.subr.mxu0 0.0
    %5115 = vmatpush1.msra.mxu0 %v4306
    %5116 = vmatprep.subr.mxu0 0.0
    %5117 = vmatpush1.msra.mxu0 0.0
    %5118 = vmatprep.subr.mxu0 0.0
    %5119 = vmatpush1.msra.mxu0 0.0
    %5120 = vmatprep.subr.mxu0 0.0
    %5121 = vmatpush1.msra.mxu0 0.0
    %5122 = vmatprep.subr.mxu0 0.0
    %5123 = vmatpush1.msra.mxu0 0.0
    %5124 = vmatprep.subr.mxu0 0.0
    %5125 = vmatpush1.msra.mxu0 0.0
    %5126 = vmatprep.subr.mxu0 0.0
    %5127 = vmatpush1.msra.mxu0 0.0
    %5128 = vmatprep.subr.mxu0 0.0
    %5129 = vmatpush1.msra.mxu0 0.0
    %5130 = vmatprep.subr.mxu0 0.0
    %5131 = vmatpush1.msra.mxu0 0.0
    %5132 = vmatprep.subr.mxu0 0.0
    %5133 = vmatpush1.msra.mxu0 0.0
    %5134 = vmatprep.subr.mxu0 0.0
    %5135 = vmatpush1.msra.mxu0 0.0
    %5136 = vmatprep.subr.mxu0 0.0
    %5137 = vmatpush1.msra.mxu0 0.0
    %5138 = vmatprep.subr.mxu0 0.0
    %5139 = vmatpush1.msra.mxu0 0.0
    %5140 = vmatprep.subr.mxu0 0.0
    %5141 = vmatpush1.msra.mxu0 0.0
    %5142 = vmatprep.subr.mxu0 0.0
    %5143 = vmatpush1.msra.mxu0 0.0
    %5144 = vmatprep.subr.mxu0 0.0
    %5145 = vmatpush1.msra.mxu0 0.0
    %5146 = vmatprep.subr.mxu0 0.0
    %5147 = vmatpush1.msra.mxu0 0.0
    %5148 = vmatprep.subr.mxu0 0.0
    %5149 = vmatpush1.msra.mxu0 0.0
    %5150 = vmatprep.subr.mxu0 0.0
    %5151 = vmatpush1.msra.mxu0 0.0
    %5152 = vmatprep.subr.mxu0 0.0
    %5153 = vmatpush1.msra.mxu0 0.0
    %5154 = vmatprep.subr.mxu0 0.0
    %5155 = vmatpush1.msra.mxu0 0.0
    %5156 = vmatprep.subr.mxu0 0.0
    %5157 = vmatpush1.msra.mxu0 0.0
    %5158 = vmatprep.subr.mxu0 0.0
    %5159 = vmatpush1.msra.mxu0 0.0
    %5160 = vmatprep.subr.mxu0 0.0
    %5161 = vmatpush1.msra.mxu0 0.0
    %5162 = vmatprep.subr.mxu0 0.0
    %5163 = vmatpush1.msra.mxu0 0.0
    %5164 = vmatprep.subr.mxu0 0.0
    %5165 = vmatpush1.msra.mxu0 0.0
    %5166 = vmatprep.subr.mxu0 0.0
    %5167 = vmatpush1.msra.mxu0 0.0
    %5168 = vmatprep.subr.mxu0 0.0
    %5169 = vmatpush1.msra.mxu0 0.0
    %5170 = vmatprep.subr.mxu0 0.0
    %5171 = vmatpush1.msra.mxu0 0.0
    %5172 = vmatprep.mubr.f32.mxu0 0.0
    %5173 = vmatmul.mubr.f32.gmra.mrb[0].mxu0 %v4743
    %v5174 = vpop.f32.mrb[0].mxu0
    %v5175 = vadd.f32 %v4312, %v5174
    %v5176 = vpop.f32.mrb[0].mxu0
    %5177 = vdwg.mxu0
    %v5178 = vadd.f32 %v5105, %v5175
    %v5179 = vxor.u32 %v5178, 2147483648
    %v5180 = vmul.f32 %v5179, 1.442695
    %v5181 = vpow.pop %v5180
    %v5182 = vadd.f32 %v5181, 1.0
    %v5183 = vrcp.pop %v5182
    %v5184 = vmul.f32 1.0, %v5183
    %5185 = vmatprep.subr.mxu0 0.0
    %5186 = vmatpush1.msra.mxu0 %v4392
    %5187 = vmatprep.subr.mxu0 0.0
    %5188 = vmatpush1.msra.mxu0 %v4393
    %5189 = vmatprep.subr.mxu0 0.0
    %5190 = vmatpush1.msra.mxu0 %v4394
    %5191 = vmatprep.subr.mxu0 0.0
    %5192 = vmatpush1.msra.mxu0 %v4395
    %5193 = vmatprep.subr.mxu0 0.0
    %5194 = vmatpush1.msra.mxu0 0.0
    %5195 = vmatprep.subr.mxu0 0.0
    %5196 = vmatpush1.msra.mxu0 0.0
    %5197 = vmatprep.subr.mxu0 0.0
    %5198 = vmatpush1.msra.mxu0 0.0
    %5199 = vmatprep.subr.mxu0 0.0
    %5200 = vmatpush1.msra.mxu0 0.0
    %5201 = vmatprep.subr.mxu0 0.0
    %5202 = vmatpush1.msra.mxu0 0.0
    %5203 = vmatprep.subr.mxu0 0.0
    %5204 = vmatpush1.msra.mxu0 0.0
    %5205 = vmatprep.subr.mxu0 0.0
    %5206 = vmatpush1.msra.mxu0 0.0
    %5207 = vmatprep.subr.mxu0 0.0
    %5208 = vmatpush1.msra.mxu0 0.0
    %5209 = vmatprep.subr.mxu0 0.0
    %5210 = vmatpush1.msra.mxu0 0.0
    %5211 = vmatprep.subr.mxu0 0.0
    %5212 = vmatpush1.msra.mxu0 0.0
    %5213 = vmatprep.subr.mxu0 0.0
    %5214 = vmatpush1.msra.mxu0 0.0
    %5215 = vmatprep.subr.mxu0 0.0
    %5216 = vmatpush1.msra.mxu0 0.0
    %5217 = vmatprep.subr.mxu0 0.0
    %5218 = vmatpush1.msra.mxu0 0.0
    %5219 = vmatprep.subr.mxu0 0.0
    %5220 = vmatpush1.msra.mxu0 0.0
    %5221 = vmatprep.subr.mxu0 0.0
    %5222 = vmatpush1.msra.mxu0 0.0
    %5223 = vmatprep.subr.mxu0 0.0
    %5224 = vmatpush1.msra.mxu0 0.0
    %5225 = vmatprep.subr.mxu0 0.0
    %5226 = vmatpush1.msra.mxu0 0.0
    %5227 = vmatprep.subr.mxu0 0.0
    %5228 = vmatpush1.msra.mxu0 0.0
    %5229 = vmatprep.subr.mxu0 0.0
    %5230 = vmatpush1.msra.mxu0 0.0
    %5231 = vmatprep.subr.mxu0 0.0
    %5232 = vmatpush1.msra.mxu0 0.0
    %5233 = vmatprep.subr.mxu0 0.0
    %5234 = vmatpush1.msra.mxu0 0.0
    %5235 = vmatprep.subr.mxu0 0.0
    %5236 = vmatpush1.msra.mxu0 0.0
    %5237 = vmatprep.subr.mxu0 0.0
    %5238 = vmatpush1.msra.mxu0 0.0
    %5239 = vmatprep.subr.mxu0 0.0
    %5240 = vmatpush1.msra.mxu0 0.0
    %5241 = vmatprep.subr.mxu0 0.0
    %5242 = vmatpush1.msra.mxu0 0.0
    %5243 = vmatprep.subr.mxu0 0.0
    %5244 = vmatpush1.msra.mxu0 0.0
    %5245 = vmatprep.subr.mxu0 0.0
    %5246 = vmatpush1.msra.mxu0 0.0
    %5247 = vmatprep.subr.mxu0 0.0
    %5248 = vmatpush1.msra.mxu0 0.0
    %5249 = vmatprep.mubr.f32.mxu0 0.0
    %5250 = vmatmul.mubr.f32.gmra.mrb[0].mxu0 %v5036
    %v5251 = vpop.f32.mrb[0].mxu0
    %v5252 = vadd.f32 %v4402, %v5251
    %v5253 = vpop.f32.mrb[0].mxu0
    %5254 = vdwg.mxu0
    %5255 = vmatprep.subr.mxu0 0.0
    %5256 = vmatpush1.msra.mxu0 %v4475
    %5257 = vmatprep.subr.mxu0 0.0
    %5258 = vmatpush1.msra.mxu0 %v4476
    %5259 = vmatprep.subr.mxu0 0.0
    %5260 = vmatpush1.msra.mxu0 %v4477
    %5261 = vmatprep.subr.mxu0 0.0
    %5262 = vmatpush1.msra.mxu0 %v4478
    %5263 = vmatprep.subr.mxu0 0.0
    %5264 = vmatpush1.msra.mxu0 0.0
    %5265 = vmatprep.subr.mxu0 0.0
    %5266 = vmatpush1.msra.mxu0 0.0
    %5267 = vmatprep.subr.mxu0 0.0
    %5268 = vmatpush1.msra.mxu0 0.0
    %5269 = vmatprep.subr.mxu0 0.0
    %5270 = vmatpush1.msra.mxu0 0.0
    %5271 = vmatprep.subr.mxu0 0.0
    %5272 = vmatpush1.msra.mxu0 0.0
    %5273 = vmatprep.subr.mxu0 0.0
    %5274 = vmatpush1.msra.mxu0 0.0
    %5275 = vmatprep.subr.mxu0 0.0
    %5276 = vmatpush1.msra.mxu0 0.0
    %5277 = vmatprep.subr.mxu0 0.0
    %5278 = vmatpush1.msra.mxu0 0.0
    %5279 = vmatprep.subr.mxu0 0.0
    %5280 = vmatpush1.msra.mxu0 0.0
    %5281 = vmatprep.subr.mxu0 0.0
    %5282 = vmatpush1.msra.mxu0 0.0
    %5283 = vmatprep.subr.mxu0 0.0
    %5284 = vmatpush1.msra.mxu0 0.0
    %5285 = vmatprep.subr.mxu0 0.0
    %5286 = vmatpush1.msra.mxu0 0.0
    %5287 = vmatprep.subr.mxu0 0.0
    %5288 = vmatpush1.msra.mxu0 0.0
    %5289 = vmatprep.subr.mxu0 0.0
    %5290 = vmatpush1.msra.mxu0 0.0
    %5291 = vmatprep.subr.mxu0 0.0
    %5292 = vmatpush1.msra.mxu0 0.0
    %5293 = vmatprep.subr.mxu0 0.0
    %5294 = vmatpush1.msra.mxu0 0.0
    %5295 = vmatprep.subr.mxu0 0.0
    %5296 = vmatpush1.msra.mxu0 0.0
    %5297 = vmatprep.subr.mxu0 0.0
    %5298 = vmatpush1.msra.mxu0 0.0
    %5299 = vmatprep.subr.mxu0 0.0
    %5300 = vmatpush1.msra.mxu0 0.0
    %5301 = vmatprep.subr.mxu0 0.0
    %5302 = vmatpush1.msra.mxu0 0.0
    %5303 = vmatprep.subr.mxu0 0.0
    %5304 = vmatpush1.msra.mxu0 0.0
    %5305 = vmatprep.subr.mxu0 0.0
    %5306 = vmatpush1.msra.mxu0 0.0
    %5307 = vmatprep.subr.mxu0 0.0
    %5308 = vmatpush1.msra.mxu0 0.0
    %5309 = vmatprep.subr.mxu0 0.0
    %5310 = vmatpush1.msra.mxu0 0.0
    %5311 = vmatprep.subr.mxu0 0.0
    %5312 = vmatpush1.msra.mxu0 0.0
    %5313 = vmatprep.subr.mxu0 0.0
    %5314 = vmatpush1.msra.mxu0 0.0
    %5315 = vmatprep.subr.mxu0 0.0
    %5316 = vmatpush1.msra.mxu0 0.0
    %5317 = vmatprep.subr.mxu0 0.0
    %5318 = vmatpush1.msra.mxu0 0.0
    %5319 = vmatprep.mubr.f32.mxu0 0.0
    %5320 = vmatmul.mubr.f32.gmra.mrb[0].mxu0 %v4743
    %v5321 = vpop.f32.mrb[0].mxu0
    %v5322 = vadd.f32 %v4485, %v5321
    %v5323 = vpop.f32.mrb[0].mxu0
    %5324 = vdwg.mxu0
    %v5325 = vadd.f32 %v5252, %v5322
    %v5326 = vxor.u32 %v5325, 2147483648
    %v5327 = vmul.f32 %v5326, 1.442695
    %v5328 = vpow.pop %v5327
    %v5329 = vadd.f32 %v5328, 1.0
    %v5330 = vrcp.pop %v5329
    %v5331 = vmul.f32 1.0, %v5330
    %5332 = vmatprep.subr.mxu0 0.0
    %5333 = vmatpush1.msra.mxu0 %v4565
    %5334 = vmatprep.subr.mxu0 0.0
    %5335 = vmatpush1.msra.mxu0 %v4566
    %5336 = vmatprep.subr.mxu0 0.0
    %5337 = vmatpush1.msra.mxu0 %v4567
    %5338 = vmatprep.subr.mxu0 0.0
    %5339 = vmatpush1.msra.mxu0 %v4568
    %5340 = vmatprep.subr.mxu0 0.0
    %5341 = vmatpush1.msra.mxu0 0.0
    %5342 = vmatprep.subr.mxu0 0.0
    %5343 = vmatpush1.msra.mxu0 0.0
    %5344 = vmatprep.subr.mxu0 0.0
    %5345 = vmatpush1.msra.mxu0 0.0
    %5346 = vmatprep.subr.mxu0 0.0
    %5347 = vmatpush1.msra.mxu0 0.0
    %5348 = vmatprep.subr.mxu0 0.0
    %5349 = vmatpush1.msra.mxu0 0.0
    %5350 = vmatprep.subr.mxu0 0.0
    %5351 = vmatpush1.msra.mxu0 0.0
    %5352 = vmatprep.subr.mxu0 0.0
    %5353 = vmatpush1.msra.mxu0 0.0
    %5354 = vmatprep.subr.mxu0 0.0
    %5355 = vmatpush1.msra.mxu0 0.0
    %5356 = vmatprep.subr.mxu0 0.0
    %5357 = vmatpush1.msra.mxu0 0.0
    %5358 = vmatprep.subr.mxu0 0.0
    %5359 = vmatpush1.msra.mxu0 0.0
    %5360 = vmatprep.subr.mxu0 0.0
    %5361 = vmatpush1.msra.mxu0 0.0
    %5362 = vmatprep.subr.mxu0 0.0
    %5363 = vmatpush1.msra.mxu0 0.0
    %5364 = vmatprep.subr.mxu0 0.0
    %5365 = vmatpush1.msra.mxu0 0.0
    %5366 = vmatprep.subr.mxu0 0.0
    %5367 = vmatpush1.msra.mxu0 0.0
    %5368 = vmatprep.subr.mxu0 0.0
    %5369 = vmatpush1.msra.mxu0 0.0
    %5370 = vmatprep.subr.mxu0 0.0
    %5371 = vmatpush1.msra.mxu0 0.0
    %5372 = vmatprep.subr.mxu0 0.0
    %5373 = vmatpush1.msra.mxu0 0.0
    %5374 = vmatprep.subr.mxu0 0.0
    %5375 = vmatpush1.msra.mxu0 0.0
    %5376 = vmatprep.subr.mxu0 0.0
    %5377 = vmatpush1.msra.mxu0 0.0
    %5378 = vmatprep.subr.mxu0 0.0
    %5379 = vmatpush1.msra.mxu0 0.0
    %5380 = vmatprep.subr.mxu0 0.0
    %5381 = vmatpush1.msra.mxu0 0.0
    %5382 = vmatprep.subr.mxu0 0.0
    %5383 = vmatpush1.msra.mxu0 0.0
    %5384 = vmatprep.subr.mxu0 0.0
    %5385 = vmatpush1.msra.mxu0 0.0
    %5386 = vmatprep.subr.mxu0 0.0
    %5387 = vmatpush1.msra.mxu0 0.0
    %5388 = vmatprep.subr.mxu0 0.0
    %5389 = vmatpush1.msra.mxu0 0.0
    %5390 = vmatprep.subr.mxu0 0.0
    %5391 = vmatpush1.msra.mxu0 0.0
    %5392 = vmatprep.subr.mxu0 0.0
    %5393 = vmatpush1.msra.mxu0 0.0
    %5394 = vmatprep.subr.mxu0 0.0
    %5395 = vmatpush1.msra.mxu0 0.0
    %5396 = vmatprep.mubr.f32.mxu0 0.0
    %5397 = vmatmul.mubr.f32.gmra.mrb[0].mxu0 %v5036
    %v5398 = vpop.f32.mrb[0].mxu0
    %v5399 = vadd.f32 %v4575, %v5398
    %v5400 = vpop.f32.mrb[0].mxu0
    %5401 = vdwg.mxu0
    %5402 = vmatprep.subr.mxu0 0.0
    %5403 = vmatpush1.msra.mxu0 %v4648
    %5404 = vmatprep.subr.mxu0 0.0
    %5405 = vmatpush1.msra.mxu0 %v4649
    %5406 = vmatprep.subr.mxu0 0.0
    %5407 = vmatpush1.msra.mxu0 %v4650
    %5408 = vmatprep.subr.mxu0 0.0
    %5409 = vmatpush1.msra.mxu0 %v4651
    %5410 = vmatprep.subr.mxu0 0.0
    %5411 = vmatpush1.msra.mxu0 0.0
    %5412 = vmatprep.subr.mxu0 0.0
    %5413 = vmatpush1.msra.mxu0 0.0
    %5414 = vmatprep.subr.mxu0 0.0
    %5415 = vmatpush1.msra.mxu0 0.0
    %5416 = vmatprep.subr.mxu0 0.0
    %5417 = vmatpush1.msra.mxu0 0.0
    %5418 = vmatprep.subr.mxu0 0.0
    %5419 = vmatpush1.msra.mxu0 0.0
    %5420 = vmatprep.subr.mxu0 0.0
    %5421 = vmatpush1.msra.mxu0 0.0
    %5422 = vmatprep.subr.mxu0 0.0
    %5423 = vmatpush1.msra.mxu0 0.0
    %5424 = vmatprep.subr.mxu0 0.0
    %5425 = vmatpush1.msra.mxu0 0.0
    %5426 = vmatprep.subr.mxu0 0.0
    %5427 = vmatpush1.msra.mxu0 0.0
    %5428 = vmatprep.subr.mxu0 0.0
    %5429 = vmatpush1.msra.mxu0 0.0
    %5430 = vmatprep.subr.mxu0 0.0
    %5431 = vmatpush1.msra.mxu0 0.0
    %5432 = vmatprep.subr.mxu0 0.0
    %5433 = vmatpush1.msra.mxu0 0.0
    %5434 = vmatprep.subr.mxu0 0.0
    %5435 = vmatpush1.msra.mxu0 0.0
    %5436 = vmatprep.subr.mxu0 0.0
    %5437 = vmatpush1.msra.mxu0 0.0
    %5438 = vmatprep.subr.mxu0 0.0
    %5439 = vmatpush1.msra.mxu0 0.0
    %5440 = vmatprep.subr.mxu0 0.0
    %5441 = vmatpush1.msra.mxu0 0.0
    %5442 = vmatprep.subr.mxu0 0.0
    %5443 = vmatpush1.msra.mxu0 0.0
    %5444 = vmatprep.subr.mxu0 0.0
    %5445 = vmatpush1.msra.mxu0 0.0
    %5446 = vmatprep.subr.mxu0 0.0
    %5447 = vmatpush1.msra.mxu0 0.0
    %5448 = vmatprep.subr.mxu0 0.0
    %5449 = vmatpush1.msra.mxu0 0.0
    %5450 = vmatprep.subr.mxu0 0.0
    %5451 = vmatpush1.msra.mxu0 0.0
    %5452 = vmatprep.subr.mxu0 0.0
    %5453 = vmatpush1.msra.mxu0 0.0
    %5454 = vmatprep.subr.mxu0 0.0
    %5455 = vmatpush1.msra.mxu0 0.0
    %5456 = vmatprep.subr.mxu0 0.0
    %5457 = vmatpush1.msra.mxu0 0.0
    %5458 = vmatprep.subr.mxu0 0.0
    %5459 = vmatpush1.msra.mxu0 0.0
    %5460 = vmatprep.subr.mxu0 0.0
    %5461 = vmatpush1.msra.mxu0 0.0
    %5462 = vmatprep.subr.mxu0 0.0
    %5463 = vmatpush1.msra.mxu0 0.0
    %5464 = vmatprep.subr.mxu0 0.0
    %5465 = vmatpush1.msra.mxu0 0.0
    %5466 = vmatprep.mubr.f32.mxu0 0.0
    %5467 = vmatmul.mubr.f32.gmra.mrb[0].mxu0 %v4743
    %v5468 = vpop.f32.mrb[0].mxu0
    %v5469 = vadd.f32 %v4658, %v5468
    %v5470 = vpop.f32.mrb[0].mxu0
    %5471 = vdwg.mxu0
    %v5472 = vmul.f32 %v5184, %v5469
    %v5473 = vadd.f32 %v5399, %v5472
    %v5474 = vtanh.pop %v5473
    %v5475 = vsub.f32 1.0, %v5331
    %v5476 = vmul.f32 %v5475, %v5474
    %v5477 = vmul.f32 %v5331, %v4739
    %v5478 = vadd.f32 %v5476, %v5477
    %vm5479 = vcmp.ge.f32.partialorder %v5478, 0.0
    %v5480 = vmul.f32 %v5478, 0.01
    %v5481 = vsel %vm5479, %v5478, %v5480
    %v5482 = vadd.f32 %v4740, %v4956
    %v5483 = vadd.f32 %v4741, %v4957
    %v5484 = vmul.f32 %v5482, 0.5
    %v5485 = vmul.f32 %v5483, 0.5
    %vm5486 = vcmask 7168
    %5487 = vst.msk [vmem:[%s61] sm:$0xff] %vm5486, %v5484
    %5488 = vst.msk [vmem:[%s61 + $0x8] sm:$0xff] %vm5486, %v5485
    %v5489 = vld [vmem:[%s55] sm:$0xff]
    %v5490 = vld [vmem:[%s55 + $0x8] sm:$0xff]
    %v5491 = vld [vmem:[%s55 + $0x10] sm:$0xff]
    %v5492 = vld [vmem:[%s55 + $0x18] sm:$0xff]
    %v5493 = vld [vmem:[#allocation35] sm:$0x1]
    %v5495 = vlaneseq
    %v5496 = vshrl.u32 %v5495, 7
    %v5497 = vsub.s32 0, %v5496
    %v5498 = vrot.slane %v5493, %v5497
    %v5501 = vsel %vm651, %v5481, 0
    %5503 = vmatprep.subr.mxu0 0.0
    %5504 = vmatpush1.msra.mxu0 %v5489
    %5505 = vmatprep.subr.mxu0 0.0
    %5506 = vmatpush1.msra.mxu0 %v5490
    %5507 = vmatprep.subr.mxu0 0.0
    %5508 = vmatpush1.msra.mxu0 %v5491
    %5509 = vmatprep.subr.mxu0 0.0
    %5510 = vmatpush1.msra.mxu0 %v5492
    %5511 = vmatprep.subr.mxu0 0.0
    %5512 = vmatpush1.msra.mxu0 0.0
    %5513 = vmatprep.subr.mxu0 0.0
    %5514 = vmatpush1.msra.mxu0 0.0
    %5515 = vmatprep.subr.mxu0 0.0
    %5516 = vmatpush1.msra.mxu0 0.0
    %5517 = vmatprep.subr.mxu0 0.0
    %5518 = vmatpush1.msra.mxu0 0.0
    %5519 = vmatprep.subr.mxu0 0.0
    %5520 = vmatpush1.msra.mxu0 0.0
    %5521 = vmatprep.subr.mxu0 0.0
    %5522 = vmatpush1.msra.mxu0 0.0
    %5523 = vmatprep.subr.mxu0 0.0
    %5524 = vmatpush1.msra.mxu0 0.0
    %5525 = vmatprep.subr.mxu0 0.0
    %5526 = vmatpush1.msra.mxu0 0.0
    %5527 = vmatprep.subr.mxu0 0.0
    %5528 = vmatpush1.msra.mxu0 0.0
    %5529 = vmatprep.subr.mxu0 0.0
    %5530 = vmatpush1.msra.mxu0 0.0
    %5531 = vmatprep.subr.mxu0 0.0
    %5532 = vmatpush1.msra.mxu0 0.0
    %5533 = vmatprep.subr.mxu0 0.0
    %5534 = vmatpush1.msra.mxu0 0.0
    %5535 = vmatprep.subr.mxu0 0.0
    %5536 = vmatpush1.msra.mxu0 0.0
    %5537 = vmatprep.subr.mxu0 0.0
    %5538 = vmatpush1.msra.mxu0 0.0
    %5539 = vmatprep.subr.mxu0 0.0
    %5540 = vmatpush1.msra.mxu0 0.0
    %5541 = vmatprep.subr.mxu0 0.0
    %5542 = vmatpush1.msra.mxu0 0.0
    %5543 = vmatprep.subr.mxu0 0.0
    %5544 = vmatpush1.msra.mxu0 0.0
    %5545 = vmatprep.subr.mxu0 0.0
    %5546 = vmatpush1.msra.mxu0 0.0
    %5547 = vmatprep.subr.mxu0 0.0
    %5548 = vmatpush1.msra.mxu0 0.0
    %5549 = vmatprep.subr.mxu0 0.0
    %5550 = vmatpush1.msra.mxu0 0.0
    %5551 = vmatprep.subr.mxu0 0.0
    %5552 = vmatpush1.msra.mxu0 0.0
    %5553 = vmatprep.subr.mxu0 0.0
    %5554 = vmatpush1.msra.mxu0 0.0
    %5555 = vmatprep.subr.mxu0 0.0
    %5556 = vmatpush1.msra.mxu0 0.0
    %5557 = vmatprep.subr.mxu0 0.0
    %5558 = vmatpush1.msra.mxu0 0.0
    %5559 = vmatprep.subr.mxu0 0.0
    %5560 = vmatpush1.msra.mxu0 0.0
    %5561 = vmatprep.subr.mxu0 0.0
    %5562 = vmatpush1.msra.mxu0 0.0
    %5563 = vmatprep.subr.mxu0 0.0
    %5564 = vmatpush1.msra.mxu0 0.0
    %5565 = vmatprep.subr.mxu0 0.0
    %5566 = vmatpush1.msra.mxu0 0.0
    %5567 = vmatprep.mubr.f32.mxu0 0.0
    %5568 = vmatmul.mubr.f32.gmra.mrb[0].mxu0 %v5501
    %v5569 = vpop.f32.mrb[0].mxu0
    %v5570 = vadd.f32 %v5498, %v5569
    %v5571 = vpop.f32.mrb[0].mxu0
    %5572 = vdwg.mxu0
    %vm5573 = vcmask 58368
    %5574 = vst.msk [vmem:[#allocation37] sm:$0x3] %vm5573, %v5570
    // Predicated region
    $region206: #{gnn_graph_forward.1} parent=1 // pred_check
      _
    $region207: #{gnn_graph_forward.1} parent=1 // pred_check_branch
      %5576 = sbr.rel (0) target = $region209
    $region208: #{gnn_graph_forward.1} parent=1 // pred_region
      %s5578 = ssub.s32 32, 32
      %5579 = vsyncadd [#allocation4], %s5578
      %s5581 = sshll.u32 [#allocation37], 4
      %s5582 = int_to_ptr.vmem [resolvable:$true] %s5581
      %5584 = dma.vmem_to_hbm [thread:$0]  %s5582, 32, %s59, [#allocation4]
    $region209: #{gnn_graph_forward.1} parent=1 // pred_fallthru
      _
    // Predicated region
    $region210: #{gnn_graph_forward.1} parent=1 // pred_check
      _
    $region211: #{gnn_graph_forward.1} parent=1 // pred_check_branch
      %5586 = sbr.rel (0) target = $region213
    $region212: #{gnn_graph_forward.1} parent=1 // pred_region
      _
    $region213: #{gnn_graph_forward.1} parent=1 // pred_fallthru
      _
    // Predicated region
    $region214: #{gnn_graph_forward.1} parent=1 // pred_check
      _
    $region215: #{gnn_graph_forward.1} parent=1 // pred_check_branch
      %5588 = sbr.rel (0) target = $region217
    $region216: #{gnn_graph_forward.1} parent=1 // pred_region
      %s5590 = ssub.s32 256, 256
      %5591 = vsyncadd [#allocation39], %s5590
      %s5592 = sshll.u32 [#allocation38], 4
      %s5593 = int_to_ptr.vmem [resolvable:$true] %s5592
      %5598 = dma.vmem_to_hbm [thread:$0]  %s5593, 256, %s63, [#allocation39], 128, 128, 8
    $region217: #{gnn_graph_forward.1} parent=1 // pred_fallthru
      _
    // Predicated region
    $region218: #{gnn_graph_forward.1} parent=1 // pred_check
      _
    $region219: #{gnn_graph_forward.1} parent=1 // pred_check_branch
      %5600 = sbr.rel (0) target = $region221
    $region220: #{gnn_graph_forward.1} parent=1 // pred_region
      %5601 = dma.done [#allocation4], 32
    $region221: #{gnn_graph_forward.1} parent=1 // pred_fallthru
      _
    // Predicated region
    $region222: #{gnn_graph_forward.1} parent=1 // pred_check
      _
    $region223: #{gnn_graph_forward.1} parent=1 // pred_check_branch
      %5603 = sbr.rel (0) target = $region225
    $region224: #{gnn_graph_forward.1} parent=1 // pred_region
      _
    $region225: #{gnn_graph_forward.1} parent=1 // pred_fallthru
      _
    // Predicated region
    $region226: #{gnn_graph_forward.1} parent=1 // pred_check
      _
    $region227: #{gnn_graph_forward.1} parent=1 // pred_check_branch
      %5605 = sbr.rel (0) target = $region229
    $region228: #{gnn_graph_forward.1} parent=1 // pred_region
      %5606 = dma.done [#allocation39], 256
    $region229: #{gnn_graph_forward.1} parent=1 // pred_fallthru
      _
    %5607 = vsyncpa [#allocation3], 1
    %5608 = vsyncpa [#allocation6], 1
    %5609 = vsyncpa [#allocation9], 1
    %5610 = vsyncpa [#allocation12], 1
    %5611 = vsyncpa [#allocation15], 1
    %5612 = vsyncpa [#allocation18], 1
    %5613 = vsyncpa [#allocation21], 1
    %5614 = vsyncpa [#allocation24], 1
    %5615 = vsyncpa [#allocation27], 1
    %5616 = vsyncpa [#allocation30], 1
    %5617 = vsyncpa [#allocation33], 1
    %5618 = vsyncpa [#allocation36], 1
    %5619 = vsyncpa [#allocation4], 1
    %5620 = vsyncpa [#allocation39], 1

</llo_original>
